<compile_context>
chip_gen: v6e
topology: v6e:2x2x1
jax: 0.10.0
libtpu: 0.0.40
codegen_flags: <defaults>
</compile_context>

<pallas_src>
import jax
import jax.numpy as jnp
from jax.experimental import pallas as pl
from jax.experimental.pallas import tpu as pltpu

HEAD_NUM = 4
HIDDEN = 768
LN_EPS = 1e-5
NEG_FILL = -1000000000.0
INV_SCALE = 1.0 / 20.0


def _mha_kernel(x_ref, xperm_ref, mask_ref, wqkv_ref, bqkv_ref,
                gamma_ref, beta_ref, out_ref, attn_ref):
    Bt, S, D = x_ref.shape
    dh = D // HEAD_NUM

    # ---- fused QKV projection: one MXU matmul with M = Bt*S rows ----
    x2d = x_ref[...].reshape(Bt * S, D)                    # merge leading dims (free)
    qkv = jnp.dot(x2d, wqkv_ref[...],
                  preferred_element_type=jnp.float32) + bqkv_ref[...]
    # Fold the /20 score scale into Q once (instead of dividing every SxS tile).
    q3 = (qkv[:, 0 * D:1 * D] * INV_SCALE).reshape(Bt, S, D)
    k3 = qkv[:, 1 * D:2 * D].reshape(Bt, S, D)
    v3 = qkv[:, 2 * D:3 * D].reshape(Bt, S, D)

    # ---- combined mask: strict-upper-triangular causal OR per-query-row padding ----
    pad = mask_ref[...] > 0.5                              # (Bt, S, 1)
    row = jax.lax.broadcasted_iota(jnp.int32, (S, S), 0)
    col = jax.lax.broadcasted_iota(jnp.int32, (S, S), 1)
    look = (col > row)[None, :, :]                         # triu(ones, 1) == 1
    full_mask = jnp.logical_or(look, pad)                  # (Bt, S, S)

    # ---- per-head attention, batched over the Bt batch tile ----
    head_outs = []
    for h in range(HEAD_NUM):
        qh = q3[:, :, h * dh:(h + 1) * dh]                 # (Bt, S, dh)
        kh = k3[:, :, h * dh:(h + 1) * dh]
        vh = v3[:, :, h * dh:(h + 1) * dh]
        # (Q/20) @ K^T, batched over Bt -> (Bt, Sq, Sk)
        w = jax.lax.dot_general(qh, kh, (((2,), (2,)), ((0,), (0,))),
                                preferred_element_type=jnp.float32)
        w = jnp.where(full_mask, NEG_FILL, w)
        # softmax over dim=2 of (B, H, Sq, Sk) == the QUERY axis (axis 1 here)
        w = w - jnp.max(w, axis=1, keepdims=True)
        e = jnp.exp(w)
        p = e / jnp.sum(e, axis=1, keepdims=True)
        head_outs.append(
            jax.lax.dot_general(p, vh, (((2,), (1,)), ((0,), (0,))),
                                preferred_element_type=jnp.float32))   # (Bt, S, dh)
    # single lane-dense (Bt, S, 768) store instead of 4 masked partial stores
    attn_ref[...] = jnp.concatenate(head_outs, axis=-1)

    # ---- residual + LayerNorm, reproducing the original bug:
    # the residual uses the *permuted input*, not the attention output.
    y = x_ref[...] + xperm_ref[...]
    mu = jnp.mean(y, axis=-1, keepdims=True)
    c = y - mu
    var = jnp.mean(c * c, axis=-1, keepdims=True)
    out_ref[...] = c * jax.lax.rsqrt(var + LN_EPS) * gamma_ref[...] + beta_ref[...]


def _pick_batch_tile(B, S, max_rows=512):
    """Largest Bt dividing B with Bt*S <= max_rows rows per step, while keeping
    >= 2 grid steps (when B >= 2) so both v7x TensorCores stay fed."""
    best = 1
    for bt in range(1, B + 1):
        if B % bt:
            continue
        if bt * S > max_rows:
            continue
        if B >= 2 and (B // bt) < 2:
            continue
        best = bt
    return best


def multi_head_attention(x, attention_mask, params):
    """x: (B, S, 768) f32, attention_mask: (B, 1, S) bool. Returns (out, attn_aux)."""
    wq, bq, wk, bk, wv, bv, gamma, beta = params
    B, S, D = x.shape
    assert D == HIDDEN and D % HEAD_NUM == 0

    # Fuse the three projections: one weight DMA, one MXU weight stream.
    wqkv = jnp.concatenate([wq, wk, wv], axis=1)           # (D, 3D)
    bqkv = jnp.concatenate([bq, bk, bv], axis=1)           # (1, 3D)

    # glue: the buggy x.transpose(1, 2).reshape(B, S, D) permutation of the input.
    # TODO(synk): this pure lane-scrambling (S,D)->(D,S)->(S,D) reshape has no clean
    # in-kernel Mosaic lowering; done in plain JAX here (costs one extra input DMA).
    x_perm = jnp.swapaxes(x, 1, 2).reshape(B, S, D)
    # glue: mask as (B, S, 1) float32 column (per-query-row padding mask)
    mask_f = attention_mask.astype(jnp.float32).reshape(B, S, 1)

    Bt = _pick_batch_tile(B, S)
    grid = (B // Bt,)

    grid_spec = pltpu.PrefetchScalarGridSpec(
        num_scalar_prefetch=0,
        grid=grid,
        in_specs=[
            pl.BlockSpec((Bt, S, D), lambda b: (b, 0, 0)),   # x
            pl.BlockSpec((Bt, S, D), lambda b: (b, 0, 0)),   # x_perm
            pl.BlockSpec((Bt, S, 1), lambda b: (b, 0, 0)),   # padding mask
            pl.BlockSpec((D, 3 * D), lambda b: (0, 0)),      # fused Wqkv
            pl.BlockSpec((1, 3 * D), lambda b: (0, 0)),      # fused bias
            pl.BlockSpec((1, D), lambda b: (0, 0)),          # gamma
            pl.BlockSpec((1, D), lambda b: (0, 0)),          # beta
        ],
        out_specs=[
            pl.BlockSpec((Bt, S, D), lambda b: (b, 0, 0)),   # module output
            pl.BlockSpec((Bt, S, D), lambda b: (b, 0, 0)),   # attention aux
        ],
    )

    cost = pl.CostEstimate(
        flops=2 * B * S * D * 3 * D + 4 * B * S * S * D + 10 * B * S * D,
        transcendentals=B * HEAD_NUM * S * S + B * S,
        bytes_accessed=4 * (D * 3 * D + 5 * D) + 4 * 4 * B * S * D + 4 * B * S,
    )

    out, attn = pl.pallas_call(
        _mha_kernel,
        out_shape=(jax.ShapeDtypeStruct((B, S, D), jnp.float32),
                   jax.ShapeDtypeStruct((B, S, D), jnp.float32)),
        grid_spec=grid_spec,
        compiler_params=pltpu.CompilerParams(
            dimension_semantics=("parallel",),
            vmem_limit_bytes=32 * 1024 * 1024),
        cost_estimate=cost,
    )(x, x_perm, mask_f, wqkv, bqkv, gamma, beta)
    return out, attn


def reference(x, attention_mask, params):
    """Pure-JAX re-implementation of the PyTorch forward (bug included)."""
    wq, bq, wk, bk, wv, bv, gamma, beta = params
    B, S, D = x.shape
    dh = D // HEAD_NUM
    Q = (x @ wq + bq).reshape(B, S, HEAD_NUM, dh).transpose(0, 2, 1, 3)
    K = (x @ wk + bk).reshape(B, S, HEAD_NUM, dh).transpose(0, 2, 1, 3)
    V = (x @ wv + bv).reshape(B, S, HEAD_NUM, dh).transpose(0, 2, 1, 3)
    w = Q @ jnp.swapaxes(K, -1, -2) / 20.0                    # (B, H, S, S)
    am = jnp.broadcast_to(attention_mask[..., None], w.shape)  # (B,1,S,1)->(B,H,S,S)
    look = (jnp.arange(S)[None, :] > jnp.arange(S)[:, None])[None, None]
    mask = jnp.logical_or(look, am)
    w = jnp.where(mask, NEG_FILL, w)
    p = jax.nn.softmax(w, axis=2)                              # dim=2 (query axis)
    attn = (p @ V).transpose(0, 2, 1, 3).reshape(B, S, D)
    x1 = jnp.swapaxes(x, 1, 2).reshape(B, S, D)                # the original bug
    y = x + x1
    mu = y.mean(-1, keepdims=True)
    var = ((y - mu) ** 2).mean(-1, keepdims=True)
    out = (y - mu) / jnp.sqrt(var + LN_EPS) * gamma + beta
    return out, attn


def init_params(key):
    ks = jax.random.split(key, 6)
    scale = 0.02
    wq = scale * jax.random.normal(ks[0], (HIDDEN, HIDDEN), jnp.float32)
    bq = scale * jax.random.normal(ks[1], (1, HIDDEN), jnp.float32)
    wk = scale * jax.random.normal(ks[2], (HIDDEN, HIDDEN), jnp.float32)
    bk = scale * jax.random.normal(ks[3], (1, HIDDEN), jnp.float32)
    wv = scale * jax.random.normal(ks[4], (HIDDEN, HIDDEN), jnp.float32)
    bv = scale * jax.random.normal(ks[5], (1, HIDDEN), jnp.float32)
    gamma = jnp.ones((1, HIDDEN), jnp.float32)   # nn.LayerNorm default weight
    beta = jnp.zeros((1, HIDDEN), jnp.float32)   # nn.LayerNorm default bias
    return (wq, bq, wk, bk, wv, bv, gamma, beta)


if __name__ == "__main__":
    B, S = 8, 8   # small, but enough batch to exercise Bt=4 batch-tiling, grid=(2,)
    key = jax.random.PRNGKey(0)
    k_params, k_x = jax.random.split(key)

    params = init_params(k_params)
    x = jax.random.normal(k_x, (B, S, HIDDEN), jnp.float32)
    # padding mask: True == masked query row
    attention_mask = jnp.zeros((B, 1, S), dtype=bool)
    attention_mask = attention_mask.at[1, 0, S - 2:].set(True)
    attention_mask = attention_mask.at[5, 0, S - 3:].set(True)

    out, attn = multi_head_attention(x, attention_mask, params)
    out = jax.block_until_ready(out)
    attn = jax.block_until_ready(attn)

    ref_out, ref_attn = reference(x, attention_mask, params)
    assert out.shape == (B, S, HIDDEN)
    assert jnp.allclose(out, ref_out, atol=1e-3, rtol=1e-3), "module output mismatch"
    assert jnp.allclose(attn, ref_attn, atol=2e-3, rtol=2e-3), "attention aux mismatch"

    print("KERNEL_OK")
</pallas_src>

<mosaic_0001>
module attributes {stable_mosaic.version = 11 : i64} {
  func.func @_mha_kernel(%arg0: i32, %arg1: memref<4x8x768xf32, #tpu.memory_space<vmem>>, %arg2: memref<4x8x768xf32, #tpu.memory_space<vmem>>, %arg3: memref<4x8x1xf32, #tpu.memory_space<vmem>>, %arg4: memref<768x2304xf32, #tpu.memory_space<vmem>>, %arg5: memref<1x2304xf32, #tpu.memory_space<vmem>>, %arg6: memref<1x768xf32, #tpu.memory_space<vmem>>, %arg7: memref<1x768xf32, #tpu.memory_space<vmem>>, %arg8: memref<4x8x768xf32, #tpu.memory_space<vmem>>, %arg9: memref<4x8x768xf32, #tpu.memory_space<vmem>>) attributes {dimension_semantics = [#tpu.dimension_semantics<parallel>], iteration_bounds = array<i64: 2>, scalar_prefetch = 0 : i64, scratch_operands = 0 : i64, tpu.core_type = #tpu.core_type<tc>, window_params = [{transform_indices = @transform_0, window_bounds = array<i64: 4, 8, 768>}, {transform_indices = @transform_1, window_bounds = array<i64: 4, 8, 768>}, {transform_indices = @transform_2, window_bounds = array<i64: 4, 8, 1>}, {pipeline_mode = #tpu.pipeline_mode<synchronous>, transform_indices = @transform_3, window_bounds = array<i64: 768, 2304>}, {pipeline_mode = #tpu.pipeline_mode<synchronous>, transform_indices = @transform_4, window_bounds = array<i64: 1, 2304>}, {pipeline_mode = #tpu.pipeline_mode<synchronous>, transform_indices = @transform_5, window_bounds = array<i64: 1, 768>}, {pipeline_mode = #tpu.pipeline_mode<synchronous>, transform_indices = @transform_6, window_bounds = array<i64: 1, 768>}, {transform_indices = @transform_7, window_bounds = array<i64: 4, 8, 768>}, {transform_indices = @transform_8, window_bounds = array<i64: 4, 8, 768>}]} {
    %c0 = arith.constant 0 : index
    %c0_0 = arith.constant 0 : index
    %c0_1 = arith.constant 0 : index
    %0 = vector.load %arg1[%c0, %c0_0, %c0_1] : memref<4x8x768xf32, #tpu.memory_space<vmem>>, vector<4x8x768xf32>
    %1 = vector.shape_cast %0 : vector<4x8x768xf32> to vector<32x768xf32>
    %c0_2 = arith.constant 0 : index
    %c0_3 = arith.constant 0 : index
    %2 = vector.load %arg4[%c0_2, %c0_3] : memref<768x2304xf32, #tpu.memory_space<vmem>>, vector<768x2304xf32>
    %cst = arith.constant dense<0.000000e+00> : vector<32x2304xf32>
    %3 = tpu.matmul %1, %2, %cst {dimension_numbers = #tpu.dot_dimension_numbers<[1], [0], [0], [1], [0, 0, 1, 1], [], []>} : vector<32x768xf32>, vector<768x2304xf32>, vector<32x2304xf32> -> vector<32x2304xf32>
    %c0_4 = arith.constant 0 : index
    %c0_5 = arith.constant 0 : index
    %4 = vector.load %arg5[%c0_4, %c0_5] : memref<1x2304xf32, #tpu.memory_space<vmem>>, vector<1x2304xf32>
    %5 = vector.broadcast %4 : vector<1x2304xf32> to vector<32x2304xf32>
    %6 = arith.addf %3, %5 : vector<32x2304xf32>
    %7 = vector.extract_strided_slice %6 {offsets = [0, 0], sizes = [32, 768], strides = [1, 1]} : vector<32x2304xf32> to vector<32x768xf32>
    %cst_6 = arith.constant 5.000000e-02 : f32
    %8 = vector.broadcast %cst_6 : f32 to vector<32x768xf32>
    %9 = arith.mulf %7, %8 : vector<32x768xf32>
    %10 = vector.shape_cast %9 : vector<32x768xf32> to vector<4x8x768xf32>
    %11 = vector.extract_strided_slice %6 {offsets = [0, 768], sizes = [32, 768], strides = [1, 1]} : vector<32x2304xf32> to vector<32x768xf32>
    %12 = vector.shape_cast %11 : vector<32x768xf32> to vector<4x8x768xf32>
    %13 = vector.extract_strided_slice %6 {offsets = [0, 1536], sizes = [32, 768], strides = [1, 1]} : vector<32x2304xf32> to vector<32x768xf32>
    %14 = vector.shape_cast %13 : vector<32x768xf32> to vector<4x8x768xf32>
    %c0_7 = arith.constant 0 : index
    %c0_8 = arith.constant 0 : index
    %c0_9 = arith.constant 0 : index
    %15 = vector.load %arg3[%c0_7, %c0_8, %c0_9] : memref<4x8x1xf32, #tpu.memory_space<vmem>>, vector<4x8x1xf32>
    %cst_10 = arith.constant 5.000000e-01 : f32
    %16 = vector.broadcast %cst_10 : f32 to vector<4x8x1xf32>
    %17 = arith.cmpf ogt, %15, %16 : vector<4x8x1xf32>
    %18 = tpu.iota {dimensions = array<i32: 0>} : vector<8x8xi32>
    %19 = tpu.iota {dimensions = array<i32: 1>} : vector<8x8xi32>
    %20 = arith.cmpi sgt, %19, %18 : vector<8x8xi32>
    %21 = vector.shape_cast %20 : vector<8x8xi1> to vector<1x8x8xi1>
    %22 = vector.broadcast %21 : vector<1x8x8xi1> to vector<4x8x8xi1>
    %23 = vector.broadcast %17 : vector<4x8x1xi1> to vector<4x8x8xi1>
    %24 = arith.ori %22, %23 : vector<4x8x8xi1>
    %25 = vector.extract_strided_slice %10 {offsets = [0, 0, 0], sizes = [4, 8, 192], strides = [1, 1, 1]} : vector<4x8x768xf32> to vector<4x8x192xf32>
    %26 = vector.extract_strided_slice %12 {offsets = [0, 0, 0], sizes = [4, 8, 192], strides = [1, 1, 1]} : vector<4x8x768xf32> to vector<4x8x192xf32>
    %27 = vector.extract_strided_slice %14 {offsets = [0, 0, 0], sizes = [4, 8, 192], strides = [1, 1, 1]} : vector<4x8x768xf32> to vector<4x8x192xf32>
    %cst_11 = arith.constant dense<0.000000e+00> : vector<4x8x8xf32>
    %28 = tpu.matmul %25, %26, %cst_11 {dimension_numbers = #tpu.dot_dimension_numbers<[2], [2], [1], [1], [0, 0, 0, 1, 1, 1], [0], [0]>} : vector<4x8x192xf32>, vector<4x8x192xf32>, vector<4x8x8xf32> -> vector<4x8x8xf32>
    %cst_12 = arith.constant -1.000000e+09 : f32
    %29 = vector.broadcast %cst_12 : f32 to vector<4x8x8xf32>
    %30 = arith.select %24, %29, %28 : vector<4x8x8xi1>, vector<4x8x8xf32>
    %cst_13 = arith.constant dense<0xFF800000> : vector<4x8xf32>
    %31 = vector.multi_reduction <maximumf>, %30, %cst_13 [1] : vector<4x8x8xf32> to vector<4x8xf32>
    %32 = vector.shape_cast %31 : vector<4x8xf32> to vector<4x1x8xf32>
    %33 = vector.broadcast %32 : vector<4x1x8xf32> to vector<4x8x8xf32>
    %34 = arith.subf %30, %33 : vector<4x8x8xf32>
    %35 = math.exp %34 : vector<4x8x8xf32>
    %cst_14 = arith.constant dense<0.000000e+00> : vector<4x8xf32>
    %36 = vector.multi_reduction <add>, %35, %cst_14 [1] : vector<4x8x8xf32> to vector<4x8xf32>
    %37 = vector.shape_cast %36 : vector<4x8xf32> to vector<4x1x8xf32>
    %38 = vector.broadcast %37 : vector<4x1x8xf32> to vector<4x8x8xf32>
    %39 = arith.divf %35, %38 : vector<4x8x8xf32>
    %cst_15 = arith.constant dense<0.000000e+00> : vector<4x8x192xf32>
    %40 = tpu.matmul %39, %27, %cst_15 {dimension_numbers = #tpu.dot_dimension_numbers<[2], [1], [1], [2], [0, 0, 0, 1, 1, 2], [0], [0]>} : vector<4x8x8xf32>, vector<4x8x192xf32>, vector<4x8x192xf32> -> vector<4x8x192xf32>
    %41 = vector.extract_strided_slice %10 {offsets = [0, 0, 192], sizes = [4, 8, 192], strides = [1, 1, 1]} : vector<4x8x768xf32> to vector<4x8x192xf32>
    %42 = vector.extract_strided_slice %12 {offsets = [0, 0, 192], sizes = [4, 8, 192], strides = [1, 1, 1]} : vector<4x8x768xf32> to vector<4x8x192xf32>
    %43 = vector.extract_strided_slice %14 {offsets = [0, 0, 192], sizes = [4, 8, 192], strides = [1, 1, 1]} : vector<4x8x768xf32> to vector<4x8x192xf32>
    %cst_16 = arith.constant dense<0.000000e+00> : vector<4x8x8xf32>
    %44 = tpu.matmul %41, %42, %cst_16 {dimension_numbers = #tpu.dot_dimension_numbers<[2], [2], [1], [1], [0, 0, 0, 1, 1, 1], [0], [0]>} : vector<4x8x192xf32>, vector<4x8x192xf32>, vector<4x8x8xf32> -> vector<4x8x8xf32>
    %cst_17 = arith.constant -1.000000e+09 : f32
    %45 = vector.broadcast %cst_17 : f32 to vector<4x8x8xf32>
    %46 = arith.select %24, %45, %44 : vector<4x8x8xi1>, vector<4x8x8xf32>
    %cst_18 = arith.constant dense<0xFF800000> : vector<4x8xf32>
    %47 = vector.multi_reduction <maximumf>, %46, %cst_18 [1] : vector<4x8x8xf32> to vector<4x8xf32>
    %48 = vector.shape_cast %47 : vector<4x8xf32> to vector<4x1x8xf32>
    %49 = vector.broadcast %48 : vector<4x1x8xf32> to vector<4x8x8xf32>
    %50 = arith.subf %46, %49 : vector<4x8x8xf32>
    %51 = math.exp %50 : vector<4x8x8xf32>
    %cst_19 = arith.constant dense<0.000000e+00> : vector<4x8xf32>
    %52 = vector.multi_reduction <add>, %51, %cst_19 [1] : vector<4x8x8xf32> to vector<4x8xf32>
    %53 = vector.shape_cast %52 : vector<4x8xf32> to vector<4x1x8xf32>
    %54 = vector.broadcast %53 : vector<4x1x8xf32> to vector<4x8x8xf32>
    %55 = arith.divf %51, %54 : vector<4x8x8xf32>
    %cst_20 = arith.constant dense<0.000000e+00> : vector<4x8x192xf32>
    %56 = tpu.matmul %55, %43, %cst_20 {dimension_numbers = #tpu.dot_dimension_numbers<[2], [1], [1], [2], [0, 0, 0, 1, 1, 2], [0], [0]>} : vector<4x8x8xf32>, vector<4x8x192xf32>, vector<4x8x192xf32> -> vector<4x8x192xf32>
    %57 = vector.extract_strided_slice %10 {offsets = [0, 0, 384], sizes = [4, 8, 192], strides = [1, 1, 1]} : vector<4x8x768xf32> to vector<4x8x192xf32>
    %58 = vector.extract_strided_slice %12 {offsets = [0, 0, 384], sizes = [4, 8, 192], strides = [1, 1, 1]} : vector<4x8x768xf32> to vector<4x8x192xf32>
    %59 = vector.extract_strided_slice %14 {offsets = [0, 0, 384], sizes = [4, 8, 192], strides = [1, 1, 1]} : vector<4x8x768xf32> to vector<4x8x192xf32>
    %cst_21 = arith.constant dense<0.000000e+00> : vector<4x8x8xf32>
    %60 = tpu.matmul %57, %58, %cst_21 {dimension_numbers = #tpu.dot_dimension_numbers<[2], [2], [1], [1], [0, 0, 0, 1, 1, 1], [0], [0]>} : vector<4x8x192xf32>, vector<4x8x192xf32>, vector<4x8x8xf32> -> vector<4x8x8xf32>
    %cst_22 = arith.constant -1.000000e+09 : f32
    %61 = vector.broadcast %cst_22 : f32 to vector<4x8x8xf32>
    %62 = arith.select %24, %61, %60 : vector<4x8x8xi1>, vector<4x8x8xf32>
    %cst_23 = arith.constant dense<0xFF800000> : vector<4x8xf32>
    %63 = vector.multi_reduction <maximumf>, %62, %cst_23 [1] : vector<4x8x8xf32> to vector<4x8xf32>
    %64 = vector.shape_cast %63 : vector<4x8xf32> to vector<4x1x8xf32>
    %65 = vector.broadcast %64 : vector<4x1x8xf32> to vector<4x8x8xf32>
    %66 = arith.subf %62, %65 : vector<4x8x8xf32>
    %67 = math.exp %66 : vector<4x8x8xf32>
    %cst_24 = arith.constant dense<0.000000e+00> : vector<4x8xf32>
    %68 = vector.multi_reduction <add>, %67, %cst_24 [1] : vector<4x8x8xf32> to vector<4x8xf32>
    %69 = vector.shape_cast %68 : vector<4x8xf32> to vector<4x1x8xf32>
    %70 = vector.broadcast %69 : vector<4x1x8xf32> to vector<4x8x8xf32>
    %71 = arith.divf %67, %70 : vector<4x8x8xf32>
    %cst_25 = arith.constant dense<0.000000e+00> : vector<4x8x192xf32>
    %72 = tpu.matmul %71, %59, %cst_25 {dimension_numbers = #tpu.dot_dimension_numbers<[2], [1], [1], [2], [0, 0, 0, 1, 1, 2], [0], [0]>} : vector<4x8x8xf32>, vector<4x8x192xf32>, vector<4x8x192xf32> -> vector<4x8x192xf32>
    %73 = vector.extract_strided_slice %10 {offsets = [0, 0, 576], sizes = [4, 8, 192], strides = [1, 1, 1]} : vector<4x8x768xf32> to vector<4x8x192xf32>
    %74 = vector.extract_strided_slice %12 {offsets = [0, 0, 576], sizes = [4, 8, 192], strides = [1, 1, 1]} : vector<4x8x768xf32> to vector<4x8x192xf32>
    %75 = vector.extract_strided_slice %14 {offsets = [0, 0, 576], sizes = [4, 8, 192], strides = [1, 1, 1]} : vector<4x8x768xf32> to vector<4x8x192xf32>
    %cst_26 = arith.constant dense<0.000000e+00> : vector<4x8x8xf32>
    %76 = tpu.matmul %73, %74, %cst_26 {dimension_numbers = #tpu.dot_dimension_numbers<[2], [2], [1], [1], [0, 0, 0, 1, 1, 1], [0], [0]>} : vector<4x8x192xf32>, vector<4x8x192xf32>, vector<4x8x8xf32> -> vector<4x8x8xf32>
    %cst_27 = arith.constant -1.000000e+09 : f32
    %77 = vector.broadcast %cst_27 : f32 to vector<4x8x8xf32>
    %78 = arith.select %24, %77, %76 : vector<4x8x8xi1>, vector<4x8x8xf32>
    %cst_28 = arith.constant dense<0xFF800000> : vector<4x8xf32>
    %79 = vector.multi_reduction <maximumf>, %78, %cst_28 [1] : vector<4x8x8xf32> to vector<4x8xf32>
    %80 = vector.shape_cast %79 : vector<4x8xf32> to vector<4x1x8xf32>
    %81 = vector.broadcast %80 : vector<4x1x8xf32> to vector<4x8x8xf32>
    %82 = arith.subf %78, %81 : vector<4x8x8xf32>
    %83 = math.exp %82 : vector<4x8x8xf32>
    %cst_29 = arith.constant dense<0.000000e+00> : vector<4x8xf32>
    %84 = vector.multi_reduction <add>, %83, %cst_29 [1] : vector<4x8x8xf32> to vector<4x8xf32>
    %85 = vector.shape_cast %84 : vector<4x8xf32> to vector<4x1x8xf32>
    %86 = vector.broadcast %85 : vector<4x1x8xf32> to vector<4x8x8xf32>
    %87 = arith.divf %83, %86 : vector<4x8x8xf32>
    %cst_30 = arith.constant dense<0.000000e+00> : vector<4x8x192xf32>
    %88 = tpu.matmul %87, %75, %cst_30 {dimension_numbers = #tpu.dot_dimension_numbers<[2], [1], [1], [2], [0, 0, 0, 1, 1, 2], [0], [0]>} : vector<4x8x8xf32>, vector<4x8x192xf32>, vector<4x8x192xf32> -> vector<4x8x192xf32>
    %89 = tpu.concatenate %40, %56, %72, %88 in 2 : vector<4x8x192xf32>, vector<4x8x192xf32>, vector<4x8x192xf32>, vector<4x8x192xf32> -> vector<4x8x768xf32>
    %c0_31 = arith.constant 0 : index
    %c0_32 = arith.constant 0 : index
    %c0_33 = arith.constant 0 : index
    %90 = vector.load %arg9[%c0_31, %c0_32, %c0_33] : memref<4x8x768xf32, #tpu.memory_space<vmem>>, vector<4x8x768xf32>
    tpu.vector_store %arg9[%c0_31, %c0_32, %c0_33], %89 {strides = array<i32>} : memref<4x8x768xf32, #tpu.memory_space<vmem>>, vector<4x8x768xf32>,
    %c0_34 = arith.constant 0 : index
    %c0_35 = arith.constant 0 : index
    %c0_36 = arith.constant 0 : index
    %91 = vector.load %arg1[%c0_34, %c0_35, %c0_36] : memref<4x8x768xf32, #tpu.memory_space<vmem>>, vector<4x8x768xf32>
    %c0_37 = arith.constant 0 : index
    %c0_38 = arith.constant 0 : index
    %c0_39 = arith.constant 0 : index
    %92 = vector.load %arg2[%c0_37, %c0_38, %c0_39] : memref<4x8x768xf32, #tpu.memory_space<vmem>>, vector<4x8x768xf32>
    %93 = arith.addf %91, %92 : vector<4x8x768xf32>
    %cst_40 = arith.constant dense<0.000000e+00> : vector<4x8xf32>
    %94 = vector.multi_reduction <add>, %93, %cst_40 [2] : vector<4x8x768xf32> to vector<4x8xf32>
    %95 = vector.shape_cast %94 : vector<4x8xf32> to vector<4x8x1xf32>
    %cst_41 = arith.constant 7.680000e+02 : f32
    %96 = vector.broadcast %cst_41 : f32 to vector<4x8x1xf32>
    %97 = arith.divf %95, %96 : vector<4x8x1xf32>
    %98 = vector.broadcast %97 : vector<4x8x1xf32> to vector<4x8x768xf32>
    %99 = arith.subf %93, %98 : vector<4x8x768xf32>
    %100 = arith.mulf %99, %99 : vector<4x8x768xf32>
    %cst_42 = arith.constant dense<0.000000e+00> : vector<4x8xf32>
    %101 = vector.multi_reduction <add>, %100, %cst_42 [2] : vector<4x8x768xf32> to vector<4x8xf32>
    %102 = vector.shape_cast %101 : vector<4x8xf32> to vector<4x8x1xf32>
    %cst_43 = arith.constant 7.680000e+02 : f32
    %103 = vector.broadcast %cst_43 : f32 to vector<4x8x1xf32>
    %104 = arith.divf %102, %103 : vector<4x8x1xf32>
    %cst_44 = arith.constant 9.99999974E-6 : f32
    %105 = vector.broadcast %cst_44 : f32 to vector<4x8x1xf32>
    %106 = arith.addf %104, %105 : vector<4x8x1xf32>
    %107 = math.rsqrt %106 : vector<4x8x1xf32>
    %108 = vector.broadcast %107 : vector<4x8x1xf32> to vector<4x8x768xf32>
    %109 = arith.mulf %99, %108 : vector<4x8x768xf32>
    %c0_45 = arith.constant 0 : index
    %c0_46 = arith.constant 0 : index
    %110 = vector.load %arg6[%c0_45, %c0_46] : memref<1x768xf32, #tpu.memory_space<vmem>>, vector<1x768xf32>
    %111 = vector.shape_cast %110 : vector<1x768xf32> to vector<1x1x768xf32>
    %112 = vector.broadcast %111 : vector<1x1x768xf32> to vector<4x8x768xf32>
    %113 = arith.mulf %109, %112 : vector<4x8x768xf32>
    %c0_47 = arith.constant 0 : index
    %c0_48 = arith.constant 0 : index
    %114 = vector.load %arg7[%c0_47, %c0_48] : memref<1x768xf32, #tpu.memory_space<vmem>>, vector<1x768xf32>
    %115 = vector.shape_cast %114 : vector<1x768xf32> to vector<1x1x768xf32>
    %116 = vector.broadcast %115 : vector<1x1x768xf32> to vector<4x8x768xf32>
    %117 = arith.addf %113, %116 : vector<4x8x768xf32>
    %c0_49 = arith.constant 0 : index
    %c0_50 = arith.constant 0 : index
    %c0_51 = arith.constant 0 : index
    %118 = vector.load %arg8[%c0_49, %c0_50, %c0_51] : memref<4x8x768xf32, #tpu.memory_space<vmem>>, vector<4x8x768xf32>
    tpu.vector_store %arg8[%c0_49, %c0_50, %c0_51], %117 {strides = array<i32>} : memref<4x8x768xf32, #tpu.memory_space<vmem>>, vector<4x8x768xf32>,
    return
  }
  func.func @transform_0(%arg0: i32) -> (i32, i32, i32) {
    %c0_i32 = arith.constant 0 : i32
    %c0_i32_0 = arith.constant 0 : i32
    %c0_i32_1 = arith.constant 0 : i32
    return %arg0, %c0_i32, %c0_i32_0 : i32, i32, i32
  }
  func.func @transform_1(%arg0: i32) -> (i32, i32, i32) {
    %c0_i32 = arith.constant 0 : i32
    %c0_i32_0 = arith.constant 0 : i32
    %c0_i32_1 = arith.constant 0 : i32
    return %arg0, %c0_i32, %c0_i32_0 : i32, i32, i32
  }
  func.func @transform_2(%arg0: i32) -> (i32, i32, i32) {
    %c0_i32 = arith.constant 0 : i32
    %c0_i32_0 = arith.constant 0 : i32
    %c0_i32_1 = arith.constant 0 : i32
    return %arg0, %c0_i32, %c0_i32_0 : i32, i32, i32
  }
  func.func @transform_3(%arg0: i32) -> (i32, i32) {
    %c0_i32 = arith.constant 0 : i32
    %c0_i32_0 = arith.constant 0 : i32
    %c0_i32_1 = arith.constant 0 : i32
    return %c0_i32, %c0_i32_0 : i32, i32
  }
  func.func @transform_4(%arg0: i32) -> (i32, i32) {
    %c0_i32 = arith.constant 0 : i32
    %c0_i32_0 = arith.constant 0 : i32
    %c0_i32_1 = arith.constant 0 : i32
    return %c0_i32, %c0_i32_0 : i32, i32
  }
  func.func @transform_5(%arg0: i32) -> (i32, i32) {
    %c0_i32 = arith.constant 0 : i32
    %c0_i32_0 = arith.constant 0 : i32
    %c0_i32_1 = arith.constant 0 : i32
    return %c0_i32, %c0_i32_0 : i32, i32
  }
  func.func @transform_6(%arg0: i32) -> (i32, i32) {
    %c0_i32 = arith.constant 0 : i32
    %c0_i32_0 = arith.constant 0 : i32
    %c0_i32_1 = arith.constant 0 : i32
    return %c0_i32, %c0_i32_0 : i32, i32
  }
  func.func @transform_7(%arg0: i32) -> (i32, i32, i32) {
    %c0_i32 = arith.constant 0 : i32
    %c0_i32_0 = arith.constant 0 : i32
    %c0_i32_1 = arith.constant 0 : i32
    return %arg0, %c0_i32, %c0_i32_0 : i32, i32, i32
  }
  func.func @transform_8(%arg0: i32) -> (i32, i32, i32) {
    %c0_i32 = arith.constant 0 : i32
    %c0_i32_0 = arith.constant 0 : i32
    %c0_i32_1 = arith.constant 0 : i32
    return %arg0, %c0_i32, %c0_i32_0 : i32, i32, i32
  }
}

</mosaic_0001>

<llo_original>
// kernel: tpu_custom_call.1
$region0: #{tpu_custom_call.1}
  #allocation0 [shape = 'u32[]', space=smem, size = 0x4, offset = 0x4, fixed_abs, tag = 'smem constant byte address 0x4 - core index']
  #allocation1 [shape = 'u32[144,128]{1,0:T(1,128)}', space=vmem, size = 0x12000, scoped, tag = 'internal scratch']
  %s0 = inlined_call_operand.hbm [shape: f32[8,8,768], index: 0, kind: input, shape index: {}]
  %s1 = inlined_call_operand.hbm [shape: f32[8,8,768], index: 1, kind: input, shape index: {}]
  %s2 = inlined_call_operand.vmem [shape: f32[8,8,1], index: 2, kind: input, shape index: {}]
  %s3 = inlined_call_operand.hbm [shape: f32[768,2304], index: 3, kind: input, shape index: {}]
  %s4 = inlined_call_operand.hbm [shape: f32[1,2304], index: 4, kind: input, shape index: {}]
  %s5 = inlined_call_operand.hbm [shape: f32[1,768], index: 5, kind: input, shape index: {}]
  %s6 = inlined_call_operand.hbm [shape: f32[1,768], index: 6, kind: input, shape index: {}]
  %s7 = inlined_call_operand.hbm [shape: f32[8,8,768], index: 7, kind: output, shape index: {0}]
  %s8 = inlined_call_operand.hbm [shape: f32[8,8,768], index: 8, kind: output, shape index: {1}]
  %9 = xla_tuple %s7, %s8
  %s10 = sld [smem:[#allocation0]]
  $region93: #{tpu_custom_call.1} parent=0
    _
  %s12 = ssub.s32 1, %s10
  %s13 = scalar_select 0, %s12, %s10
  $region1: #{tpu_custom_call.1} parent=0
    #allocation2 [shape = 'u8[196608]{0}', space=vmem, size = 0x30000, scoped, tag = 'input window, operand 0']
    #allocation3 [shape = 's32[2]{0}', space=sflag, size = 0x8, scoped, tag = 'scoped memory for tpu_custom_call.1']
    #allocation4 [shape = 's32[2]{0}', space=sflag, size = 0x8, scoped, tag = 'scoped memory for tpu_custom_call.1']
    #allocation5 [shape = 'u8[196608]{0}', space=vmem, size = 0x30000, scoped, tag = 'input window, operand 1']
    #allocation6 [shape = 's32[2]{0}', space=sflag, size = 0x8, scoped, tag = 'scoped memory for tpu_custom_call.1']
    #allocation7 [shape = 'u8[7077888]{0}', space=vmem, size = 0x6c0000, scoped, tag = 'input window, operand 3, single buffered']
    #allocation8 [shape = 'u8[9216]{0}', space=vmem, size = 0x2400, scoped, tag = 'input window, operand 4, single buffered']
    #allocation9 [shape = 's32[1]{0}', space=sflag, size = 0x4, scoped, tag = 'scoped memory for tpu_custom_call.1']
    #allocation10 [shape = 'u8[3072]{0}', space=vmem, size = 0xc00, scoped, tag = 'input window, operand 5, single buffered']
    #allocation11 [shape = 'u8[3072]{0}', space=vmem, size = 0xc00, scoped, tag = 'input window, operand 6, single buffered']
    #allocation12 [shape = 's32[1]{0}', space=sflag, size = 0x4, scoped, tag = 'scoped memory for tpu_custom_call.1']
    #allocation13 [shape = 'u8[196608]{0}', space=vmem, size = 0x30000, scoped, tag = 'output window, operand 0']
    #allocation14 [shape = 'u8[196608]{0}', space=vmem, size = 0x30000, scoped, tag = 'output window, operand 1']
    #allocation15 [shape = 's32[2]{0}', space=sflag, size = 0x8, scoped, tag = 'scoped memory for tpu_custom_call.1']
    %14 = vsyncpa [#allocation3], 0
    %s15 = scalar_lea.sflag [#allocation3], 1
    %16 = vsyncpa %s15, 0
    %17 = vsyncpa [#allocation6], 0
    %s18 = scalar_lea.sflag [#allocation6], 1
    %19 = vsyncpa %s18, 0
    %20 = vsyncpa [#allocation9], 0
    %21 = vsyncpa [#allocation12], 0
    %22 = vsyncpa [#allocation4], 0
    %s23 = scalar_lea.sflag [#allocation4], 1
    %24 = vsyncpa %s23, 0
    %25 = vsyncpa [#allocation15], 0
    %s26 = scalar_lea.sflag [#allocation15], 1
    %27 = vsyncpa %s26, 0
    loop: start=0, step=1, limit=4
    $region2: #{tpu_custom_call.1} parent=1 // loop_pre_header
      _
    $region3: #{tpu_custom_call.1} parent=1 // loop_header
      %s29 = sphi 0, %s33
      %p30 = scmp.ge.s32.totalorder %s29, 4
      %s39 = sphi 0, %s41
      %s42 = sphi 0, %s39
      %s43 = sphi 0, %s42
      %s59 = sphi 0, %s43
      %s65 = sphi 0, %s67
      %s68 = sphi 0, %s65
      %s69 = sphi 0, %s68
      %s85 = sphi 0, %s69
      %s91 = sphi 0, %s93
      %s94 = sphi 0, %s91
      %s95 = sphi 0, %s94
      %s111 = sphi 0, %s95
      %s115 = sphi 0, %s115
      %s117 = sphi 0, %s115
      %s118 = sphi 0, %s117
      %s132 = sphi 0, %s118
      %s136 = sphi 0, %s136
      %s138 = sphi 0, %s136
      %s139 = sphi 0, %s138
      %s153 = sphi 0, %s139
      %s157 = sphi 0, %s157
      %s159 = sphi 0, %s157
      %s160 = sphi 0, %s159
      %s174 = sphi 0, %s160
      %s178 = sphi 0, %s178
      %s180 = sphi 0, %s178
      %s181 = sphi 0, %s180
      %s195 = sphi 0, %s181
      %s201 = sphi 0, %s203
      %s204 = sphi 0, %s201
      %s205 = sphi 0, %s204
      %s221 = sphi 0, %s205
      %s227 = sphi 0, %s229
      %s230 = sphi 0, %s227
      %s231 = sphi 0, %s230
      %s247 = sphi 0, %s231
    $region4: #{tpu_custom_call.1} parent=1 // loop_header_branch
      %32 = sbr.rel (%p30) target = $region8
    $region5: #{tpu_custom_call.1} parent=1 // loop_body
      %s34 = ssub.s32 %s29, 1
      %s35 = ssub.s32 %s29, 2
      %s36 = sadd.s32 %s29, 1
      %s37 = ssub.s32 %s29, %s36
      %p38 = scmp.eq.s32.totalorder %s37, 0
      %s40 = sadd.s32 %s39, 1
      %s41 = scalar_select %p38, %s39, %s40
      %p44 = pneg %p38
      %p45 = scmp.eq.s32.totalorder %s29, 1
      %p46 = por %p44, %p45
      %p47 = scmp.ne.s32.totalorder %s39, %s42
      %p48 = scmp.eq.s32.totalorder %s29, 0
      %p49 = por %p47, %p48
      %p50 = scmp.ne.s32.totalorder %s39, %s42
      %p51 = scmp.eq.s32.totalorder %s34, 1
      %p52 = por %p50, %p51
      %p53 = scmp.ne.s32.totalorder %s42, %s43
      %p54 = scmp.eq.s32.totalorder %s34, 0
      %p55 = por %p53, %p54
      %p56 = scmp.ne.s32.totalorder %s42, %s43
      %p57 = scmp.eq.s32.totalorder %s35, 1
      %p58 = por %p56, %p57
      %p60 = scmp.ne.s32.totalorder %s43, %s59
      %p61 = scmp.eq.s32.totalorder %s35, 0
      %p62 = por %p60, %p61
      %s63 = ssub.s32 %s29, %s36
      %p64 = scmp.eq.s32.totalorder %s63, 0
      %s66 = sadd.s32 %s65, 1
      %s67 = scalar_select %p64, %s65, %s66
      %p70 = pneg %p64
      %p71 = scmp.eq.s32.totalorder %s29, 1
      %p72 = por %p70, %p71
      %p73 = scmp.ne.s32.totalorder %s65, %s68
      %p74 = scmp.eq.s32.totalorder %s29, 0
      %p75 = por %p73, %p74
      %p76 = scmp.ne.s32.totalorder %s65, %s68
      %p77 = scmp.eq.s32.totalorder %s34, 1
      %p78 = por %p76, %p77
      %p79 = scmp.ne.s32.totalorder %s68, %s69
      %p80 = scmp.eq.s32.totalorder %s34, 0
      %p81 = por %p79, %p80
      %p82 = scmp.ne.s32.totalorder %s68, %s69
      %p83 = scmp.eq.s32.totalorder %s35, 1
      %p84 = por %p82, %p83
      %p86 = scmp.ne.s32.totalorder %s69, %s85
      %p87 = scmp.eq.s32.totalorder %s35, 0
      %p88 = por %p86, %p87
      %s89 = ssub.s32 %s29, %s36
      %p90 = scmp.eq.s32.totalorder %s89, 0
      %s92 = sadd.s32 %s91, 1
      %s93 = scalar_select %p90, %s91, %s92
      %p96 = pneg %p90
      %p97 = scmp.eq.s32.totalorder %s29, 1
      %p98 = por %p96, %p97
      %p99 = scmp.ne.s32.totalorder %s91, %s94
      %p100 = scmp.eq.s32.totalorder %s29, 0
      %p101 = por %p99, %p100
      %p102 = scmp.ne.s32.totalorder %s91, %s94
      %p103 = scmp.eq.s32.totalorder %s34, 1
      %p104 = por %p102, %p103
      %p105 = scmp.ne.s32.totalorder %s94, %s95
      %p106 = scmp.eq.s32.totalorder %s34, 0
      %p107 = por %p105, %p106
      %p108 = scmp.ne.s32.totalorder %s94, %s95
      %p109 = scmp.eq.s32.totalorder %s35, 1
      %p110 = por %p108, %p109
      %p112 = scmp.ne.s32.totalorder %s95, %s111
      %p113 = scmp.eq.s32.totalorder %s35, 0
      %p114 = por %p112, %p113
      %s116 = sadd.s32 %s115, 1
      %p119 = scmp.eq.s32.totalorder %s29, 1
      %p120 = scmp.ne.s32.totalorder %s115, %s117
      %p121 = scmp.eq.s32.totalorder %s29, 0
      %p122 = por %p120, %p121
      %p123 = scmp.ne.s32.totalorder %s115, %s117
      %p124 = scmp.eq.s32.totalorder %s34, 1
      %p125 = por %p123, %p124
      %p126 = scmp.ne.s32.totalorder %s117, %s118
      %p127 = scmp.eq.s32.totalorder %s34, 0
      %p128 = por %p126, %p127
      %p129 = scmp.ne.s32.totalorder %s117, %s118
      %p130 = scmp.eq.s32.totalorder %s35, 1
      %p131 = por %p129, %p130
      %p133 = scmp.ne.s32.totalorder %s118, %s132
      %p134 = scmp.eq.s32.totalorder %s35, 0
      %p135 = por %p133, %p134
      %s137 = sadd.s32 %s136, 1
      %p140 = scmp.eq.s32.totalorder %s29, 1
      %p141 = scmp.ne.s32.totalorder %s136, %s138
      %p142 = scmp.eq.s32.totalorder %s29, 0
      %p143 = por %p141, %p142
      %p144 = scmp.ne.s32.totalorder %s136, %s138
      %p145 = scmp.eq.s32.totalorder %s34, 1
      %p146 = por %p144, %p145
      %p147 = scmp.ne.s32.totalorder %s138, %s139
      %p148 = scmp.eq.s32.totalorder %s34, 0
      %p149 = por %p147, %p148
      %p150 = scmp.ne.s32.totalorder %s138, %s139
      %p151 = scmp.eq.s32.totalorder %s35, 1
      %p152 = por %p150, %p151
      %p154 = scmp.ne.s32.totalorder %s139, %s153
      %p155 = scmp.eq.s32.totalorder %s35, 0
      %p156 = por %p154, %p155
      %s158 = sadd.s32 %s157, 1
      %p161 = scmp.eq.s32.totalorder %s29, 1
      %p162 = scmp.ne.s32.totalorder %s157, %s159
      %p163 = scmp.eq.s32.totalorder %s29, 0
      %p164 = por %p162, %p163
      %p165 = scmp.ne.s32.totalorder %s157, %s159
      %p166 = scmp.eq.s32.totalorder %s34, 1
      %p167 = por %p165, %p166
      %p168 = scmp.ne.s32.totalorder %s159, %s160
      %p169 = scmp.eq.s32.totalorder %s34, 0
      %p170 = por %p168, %p169
      %p171 = scmp.ne.s32.totalorder %s159, %s160
      %p172 = scmp.eq.s32.totalorder %s35, 1
      %p173 = por %p171, %p172
      %p175 = scmp.ne.s32.totalorder %s160, %s174
      %p176 = scmp.eq.s32.totalorder %s35, 0
      %p177 = por %p175, %p176
      %s179 = sadd.s32 %s178, 1
      %p182 = scmp.eq.s32.totalorder %s29, 1
      %p183 = scmp.ne.s32.totalorder %s178, %s180
      %p184 = scmp.eq.s32.totalorder %s29, 0
      %p185 = por %p183, %p184
      %p186 = scmp.ne.s32.totalorder %s178, %s180
      %p187 = scmp.eq.s32.totalorder %s34, 1
      %p188 = por %p186, %p187
      %p189 = scmp.ne.s32.totalorder %s180, %s181
      %p190 = scmp.eq.s32.totalorder %s34, 0
      %p191 = por %p189, %p190
      %p192 = scmp.ne.s32.totalorder %s180, %s181
      %p193 = scmp.eq.s32.totalorder %s35, 1
      %p194 = por %p192, %p193
      %p196 = scmp.ne.s32.totalorder %s181, %s195
      %p197 = scmp.eq.s32.totalorder %s35, 0
      %p198 = por %p196, %p197
      %s199 = ssub.s32 %s29, %s36
      %p200 = scmp.eq.s32.totalorder %s199, 0
      %s202 = sadd.s32 %s201, 1
      %s203 = scalar_select %p200, %s201, %s202
      %p206 = pneg %p200
      %p207 = scmp.eq.s32.totalorder %s29, 1
      %p208 = por %p206, %p207
      %p209 = scmp.ne.s32.totalorder %s201, %s204
      %p210 = scmp.eq.s32.totalorder %s29, 0
      %p211 = por %p209, %p210
      %p212 = scmp.ne.s32.totalorder %s201, %s204
      %p213 = scmp.eq.s32.totalorder %s34, 1
      %p214 = por %p212, %p213
      %p215 = scmp.ne.s32.totalorder %s204, %s205
      %p216 = scmp.eq.s32.totalorder %s34, 0
      %p217 = por %p215, %p216
      %p218 = scmp.ne.s32.totalorder %s204, %s205
      %p219 = scmp.eq.s32.totalorder %s35, 1
      %p220 = por %p218, %p219
      %p222 = scmp.ne.s32.totalorder %s205, %s221
      %p223 = scmp.eq.s32.totalorder %s35, 0
      %p224 = por %p222, %p223
      %s225 = ssub.s32 %s29, %s36
      %p226 = scmp.eq.s32.totalorder %s225, 0
      %s228 = sadd.s32 %s227, 1
      %s229 = scalar_select %p226, %s227, %s228
      %p232 = pneg %p226
      %p233 = scmp.eq.s32.totalorder %s29, 1
      %p234 = por %p232, %p233
      %p235 = scmp.ne.s32.totalorder %s227, %s230
      %p236 = scmp.eq.s32.totalorder %s29, 0
      %p237 = por %p235, %p236
      %p238 = scmp.ne.s32.totalorder %s227, %s230
      %p239 = scmp.eq.s32.totalorder %s34, 1
      %p240 = por %p238, %p239
      %p241 = scmp.ne.s32.totalorder %s230, %s231
      %p242 = scmp.eq.s32.totalorder %s34, 0
      %p243 = por %p241, %p242
      %p244 = scmp.ne.s32.totalorder %s230, %s231
      %p245 = scmp.eq.s32.totalorder %s35, 1
      %p246 = por %p244, %p245
      %p248 = scmp.ne.s32.totalorder %s231, %s247
      %p249 = scmp.eq.s32.totalorder %s35, 0
      %p250 = por %p248, %p249
      %p251 = scmp.le.s32.totalorder 1, %s29
      %p252 = scmp.lt.s32.totalorder %s29, 3
      %p253 = pnand %p251, %p252
      %p254 = pneg %p253
      // Predicated region
      $region9: #{tpu_custom_call.1} parent=5 // pred_check
        _
      $region10: #{tpu_custom_call.1} parent=5 // pred_check_branch
        %256 = sbr.rel (%p253) target = $region12
      $region11: #{tpu_custom_call.1} parent=5 // pred_region
        %s257 = ssub.s32 %s29, 1
        // Predicated region
        $region13: #{tpu_custom_call.1} parent=11 // pred_check
          %p258 = pneg %p128
        $region14: #{tpu_custom_call.1} parent=11 // pred_check_branch
          %260 = sbr.rel (%p258) target = $region16
        $region15: #{tpu_custom_call.1} parent=11 // pred_region
          %s262 = ssub.s32 221184, 221184
          %263 = vsyncadd [#allocation6], %s262
          %s264 = sshll.u32 [#allocation7], 4
          %s265 = int_to_ptr.vmem [resolvable:$true] %s264
          %270 = dma.hbm_to_vmem [thread:$0]  %s3, 221184, %s265, [#allocation6], 2304, 2304, 144
        $region16: #{tpu_custom_call.1} parent=11 // pred_fallthru
          _
        // Predicated region
        $region17: #{tpu_custom_call.1} parent=11 // pred_check
          %p271 = pneg %p149
        $region18: #{tpu_custom_call.1} parent=11 // pred_check_branch
          %273 = sbr.rel (%p271) target = $region20
        $region19: #{tpu_custom_call.1} parent=11 // pred_region
          %s275 = ssub.s32 288, 288
          %276 = vsyncadd [#allocation9], %s275
          %s278 = sshll.u32 [#allocation8], 4
          %s279 = int_to_ptr.vmem [resolvable:$true] %s278
          %281 = dma.hbm_to_vmem [thread:$0]  %s4, 288, %s279, [#allocation9]
        $region20: #{tpu_custom_call.1} parent=11 // pred_fallthru
          _
        // Predicated region
        $region21: #{tpu_custom_call.1} parent=11 // pred_check
          %p282 = pneg %p170
        $region22: #{tpu_custom_call.1} parent=11 // pred_check_branch
          %284 = sbr.rel (%p282) target = $region24
        $region23: #{tpu_custom_call.1} parent=11 // pred_region
          %s286 = ssub.s32 96, 96
          %287 = vsyncadd [#allocation9], %s286
          %s289 = sshll.u32 [#allocation10], 4
          %s290 = int_to_ptr.vmem [resolvable:$true] %s289
          %292 = dma.hbm_to_vmem [thread:$0]  %s5, 96, %s290, [#allocation9]
        $region24: #{tpu_custom_call.1} parent=11 // pred_fallthru
          _
        // Predicated region
        $region25: #{tpu_custom_call.1} parent=11 // pred_check
          %p293 = pneg %p191
        $region26: #{tpu_custom_call.1} parent=11 // pred_check_branch
          %295 = sbr.rel (%p293) target = $region28
        $region27: #{tpu_custom_call.1} parent=11 // pred_region
          %s297 = ssub.s32 96, 96
          %298 = vsyncadd [#allocation12], %s297
          %s300 = sshll.u32 [#allocation11], 4
          %s301 = int_to_ptr.vmem [resolvable:$true] %s300
          %303 = dma.hbm_to_vmem [thread:$0]  %s6, 96, %s301, [#allocation12]
        $region28: #{tpu_custom_call.1} parent=11 // pred_fallthru
          _
      $region12: #{tpu_custom_call.1} parent=5 // pred_fallthru
        _
      %p304 = scmp.lt.s32.totalorder %s29, 2
      // Predicated region
      $region29: #{tpu_custom_call.1} parent=5 // pred_check
        %p305 = pneg %p304
      $region30: #{tpu_custom_call.1} parent=5 // pred_check_branch
        %307 = sbr.rel (%p305) target = $region32
      $region31: #{tpu_custom_call.1} parent=5 // pred_region
        // Predicated region
        $region33: #{tpu_custom_call.1} parent=31 // pred_check
          %p308 = pneg %p49
        $region34: #{tpu_custom_call.1} parent=31 // pred_check_branch
          %310 = sbr.rel (%p308) target = $region36
        $region35: #{tpu_custom_call.1} parent=31 // pred_region
          %s311 = sand.u32 %s39, 1
          %s312 = scalar_lea.sflag [#allocation3], %s311
          %s313 = sand.u32 %s39, 1
          %s314 = smul.addr %s313, 192
          %s315 = scalar_lea.vmem [#allocation2], %s314
          %s316 = smul.u32 4, %s29
          %s318 = ssub.s32 3072, 3072
          %319 = vsyncadd %s312, %s318
          %s320 = smul.addr %s316, 6
          %s321 = smul.addr %s320, 128
          %s322 = scalar_lea.hbm %s0, %s321
          %s323 = sshll.u32 %s315, 4
          %s324 = int_to_ptr.vmem [resolvable:$true] %s323
          %329 = dma.hbm_to_vmem [thread:$0]  %s322, 3072, %s324, %s312, 768, 768, 48
        $region36: #{tpu_custom_call.1} parent=31 // pred_fallthru
          _
        // Predicated region
        $region37: #{tpu_custom_call.1} parent=31 // pred_check
          %p330 = pneg %p75
        $region38: #{tpu_custom_call.1} parent=31 // pred_check_branch
          %332 = sbr.rel (%p330) target = $region40
        $region39: #{tpu_custom_call.1} parent=31 // pred_region
          %s333 = sand.u32 %s29, 1
          %s334 = scalar_lea.sflag [#allocation6], %s333
          %s335 = sand.u32 %s65, 1
          %s336 = smul.addr %s335, 192
          %s337 = scalar_lea.vmem [#allocation5], %s336
          %s338 = smul.u32 4, %s29
          %s340 = ssub.s32 3072, 3072
          %341 = vsyncadd %s334, %s340
          %s342 = smul.addr %s338, 6
          %s343 = smul.addr %s342, 128
          %s344 = scalar_lea.hbm %s1, %s343
          %s345 = sshll.u32 %s337, 4
          %s346 = int_to_ptr.vmem [resolvable:$true] %s345
          %351 = dma.hbm_to_vmem [thread:$0]  %s344, 3072, %s346, %s334, 768, 768, 48
        $region40: #{tpu_custom_call.1} parent=31 // pred_fallthru
          _
        // Predicated region
        $region41: #{tpu_custom_call.1} parent=31 // pred_check
          %p352 = pneg %p101
        $region42: #{tpu_custom_call.1} parent=31 // pred_check_branch
          %354 = sbr.rel (%p352) target = $region44
        $region43: #{tpu_custom_call.1} parent=31 // pred_region
          %s355 = smul.u32 4, %s29
          %p356 = scmp.lt.s32.totalorder %s355, 7
          %s357 = scalar_select %p356, %s355, 7
          %s358 = smul.addr %s357, 8
          %s359 = scalar_lea.vmem %s2, %s358
          %s360 = smul.u32 4, %s29
        $region44: #{tpu_custom_call.1} parent=31 // pred_fallthru
          _
      $region32: #{tpu_custom_call.1} parent=5 // pred_fallthru
        _
      %p361 = scmp.le.s32.totalorder 1, %s29
      %p362 = scmp.lt.s32.totalorder %s29, 3
      %p363 = pnand %p361, %p362
      %p364 = pneg %p363
      // Predicated region
      $region45: #{tpu_custom_call.1} parent=5 // pred_check
        _
      $region46: #{tpu_custom_call.1} parent=5 // pred_check_branch
        %366 = sbr.rel (%p363) target = $region48
      $region47: #{tpu_custom_call.1} parent=5 // pred_region
        %s367 = ssub.s32 %s29, 1
        %s368 = sand.u32 %s42, 1
        %s369 = scalar_lea.sflag [#allocation3], %s368
        %s370 = sand.u32 %s42, 1
        %s371 = smul.addr %s370, 192
        %s372 = scalar_lea.vmem [#allocation2], %s371
        // Predicated region
        $region49: #{tpu_custom_call.1} parent=47 // pred_check
          %p373 = pneg %p55
        $region50: #{tpu_custom_call.1} parent=47 // pred_check_branch
          %375 = sbr.rel (%p373) target = $region52
        $region51: #{tpu_custom_call.1} parent=47 // pred_region
          %376 = dma.done %s369, 3072
        $region52: #{tpu_custom_call.1} parent=47 // pred_fallthru
          _
        %s377 = sand.u32 %s34, 1
        %s378 = scalar_lea.sflag [#allocation6], %s377
        %s379 = sand.u32 %s68, 1
        %s380 = smul.addr %s379, 192
        %s381 = scalar_lea.vmem [#allocation5], %s380
        // Predicated region
        $region53: #{tpu_custom_call.1} parent=47 // pred_check
          %p382 = pneg %p81
        $region54: #{tpu_custom_call.1} parent=47 // pred_check_branch
          %384 = sbr.rel (%p382) target = $region56
        $region55: #{tpu_custom_call.1} parent=47 // pred_region
          %385 = dma.done %s378, 3072
        $region56: #{tpu_custom_call.1} parent=47 // pred_fallthru
          _
        // Predicated region
        $region57: #{tpu_custom_call.1} parent=47 // pred_check
          %p386 = pneg %p128
        $region58: #{tpu_custom_call.1} parent=47 // pred_check_branch
          %388 = sbr.rel (%p386) target = $region60
        $region59: #{tpu_custom_call.1} parent=47 // pred_region
          %389 = dma.done [#allocation6], 221184
        $region60: #{tpu_custom_call.1} parent=47 // pred_fallthru
          _
        // Predicated region
        $region61: #{tpu_custom_call.1} parent=47 // pred_check
          %p390 = pneg %p149
        $region62: #{tpu_custom_call.1} parent=47 // pred_check_branch
          %392 = sbr.rel (%p390) target = $region64
        $region63: #{tpu_custom_call.1} parent=47 // pred_region
          %393 = dma.done [#allocation9], 288
        $region64: #{tpu_custom_call.1} parent=47 // pred_fallthru
          _
        // Predicated region
        $region65: #{tpu_custom_call.1} parent=47 // pred_check
          %p394 = pneg %p170
        $region66: #{tpu_custom_call.1} parent=47 // pred_check_branch
          %396 = sbr.rel (%p394) target = $region68
        $region67: #{tpu_custom_call.1} parent=47 // pred_region
          %397 = dma.done [#allocation9], 96
        $region68: #{tpu_custom_call.1} parent=47 // pred_fallthru
          _
        // Predicated region
        $region69: #{tpu_custom_call.1} parent=47 // pred_check
          %p398 = pneg %p191
        $region70: #{tpu_custom_call.1} parent=47 // pred_check_branch
          %400 = sbr.rel (%p398) target = $region72
        $region71: #{tpu_custom_call.1} parent=47 // pred_region
          %401 = dma.done [#allocation12], 96
        $region72: #{tpu_custom_call.1} parent=47 // pred_fallthru
          _
        %s402 = sand.u32 %s42, 1
        %s403 = scalar_lea.sflag [#allocation3], %s402
        %s404 = sand.u32 %s42, 1
        %s405 = smul.addr %s404, 192
        %s406 = scalar_lea.vmem [#allocation2], %s405
        %p407 = pneg %p55
        %p408 = pneg %p52
        %s409 = sand.u32 %s34, 1
        %s410 = scalar_lea.sflag [#allocation6], %s409
        %s411 = sand.u32 %s68, 1
        %s412 = smul.addr %s411, 192
        %s413 = scalar_lea.vmem [#allocation5], %s412
        %p414 = pneg %p81
        %p415 = pneg %p78
        %s416 = smul.u32 4, %s34
        %p417 = scmp.lt.s32.totalorder %s416, 7
        %s418 = scalar_select %p417, %s416, 7
        %s419 = smul.addr %s418, 8
        %s420 = scalar_lea.vmem %s2, %s419
        %p421 = pneg %p107
        %p422 = pneg %p104
        %p423 = pneg %p128
        %p424 = pneg %p125
        %p425 = pneg %p149
        %p426 = pneg %p146
        %p427 = pneg %p170
        %p428 = pneg %p167
        %p429 = pneg %p191
        %p430 = pneg %p188
        %p431 = pneg %p217
        %p432 = pneg %p214
        %s433 = sand.u32 %s204, 1
        %s434 = scalar_lea.sflag [#allocation4], %s433
        %s435 = sand.u32 %s204, 1
        %s436 = smul.addr %s435, 192
        %s437 = scalar_lea.vmem [#allocation13], %s436
        %p438 = pneg %p243
        %p439 = pneg %p240
        %s440 = sand.u32 %s230, 1
        %s441 = scalar_lea.sflag [#allocation15], %s440
        %s442 = sand.u32 %s230, 1
        %s443 = smul.addr %s442, 192
        %s444 = scalar_lea.vmem [#allocation14], %s443
        %s445 = smul.u32 4, %s34
        %s446 = smul.u32 4, %s34
        %s447 = smul.u32 4, %s34
        %p448 = scmp.lt.s32.totalorder %s447, 7
        %s449 = scalar_select %p448, %s447, 7
        %s450 = smul.addr %s449, 8
        %s451 = scalar_lea.vmem %s2, %s450
        %s452 = smul.u32 4, %s34
        %s453 = smul.u32 4, %s34
        %s454 = smul.u32 4, %s34
        %v455 = vld [vmem:[%s372] sm:$0xff]
        %v456 = vld [vmem:[%s372 + $0x8] sm:$0xff]
        %v457 = vld [vmem:[%s372 + $0x10] sm:$0xff]
        %v458 = vld [vmem:[%s372 + $0x18] sm:$0xff]
        %v459 = vld [vmem:[%s372 + $0x20] sm:$0xff]
        %v460 = vld [vmem:[%s372 + $0x28] sm:$0xff]
        %v461 = vld [vmem:[%s372 + $0x30] sm:$0xff]
        %v462 = vld [vmem:[%s372 + $0x38] sm:$0xff]
        %v463 = vld [vmem:[%s372 + $0x40] sm:$0xff]
        %v464 = vld [vmem:[%s372 + $0x48] sm:$0xff]
        %v465 = vld [vmem:[%s372 + $0x50] sm:$0xff]
        %v466 = vld [vmem:[%s372 + $0x58] sm:$0xff]
        %v467 = vld [vmem:[%s372 + $0x60] sm:$0xff]
        %v468 = vld [vmem:[%s372 + $0x68] sm:$0xff]
        %v469 = vld [vmem:[%s372 + $0x70] sm:$0xff]
        %v470 = vld [vmem:[%s372 + $0x78] sm:$0xff]
        %v471 = vld [vmem:[%s372 + $0x80] sm:$0xff]
        %v472 = vld [vmem:[%s372 + $0x88] sm:$0xff]
        %v473 = vld [vmem:[%s372 + $0x90] sm:$0xff]
        %v474 = vld [vmem:[%s372 + $0x98] sm:$0xff]
        %v475 = vld [vmem:[%s372 + $0xa0] sm:$0xff]
        %v476 = vld [vmem:[%s372 + $0xa8] sm:$0xff]
        %v477 = vld [vmem:[%s372 + $0xb0] sm:$0xff]
        %v478 = vld [vmem:[%s372 + $0xb8] sm:$0xff]
        %v479 = vld [vmem:[#allocation7] sm:$0xff]
        %v480 = vld [vmem:[#allocation7 + $0x8] sm:$0xff]
        %v481 = vld [vmem:[#allocation7 + $0x10] sm:$0xff]
        %v482 = vld [vmem:[#allocation7 + $0x18] sm:$0xff]
        %v483 = vld [vmem:[#allocation7 + $0x20] sm:$0xff]
        %v484 = vld [vmem:[#allocation7 + $0x28] sm:$0xff]
        %v485 = vld [vmem:[#allocation7 + $0x30] sm:$0xff]
        %v486 = vld [vmem:[#allocation7 + $0x38] sm:$0xff]
        %v487 = vld [vmem:[#allocation7 + $0x40] sm:$0xff]
        %v488 = vld [vmem:[#allocation7 + $0x48] sm:$0xff]
        %v489 = vld [vmem:[#allocation7 + $0x50] sm:$0xff]
        %v490 = vld [vmem:[#allocation7 + $0x58] sm:$0xff]
        %v491 = vld [vmem:[#allocation7 + $0x60] sm:$0xff]
        %v492 = vld [vmem:[#allocation7 + $0x68] sm:$0xff]
        %v493 = vld [vmem:[#allocation7 + $0x70] sm:$0xff]
        %v494 = vld [vmem:[#allocation7 + $0x78] sm:$0xff]
        %v495 = vld [vmem:[#allocation7 + $0x80] sm:$0xff]
        %v496 = vld [vmem:[#allocation7 + $0x88] sm:$0xff]
        %v497 = vld [vmem:[#allocation7 + $0x90] sm:$0xff]
        %v498 = vld [vmem:[#allocation7 + $0x98] sm:$0xff]
        %v499 = vld [vmem:[#allocation7 + $0xa0] sm:$0xff]
        %v500 = vld [vmem:[#allocation7 + $0xa8] sm:$0xff]
        %v501 = vld [vmem:[#allocation7 + $0xb0] sm:$0xff]
        %v502 = vld [vmem:[#allocation7 + $0xb8] sm:$0xff]
        %v503 = vld [vmem:[#allocation7 + $0xc0] sm:$0xff]
        %v504 = vld [vmem:[#allocation7 + $0xc8] sm:$0xff]
        %v505 = vld [vmem:[#allocation7 + $0xd0] sm:$0xff]
        %v506 = vld [vmem:[#allocation7 + $0xd8] sm:$0xff]
        %v507 = vld [vmem:[#allocation7 + $0xe0] sm:$0xff]
        %v508 = vld [vmem:[#allocation7 + $0xe8] sm:$0xff]
        %v509 = vld [vmem:[#allocation7 + $0xf0] sm:$0xff]
        %v510 = vld [vmem:[#allocation7 + $0xf8] sm:$0xff]
        %v511 = vld [vmem:[#allocation7 + $0x100] sm:$0xff]
        %v512 = vld [vmem:[#allocation7 + $0x108] sm:$0xff]
        %v513 = vld [vmem:[#allocation7 + $0x110] sm:$0xff]
        %v514 = vld [vmem:[#allocation7 + $0x118] sm:$0xff]
        %v515 = vld [vmem:[#allocation7 + $0x120] sm:$0xff]
        %v516 = vld [vmem:[#allocation7 + $0x128] sm:$0xff]
        %v517 = vld [vmem:[#allocation7 + $0x130] sm:$0xff]
        %v518 = vld [vmem:[#allocation7 + $0x138] sm:$0xff]
        %v519 = vld [vmem:[#allocation7 + $0x140] sm:$0xff]
        %v520 = vld [vmem:[#allocation7 + $0x148] sm:$0xff]
        %v521 = vld [vmem:[#allocation7 + $0x150] sm:$0xff]
        %v522 = vld [vmem:[#allocation7 + $0x158] sm:$0xff]
        %v523 = vld [vmem:[#allocation7 + $0x160] sm:$0xff]
        %v524 = vld [vmem:[#allocation7 + $0x168] sm:$0xff]
        %v525 = vld [vmem:[#allocation7 + $0x170] sm:$0xff]
        %v526 = vld [vmem:[#allocation7 + $0x178] sm:$0xff]
        %v527 = vld [vmem:[#allocation7 + $0x180] sm:$0xff]
        %v528 = vld [vmem:[#allocation7 + $0x188] sm:$0xff]
        %v529 = vld [vmem:[#allocation7 + $0x190] sm:$0xff]
        %v530 = vld [vmem:[#allocation7 + $0x198] sm:$0xff]
        %v531 = vld [vmem:[#allocation7 + $0x1a0] sm:$0xff]
        %v532 = vld [vmem:[#allocation7 + $0x1a8] sm:$0xff]
        %v533 = vld [vmem:[#allocation7 + $0x1b0] sm:$0xff]
        %v534 = vld [vmem:[#allocation7 + $0x1b8] sm:$0xff]
        %v535 = vld [vmem:[#allocation7 + $0x1c0] sm:$0xff]
        %v536 = vld [vmem:[#allocation7 + $0x1c8] sm:$0xff]
        %v537 = vld [vmem:[#allocation7 + $0x1d0] sm:$0xff]
        %v538 = vld [vmem:[#allocation7 + $0x1d8] sm:$0xff]
        %v539 = vld [vmem:[#allocation7 + $0x1e0] sm:$0xff]
        %v540 = vld [vmem:[#allocation7 + $0x1e8] sm:$0xff]
        %v541 = vld [vmem:[#allocation7 + $0x1f0] sm:$0xff]
        %v542 = vld [vmem:[#allocation7 + $0x1f8] sm:$0xff]
        %v543 = vld [vmem:[#allocation7 + $0x200] sm:$0xff]
        %v544 = vld [vmem:[#allocation7 + $0x208] sm:$0xff]
        %v545 = vld [vmem:[#allocation7 + $0x210] sm:$0xff]
        %v546 = vld [vmem:[#allocation7 + $0x218] sm:$0xff]
        %v547 = vld [vmem:[#allocation7 + $0x220] sm:$0xff]
        %v548 = vld [vmem:[#allocation7 + $0x228] sm:$0xff]
        %v549 = vld [vmem:[#allocation7 + $0x230] sm:$0xff]
        %v550 = vld [vmem:[#allocation7 + $0x238] sm:$0xff]
        %v551 = vld [vmem:[#allocation7 + $0x240] sm:$0xff]
        %v552 = vld [vmem:[#allocation7 + $0x248] sm:$0xff]
        %v553 = vld [vmem:[#allocation7 + $0x250] sm:$0xff]
        %v554 = vld [vmem:[#allocation7 + $0x258] sm:$0xff]
        %v555 = vld [vmem:[#allocation7 + $0x260] sm:$0xff]
        %v556 = vld [vmem:[#allocation7 + $0x268] sm:$0xff]
        %v557 = vld [vmem:[#allocation7 + $0x270] sm:$0xff]
        %v558 = vld [vmem:[#allocation7 + $0x278] sm:$0xff]
        %v559 = vld [vmem:[#allocation7 + $0x280] sm:$0xff]
        %v560 = vld [vmem:[#allocation7 + $0x288] sm:$0xff]
        %v561 = vld [vmem:[#allocation7 + $0x290] sm:$0xff]
        %v562 = vld [vmem:[#allocation7 + $0x298] sm:$0xff]
        %v563 = vld [vmem:[#allocation7 + $0x2a0] sm:$0xff]
        %v564 = vld [vmem:[#allocation7 + $0x2a8] sm:$0xff]
        %v565 = vld [vmem:[#allocation7 + $0x2b0] sm:$0xff]
        %v566 = vld [vmem:[#allocation7 + $0x2b8] sm:$0xff]
        %v567 = vld [vmem:[#allocation7 + $0x2c0] sm:$0xff]
        %v568 = vld [vmem:[#allocation7 + $0x2c8] sm:$0xff]
        %v569 = vld [vmem:[#allocation7 + $0x2d0] sm:$0xff]
        %v570 = vld [vmem:[#allocation7 + $0x2d8] sm:$0xff]
        %v571 = vld [vmem:[#allocation7 + $0x2e0] sm:$0xff]
        %v572 = vld [vmem:[#allocation7 + $0x2e8] sm:$0xff]
        %v573 = vld [vmem:[#allocation7 + $0x2f0] sm:$0xff]
        %v574 = vld [vmem:[#allocation7 + $0x2f8] sm:$0xff]
        %v575 = vld [vmem:[#allocation7 + $0x300] sm:$0xff]
        %v576 = vld [vmem:[#allocation7 + $0x308] sm:$0xff]
        %v577 = vld [vmem:[#allocation7 + $0x310] sm:$0xff]
        %v578 = vld [vmem:[#allocation7 + $0x318] sm:$0xff]
        %v579 = vld [vmem:[#allocation7 + $0x320] sm:$0xff]
        %v580 = vld [vmem:[#allocation7 + $0x328] sm:$0xff]
        %v581 = vld [vmem:[#allocation7 + $0x330] sm:$0xff]
        %v582 = vld [vmem:[#allocation7 + $0x338] sm:$0xff]
        %v583 = vld [vmem:[#allocation7 + $0x340] sm:$0xff]
        %v584 = vld [vmem:[#allocation7 + $0x348] sm:$0xff]
        %v585 = vld [vmem:[#allocation7 + $0x350] sm:$0xff]
        %v586 = vld [vmem:[#allocation7 + $0x358] sm:$0xff]
        %v587 = vld [vmem:[#allocation7 + $0x360] sm:$0xff]
        %v588 = vld [vmem:[#allocation7 + $0x368] sm:$0xff]
        %v589 = vld [vmem:[#allocation7 + $0x370] sm:$0xff]
        %v590 = vld [vmem:[#allocation7 + $0x378] sm:$0xff]
        %v591 = vld [vmem:[#allocation7 + $0x380] sm:$0xff]
        %v592 = vld [vmem:[#allocation7 + $0x388] sm:$0xff]
        %v593 = vld [vmem:[#allocation7 + $0x390] sm:$0xff]
        %v594 = vld [vmem:[#allocation7 + $0x398] sm:$0xff]
        %v595 = vld [vmem:[#allocation7 + $0x3a0] sm:$0xff]
        %v596 = vld [vmem:[#allocation7 + $0x3a8] sm:$0xff]
        %v597 = vld [vmem:[#allocation7 + $0x3b0] sm:$0xff]
        %v598 = vld [vmem:[#allocation7 + $0x3b8] sm:$0xff]
        %v599 = vld [vmem:[#allocation7 + $0x3c0] sm:$0xff]
        %v600 = vld [vmem:[#allocation7 + $0x3c8] sm:$0xff]
        %v601 = vld [vmem:[#allocation7 + $0x3d0] sm:$0xff]
        %v602 = vld [vmem:[#allocation7 + $0x3d8] sm:$0xff]
        %v603 = vld [vmem:[#allocation7 + $0x3e0] sm:$0xff]
        %v604 = vld [vmem:[#allocation7 + $0x3e8] sm:$0xff]
        %v605 = vld [vmem:[#allocation7 + $0x3f0] sm:$0xff]
        %v606 = vld [vmem:[#allocation7 + $0x3f8] sm:$0xff]
        %v607 = vld [vmem:[#allocation7 + $0x400] sm:$0xff]
        %v608 = vld [vmem:[#allocation7 + $0x408] sm:$0xff]
        %v609 = vld [vmem:[#allocation7 + $0x410] sm:$0xff]
        %v610 = vld [vmem:[#allocation7 + $0x418] sm:$0xff]
        %v611 = vld [vmem:[#allocation7 + $0x420] sm:$0xff]
        %v612 = vld [vmem:[#allocation7 + $0x428] sm:$0xff]
        %v613 = vld [vmem:[#allocation7 + $0x430] sm:$0xff]
        %v614 = vld [vmem:[#allocation7 + $0x438] sm:$0xff]
        %v615 = vld [vmem:[#allocation7 + $0x440] sm:$0xff]
        %v616 = vld [vmem:[#allocation7 + $0x448] sm:$0xff]
        %v617 = vld [vmem:[#allocation7 + $0x450] sm:$0xff]
        %v618 = vld [vmem:[#allocation7 + $0x458] sm:$0xff]
        %v619 = vld [vmem:[#allocation7 + $0x460] sm:$0xff]
        %v620 = vld [vmem:[#allocation7 + $0x468] sm:$0xff]
        %v621 = vld [vmem:[#allocation7 + $0x470] sm:$0xff]
        %v622 = vld [vmem:[#allocation7 + $0x478] sm:$0xff]
        %v623 = vld [vmem:[#allocation7 + $0x480] sm:$0xff]
        %v624 = vld [vmem:[#allocation7 + $0x488] sm:$0xff]
        %v625 = vld [vmem:[#allocation7 + $0x490] sm:$0xff]
        %v626 = vld [vmem:[#allocation7 + $0x498] sm:$0xff]
        %v627 = vld [vmem:[#allocation7 + $0x4a0] sm:$0xff]
        %v628 = vld [vmem:[#allocation7 + $0x4a8] sm:$0xff]
        %v629 = vld [vmem:[#allocation7 + $0x4b0] sm:$0xff]
        %v630 = vld [vmem:[#allocation7 + $0x4b8] sm:$0xff]
        %v631 = vld [vmem:[#allocation7 + $0x4c0] sm:$0xff]
        %v632 = vld [vmem:[#allocation7 + $0x4c8] sm:$0xff]
        %v633 = vld [vmem:[#allocation7 + $0x4d0] sm:$0xff]
        %v634 = vld [vmem:[#allocation7 + $0x4d8] sm:$0xff]
        %v635 = vld [vmem:[#allocation7 + $0x4e0] sm:$0xff]
        %v636 = vld [vmem:[#allocation7 + $0x4e8] sm:$0xff]
        %v637 = vld [vmem:[#allocation7 + $0x4f0] sm:$0xff]
        %v638 = vld [vmem:[#allocation7 + $0x4f8] sm:$0xff]
        %v639 = vld [vmem:[#allocation7 + $0x500] sm:$0xff]
        %v640 = vld [vmem:[#allocation7 + $0x508] sm:$0xff]
        %v641 = vld [vmem:[#allocation7 + $0x510] sm:$0xff]
        %v642 = vld [vmem:[#allocation7 + $0x518] sm:$0xff]
        %v643 = vld [vmem:[#allocation7 + $0x520] sm:$0xff]
        %v644 = vld [vmem:[#allocation7 + $0x528] sm:$0xff]
        %v645 = vld [vmem:[#allocation7 + $0x530] sm:$0xff]
        %v646 = vld [vmem:[#allocation7 + $0x538] sm:$0xff]
        %v647 = vld [vmem:[#allocation7 + $0x540] sm:$0xff]
        %v648 = vld [vmem:[#allocation7 + $0x548] sm:$0xff]
        %v649 = vld [vmem:[#allocation7 + $0x550] sm:$0xff]
        %v650 = vld [vmem:[#allocation7 + $0x558] sm:$0xff]
        %v651 = vld [vmem:[#allocation7 + $0x560] sm:$0xff]
        %v652 = vld [vmem:[#allocation7 + $0x568] sm:$0xff]
        %v653 = vld [vmem:[#allocation7 + $0x570] sm:$0xff]
        %v654 = vld [vmem:[#allocation7 + $0x578] sm:$0xff]
        %v655 = vld [vmem:[#allocation7 + $0x580] sm:$0xff]
        %v656 = vld [vmem:[#allocation7 + $0x588] sm:$0xff]
        %v657 = vld [vmem:[#allocation7 + $0x590] sm:$0xff]
        %v658 = vld [vmem:[#allocation7 + $0x598] sm:$0xff]
        %v659 = vld [vmem:[#allocation7 + $0x5a0] sm:$0xff]
        %v660 = vld [vmem:[#allocation7 + $0x5a8] sm:$0xff]
        %v661 = vld [vmem:[#allocation7 + $0x5b0] sm:$0xff]
        %v662 = vld [vmem:[#allocation7 + $0x5b8] sm:$0xff]
        %v663 = vld [vmem:[#allocation7 + $0x5c0] sm:$0xff]
        %v664 = vld [vmem:[#allocation7 + $0x5c8] sm:$0xff]
        %v665 = vld [vmem:[#allocation7 + $0x5d0] sm:$0xff]
        %v666 = vld [vmem:[#allocation7 + $0x5d8] sm:$0xff]
        %v667 = vld [vmem:[#allocation7 + $0x5e0] sm:$0xff]
        %v668 = vld [vmem:[#allocation7 + $0x5e8] sm:$0xff]
        %v669 = vld [vmem:[#allocation7 + $0x5f0] sm:$0xff]
        %v670 = vld [vmem:[#allocation7 + $0x5f8] sm:$0xff]
        %v671 = vld [vmem:[#allocation7 + $0x600] sm:$0xff]
        %v672 = vld [vmem:[#allocation7 + $0x608] sm:$0xff]
        %v673 = vld [vmem:[#allocation7 + $0x610] sm:$0xff]
        %v674 = vld [vmem:[#allocation7 + $0x618] sm:$0xff]
        %v675 = vld [vmem:[#allocation7 + $0x620] sm:$0xff]
        %v676 = vld [vmem:[#allocation7 + $0x628] sm:$0xff]
        %v677 = vld [vmem:[#allocation7 + $0x630] sm:$0xff]
        %v678 = vld [vmem:[#allocation7 + $0x638] sm:$0xff]
        %v679 = vld [vmem:[#allocation7 + $0x640] sm:$0xff]
        %v680 = vld [vmem:[#allocation7 + $0x648] sm:$0xff]
        %v681 = vld [vmem:[#allocation7 + $0x650] sm:$0xff]
        %v682 = vld [vmem:[#allocation7 + $0x658] sm:$0xff]
        %v683 = vld [vmem:[#allocation7 + $0x660] sm:$0xff]
        %v684 = vld [vmem:[#allocation7 + $0x668] sm:$0xff]
        %v685 = vld [vmem:[#allocation7 + $0x670] sm:$0xff]
        %v686 = vld [vmem:[#allocation7 + $0x678] sm:$0xff]
        %v687 = vld [vmem:[#allocation7 + $0x680] sm:$0xff]
        %v688 = vld [vmem:[#allocation7 + $0x688] sm:$0xff]
        %v689 = vld [vmem:[#allocation7 + $0x690] sm:$0xff]
        %v690 = vld [vmem:[#allocation7 + $0x698] sm:$0xff]
        %v691 = vld [vmem:[#allocation7 + $0x6a0] sm:$0xff]
        %v692 = vld [vmem:[#allocation7 + $0x6a8] sm:$0xff]
        %v693 = vld [vmem:[#allocation7 + $0x6b0] sm:$0xff]
        %v694 = vld [vmem:[#allocation7 + $0x6b8] sm:$0xff]
        %v695 = vld [vmem:[#allocation7 + $0x6c0] sm:$0xff]
        %v696 = vld [vmem:[#allocation7 + $0x6c8] sm:$0xff]
        %v697 = vld [vmem:[#allocation7 + $0x6d0] sm:$0xff]
        %v698 = vld [vmem:[#allocation7 + $0x6d8] sm:$0xff]
        %v699 = vld [vmem:[#allocation7 + $0x6e0] sm:$0xff]
        %v700 = vld [vmem:[#allocation7 + $0x6e8] sm:$0xff]
        %v701 = vld [vmem:[#allocation7 + $0x6f0] sm:$0xff]
        %v702 = vld [vmem:[#allocation7 + $0x6f8] sm:$0xff]
        %v703 = vld [vmem:[#allocation7 + $0x700] sm:$0xff]
        %v704 = vld [vmem:[#allocation7 + $0x708] sm:$0xff]
        %v705 = vld [vmem:[#allocation7 + $0x710] sm:$0xff]
        %v706 = vld [vmem:[#allocation7 + $0x718] sm:$0xff]
        %v707 = vld [vmem:[#allocation7 + $0x720] sm:$0xff]
        %v708 = vld [vmem:[#allocation7 + $0x728] sm:$0xff]
        %v709 = vld [vmem:[#allocation7 + $0x730] sm:$0xff]
        %v710 = vld [vmem:[#allocation7 + $0x738] sm:$0xff]
        %v711 = vld [vmem:[#allocation7 + $0x740] sm:$0xff]
        %v712 = vld [vmem:[#allocation7 + $0x748] sm:$0xff]
        %v713 = vld [vmem:[#allocation7 + $0x750] sm:$0xff]
        %v714 = vld [vmem:[#allocation7 + $0x758] sm:$0xff]
        %v715 = vld [vmem:[#allocation7 + $0x760] sm:$0xff]
        %v716 = vld [vmem:[#allocation7 + $0x768] sm:$0xff]
        %v717 = vld [vmem:[#allocation7 + $0x770] sm:$0xff]
        %v718 = vld [vmem:[#allocation7 + $0x778] sm:$0xff]
        %v719 = vld [vmem:[#allocation7 + $0x780] sm:$0xff]
        %v720 = vld [vmem:[#allocation7 + $0x788] sm:$0xff]
        %v721 = vld [vmem:[#allocation7 + $0x790] sm:$0xff]
        %v722 = vld [vmem:[#allocation7 + $0x798] sm:$0xff]
        %v723 = vld [vmem:[#allocation7 + $0x7a0] sm:$0xff]
        %v724 = vld [vmem:[#allocation7 + $0x7a8] sm:$0xff]
        %v725 = vld [vmem:[#allocation7 + $0x7b0] sm:$0xff]
        %v726 = vld [vmem:[#allocation7 + $0x7b8] sm:$0xff]
        %v727 = vld [vmem:[#allocation7 + $0x7c0] sm:$0xff]
        %v728 = vld [vmem:[#allocation7 + $0x7c8] sm:$0xff]
        %v729 = vld [vmem:[#allocation7 + $0x7d0] sm:$0xff]
        %v730 = vld [vmem:[#allocation7 + $0x7d8] sm:$0xff]
        %v731 = vld [vmem:[#allocation7 + $0x7e0] sm:$0xff]
        %v732 = vld [vmem:[#allocation7 + $0x7e8] sm:$0xff]
        %v733 = vld [vmem:[#allocation7 + $0x7f0] sm:$0xff]
        %v734 = vld [vmem:[#allocation7 + $0x7f8] sm:$0xff]
        %v735 = vld [vmem:[#allocation7 + $0x800] sm:$0xff]
        %v736 = vld [vmem:[#allocation7 + $0x808] sm:$0xff]
        %v737 = vld [vmem:[#allocation7 + $0x810] sm:$0xff]
        %v738 = vld [vmem:[#allocation7 + $0x818] sm:$0xff]
        %v739 = vld [vmem:[#allocation7 + $0x820] sm:$0xff]
        %v740 = vld [vmem:[#allocation7 + $0x828] sm:$0xff]
        %v741 = vld [vmem:[#allocation7 + $0x830] sm:$0xff]
        %v742 = vld [vmem:[#allocation7 + $0x838] sm:$0xff]
        %v743 = vld [vmem:[#allocation7 + $0x840] sm:$0xff]
        %v744 = vld [vmem:[#allocation7 + $0x848] sm:$0xff]
        %v745 = vld [vmem:[#allocation7 + $0x850] sm:$0xff]
        %v746 = vld [vmem:[#allocation7 + $0x858] sm:$0xff]
        %v747 = vld [vmem:[#allocation7 + $0x860] sm:$0xff]
        %v748 = vld [vmem:[#allocation7 + $0x868] sm:$0xff]
        %v749 = vld [vmem:[#allocation7 + $0x870] sm:$0xff]
        %v750 = vld [vmem:[#allocation7 + $0x878] sm:$0xff]
        %v751 = vld [vmem:[#allocation7 + $0x880] sm:$0xff]
        %v752 = vld [vmem:[#allocation7 + $0x888] sm:$0xff]
        %v753 = vld [vmem:[#allocation7 + $0x890] sm:$0xff]
        %v754 = vld [vmem:[#allocation7 + $0x898] sm:$0xff]
        %v755 = vld [vmem:[#allocation7 + $0x8a0] sm:$0xff]
        %v756 = vld [vmem:[#allocation7 + $0x8a8] sm:$0xff]
        %v757 = vld [vmem:[#allocation7 + $0x8b0] sm:$0xff]
        %v758 = vld [vmem:[#allocation7 + $0x8b8] sm:$0xff]
        %v759 = vld [vmem:[#allocation7 + $0x8c0] sm:$0xff]
        %v760 = vld [vmem:[#allocation7 + $0x8c8] sm:$0xff]
        %v761 = vld [vmem:[#allocation7 + $0x8d0] sm:$0xff]
        %v762 = vld [vmem:[#allocation7 + $0x8d8] sm:$0xff]
        %v763 = vld [vmem:[#allocation7 + $0x8e0] sm:$0xff]
        %v764 = vld [vmem:[#allocation7 + $0x8e8] sm:$0xff]
        %v765 = vld [vmem:[#allocation7 + $0x8f0] sm:$0xff]
        %v766 = vld [vmem:[#allocation7 + $0x8f8] sm:$0xff]
        %v767 = vld [vmem:[#allocation7 + $0x900] sm:$0xff]
        %v768 = vld [vmem:[#allocation7 + $0x908] sm:$0xff]
        %v769 = vld [vmem:[#allocation7 + $0x910] sm:$0xff]
        %v770 = vld [vmem:[#allocation7 + $0x918] sm:$0xff]
        %v771 = vld [vmem:[#allocation7 + $0x920] sm:$0xff]
        %v772 = vld [vmem:[#allocation7 + $0x928] sm:$0xff]
        %v773 = vld [vmem:[#allocation7 + $0x930] sm:$0xff]
        %v774 = vld [vmem:[#allocation7 + $0x938] sm:$0xff]
        %v775 = vld [vmem:[#allocation7 + $0x940] sm:$0xff]
        %v776 = vld [vmem:[#allocation7 + $0x948] sm:$0xff]
        %v777 = vld [vmem:[#allocation7 + $0x950] sm:$0xff]
        %v778 = vld [vmem:[#allocation7 + $0x958] sm:$0xff]
        %v779 = vld [vmem:[#allocation7 + $0x960] sm:$0xff]
        %v780 = vld [vmem:[#allocation7 + $0x968] sm:$0xff]
        %v781 = vld [vmem:[#allocation7 + $0x970] sm:$0xff]
        %v782 = vld [vmem:[#allocation7 + $0x978] sm:$0xff]
        %v783 = vld [vmem:[#allocation7 + $0x980] sm:$0xff]
        %v784 = vld [vmem:[#allocation7 + $0x988] sm:$0xff]
        %v785 = vld [vmem:[#allocation7 + $0x990] sm:$0xff]
        %v786 = vld [vmem:[#allocation7 + $0x998] sm:$0xff]
        %v787 = vld [vmem:[#allocation7 + $0x9a0] sm:$0xff]
        %v788 = vld [vmem:[#allocation7 + $0x9a8] sm:$0xff]
        %v789 = vld [vmem:[#allocation7 + $0x9b0] sm:$0xff]
        %v790 = vld [vmem:[#allocation7 + $0x9b8] sm:$0xff]
        %v791 = vld [vmem:[#allocation7 + $0x9c0] sm:$0xff]
        %v792 = vld [vmem:[#allocation7 + $0x9c8] sm:$0xff]
        %v793 = vld [vmem:[#allocation7 + $0x9d0] sm:$0xff]
        %v794 = vld [vmem:[#allocation7 + $0x9d8] sm:$0xff]
        %v795 = vld [vmem:[#allocation7 + $0x9e0] sm:$0xff]
        %v796 = vld [vmem:[#allocation7 + $0x9e8] sm:$0xff]
        %v797 = vld [vmem:[#allocation7 + $0x9f0] sm:$0xff]
        %v798 = vld [vmem:[#allocation7 + $0x9f8] sm:$0xff]
        %v799 = vld [vmem:[#allocation7 + $0xa00] sm:$0xff]
        %v800 = vld [vmem:[#allocation7 + $0xa08] sm:$0xff]
        %v801 = vld [vmem:[#allocation7 + $0xa10] sm:$0xff]
        %v802 = vld [vmem:[#allocation7 + $0xa18] sm:$0xff]
        %v803 = vld [vmem:[#allocation7 + $0xa20] sm:$0xff]
        %v804 = vld [vmem:[#allocation7 + $0xa28] sm:$0xff]
        %v805 = vld [vmem:[#allocation7 + $0xa30] sm:$0xff]
        %v806 = vld [vmem:[#allocation7 + $0xa38] sm:$0xff]
        %v807 = vld [vmem:[#allocation7 + $0xa40] sm:$0xff]
        %v808 = vld [vmem:[#allocation7 + $0xa48] sm:$0xff]
        %v809 = vld [vmem:[#allocation7 + $0xa50] sm:$0xff]
        %v810 = vld [vmem:[#allocation7 + $0xa58] sm:$0xff]
        %v811 = vld [vmem:[#allocation7 + $0xa60] sm:$0xff]
        %v812 = vld [vmem:[#allocation7 + $0xa68] sm:$0xff]
        %v813 = vld [vmem:[#allocation7 + $0xa70] sm:$0xff]
        %v814 = vld [vmem:[#allocation7 + $0xa78] sm:$0xff]
        %v815 = vld [vmem:[#allocation7 + $0xa80] sm:$0xff]
        %v816 = vld [vmem:[#allocation7 + $0xa88] sm:$0xff]
        %v817 = vld [vmem:[#allocation7 + $0xa90] sm:$0xff]
        %v818 = vld [vmem:[#allocation7 + $0xa98] sm:$0xff]
        %v819 = vld [vmem:[#allocation7 + $0xaa0] sm:$0xff]
        %v820 = vld [vmem:[#allocation7 + $0xaa8] sm:$0xff]
        %v821 = vld [vmem:[#allocation7 + $0xab0] sm:$0xff]
        %v822 = vld [vmem:[#allocation7 + $0xab8] sm:$0xff]
        %v823 = vld [vmem:[#allocation7 + $0xac0] sm:$0xff]
        %v824 = vld [vmem:[#allocation7 + $0xac8] sm:$0xff]
        %v825 = vld [vmem:[#allocation7 + $0xad0] sm:$0xff]
        %v826 = vld [vmem:[#allocation7 + $0xad8] sm:$0xff]
        %v827 = vld [vmem:[#allocation7 + $0xae0] sm:$0xff]
        %v828 = vld [vmem:[#allocation7 + $0xae8] sm:$0xff]
        %v829 = vld [vmem:[#allocation7 + $0xaf0] sm:$0xff]
        %v830 = vld [vmem:[#allocation7 + $0xaf8] sm:$0xff]
        %v831 = vld [vmem:[#allocation7 + $0xb00] sm:$0xff]
        %v832 = vld [vmem:[#allocation7 + $0xb08] sm:$0xff]
        %v833 = vld [vmem:[#allocation7 + $0xb10] sm:$0xff]
        %v834 = vld [vmem:[#allocation7 + $0xb18] sm:$0xff]
        %v835 = vld [vmem:[#allocation7 + $0xb20] sm:$0xff]
        %v836 = vld [vmem:[#allocation7 + $0xb28] sm:$0xff]
        %v837 = vld [vmem:[#allocation7 + $0xb30] sm:$0xff]
        %v838 = vld [vmem:[#allocation7 + $0xb38] sm:$0xff]
        %v839 = vld [vmem:[#allocation7 + $0xb40] sm:$0xff]
        %v840 = vld [vmem:[#allocation7 + $0xb48] sm:$0xff]
        %v841 = vld [vmem:[#allocation7 + $0xb50] sm:$0xff]
        %v842 = vld [vmem:[#allocation7 + $0xb58] sm:$0xff]
        %v843 = vld [vmem:[#allocation7 + $0xb60] sm:$0xff]
        %v844 = vld [vmem:[#allocation7 + $0xb68] sm:$0xff]
        %v845 = vld [vmem:[#allocation7 + $0xb70] sm:$0xff]
        %v846 = vld [vmem:[#allocation7 + $0xb78] sm:$0xff]
        %v847 = vld [vmem:[#allocation7 + $0xb80] sm:$0xff]
        %v848 = vld [vmem:[#allocation7 + $0xb88] sm:$0xff]
        %v849 = vld [vmem:[#allocation7 + $0xb90] sm:$0xff]
        %v850 = vld [vmem:[#allocation7 + $0xb98] sm:$0xff]
        %v851 = vld [vmem:[#allocation7 + $0xba0] sm:$0xff]
        %v852 = vld [vmem:[#allocation7 + $0xba8] sm:$0xff]
        %v853 = vld [vmem:[#allocation7 + $0xbb0] sm:$0xff]
        %v854 = vld [vmem:[#allocation7 + $0xbb8] sm:$0xff]
        %v855 = vld [vmem:[#allocation7 + $0xbc0] sm:$0xff]
        %v856 = vld [vmem:[#allocation7 + $0xbc8] sm:$0xff]
        %v857 = vld [vmem:[#allocation7 + $0xbd0] sm:$0xff]
        %v858 = vld [vmem:[#allocation7 + $0xbd8] sm:$0xff]
        %v859 = vld [vmem:[#allocation7 + $0xbe0] sm:$0xff]
        %v860 = vld [vmem:[#allocation7 + $0xbe8] sm:$0xff]
        %v861 = vld [vmem:[#allocation7 + $0xbf0] sm:$0xff]
        %v862 = vld [vmem:[#allocation7 + $0xbf8] sm:$0xff]
        %v863 = vld [vmem:[#allocation7 + $0xc00] sm:$0xff]
        %v864 = vld [vmem:[#allocation7 + $0xc08] sm:$0xff]
        %v865 = vld [vmem:[#allocation7 + $0xc10] sm:$0xff]
        %v866 = vld [vmem:[#allocation7 + $0xc18] sm:$0xff]
        %v867 = vld [vmem:[#allocation7 + $0xc20] sm:$0xff]
        %v868 = vld [vmem:[#allocation7 + $0xc28] sm:$0xff]
        %v869 = vld [vmem:[#allocation7 + $0xc30] sm:$0xff]
        %v870 = vld [vmem:[#allocation7 + $0xc38] sm:$0xff]
        %v871 = vld [vmem:[#allocation7 + $0xc40] sm:$0xff]
        %v872 = vld [vmem:[#allocation7 + $0xc48] sm:$0xff]
        %v873 = vld [vmem:[#allocation7 + $0xc50] sm:$0xff]
        %v874 = vld [vmem:[#allocation7 + $0xc58] sm:$0xff]
        %v875 = vld [vmem:[#allocation7 + $0xc60] sm:$0xff]
        %v876 = vld [vmem:[#allocation7 + $0xc68] sm:$0xff]
        %v877 = vld [vmem:[#allocation7 + $0xc70] sm:$0xff]
        %v878 = vld [vmem:[#allocation7 + $0xc78] sm:$0xff]
        %v879 = vld [vmem:[#allocation7 + $0xc80] sm:$0xff]
        %v880 = vld [vmem:[#allocation7 + $0xc88] sm:$0xff]
        %v881 = vld [vmem:[#allocation7 + $0xc90] sm:$0xff]
        %v882 = vld [vmem:[#allocation7 + $0xc98] sm:$0xff]
        %v883 = vld [vmem:[#allocation7 + $0xca0] sm:$0xff]
        %v884 = vld [vmem:[#allocation7 + $0xca8] sm:$0xff]
        %v885 = vld [vmem:[#allocation7 + $0xcb0] sm:$0xff]
        %v886 = vld [vmem:[#allocation7 + $0xcb8] sm:$0xff]
        %v887 = vld [vmem:[#allocation7 + $0xcc0] sm:$0xff]
        %v888 = vld [vmem:[#allocation7 + $0xcc8] sm:$0xff]
        %v889 = vld [vmem:[#allocation7 + $0xcd0] sm:$0xff]
        %v890 = vld [vmem:[#allocation7 + $0xcd8] sm:$0xff]
        %v891 = vld [vmem:[#allocation7 + $0xce0] sm:$0xff]
        %v892 = vld [vmem:[#allocation7 + $0xce8] sm:$0xff]
        %v893 = vld [vmem:[#allocation7 + $0xcf0] sm:$0xff]
        %v894 = vld [vmem:[#allocation7 + $0xcf8] sm:$0xff]
        %v895 = vld [vmem:[#allocation7 + $0xd00] sm:$0xff]
        %v896 = vld [vmem:[#allocation7 + $0xd08] sm:$0xff]
        %v897 = vld [vmem:[#allocation7 + $0xd10] sm:$0xff]
        %v898 = vld [vmem:[#allocation7 + $0xd18] sm:$0xff]
        %v899 = vld [vmem:[#allocation7 + $0xd20] sm:$0xff]
        %v900 = vld [vmem:[#allocation7 + $0xd28] sm:$0xff]
        %v901 = vld [vmem:[#allocation7 + $0xd30] sm:$0xff]
        %v902 = vld [vmem:[#allocation7 + $0xd38] sm:$0xff]
        %v903 = vld [vmem:[#allocation7 + $0xd40] sm:$0xff]
        %v904 = vld [vmem:[#allocation7 + $0xd48] sm:$0xff]
        %v905 = vld [vmem:[#allocation7 + $0xd50] sm:$0xff]
        %v906 = vld [vmem:[#allocation7 + $0xd58] sm:$0xff]
        %v907 = vld [vmem:[#allocation7 + $0xd60] sm:$0xff]
        %v908 = vld [vmem:[#allocation7 + $0xd68] sm:$0xff]
        %v909 = vld [vmem:[#allocation7 + $0xd70] sm:$0xff]
        %v910 = vld [vmem:[#allocation7 + $0xd78] sm:$0xff]
        %v911 = vld [vmem:[#allocation7 + $0xd80] sm:$0xff]
        %v912 = vld [vmem:[#allocation7 + $0xd88] sm:$0xff]
        %v913 = vld [vmem:[#allocation7 + $0xd90] sm:$0xff]
        %v914 = vld [vmem:[#allocation7 + $0xd98] sm:$0xff]
        %v915 = vld [vmem:[#allocation7 + $0xda0] sm:$0xff]
        %v916 = vld [vmem:[#allocation7 + $0xda8] sm:$0xff]
        %v917 = vld [vmem:[#allocation7 + $0xdb0] sm:$0xff]
        %v918 = vld [vmem:[#allocation7 + $0xdb8] sm:$0xff]
        %v919 = vld [vmem:[#allocation7 + $0xdc0] sm:$0xff]
        %v920 = vld [vmem:[#allocation7 + $0xdc8] sm:$0xff]
        %v921 = vld [vmem:[#allocation7 + $0xdd0] sm:$0xff]
        %v922 = vld [vmem:[#allocation7 + $0xdd8] sm:$0xff]
        %v923 = vld [vmem:[#allocation7 + $0xde0] sm:$0xff]
        %v924 = vld [vmem:[#allocation7 + $0xde8] sm:$0xff]
        %v925 = vld [vmem:[#allocation7 + $0xdf0] sm:$0xff]
        %v926 = vld [vmem:[#allocation7 + $0xdf8] sm:$0xff]
        %v927 = vld [vmem:[#allocation7 + $0xe00] sm:$0xff]
        %v928 = vld [vmem:[#allocation7 + $0xe08] sm:$0xff]
        %v929 = vld [vmem:[#allocation7 + $0xe10] sm:$0xff]
        %v930 = vld [vmem:[#allocation7 + $0xe18] sm:$0xff]
        %v931 = vld [vmem:[#allocation7 + $0xe20] sm:$0xff]
        %v932 = vld [vmem:[#allocation7 + $0xe28] sm:$0xff]
        %v933 = vld [vmem:[#allocation7 + $0xe30] sm:$0xff]
        %v934 = vld [vmem:[#allocation7 + $0xe38] sm:$0xff]
        %v935 = vld [vmem:[#allocation7 + $0xe40] sm:$0xff]
        %v936 = vld [vmem:[#allocation7 + $0xe48] sm:$0xff]
        %v937 = vld [vmem:[#allocation7 + $0xe50] sm:$0xff]
        %v938 = vld [vmem:[#allocation7 + $0xe58] sm:$0xff]
        %v939 = vld [vmem:[#allocation7 + $0xe60] sm:$0xff]
        %v940 = vld [vmem:[#allocation7 + $0xe68] sm:$0xff]
        %v941 = vld [vmem:[#allocation7 + $0xe70] sm:$0xff]
        %v942 = vld [vmem:[#allocation7 + $0xe78] sm:$0xff]
        %v943 = vld [vmem:[#allocation7 + $0xe80] sm:$0xff]
        %v944 = vld [vmem:[#allocation7 + $0xe88] sm:$0xff]
        %v945 = vld [vmem:[#allocation7 + $0xe90] sm:$0xff]
        %v946 = vld [vmem:[#allocation7 + $0xe98] sm:$0xff]
        %v947 = vld [vmem:[#allocation7 + $0xea0] sm:$0xff]
        %v948 = vld [vmem:[#allocation7 + $0xea8] sm:$0xff]
        %v949 = vld [vmem:[#allocation7 + $0xeb0] sm:$0xff]
        %v950 = vld [vmem:[#allocation7 + $0xeb8] sm:$0xff]
        %v951 = vld [vmem:[#allocation7 + $0xec0] sm:$0xff]
        %v952 = vld [vmem:[#allocation7 + $0xec8] sm:$0xff]
        %v953 = vld [vmem:[#allocation7 + $0xed0] sm:$0xff]
        %v954 = vld [vmem:[#allocation7 + $0xed8] sm:$0xff]
        %v955 = vld [vmem:[#allocation7 + $0xee0] sm:$0xff]
        %v956 = vld [vmem:[#allocation7 + $0xee8] sm:$0xff]
        %v957 = vld [vmem:[#allocation7 + $0xef0] sm:$0xff]
        %v958 = vld [vmem:[#allocation7 + $0xef8] sm:$0xff]
        %v959 = vld [vmem:[#allocation7 + $0xf00] sm:$0xff]
        %v960 = vld [vmem:[#allocation7 + $0xf08] sm:$0xff]
        %v961 = vld [vmem:[#allocation7 + $0xf10] sm:$0xff]
        %v962 = vld [vmem:[#allocation7 + $0xf18] sm:$0xff]
        %v963 = vld [vmem:[#allocation7 + $0xf20] sm:$0xff]
        %v964 = vld [vmem:[#allocation7 + $0xf28] sm:$0xff]
        %v965 = vld [vmem:[#allocation7 + $0xf30] sm:$0xff]
        %v966 = vld [vmem:[#allocation7 + $0xf38] sm:$0xff]
        %v967 = vld [vmem:[#allocation7 + $0xf40] sm:$0xff]
        %v968 = vld [vmem:[#allocation7 + $0xf48] sm:$0xff]
        %v969 = vld [vmem:[#allocation7 + $0xf50] sm:$0xff]
        %v970 = vld [vmem:[#allocation7 + $0xf58] sm:$0xff]
        %v971 = vld [vmem:[#allocation7 + $0xf60] sm:$0xff]
        %v972 = vld [vmem:[#allocation7 + $0xf68] sm:$0xff]
        %v973 = vld [vmem:[#allocation7 + $0xf70] sm:$0xff]
        %v974 = vld [vmem:[#allocation7 + $0xf78] sm:$0xff]
        %v975 = vld [vmem:[#allocation7 + $0xf80] sm:$0xff]
        %v976 = vld [vmem:[#allocation7 + $0xf88] sm:$0xff]
        %v977 = vld [vmem:[#allocation7 + $0xf90] sm:$0xff]
        %v978 = vld [vmem:[#allocation7 + $0xf98] sm:$0xff]
        %v979 = vld [vmem:[#allocation7 + $0xfa0] sm:$0xff]
        %v980 = vld [vmem:[#allocation7 + $0xfa8] sm:$0xff]
        %v981 = vld [vmem:[#allocation7 + $0xfb0] sm:$0xff]
        %v982 = vld [vmem:[#allocation7 + $0xfb8] sm:$0xff]
        %v983 = vld [vmem:[#allocation7 + $0xfc0] sm:$0xff]
        %v984 = vld [vmem:[#allocation7 + $0xfc8] sm:$0xff]
        %v985 = vld [vmem:[#allocation7 + $0xfd0] sm:$0xff]
        %v986 = vld [vmem:[#allocation7 + $0xfd8] sm:$0xff]
        %v987 = vld [vmem:[#allocation7 + $0xfe0] sm:$0xff]
        %v988 = vld [vmem:[#allocation7 + $0xfe8] sm:$0xff]
        %v989 = vld [vmem:[#allocation7 + $0xff0] sm:$0xff]
        %v990 = vld [vmem:[#allocation7 + $0xff8] sm:$0xff]
        %v991 = vld [vmem:[#allocation7 + $0x1000] sm:$0xff]
        %v992 = vld [vmem:[#allocation7 + $0x1008] sm:$0xff]
        %v993 = vld [vmem:[#allocation7 + $0x1010] sm:$0xff]
        %v994 = vld [vmem:[#allocation7 + $0x1018] sm:$0xff]
        %v995 = vld [vmem:[#allocation7 + $0x1020] sm:$0xff]
        %v996 = vld [vmem:[#allocation7 + $0x1028] sm:$0xff]
        %v997 = vld [vmem:[#allocation7 + $0x1030] sm:$0xff]
        %v998 = vld [vmem:[#allocation7 + $0x1038] sm:$0xff]
        %v999 = vld [vmem:[#allocation7 + $0x1040] sm:$0xff]
        %v1000 = vld [vmem:[#allocation7 + $0x1048] sm:$0xff]
        %v1001 = vld [vmem:[#allocation7 + $0x1050] sm:$0xff]
        %v1002 = vld [vmem:[#allocation7 + $0x1058] sm:$0xff]
        %v1003 = vld [vmem:[#allocation7 + $0x1060] sm:$0xff]
        %v1004 = vld [vmem:[#allocation7 + $0x1068] sm:$0xff]
        %v1005 = vld [vmem:[#allocation7 + $0x1070] sm:$0xff]
        %v1006 = vld [vmem:[#allocation7 + $0x1078] sm:$0xff]
        %v1007 = vld [vmem:[#allocation7 + $0x1080] sm:$0xff]
        %v1008 = vld [vmem:[#allocation7 + $0x1088] sm:$0xff]
        %v1009 = vld [vmem:[#allocation7 + $0x1090] sm:$0xff]
        %v1010 = vld [vmem:[#allocation7 + $0x1098] sm:$0xff]
        %v1011 = vld [vmem:[#allocation7 + $0x10a0] sm:$0xff]
        %v1012 = vld [vmem:[#allocation7 + $0x10a8] sm:$0xff]
        %v1013 = vld [vmem:[#allocation7 + $0x10b0] sm:$0xff]
        %v1014 = vld [vmem:[#allocation7 + $0x10b8] sm:$0xff]
        %v1015 = vld [vmem:[#allocation7 + $0x10c0] sm:$0xff]
        %v1016 = vld [vmem:[#allocation7 + $0x10c8] sm:$0xff]
        %v1017 = vld [vmem:[#allocation7 + $0x10d0] sm:$0xff]
        %v1018 = vld [vmem:[#allocation7 + $0x10d8] sm:$0xff]
        %v1019 = vld [vmem:[#allocation7 + $0x10e0] sm:$0xff]
        %v1020 = vld [vmem:[#allocation7 + $0x10e8] sm:$0xff]
        %v1021 = vld [vmem:[#allocation7 + $0x10f0] sm:$0xff]
        %v1022 = vld [vmem:[#allocation7 + $0x10f8] sm:$0xff]
        %v1023 = vld [vmem:[#allocation7 + $0x1100] sm:$0xff]
        %v1024 = vld [vmem:[#allocation7 + $0x1108] sm:$0xff]
        %v1025 = vld [vmem:[#allocation7 + $0x1110] sm:$0xff]
        %v1026 = vld [vmem:[#allocation7 + $0x1118] sm:$0xff]
        %v1027 = vld [vmem:[#allocation7 + $0x1120] sm:$0xff]
        %v1028 = vld [vmem:[#allocation7 + $0x1128] sm:$0xff]
        %v1029 = vld [vmem:[#allocation7 + $0x1130] sm:$0xff]
        %v1030 = vld [vmem:[#allocation7 + $0x1138] sm:$0xff]
        %v1031 = vld [vmem:[#allocation7 + $0x1140] sm:$0xff]
        %v1032 = vld [vmem:[#allocation7 + $0x1148] sm:$0xff]
        %v1033 = vld [vmem:[#allocation7 + $0x1150] sm:$0xff]
        %v1034 = vld [vmem:[#allocation7 + $0x1158] sm:$0xff]
        %v1035 = vld [vmem:[#allocation7 + $0x1160] sm:$0xff]
        %v1036 = vld [vmem:[#allocation7 + $0x1168] sm:$0xff]
        %v1037 = vld [vmem:[#allocation7 + $0x1170] sm:$0xff]
        %v1038 = vld [vmem:[#allocation7 + $0x1178] sm:$0xff]
        %v1039 = vld [vmem:[#allocation7 + $0x1180] sm:$0xff]
        %v1040 = vld [vmem:[#allocation7 + $0x1188] sm:$0xff]
        %v1041 = vld [vmem:[#allocation7 + $0x1190] sm:$0xff]
        %v1042 = vld [vmem:[#allocation7 + $0x1198] sm:$0xff]
        %v1043 = vld [vmem:[#allocation7 + $0x11a0] sm:$0xff]
        %v1044 = vld [vmem:[#allocation7 + $0x11a8] sm:$0xff]
        %v1045 = vld [vmem:[#allocation7 + $0x11b0] sm:$0xff]
        %v1046 = vld [vmem:[#allocation7 + $0x11b8] sm:$0xff]
        %v1047 = vld [vmem:[#allocation7 + $0x11c0] sm:$0xff]
        %v1048 = vld [vmem:[#allocation7 + $0x11c8] sm:$0xff]
        %v1049 = vld [vmem:[#allocation7 + $0x11d0] sm:$0xff]
        %v1050 = vld [vmem:[#allocation7 + $0x11d8] sm:$0xff]
        %v1051 = vld [vmem:[#allocation7 + $0x11e0] sm:$0xff]
        %v1052 = vld [vmem:[#allocation7 + $0x11e8] sm:$0xff]
        %v1053 = vld [vmem:[#allocation7 + $0x11f0] sm:$0xff]
        %v1054 = vld [vmem:[#allocation7 + $0x11f8] sm:$0xff]
        %v1055 = vld [vmem:[#allocation7 + $0x1200] sm:$0xff]
        %v1056 = vld [vmem:[#allocation7 + $0x1208] sm:$0xff]
        %v1057 = vld [vmem:[#allocation7 + $0x1210] sm:$0xff]
        %v1058 = vld [vmem:[#allocation7 + $0x1218] sm:$0xff]
        %v1059 = vld [vmem:[#allocation7 + $0x1220] sm:$0xff]
        %v1060 = vld [vmem:[#allocation7 + $0x1228] sm:$0xff]
        %v1061 = vld [vmem:[#allocation7 + $0x1230] sm:$0xff]
        %v1062 = vld [vmem:[#allocation7 + $0x1238] sm:$0xff]
        %v1063 = vld [vmem:[#allocation7 + $0x1240] sm:$0xff]
        %v1064 = vld [vmem:[#allocation7 + $0x1248] sm:$0xff]
        %v1065 = vld [vmem:[#allocation7 + $0x1250] sm:$0xff]
        %v1066 = vld [vmem:[#allocation7 + $0x1258] sm:$0xff]
        %v1067 = vld [vmem:[#allocation7 + $0x1260] sm:$0xff]
        %v1068 = vld [vmem:[#allocation7 + $0x1268] sm:$0xff]
        %v1069 = vld [vmem:[#allocation7 + $0x1270] sm:$0xff]
        %v1070 = vld [vmem:[#allocation7 + $0x1278] sm:$0xff]
        %v1071 = vld [vmem:[#allocation7 + $0x1280] sm:$0xff]
        %v1072 = vld [vmem:[#allocation7 + $0x1288] sm:$0xff]
        %v1073 = vld [vmem:[#allocation7 + $0x1290] sm:$0xff]
        %v1074 = vld [vmem:[#allocation7 + $0x1298] sm:$0xff]
        %v1075 = vld [vmem:[#allocation7 + $0x12a0] sm:$0xff]
        %v1076 = vld [vmem:[#allocation7 + $0x12a8] sm:$0xff]
        %v1077 = vld [vmem:[#allocation7 + $0x12b0] sm:$0xff]
        %v1078 = vld [vmem:[#allocation7 + $0x12b8] sm:$0xff]
        %v1079 = vld [vmem:[#allocation7 + $0x12c0] sm:$0xff]
        %v1080 = vld [vmem:[#allocation7 + $0x12c8] sm:$0xff]
        %v1081 = vld [vmem:[#allocation7 + $0x12d0] sm:$0xff]
        %v1082 = vld [vmem:[#allocation7 + $0x12d8] sm:$0xff]
        %v1083 = vld [vmem:[#allocation7 + $0x12e0] sm:$0xff]
        %v1084 = vld [vmem:[#allocation7 + $0x12e8] sm:$0xff]
        %v1085 = vld [vmem:[#allocation7 + $0x12f0] sm:$0xff]
        %v1086 = vld [vmem:[#allocation7 + $0x12f8] sm:$0xff]
        %v1087 = vld [vmem:[#allocation7 + $0x1300] sm:$0xff]
        %v1088 = vld [vmem:[#allocation7 + $0x1308] sm:$0xff]
        %v1089 = vld [vmem:[#allocation7 + $0x1310] sm:$0xff]
        %v1090 = vld [vmem:[#allocation7 + $0x1318] sm:$0xff]
        %v1091 = vld [vmem:[#allocation7 + $0x1320] sm:$0xff]
        %v1092 = vld [vmem:[#allocation7 + $0x1328] sm:$0xff]
        %v1093 = vld [vmem:[#allocation7 + $0x1330] sm:$0xff]
        %v1094 = vld [vmem:[#allocation7 + $0x1338] sm:$0xff]
        %v1095 = vld [vmem:[#allocation7 + $0x1340] sm:$0xff]
        %v1096 = vld [vmem:[#allocation7 + $0x1348] sm:$0xff]
        %v1097 = vld [vmem:[#allocation7 + $0x1350] sm:$0xff]
        %v1098 = vld [vmem:[#allocation7 + $0x1358] sm:$0xff]
        %v1099 = vld [vmem:[#allocation7 + $0x1360] sm:$0xff]
        %v1100 = vld [vmem:[#allocation7 + $0x1368] sm:$0xff]
        %v1101 = vld [vmem:[#allocation7 + $0x1370] sm:$0xff]
        %v1102 = vld [vmem:[#allocation7 + $0x1378] sm:$0xff]
        %v1103 = vld [vmem:[#allocation7 + $0x1380] sm:$0xff]
        %v1104 = vld [vmem:[#allocation7 + $0x1388] sm:$0xff]
        %v1105 = vld [vmem:[#allocation7 + $0x1390] sm:$0xff]
        %v1106 = vld [vmem:[#allocation7 + $0x1398] sm:$0xff]
        %v1107 = vld [vmem:[#allocation7 + $0x13a0] sm:$0xff]
        %v1108 = vld [vmem:[#allocation7 + $0x13a8] sm:$0xff]
        %v1109 = vld [vmem:[#allocation7 + $0x13b0] sm:$0xff]
        %v1110 = vld [vmem:[#allocation7 + $0x13b8] sm:$0xff]
        %v1111 = vld [vmem:[#allocation7 + $0x13c0] sm:$0xff]
        %v1112 = vld [vmem:[#allocation7 + $0x13c8] sm:$0xff]
        %v1113 = vld [vmem:[#allocation7 + $0x13d0] sm:$0xff]
        %v1114 = vld [vmem:[#allocation7 + $0x13d8] sm:$0xff]
        %v1115 = vld [vmem:[#allocation7 + $0x13e0] sm:$0xff]
        %v1116 = vld [vmem:[#allocation7 + $0x13e8] sm:$0xff]
        %v1117 = vld [vmem:[#allocation7 + $0x13f0] sm:$0xff]
        %v1118 = vld [vmem:[#allocation7 + $0x13f8] sm:$0xff]
        %v1119 = vld [vmem:[#allocation7 + $0x1400] sm:$0xff]
        %v1120 = vld [vmem:[#allocation7 + $0x1408] sm:$0xff]
        %v1121 = vld [vmem:[#allocation7 + $0x1410] sm:$0xff]
        %v1122 = vld [vmem:[#allocation7 + $0x1418] sm:$0xff]
        %v1123 = vld [vmem:[#allocation7 + $0x1420] sm:$0xff]
        %v1124 = vld [vmem:[#allocation7 + $0x1428] sm:$0xff]
        %v1125 = vld [vmem:[#allocation7 + $0x1430] sm:$0xff]
        %v1126 = vld [vmem:[#allocation7 + $0x1438] sm:$0xff]
        %v1127 = vld [vmem:[#allocation7 + $0x1440] sm:$0xff]
        %v1128 = vld [vmem:[#allocation7 + $0x1448] sm:$0xff]
        %v1129 = vld [vmem:[#allocation7 + $0x1450] sm:$0xff]
        %v1130 = vld [vmem:[#allocation7 + $0x1458] sm:$0xff]
        %v1131 = vld [vmem:[#allocation7 + $0x1460] sm:$0xff]
        %v1132 = vld [vmem:[#allocation7 + $0x1468] sm:$0xff]
        %v1133 = vld [vmem:[#allocation7 + $0x1470] sm:$0xff]
        %v1134 = vld [vmem:[#allocation7 + $0x1478] sm:$0xff]
        %v1135 = vld [vmem:[#allocation7 + $0x1480] sm:$0xff]
        %v1136 = vld [vmem:[#allocation7 + $0x1488] sm:$0xff]
        %v1137 = vld [vmem:[#allocation7 + $0x1490] sm:$0xff]
        %v1138 = vld [vmem:[#allocation7 + $0x1498] sm:$0xff]
        %v1139 = vld [vmem:[#allocation7 + $0x14a0] sm:$0xff]
        %v1140 = vld [vmem:[#allocation7 + $0x14a8] sm:$0xff]
        %v1141 = vld [vmem:[#allocation7 + $0x14b0] sm:$0xff]
        %v1142 = vld [vmem:[#allocation7 + $0x14b8] sm:$0xff]
        %v1143 = vld [vmem:[#allocation7 + $0x14c0] sm:$0xff]
        %v1144 = vld [vmem:[#allocation7 + $0x14c8] sm:$0xff]
        %v1145 = vld [vmem:[#allocation7 + $0x14d0] sm:$0xff]
        %v1146 = vld [vmem:[#allocation7 + $0x14d8] sm:$0xff]
        %v1147 = vld [vmem:[#allocation7 + $0x14e0] sm:$0xff]
        %v1148 = vld [vmem:[#allocation7 + $0x14e8] sm:$0xff]
        %v1149 = vld [vmem:[#allocation7 + $0x14f0] sm:$0xff]
        %v1150 = vld [vmem:[#allocation7 + $0x14f8] sm:$0xff]
        %v1151 = vld [vmem:[#allocation7 + $0x1500] sm:$0xff]
        %v1152 = vld [vmem:[#allocation7 + $0x1508] sm:$0xff]
        %v1153 = vld [vmem:[#allocation7 + $0x1510] sm:$0xff]
        %v1154 = vld [vmem:[#allocation7 + $0x1518] sm:$0xff]
        %v1155 = vld [vmem:[#allocation7 + $0x1520] sm:$0xff]
        %v1156 = vld [vmem:[#allocation7 + $0x1528] sm:$0xff]
        %v1157 = vld [vmem:[#allocation7 + $0x1530] sm:$0xff]
        %v1158 = vld [vmem:[#allocation7 + $0x1538] sm:$0xff]
        %v1159 = vld [vmem:[#allocation7 + $0x1540] sm:$0xff]
        %v1160 = vld [vmem:[#allocation7 + $0x1548] sm:$0xff]
        %v1161 = vld [vmem:[#allocation7 + $0x1550] sm:$0xff]
        %v1162 = vld [vmem:[#allocation7 + $0x1558] sm:$0xff]
        %v1163 = vld [vmem:[#allocation7 + $0x1560] sm:$0xff]
        %v1164 = vld [vmem:[#allocation7 + $0x1568] sm:$0xff]
        %v1165 = vld [vmem:[#allocation7 + $0x1570] sm:$0xff]
        %v1166 = vld [vmem:[#allocation7 + $0x1578] sm:$0xff]
        %v1167 = vld [vmem:[#allocation7 + $0x1580] sm:$0xff]
        %v1168 = vld [vmem:[#allocation7 + $0x1588] sm:$0xff]
        %v1169 = vld [vmem:[#allocation7 + $0x1590] sm:$0xff]
        %v1170 = vld [vmem:[#allocation7 + $0x1598] sm:$0xff]
        %v1171 = vld [vmem:[#allocation7 + $0x15a0] sm:$0xff]
        %v1172 = vld [vmem:[#allocation7 + $0x15a8] sm:$0xff]
        %v1173 = vld [vmem:[#allocation7 + $0x15b0] sm:$0xff]
        %v1174 = vld [vmem:[#allocation7 + $0x15b8] sm:$0xff]
        %v1175 = vld [vmem:[#allocation7 + $0x15c0] sm:$0xff]
        %v1176 = vld [vmem:[#allocation7 + $0x15c8] sm:$0xff]
        %v1177 = vld [vmem:[#allocation7 + $0x15d0] sm:$0xff]
        %v1178 = vld [vmem:[#allocation7 + $0x15d8] sm:$0xff]
        %v1179 = vld [vmem:[#allocation7 + $0x15e0] sm:$0xff]
        %v1180 = vld [vmem:[#allocation7 + $0x15e8] sm:$0xff]
        %v1181 = vld [vmem:[#allocation7 + $0x15f0] sm:$0xff]
        %v1182 = vld [vmem:[#allocation7 + $0x15f8] sm:$0xff]
        %v1183 = vld [vmem:[#allocation7 + $0x1600] sm:$0xff]
        %v1184 = vld [vmem:[#allocation7 + $0x1608] sm:$0xff]
        %v1185 = vld [vmem:[#allocation7 + $0x1610] sm:$0xff]
        %v1186 = vld [vmem:[#allocation7 + $0x1618] sm:$0xff]
        %v1187 = vld [vmem:[#allocation7 + $0x1620] sm:$0xff]
        %v1188 = vld [vmem:[#allocation7 + $0x1628] sm:$0xff]
        %v1189 = vld [vmem:[#allocation7 + $0x1630] sm:$0xff]
        %v1190 = vld [vmem:[#allocation7 + $0x1638] sm:$0xff]
        %v1191 = vld [vmem:[#allocation7 + $0x1640] sm:$0xff]
        %v1192 = vld [vmem:[#allocation7 + $0x1648] sm:$0xff]
        %v1193 = vld [vmem:[#allocation7 + $0x1650] sm:$0xff]
        %v1194 = vld [vmem:[#allocation7 + $0x1658] sm:$0xff]
        %v1195 = vld [vmem:[#allocation7 + $0x1660] sm:$0xff]
        %v1196 = vld [vmem:[#allocation7 + $0x1668] sm:$0xff]
        %v1197 = vld [vmem:[#allocation7 + $0x1670] sm:$0xff]
        %v1198 = vld [vmem:[#allocation7 + $0x1678] sm:$0xff]
        %v1199 = vld [vmem:[#allocation7 + $0x1680] sm:$0xff]
        %v1200 = vld [vmem:[#allocation7 + $0x1688] sm:$0xff]
        %v1201 = vld [vmem:[#allocation7 + $0x1690] sm:$0xff]
        %v1202 = vld [vmem:[#allocation7 + $0x1698] sm:$0xff]
        %v1203 = vld [vmem:[#allocation7 + $0x16a0] sm:$0xff]
        %v1204 = vld [vmem:[#allocation7 + $0x16a8] sm:$0xff]
        %v1205 = vld [vmem:[#allocation7 + $0x16b0] sm:$0xff]
        %v1206 = vld [vmem:[#allocation7 + $0x16b8] sm:$0xff]
        %v1207 = vld [vmem:[#allocation7 + $0x16c0] sm:$0xff]
        %v1208 = vld [vmem:[#allocation7 + $0x16c8] sm:$0xff]
        %v1209 = vld [vmem:[#allocation7 + $0x16d0] sm:$0xff]
        %v1210 = vld [vmem:[#allocation7 + $0x16d8] sm:$0xff]
        %v1211 = vld [vmem:[#allocation7 + $0x16e0] sm:$0xff]
        %v1212 = vld [vmem:[#allocation7 + $0x16e8] sm:$0xff]
        %v1213 = vld [vmem:[#allocation7 + $0x16f0] sm:$0xff]
        %v1214 = vld [vmem:[#allocation7 + $0x16f8] sm:$0xff]
        %v1215 = vld [vmem:[#allocation7 + $0x1700] sm:$0xff]
        %v1216 = vld [vmem:[#allocation7 + $0x1708] sm:$0xff]
        %v1217 = vld [vmem:[#allocation7 + $0x1710] sm:$0xff]
        %v1218 = vld [vmem:[#allocation7 + $0x1718] sm:$0xff]
        %v1219 = vld [vmem:[#allocation7 + $0x1720] sm:$0xff]
        %v1220 = vld [vmem:[#allocation7 + $0x1728] sm:$0xff]
        %v1221 = vld [vmem:[#allocation7 + $0x1730] sm:$0xff]
        %v1222 = vld [vmem:[#allocation7 + $0x1738] sm:$0xff]
        %v1223 = vld [vmem:[#allocation7 + $0x1740] sm:$0xff]
        %v1224 = vld [vmem:[#allocation7 + $0x1748] sm:$0xff]
        %v1225 = vld [vmem:[#allocation7 + $0x1750] sm:$0xff]
        %v1226 = vld [vmem:[#allocation7 + $0x1758] sm:$0xff]
        %v1227 = vld [vmem:[#allocation7 + $0x1760] sm:$0xff]
        %v1228 = vld [vmem:[#allocation7 + $0x1768] sm:$0xff]
        %v1229 = vld [vmem:[#allocation7 + $0x1770] sm:$0xff]
        %v1230 = vld [vmem:[#allocation7 + $0x1778] sm:$0xff]
        %v1231 = vld [vmem:[#allocation7 + $0x1780] sm:$0xff]
        %v1232 = vld [vmem:[#allocation7 + $0x1788] sm:$0xff]
        %v1233 = vld [vmem:[#allocation7 + $0x1790] sm:$0xff]
        %v1234 = vld [vmem:[#allocation7 + $0x1798] sm:$0xff]
        %v1235 = vld [vmem:[#allocation7 + $0x17a0] sm:$0xff]
        %v1236 = vld [vmem:[#allocation7 + $0x17a8] sm:$0xff]
        %v1237 = vld [vmem:[#allocation7 + $0x17b0] sm:$0xff]
        %v1238 = vld [vmem:[#allocation7 + $0x17b8] sm:$0xff]
        %v1239 = vld [vmem:[#allocation7 + $0x17c0] sm:$0xff]
        %v1240 = vld [vmem:[#allocation7 + $0x17c8] sm:$0xff]
        %v1241 = vld [vmem:[#allocation7 + $0x17d0] sm:$0xff]
        %v1242 = vld [vmem:[#allocation7 + $0x17d8] sm:$0xff]
        %v1243 = vld [vmem:[#allocation7 + $0x17e0] sm:$0xff]
        %v1244 = vld [vmem:[#allocation7 + $0x17e8] sm:$0xff]
        %v1245 = vld [vmem:[#allocation7 + $0x17f0] sm:$0xff]
        %v1246 = vld [vmem:[#allocation7 + $0x17f8] sm:$0xff]
        %v1247 = vld [vmem:[#allocation7 + $0x1800] sm:$0xff]
        %v1248 = vld [vmem:[#allocation7 + $0x1808] sm:$0xff]
        %v1249 = vld [vmem:[#allocation7 + $0x1810] sm:$0xff]
        %v1250 = vld [vmem:[#allocation7 + $0x1818] sm:$0xff]
        %v1251 = vld [vmem:[#allocation7 + $0x1820] sm:$0xff]
        %v1252 = vld [vmem:[#allocation7 + $0x1828] sm:$0xff]
        %v1253 = vld [vmem:[#allocation7 + $0x1830] sm:$0xff]
        %v1254 = vld [vmem:[#allocation7 + $0x1838] sm:$0xff]
        %v1255 = vld [vmem:[#allocation7 + $0x1840] sm:$0xff]
        %v1256 = vld [vmem:[#allocation7 + $0x1848] sm:$0xff]
        %v1257 = vld [vmem:[#allocation7 + $0x1850] sm:$0xff]
        %v1258 = vld [vmem:[#allocation7 + $0x1858] sm:$0xff]
        %v1259 = vld [vmem:[#allocation7 + $0x1860] sm:$0xff]
        %v1260 = vld [vmem:[#allocation7 + $0x1868] sm:$0xff]
        %v1261 = vld [vmem:[#allocation7 + $0x1870] sm:$0xff]
        %v1262 = vld [vmem:[#allocation7 + $0x1878] sm:$0xff]
        %v1263 = vld [vmem:[#allocation7 + $0x1880] sm:$0xff]
        %v1264 = vld [vmem:[#allocation7 + $0x1888] sm:$0xff]
        %v1265 = vld [vmem:[#allocation7 + $0x1890] sm:$0xff]
        %v1266 = vld [vmem:[#allocation7 + $0x1898] sm:$0xff]
        %v1267 = vld [vmem:[#allocation7 + $0x18a0] sm:$0xff]
        %v1268 = vld [vmem:[#allocation7 + $0x18a8] sm:$0xff]
        %v1269 = vld [vmem:[#allocation7 + $0x18b0] sm:$0xff]
        %v1270 = vld [vmem:[#allocation7 + $0x18b8] sm:$0xff]
        %v1271 = vld [vmem:[#allocation7 + $0x18c0] sm:$0xff]
        %v1272 = vld [vmem:[#allocation7 + $0x18c8] sm:$0xff]
        %v1273 = vld [vmem:[#allocation7 + $0x18d0] sm:$0xff]
        %v1274 = vld [vmem:[#allocation7 + $0x18d8] sm:$0xff]
        %v1275 = vld [vmem:[#allocation7 + $0x18e0] sm:$0xff]
        %v1276 = vld [vmem:[#allocation7 + $0x18e8] sm:$0xff]
        %v1277 = vld [vmem:[#allocation7 + $0x18f0] sm:$0xff]
        %v1278 = vld [vmem:[#allocation7 + $0x18f8] sm:$0xff]
        %v1279 = vld [vmem:[#allocation7 + $0x1900] sm:$0xff]
        %v1280 = vld [vmem:[#allocation7 + $0x1908] sm:$0xff]
        %v1281 = vld [vmem:[#allocation7 + $0x1910] sm:$0xff]
        %v1282 = vld [vmem:[#allocation7 + $0x1918] sm:$0xff]
        %v1283 = vld [vmem:[#allocation7 + $0x1920] sm:$0xff]
        %v1284 = vld [vmem:[#allocation7 + $0x1928] sm:$0xff]
        %v1285 = vld [vmem:[#allocation7 + $0x1930] sm:$0xff]
        %v1286 = vld [vmem:[#allocation7 + $0x1938] sm:$0xff]
        %v1287 = vld [vmem:[#allocation7 + $0x1940] sm:$0xff]
        %v1288 = vld [vmem:[#allocation7 + $0x1948] sm:$0xff]
        %v1289 = vld [vmem:[#allocation7 + $0x1950] sm:$0xff]
        %v1290 = vld [vmem:[#allocation7 + $0x1958] sm:$0xff]
        %v1291 = vld [vmem:[#allocation7 + $0x1960] sm:$0xff]
        %v1292 = vld [vmem:[#allocation7 + $0x1968] sm:$0xff]
        %v1293 = vld [vmem:[#allocation7 + $0x1970] sm:$0xff]
        %v1294 = vld [vmem:[#allocation7 + $0x1978] sm:$0xff]
        %v1295 = vld [vmem:[#allocation7 + $0x1980] sm:$0xff]
        %v1296 = vld [vmem:[#allocation7 + $0x1988] sm:$0xff]
        %v1297 = vld [vmem:[#allocation7 + $0x1990] sm:$0xff]
        %v1298 = vld [vmem:[#allocation7 + $0x1998] sm:$0xff]
        %v1299 = vld [vmem:[#allocation7 + $0x19a0] sm:$0xff]
        %v1300 = vld [vmem:[#allocation7 + $0x19a8] sm:$0xff]
        %v1301 = vld [vmem:[#allocation7 + $0x19b0] sm:$0xff]
        %v1302 = vld [vmem:[#allocation7 + $0x19b8] sm:$0xff]
        %v1303 = vld [vmem:[#allocation7 + $0x19c0] sm:$0xff]
        %v1304 = vld [vmem:[#allocation7 + $0x19c8] sm:$0xff]
        %v1305 = vld [vmem:[#allocation7 + $0x19d0] sm:$0xff]
        %v1306 = vld [vmem:[#allocation7 + $0x19d8] sm:$0xff]
        %v1307 = vld [vmem:[#allocation7 + $0x19e0] sm:$0xff]
        %v1308 = vld [vmem:[#allocation7 + $0x19e8] sm:$0xff]
        %v1309 = vld [vmem:[#allocation7 + $0x19f0] sm:$0xff]
        %v1310 = vld [vmem:[#allocation7 + $0x19f8] sm:$0xff]
        %v1311 = vld [vmem:[#allocation7 + $0x1a00] sm:$0xff]
        %v1312 = vld [vmem:[#allocation7 + $0x1a08] sm:$0xff]
        %v1313 = vld [vmem:[#allocation7 + $0x1a10] sm:$0xff]
        %v1314 = vld [vmem:[#allocation7 + $0x1a18] sm:$0xff]
        %v1315 = vld [vmem:[#allocation7 + $0x1a20] sm:$0xff]
        %v1316 = vld [vmem:[#allocation7 + $0x1a28] sm:$0xff]
        %v1317 = vld [vmem:[#allocation7 + $0x1a30] sm:$0xff]
        %v1318 = vld [vmem:[#allocation7 + $0x1a38] sm:$0xff]
        %v1319 = vld [vmem:[#allocation7 + $0x1a40] sm:$0xff]
        %v1320 = vld [vmem:[#allocation7 + $0x1a48] sm:$0xff]
        %v1321 = vld [vmem:[#allocation7 + $0x1a50] sm:$0xff]
        %v1322 = vld [vmem:[#allocation7 + $0x1a58] sm:$0xff]
        %v1323 = vld [vmem:[#allocation7 + $0x1a60] sm:$0xff]
        %v1324 = vld [vmem:[#allocation7 + $0x1a68] sm:$0xff]
        %v1325 = vld [vmem:[#allocation7 + $0x1a70] sm:$0xff]
        %v1326 = vld [vmem:[#allocation7 + $0x1a78] sm:$0xff]
        %v1327 = vld [vmem:[#allocation7 + $0x1a80] sm:$0xff]
        %v1328 = vld [vmem:[#allocation7 + $0x1a88] sm:$0xff]
        %v1329 = vld [vmem:[#allocation7 + $0x1a90] sm:$0xff]
        %v1330 = vld [vmem:[#allocation7 + $0x1a98] sm:$0xff]
        %v1331 = vld [vmem:[#allocation7 + $0x1aa0] sm:$0xff]
        %v1332 = vld [vmem:[#allocation7 + $0x1aa8] sm:$0xff]
        %v1333 = vld [vmem:[#allocation7 + $0x1ab0] sm:$0xff]
        %v1334 = vld [vmem:[#allocation7 + $0x1ab8] sm:$0xff]
        %v1335 = vld [vmem:[#allocation7 + $0x1ac0] sm:$0xff]
        %v1336 = vld [vmem:[#allocation7 + $0x1ac8] sm:$0xff]
        %v1337 = vld [vmem:[#allocation7 + $0x1ad0] sm:$0xff]
        %v1338 = vld [vmem:[#allocation7 + $0x1ad8] sm:$0xff]
        %v1339 = vld [vmem:[#allocation7 + $0x1ae0] sm:$0xff]
        %v1340 = vld [vmem:[#allocation7 + $0x1ae8] sm:$0xff]
        %v1341 = vld [vmem:[#allocation7 + $0x1af0] sm:$0xff]
        %v1342 = vld [vmem:[#allocation7 + $0x1af8] sm:$0xff]
        %v1343 = vld [vmem:[#allocation7 + $0x1b00] sm:$0xff]
        %v1344 = vld [vmem:[#allocation7 + $0x1b08] sm:$0xff]
        %v1345 = vld [vmem:[#allocation7 + $0x1b10] sm:$0xff]
        %v1346 = vld [vmem:[#allocation7 + $0x1b18] sm:$0xff]
        %v1347 = vld [vmem:[#allocation7 + $0x1b20] sm:$0xff]
        %v1348 = vld [vmem:[#allocation7 + $0x1b28] sm:$0xff]
        %v1349 = vld [vmem:[#allocation7 + $0x1b30] sm:$0xff]
        %v1350 = vld [vmem:[#allocation7 + $0x1b38] sm:$0xff]
        %v1351 = vld [vmem:[#allocation7 + $0x1b40] sm:$0xff]
        %v1352 = vld [vmem:[#allocation7 + $0x1b48] sm:$0xff]
        %v1353 = vld [vmem:[#allocation7 + $0x1b50] sm:$0xff]
        %v1354 = vld [vmem:[#allocation7 + $0x1b58] sm:$0xff]
        %v1355 = vld [vmem:[#allocation7 + $0x1b60] sm:$0xff]
        %v1356 = vld [vmem:[#allocation7 + $0x1b68] sm:$0xff]
        %v1357 = vld [vmem:[#allocation7 + $0x1b70] sm:$0xff]
        %v1358 = vld [vmem:[#allocation7 + $0x1b78] sm:$0xff]
        %v1359 = vld [vmem:[#allocation7 + $0x1b80] sm:$0xff]
        %v1360 = vld [vmem:[#allocation7 + $0x1b88] sm:$0xff]
        %v1361 = vld [vmem:[#allocation7 + $0x1b90] sm:$0xff]
        %v1362 = vld [vmem:[#allocation7 + $0x1b98] sm:$0xff]
        %v1363 = vld [vmem:[#allocation7 + $0x1ba0] sm:$0xff]
        %v1364 = vld [vmem:[#allocation7 + $0x1ba8] sm:$0xff]
        %v1365 = vld [vmem:[#allocation7 + $0x1bb0] sm:$0xff]
        %v1366 = vld [vmem:[#allocation7 + $0x1bb8] sm:$0xff]
        %v1367 = vld [vmem:[#allocation7 + $0x1bc0] sm:$0xff]
        %v1368 = vld [vmem:[#allocation7 + $0x1bc8] sm:$0xff]
        %v1369 = vld [vmem:[#allocation7 + $0x1bd0] sm:$0xff]
        %v1370 = vld [vmem:[#allocation7 + $0x1bd8] sm:$0xff]
        %v1371 = vld [vmem:[#allocation7 + $0x1be0] sm:$0xff]
        %v1372 = vld [vmem:[#allocation7 + $0x1be8] sm:$0xff]
        %v1373 = vld [vmem:[#allocation7 + $0x1bf0] sm:$0xff]
        %v1374 = vld [vmem:[#allocation7 + $0x1bf8] sm:$0xff]
        %v1375 = vld [vmem:[#allocation7 + $0x1c00] sm:$0xff]
        %v1376 = vld [vmem:[#allocation7 + $0x1c08] sm:$0xff]
        %v1377 = vld [vmem:[#allocation7 + $0x1c10] sm:$0xff]
        %v1378 = vld [vmem:[#allocation7 + $0x1c18] sm:$0xff]
        %v1379 = vld [vmem:[#allocation7 + $0x1c20] sm:$0xff]
        %v1380 = vld [vmem:[#allocation7 + $0x1c28] sm:$0xff]
        %v1381 = vld [vmem:[#allocation7 + $0x1c30] sm:$0xff]
        %v1382 = vld [vmem:[#allocation7 + $0x1c38] sm:$0xff]
        %v1383 = vld [vmem:[#allocation7 + $0x1c40] sm:$0xff]
        %v1384 = vld [vmem:[#allocation7 + $0x1c48] sm:$0xff]
        %v1385 = vld [vmem:[#allocation7 + $0x1c50] sm:$0xff]
        %v1386 = vld [vmem:[#allocation7 + $0x1c58] sm:$0xff]
        %v1387 = vld [vmem:[#allocation7 + $0x1c60] sm:$0xff]
        %v1388 = vld [vmem:[#allocation7 + $0x1c68] sm:$0xff]
        %v1389 = vld [vmem:[#allocation7 + $0x1c70] sm:$0xff]
        %v1390 = vld [vmem:[#allocation7 + $0x1c78] sm:$0xff]
        %v1391 = vld [vmem:[#allocation7 + $0x1c80] sm:$0xff]
        %v1392 = vld [vmem:[#allocation7 + $0x1c88] sm:$0xff]
        %v1393 = vld [vmem:[#allocation7 + $0x1c90] sm:$0xff]
        %v1394 = vld [vmem:[#allocation7 + $0x1c98] sm:$0xff]
        %v1395 = vld [vmem:[#allocation7 + $0x1ca0] sm:$0xff]
        %v1396 = vld [vmem:[#allocation7 + $0x1ca8] sm:$0xff]
        %v1397 = vld [vmem:[#allocation7 + $0x1cb0] sm:$0xff]
        %v1398 = vld [vmem:[#allocation7 + $0x1cb8] sm:$0xff]
        %v1399 = vld [vmem:[#allocation7 + $0x1cc0] sm:$0xff]
        %v1400 = vld [vmem:[#allocation7 + $0x1cc8] sm:$0xff]
        %v1401 = vld [vmem:[#allocation7 + $0x1cd0] sm:$0xff]
        %v1402 = vld [vmem:[#allocation7 + $0x1cd8] sm:$0xff]
        %v1403 = vld [vmem:[#allocation7 + $0x1ce0] sm:$0xff]
        %v1404 = vld [vmem:[#allocation7 + $0x1ce8] sm:$0xff]
        %v1405 = vld [vmem:[#allocation7 + $0x1cf0] sm:$0xff]
        %v1406 = vld [vmem:[#allocation7 + $0x1cf8] sm:$0xff]
        %v1407 = vld [vmem:[#allocation7 + $0x1d00] sm:$0xff]
        %v1408 = vld [vmem:[#allocation7 + $0x1d08] sm:$0xff]
        %v1409 = vld [vmem:[#allocation7 + $0x1d10] sm:$0xff]
        %v1410 = vld [vmem:[#allocation7 + $0x1d18] sm:$0xff]
        %v1411 = vld [vmem:[#allocation7 + $0x1d20] sm:$0xff]
        %v1412 = vld [vmem:[#allocation7 + $0x1d28] sm:$0xff]
        %v1413 = vld [vmem:[#allocation7 + $0x1d30] sm:$0xff]
        %v1414 = vld [vmem:[#allocation7 + $0x1d38] sm:$0xff]
        %v1415 = vld [vmem:[#allocation7 + $0x1d40] sm:$0xff]
        %v1416 = vld [vmem:[#allocation7 + $0x1d48] sm:$0xff]
        %v1417 = vld [vmem:[#allocation7 + $0x1d50] sm:$0xff]
        %v1418 = vld [vmem:[#allocation7 + $0x1d58] sm:$0xff]
        %v1419 = vld [vmem:[#allocation7 + $0x1d60] sm:$0xff]
        %v1420 = vld [vmem:[#allocation7 + $0x1d68] sm:$0xff]
        %v1421 = vld [vmem:[#allocation7 + $0x1d70] sm:$0xff]
        %v1422 = vld [vmem:[#allocation7 + $0x1d78] sm:$0xff]
        %v1423 = vld [vmem:[#allocation7 + $0x1d80] sm:$0xff]
        %v1424 = vld [vmem:[#allocation7 + $0x1d88] sm:$0xff]
        %v1425 = vld [vmem:[#allocation7 + $0x1d90] sm:$0xff]
        %v1426 = vld [vmem:[#allocation7 + $0x1d98] sm:$0xff]
        %v1427 = vld [vmem:[#allocation7 + $0x1da0] sm:$0xff]
        %v1428 = vld [vmem:[#allocation7 + $0x1da8] sm:$0xff]
        %v1429 = vld [vmem:[#allocation7 + $0x1db0] sm:$0xff]
        %v1430 = vld [vmem:[#allocation7 + $0x1db8] sm:$0xff]
        %v1431 = vld [vmem:[#allocation7 + $0x1dc0] sm:$0xff]
        %v1432 = vld [vmem:[#allocation7 + $0x1dc8] sm:$0xff]
        %v1433 = vld [vmem:[#allocation7 + $0x1dd0] sm:$0xff]
        %v1434 = vld [vmem:[#allocation7 + $0x1dd8] sm:$0xff]
        %v1435 = vld [vmem:[#allocation7 + $0x1de0] sm:$0xff]
        %v1436 = vld [vmem:[#allocation7 + $0x1de8] sm:$0xff]
        %v1437 = vld [vmem:[#allocation7 + $0x1df0] sm:$0xff]
        %v1438 = vld [vmem:[#allocation7 + $0x1df8] sm:$0xff]
        %v1439 = vld [vmem:[#allocation7 + $0x1e00] sm:$0xff]
        %v1440 = vld [vmem:[#allocation7 + $0x1e08] sm:$0xff]
        %v1441 = vld [vmem:[#allocation7 + $0x1e10] sm:$0xff]
        %v1442 = vld [vmem:[#allocation7 + $0x1e18] sm:$0xff]
        %v1443 = vld [vmem:[#allocation7 + $0x1e20] sm:$0xff]
        %v1444 = vld [vmem:[#allocation7 + $0x1e28] sm:$0xff]
        %v1445 = vld [vmem:[#allocation7 + $0x1e30] sm:$0xff]
        %v1446 = vld [vmem:[#allocation7 + $0x1e38] sm:$0xff]
        %v1447 = vld [vmem:[#allocation7 + $0x1e40] sm:$0xff]
        %v1448 = vld [vmem:[#allocation7 + $0x1e48] sm:$0xff]
        %v1449 = vld [vmem:[#allocation7 + $0x1e50] sm:$0xff]
        %v1450 = vld [vmem:[#allocation7 + $0x1e58] sm:$0xff]
        %v1451 = vld [vmem:[#allocation7 + $0x1e60] sm:$0xff]
        %v1452 = vld [vmem:[#allocation7 + $0x1e68] sm:$0xff]
        %v1453 = vld [vmem:[#allocation7 + $0x1e70] sm:$0xff]
        %v1454 = vld [vmem:[#allocation7 + $0x1e78] sm:$0xff]
        %v1455 = vld [vmem:[#allocation7 + $0x1e80] sm:$0xff]
        %v1456 = vld [vmem:[#allocation7 + $0x1e88] sm:$0xff]
        %v1457 = vld [vmem:[#allocation7 + $0x1e90] sm:$0xff]
        %v1458 = vld [vmem:[#allocation7 + $0x1e98] sm:$0xff]
        %v1459 = vld [vmem:[#allocation7 + $0x1ea0] sm:$0xff]
        %v1460 = vld [vmem:[#allocation7 + $0x1ea8] sm:$0xff]
        %v1461 = vld [vmem:[#allocation7 + $0x1eb0] sm:$0xff]
        %v1462 = vld [vmem:[#allocation7 + $0x1eb8] sm:$0xff]
        %v1463 = vld [vmem:[#allocation7 + $0x1ec0] sm:$0xff]
        %v1464 = vld [vmem:[#allocation7 + $0x1ec8] sm:$0xff]
        %v1465 = vld [vmem:[#allocation7 + $0x1ed0] sm:$0xff]
        %v1466 = vld [vmem:[#allocation7 + $0x1ed8] sm:$0xff]
        %v1467 = vld [vmem:[#allocation7 + $0x1ee0] sm:$0xff]
        %v1468 = vld [vmem:[#allocation7 + $0x1ee8] sm:$0xff]
        %v1469 = vld [vmem:[#allocation7 + $0x1ef0] sm:$0xff]
        %v1470 = vld [vmem:[#allocation7 + $0x1ef8] sm:$0xff]
        %v1471 = vld [vmem:[#allocation7 + $0x1f00] sm:$0xff]
        %v1472 = vld [vmem:[#allocation7 + $0x1f08] sm:$0xff]
        %v1473 = vld [vmem:[#allocation7 + $0x1f10] sm:$0xff]
        %v1474 = vld [vmem:[#allocation7 + $0x1f18] sm:$0xff]
        %v1475 = vld [vmem:[#allocation7 + $0x1f20] sm:$0xff]
        %v1476 = vld [vmem:[#allocation7 + $0x1f28] sm:$0xff]
        %v1477 = vld [vmem:[#allocation7 + $0x1f30] sm:$0xff]
        %v1478 = vld [vmem:[#allocation7 + $0x1f38] sm:$0xff]
        %v1479 = vld [vmem:[#allocation7 + $0x1f40] sm:$0xff]
        %v1480 = vld [vmem:[#allocation7 + $0x1f48] sm:$0xff]
        %v1481 = vld [vmem:[#allocation7 + $0x1f50] sm:$0xff]
        %v1482 = vld [vmem:[#allocation7 + $0x1f58] sm:$0xff]
        %v1483 = vld [vmem:[#allocation7 + $0x1f60] sm:$0xff]
        %v1484 = vld [vmem:[#allocation7 + $0x1f68] sm:$0xff]
        %v1485 = vld [vmem:[#allocation7 + $0x1f70] sm:$0xff]
        %v1486 = vld [vmem:[#allocation7 + $0x1f78] sm:$0xff]
        %v1487 = vld [vmem:[#allocation7 + $0x1f80] sm:$0xff]
        %v1488 = vld [vmem:[#allocation7 + $0x1f88] sm:$0xff]
        %v1489 = vld [vmem:[#allocation7 + $0x1f90] sm:$0xff]
        %v1490 = vld [vmem:[#allocation7 + $0x1f98] sm:$0xff]
        %v1491 = vld [vmem:[#allocation7 + $0x1fa0] sm:$0xff]
        %v1492 = vld [vmem:[#allocation7 + $0x1fa8] sm:$0xff]
        %v1493 = vld [vmem:[#allocation7 + $0x1fb0] sm:$0xff]
        %v1494 = vld [vmem:[#allocation7 + $0x1fb8] sm:$0xff]
        %v1495 = vld [vmem:[#allocation7 + $0x1fc0] sm:$0xff]
        %v1496 = vld [vmem:[#allocation7 + $0x1fc8] sm:$0xff]
        %v1497 = vld [vmem:[#allocation7 + $0x1fd0] sm:$0xff]
        %v1498 = vld [vmem:[#allocation7 + $0x1fd8] sm:$0xff]
        %v1499 = vld [vmem:[#allocation7 + $0x1fe0] sm:$0xff]
        %v1500 = vld [vmem:[#allocation7 + $0x1fe8] sm:$0xff]
        %v1501 = vld [vmem:[#allocation7 + $0x1ff0] sm:$0xff]
        %v1502 = vld [vmem:[#allocation7 + $0x1ff8] sm:$0xff]
        %v1503 = vld [vmem:[#allocation7 + $0x2000] sm:$0xff]
        %v1504 = vld [vmem:[#allocation7 + $0x2008] sm:$0xff]
        %v1505 = vld [vmem:[#allocation7 + $0x2010] sm:$0xff]
        %v1506 = vld [vmem:[#allocation7 + $0x2018] sm:$0xff]
        %v1507 = vld [vmem:[#allocation7 + $0x2020] sm:$0xff]
        %v1508 = vld [vmem:[#allocation7 + $0x2028] sm:$0xff]
        %v1509 = vld [vmem:[#allocation7 + $0x2030] sm:$0xff]
        %v1510 = vld [vmem:[#allocation7 + $0x2038] sm:$0xff]
        %v1511 = vld [vmem:[#allocation7 + $0x2040] sm:$0xff]
        %v1512 = vld [vmem:[#allocation7 + $0x2048] sm:$0xff]
        %v1513 = vld [vmem:[#allocation7 + $0x2050] sm:$0xff]
        %v1514 = vld [vmem:[#allocation7 + $0x2058] sm:$0xff]
        %v1515 = vld [vmem:[#allocation7 + $0x2060] sm:$0xff]
        %v1516 = vld [vmem:[#allocation7 + $0x2068] sm:$0xff]
        %v1517 = vld [vmem:[#allocation7 + $0x2070] sm:$0xff]
        %v1518 = vld [vmem:[#allocation7 + $0x2078] sm:$0xff]
        %v1519 = vld [vmem:[#allocation7 + $0x2080] sm:$0xff]
        %v1520 = vld [vmem:[#allocation7 + $0x2088] sm:$0xff]
        %v1521 = vld [vmem:[#allocation7 + $0x2090] sm:$0xff]
        %v1522 = vld [vmem:[#allocation7 + $0x2098] sm:$0xff]
        %v1523 = vld [vmem:[#allocation7 + $0x20a0] sm:$0xff]
        %v1524 = vld [vmem:[#allocation7 + $0x20a8] sm:$0xff]
        %v1525 = vld [vmem:[#allocation7 + $0x20b0] sm:$0xff]
        %v1526 = vld [vmem:[#allocation7 + $0x20b8] sm:$0xff]
        %v1527 = vld [vmem:[#allocation7 + $0x20c0] sm:$0xff]
        %v1528 = vld [vmem:[#allocation7 + $0x20c8] sm:$0xff]
        %v1529 = vld [vmem:[#allocation7 + $0x20d0] sm:$0xff]
        %v1530 = vld [vmem:[#allocation7 + $0x20d8] sm:$0xff]
        %v1531 = vld [vmem:[#allocation7 + $0x20e0] sm:$0xff]
        %v1532 = vld [vmem:[#allocation7 + $0x20e8] sm:$0xff]
        %v1533 = vld [vmem:[#allocation7 + $0x20f0] sm:$0xff]
        %v1534 = vld [vmem:[#allocation7 + $0x20f8] sm:$0xff]
        %v1535 = vld [vmem:[#allocation7 + $0x2100] sm:$0xff]
        %v1536 = vld [vmem:[#allocation7 + $0x2108] sm:$0xff]
        %v1537 = vld [vmem:[#allocation7 + $0x2110] sm:$0xff]
        %v1538 = vld [vmem:[#allocation7 + $0x2118] sm:$0xff]
        %v1539 = vld [vmem:[#allocation7 + $0x2120] sm:$0xff]
        %v1540 = vld [vmem:[#allocation7 + $0x2128] sm:$0xff]
        %v1541 = vld [vmem:[#allocation7 + $0x2130] sm:$0xff]
        %v1542 = vld [vmem:[#allocation7 + $0x2138] sm:$0xff]
        %v1543 = vld [vmem:[#allocation7 + $0x2140] sm:$0xff]
        %v1544 = vld [vmem:[#allocation7 + $0x2148] sm:$0xff]
        %v1545 = vld [vmem:[#allocation7 + $0x2150] sm:$0xff]
        %v1546 = vld [vmem:[#allocation7 + $0x2158] sm:$0xff]
        %v1547 = vld [vmem:[#allocation7 + $0x2160] sm:$0xff]
        %v1548 = vld [vmem:[#allocation7 + $0x2168] sm:$0xff]
        %v1549 = vld [vmem:[#allocation7 + $0x2170] sm:$0xff]
        %v1550 = vld [vmem:[#allocation7 + $0x2178] sm:$0xff]
        %v1551 = vld [vmem:[#allocation7 + $0x2180] sm:$0xff]
        %v1552 = vld [vmem:[#allocation7 + $0x2188] sm:$0xff]
        %v1553 = vld [vmem:[#allocation7 + $0x2190] sm:$0xff]
        %v1554 = vld [vmem:[#allocation7 + $0x2198] sm:$0xff]
        %v1555 = vld [vmem:[#allocation7 + $0x21a0] sm:$0xff]
        %v1556 = vld [vmem:[#allocation7 + $0x21a8] sm:$0xff]
        %v1557 = vld [vmem:[#allocation7 + $0x21b0] sm:$0xff]
        %v1558 = vld [vmem:[#allocation7 + $0x21b8] sm:$0xff]
        %v1559 = vld [vmem:[#allocation7 + $0x21c0] sm:$0xff]
        %v1560 = vld [vmem:[#allocation7 + $0x21c8] sm:$0xff]
        %v1561 = vld [vmem:[#allocation7 + $0x21d0] sm:$0xff]
        %v1562 = vld [vmem:[#allocation7 + $0x21d8] sm:$0xff]
        %v1563 = vld [vmem:[#allocation7 + $0x21e0] sm:$0xff]
        %v1564 = vld [vmem:[#allocation7 + $0x21e8] sm:$0xff]
        %v1565 = vld [vmem:[#allocation7 + $0x21f0] sm:$0xff]
        %v1566 = vld [vmem:[#allocation7 + $0x21f8] sm:$0xff]
        %v1567 = vld [vmem:[#allocation7 + $0x2200] sm:$0xff]
        %v1568 = vld [vmem:[#allocation7 + $0x2208] sm:$0xff]
        %v1569 = vld [vmem:[#allocation7 + $0x2210] sm:$0xff]
        %v1570 = vld [vmem:[#allocation7 + $0x2218] sm:$0xff]
        %v1571 = vld [vmem:[#allocation7 + $0x2220] sm:$0xff]
        %v1572 = vld [vmem:[#allocation7 + $0x2228] sm:$0xff]
        %v1573 = vld [vmem:[#allocation7 + $0x2230] sm:$0xff]
        %v1574 = vld [vmem:[#allocation7 + $0x2238] sm:$0xff]
        %v1575 = vld [vmem:[#allocation7 + $0x2240] sm:$0xff]
        %v1576 = vld [vmem:[#allocation7 + $0x2248] sm:$0xff]
        %v1577 = vld [vmem:[#allocation7 + $0x2250] sm:$0xff]
        %v1578 = vld [vmem:[#allocation7 + $0x2258] sm:$0xff]
        %v1579 = vld [vmem:[#allocation7 + $0x2260] sm:$0xff]
        %v1580 = vld [vmem:[#allocation7 + $0x2268] sm:$0xff]
        %v1581 = vld [vmem:[#allocation7 + $0x2270] sm:$0xff]
        %v1582 = vld [vmem:[#allocation7 + $0x2278] sm:$0xff]
        %v1583 = vld [vmem:[#allocation7 + $0x2280] sm:$0xff]
        %v1584 = vld [vmem:[#allocation7 + $0x2288] sm:$0xff]
        %v1585 = vld [vmem:[#allocation7 + $0x2290] sm:$0xff]
        %v1586 = vld [vmem:[#allocation7 + $0x2298] sm:$0xff]
        %v1587 = vld [vmem:[#allocation7 + $0x22a0] sm:$0xff]
        %v1588 = vld [vmem:[#allocation7 + $0x22a8] sm:$0xff]
        %v1589 = vld [vmem:[#allocation7 + $0x22b0] sm:$0xff]
        %v1590 = vld [vmem:[#allocation7 + $0x22b8] sm:$0xff]
        %v1591 = vld [vmem:[#allocation7 + $0x22c0] sm:$0xff]
        %v1592 = vld [vmem:[#allocation7 + $0x22c8] sm:$0xff]
        %v1593 = vld [vmem:[#allocation7 + $0x22d0] sm:$0xff]
        %v1594 = vld [vmem:[#allocation7 + $0x22d8] sm:$0xff]
        %v1595 = vld [vmem:[#allocation7 + $0x22e0] sm:$0xff]
        %v1596 = vld [vmem:[#allocation7 + $0x22e8] sm:$0xff]
        %v1597 = vld [vmem:[#allocation7 + $0x22f0] sm:$0xff]
        %v1598 = vld [vmem:[#allocation7 + $0x22f8] sm:$0xff]
        %v1599 = vld [vmem:[#allocation7 + $0x2300] sm:$0xff]
        %v1600 = vld [vmem:[#allocation7 + $0x2308] sm:$0xff]
        %v1601 = vld [vmem:[#allocation7 + $0x2310] sm:$0xff]
        %v1602 = vld [vmem:[#allocation7 + $0x2318] sm:$0xff]
        %v1603 = vld [vmem:[#allocation7 + $0x2320] sm:$0xff]
        %v1604 = vld [vmem:[#allocation7 + $0x2328] sm:$0xff]
        %v1605 = vld [vmem:[#allocation7 + $0x2330] sm:$0xff]
        %v1606 = vld [vmem:[#allocation7 + $0x2338] sm:$0xff]
        %v1607 = vld [vmem:[#allocation7 + $0x2340] sm:$0xff]
        %v1608 = vld [vmem:[#allocation7 + $0x2348] sm:$0xff]
        %v1609 = vld [vmem:[#allocation7 + $0x2350] sm:$0xff]
        %v1610 = vld [vmem:[#allocation7 + $0x2358] sm:$0xff]
        %v1611 = vld [vmem:[#allocation7 + $0x2360] sm:$0xff]
        %v1612 = vld [vmem:[#allocation7 + $0x2368] sm:$0xff]
        %v1613 = vld [vmem:[#allocation7 + $0x2370] sm:$0xff]
        %v1614 = vld [vmem:[#allocation7 + $0x2378] sm:$0xff]
        %v1615 = vld [vmem:[#allocation7 + $0x2380] sm:$0xff]
        %v1616 = vld [vmem:[#allocation7 + $0x2388] sm:$0xff]
        %v1617 = vld [vmem:[#allocation7 + $0x2390] sm:$0xff]
        %v1618 = vld [vmem:[#allocation7 + $0x2398] sm:$0xff]
        %v1619 = vld [vmem:[#allocation7 + $0x23a0] sm:$0xff]
        %v1620 = vld [vmem:[#allocation7 + $0x23a8] sm:$0xff]
        %v1621 = vld [vmem:[#allocation7 + $0x23b0] sm:$0xff]
        %v1622 = vld [vmem:[#allocation7 + $0x23b8] sm:$0xff]
        %v1623 = vld [vmem:[#allocation7 + $0x23c0] sm:$0xff]
        %v1624 = vld [vmem:[#allocation7 + $0x23c8] sm:$0xff]
        %v1625 = vld [vmem:[#allocation7 + $0x23d0] sm:$0xff]
        %v1626 = vld [vmem:[#allocation7 + $0x23d8] sm:$0xff]
        %v1627 = vld [vmem:[#allocation7 + $0x23e0] sm:$0xff]
        %v1628 = vld [vmem:[#allocation7 + $0x23e8] sm:$0xff]
        %v1629 = vld [vmem:[#allocation7 + $0x23f0] sm:$0xff]
        %v1630 = vld [vmem:[#allocation7 + $0x23f8] sm:$0xff]
        %v1631 = vld [vmem:[#allocation7 + $0x2400] sm:$0xff]
        %v1632 = vld [vmem:[#allocation7 + $0x2408] sm:$0xff]
        %v1633 = vld [vmem:[#allocation7 + $0x2410] sm:$0xff]
        %v1634 = vld [vmem:[#allocation7 + $0x2418] sm:$0xff]
        %v1635 = vld [vmem:[#allocation7 + $0x2420] sm:$0xff]
        %v1636 = vld [vmem:[#allocation7 + $0x2428] sm:$0xff]
        %v1637 = vld [vmem:[#allocation7 + $0x2430] sm:$0xff]
        %v1638 = vld [vmem:[#allocation7 + $0x2438] sm:$0xff]
        %v1639 = vld [vmem:[#allocation7 + $0x2440] sm:$0xff]
        %v1640 = vld [vmem:[#allocation7 + $0x2448] sm:$0xff]
        %v1641 = vld [vmem:[#allocation7 + $0x2450] sm:$0xff]
        %v1642 = vld [vmem:[#allocation7 + $0x2458] sm:$0xff]
        %v1643 = vld [vmem:[#allocation7 + $0x2460] sm:$0xff]
        %v1644 = vld [vmem:[#allocation7 + $0x2468] sm:$0xff]
        %v1645 = vld [vmem:[#allocation7 + $0x2470] sm:$0xff]
        %v1646 = vld [vmem:[#allocation7 + $0x2478] sm:$0xff]
        %v1647 = vld [vmem:[#allocation7 + $0x2480] sm:$0xff]
        %v1648 = vld [vmem:[#allocation7 + $0x2488] sm:$0xff]
        %v1649 = vld [vmem:[#allocation7 + $0x2490] sm:$0xff]
        %v1650 = vld [vmem:[#allocation7 + $0x2498] sm:$0xff]
        %v1651 = vld [vmem:[#allocation7 + $0x24a0] sm:$0xff]
        %v1652 = vld [vmem:[#allocation7 + $0x24a8] sm:$0xff]
        %v1653 = vld [vmem:[#allocation7 + $0x24b0] sm:$0xff]
        %v1654 = vld [vmem:[#allocation7 + $0x24b8] sm:$0xff]
        %v1655 = vld [vmem:[#allocation7 + $0x24c0] sm:$0xff]
        %v1656 = vld [vmem:[#allocation7 + $0x24c8] sm:$0xff]
        %v1657 = vld [vmem:[#allocation7 + $0x24d0] sm:$0xff]
        %v1658 = vld [vmem:[#allocation7 + $0x24d8] sm:$0xff]
        %v1659 = vld [vmem:[#allocation7 + $0x24e0] sm:$0xff]
        %v1660 = vld [vmem:[#allocation7 + $0x24e8] sm:$0xff]
        %v1661 = vld [vmem:[#allocation7 + $0x24f0] sm:$0xff]
        %v1662 = vld [vmem:[#allocation7 + $0x24f8] sm:$0xff]
        %v1663 = vld [vmem:[#allocation7 + $0x2500] sm:$0xff]
        %v1664 = vld [vmem:[#allocation7 + $0x2508] sm:$0xff]
        %v1665 = vld [vmem:[#allocation7 + $0x2510] sm:$0xff]
        %v1666 = vld [vmem:[#allocation7 + $0x2518] sm:$0xff]
        %v1667 = vld [vmem:[#allocation7 + $0x2520] sm:$0xff]
        %v1668 = vld [vmem:[#allocation7 + $0x2528] sm:$0xff]
        %v1669 = vld [vmem:[#allocation7 + $0x2530] sm:$0xff]
        %v1670 = vld [vmem:[#allocation7 + $0x2538] sm:$0xff]
        %v1671 = vld [vmem:[#allocation7 + $0x2540] sm:$0xff]
        %v1672 = vld [vmem:[#allocation7 + $0x2548] sm:$0xff]
        %v1673 = vld [vmem:[#allocation7 + $0x2550] sm:$0xff]
        %v1674 = vld [vmem:[#allocation7 + $0x2558] sm:$0xff]
        %v1675 = vld [vmem:[#allocation7 + $0x2560] sm:$0xff]
        %v1676 = vld [vmem:[#allocation7 + $0x2568] sm:$0xff]
        %v1677 = vld [vmem:[#allocation7 + $0x2570] sm:$0xff]
        %v1678 = vld [vmem:[#allocation7 + $0x2578] sm:$0xff]
        %v1679 = vld [vmem:[#allocation7 + $0x2580] sm:$0xff]
        %v1680 = vld [vmem:[#allocation7 + $0x2588] sm:$0xff]
        %v1681 = vld [vmem:[#allocation7 + $0x2590] sm:$0xff]
        %v1682 = vld [vmem:[#allocation7 + $0x2598] sm:$0xff]
        %v1683 = vld [vmem:[#allocation7 + $0x25a0] sm:$0xff]
        %v1684 = vld [vmem:[#allocation7 + $0x25a8] sm:$0xff]
        %v1685 = vld [vmem:[#allocation7 + $0x25b0] sm:$0xff]
        %v1686 = vld [vmem:[#allocation7 + $0x25b8] sm:$0xff]
        %v1687 = vld [vmem:[#allocation7 + $0x25c0] sm:$0xff]
        %v1688 = vld [vmem:[#allocation7 + $0x25c8] sm:$0xff]
        %v1689 = vld [vmem:[#allocation7 + $0x25d0] sm:$0xff]
        %v1690 = vld [vmem:[#allocation7 + $0x25d8] sm:$0xff]
        %v1691 = vld [vmem:[#allocation7 + $0x25e0] sm:$0xff]
        %v1692 = vld [vmem:[#allocation7 + $0x25e8] sm:$0xff]
        %v1693 = vld [vmem:[#allocation7 + $0x25f0] sm:$0xff]
        %v1694 = vld [vmem:[#allocation7 + $0x25f8] sm:$0xff]
        %v1695 = vld [vmem:[#allocation7 + $0x2600] sm:$0xff]
        %v1696 = vld [vmem:[#allocation7 + $0x2608] sm:$0xff]
        %v1697 = vld [vmem:[#allocation7 + $0x2610] sm:$0xff]
        %v1698 = vld [vmem:[#allocation7 + $0x2618] sm:$0xff]
        %v1699 = vld [vmem:[#allocation7 + $0x2620] sm:$0xff]
        %v1700 = vld [vmem:[#allocation7 + $0x2628] sm:$0xff]
        %v1701 = vld [vmem:[#allocation7 + $0x2630] sm:$0xff]
        %v1702 = vld [vmem:[#allocation7 + $0x2638] sm:$0xff]
        %v1703 = vld [vmem:[#allocation7 + $0x2640] sm:$0xff]
        %v1704 = vld [vmem:[#allocation7 + $0x2648] sm:$0xff]
        %v1705 = vld [vmem:[#allocation7 + $0x2650] sm:$0xff]
        %v1706 = vld [vmem:[#allocation7 + $0x2658] sm:$0xff]
        %v1707 = vld [vmem:[#allocation7 + $0x2660] sm:$0xff]
        %v1708 = vld [vmem:[#allocation7 + $0x2668] sm:$0xff]
        %v1709 = vld [vmem:[#allocation7 + $0x2670] sm:$0xff]
        %v1710 = vld [vmem:[#allocation7 + $0x2678] sm:$0xff]
        %v1711 = vld [vmem:[#allocation7 + $0x2680] sm:$0xff]
        %v1712 = vld [vmem:[#allocation7 + $0x2688] sm:$0xff]
        %v1713 = vld [vmem:[#allocation7 + $0x2690] sm:$0xff]
        %v1714 = vld [vmem:[#allocation7 + $0x2698] sm:$0xff]
        %v1715 = vld [vmem:[#allocation7 + $0x26a0] sm:$0xff]
        %v1716 = vld [vmem:[#allocation7 + $0x26a8] sm:$0xff]
        %v1717 = vld [vmem:[#allocation7 + $0x26b0] sm:$0xff]
        %v1718 = vld [vmem:[#allocation7 + $0x26b8] sm:$0xff]
        %v1719 = vld [vmem:[#allocation7 + $0x26c0] sm:$0xff]
        %v1720 = vld [vmem:[#allocation7 + $0x26c8] sm:$0xff]
        %v1721 = vld [vmem:[#allocation7 + $0x26d0] sm:$0xff]
        %v1722 = vld [vmem:[#allocation7 + $0x26d8] sm:$0xff]
        %v1723 = vld [vmem:[#allocation7 + $0x26e0] sm:$0xff]
        %v1724 = vld [vmem:[#allocation7 + $0x26e8] sm:$0xff]
        %v1725 = vld [vmem:[#allocation7 + $0x26f0] sm:$0xff]
        %v1726 = vld [vmem:[#allocation7 + $0x26f8] sm:$0xff]
        %v1727 = vld [vmem:[#allocation7 + $0x2700] sm:$0xff]
        %v1728 = vld [vmem:[#allocation7 + $0x2708] sm:$0xff]
        %v1729 = vld [vmem:[#allocation7 + $0x2710] sm:$0xff]
        %v1730 = vld [vmem:[#allocation7 + $0x2718] sm:$0xff]
        %v1731 = vld [vmem:[#allocation7 + $0x2720] sm:$0xff]
        %v1732 = vld [vmem:[#allocation7 + $0x2728] sm:$0xff]
        %v1733 = vld [vmem:[#allocation7 + $0x2730] sm:$0xff]
        %v1734 = vld [vmem:[#allocation7 + $0x2738] sm:$0xff]
        %v1735 = vld [vmem:[#allocation7 + $0x2740] sm:$0xff]
        %v1736 = vld [vmem:[#allocation7 + $0x2748] sm:$0xff]
        %v1737 = vld [vmem:[#allocation7 + $0x2750] sm:$0xff]
        %v1738 = vld [vmem:[#allocation7 + $0x2758] sm:$0xff]
        %v1739 = vld [vmem:[#allocation7 + $0x2760] sm:$0xff]
        %v1740 = vld [vmem:[#allocation7 + $0x2768] sm:$0xff]
        %v1741 = vld [vmem:[#allocation7 + $0x2770] sm:$0xff]
        %v1742 = vld [vmem:[#allocation7 + $0x2778] sm:$0xff]
        %v1743 = vld [vmem:[#allocation7 + $0x2780] sm:$0xff]
        %v1744 = vld [vmem:[#allocation7 + $0x2788] sm:$0xff]
        %v1745 = vld [vmem:[#allocation7 + $0x2790] sm:$0xff]
        %v1746 = vld [vmem:[#allocation7 + $0x2798] sm:$0xff]
        %v1747 = vld [vmem:[#allocation7 + $0x27a0] sm:$0xff]
        %v1748 = vld [vmem:[#allocation7 + $0x27a8] sm:$0xff]
        %v1749 = vld [vmem:[#allocation7 + $0x27b0] sm:$0xff]
        %v1750 = vld [vmem:[#allocation7 + $0x27b8] sm:$0xff]
        %v1751 = vld [vmem:[#allocation7 + $0x27c0] sm:$0xff]
        %v1752 = vld [vmem:[#allocation7 + $0x27c8] sm:$0xff]
        %v1753 = vld [vmem:[#allocation7 + $0x27d0] sm:$0xff]
        %v1754 = vld [vmem:[#allocation7 + $0x27d8] sm:$0xff]
        %v1755 = vld [vmem:[#allocation7 + $0x27e0] sm:$0xff]
        %v1756 = vld [vmem:[#allocation7 + $0x27e8] sm:$0xff]
        %v1757 = vld [vmem:[#allocation7 + $0x27f0] sm:$0xff]
        %v1758 = vld [vmem:[#allocation7 + $0x27f8] sm:$0xff]
        %v1759 = vld [vmem:[#allocation7 + $0x2800] sm:$0xff]
        %v1760 = vld [vmem:[#allocation7 + $0x2808] sm:$0xff]
        %v1761 = vld [vmem:[#allocation7 + $0x2810] sm:$0xff]
        %v1762 = vld [vmem:[#allocation7 + $0x2818] sm:$0xff]
        %v1763 = vld [vmem:[#allocation7 + $0x2820] sm:$0xff]
        %v1764 = vld [vmem:[#allocation7 + $0x2828] sm:$0xff]
        %v1765 = vld [vmem:[#allocation7 + $0x2830] sm:$0xff]
        %v1766 = vld [vmem:[#allocation7 + $0x2838] sm:$0xff]
        %v1767 = vld [vmem:[#allocation7 + $0x2840] sm:$0xff]
        %v1768 = vld [vmem:[#allocation7 + $0x2848] sm:$0xff]
        %v1769 = vld [vmem:[#allocation7 + $0x2850] sm:$0xff]
        %v1770 = vld [vmem:[#allocation7 + $0x2858] sm:$0xff]
        %v1771 = vld [vmem:[#allocation7 + $0x2860] sm:$0xff]
        %v1772 = vld [vmem:[#allocation7 + $0x2868] sm:$0xff]
        %v1773 = vld [vmem:[#allocation7 + $0x2870] sm:$0xff]
        %v1774 = vld [vmem:[#allocation7 + $0x2878] sm:$0xff]
        %v1775 = vld [vmem:[#allocation7 + $0x2880] sm:$0xff]
        %v1776 = vld [vmem:[#allocation7 + $0x2888] sm:$0xff]
        %v1777 = vld [vmem:[#allocation7 + $0x2890] sm:$0xff]
        %v1778 = vld [vmem:[#allocation7 + $0x2898] sm:$0xff]
        %v1779 = vld [vmem:[#allocation7 + $0x28a0] sm:$0xff]
        %v1780 = vld [vmem:[#allocation7 + $0x28a8] sm:$0xff]
        %v1781 = vld [vmem:[#allocation7 + $0x28b0] sm:$0xff]
        %v1782 = vld [vmem:[#allocation7 + $0x28b8] sm:$0xff]
        %v1783 = vld [vmem:[#allocation7 + $0x28c0] sm:$0xff]
        %v1784 = vld [vmem:[#allocation7 + $0x28c8] sm:$0xff]
        %v1785 = vld [vmem:[#allocation7 + $0x28d0] sm:$0xff]
        %v1786 = vld [vmem:[#allocation7 + $0x28d8] sm:$0xff]
        %v1787 = vld [vmem:[#allocation7 + $0x28e0] sm:$0xff]
        %v1788 = vld [vmem:[#allocation7 + $0x28e8] sm:$0xff]
        %v1789 = vld [vmem:[#allocation7 + $0x28f0] sm:$0xff]
        %v1790 = vld [vmem:[#allocation7 + $0x28f8] sm:$0xff]
        %v1791 = vld [vmem:[#allocation7 + $0x2900] sm:$0xff]
        %v1792 = vld [vmem:[#allocation7 + $0x2908] sm:$0xff]
        %v1793 = vld [vmem:[#allocation7 + $0x2910] sm:$0xff]
        %v1794 = vld [vmem:[#allocation7 + $0x2918] sm:$0xff]
        %v1795 = vld [vmem:[#allocation7 + $0x2920] sm:$0xff]
        %v1796 = vld [vmem:[#allocation7 + $0x2928] sm:$0xff]
        %v1797 = vld [vmem:[#allocation7 + $0x2930] sm:$0xff]
        %v1798 = vld [vmem:[#allocation7 + $0x2938] sm:$0xff]
        %v1799 = vld [vmem:[#allocation7 + $0x2940] sm:$0xff]
        %v1800 = vld [vmem:[#allocation7 + $0x2948] sm:$0xff]
        %v1801 = vld [vmem:[#allocation7 + $0x2950] sm:$0xff]
        %v1802 = vld [vmem:[#allocation7 + $0x2958] sm:$0xff]
        %v1803 = vld [vmem:[#allocation7 + $0x2960] sm:$0xff]
        %v1804 = vld [vmem:[#allocation7 + $0x2968] sm:$0xff]
        %v1805 = vld [vmem:[#allocation7 + $0x2970] sm:$0xff]
        %v1806 = vld [vmem:[#allocation7 + $0x2978] sm:$0xff]
        %v1807 = vld [vmem:[#allocation7 + $0x2980] sm:$0xff]
        %v1808 = vld [vmem:[#allocation7 + $0x2988] sm:$0xff]
        %v1809 = vld [vmem:[#allocation7 + $0x2990] sm:$0xff]
        %v1810 = vld [vmem:[#allocation7 + $0x2998] sm:$0xff]
        %v1811 = vld [vmem:[#allocation7 + $0x29a0] sm:$0xff]
        %v1812 = vld [vmem:[#allocation7 + $0x29a8] sm:$0xff]
        %v1813 = vld [vmem:[#allocation7 + $0x29b0] sm:$0xff]
        %v1814 = vld [vmem:[#allocation7 + $0x29b8] sm:$0xff]
        %v1815 = vld [vmem:[#allocation7 + $0x29c0] sm:$0xff]
        %v1816 = vld [vmem:[#allocation7 + $0x29c8] sm:$0xff]
        %v1817 = vld [vmem:[#allocation7 + $0x29d0] sm:$0xff]
        %v1818 = vld [vmem:[#allocation7 + $0x29d8] sm:$0xff]
        %v1819 = vld [vmem:[#allocation7 + $0x29e0] sm:$0xff]
        %v1820 = vld [vmem:[#allocation7 + $0x29e8] sm:$0xff]
        %v1821 = vld [vmem:[#allocation7 + $0x29f0] sm:$0xff]
        %v1822 = vld [vmem:[#allocation7 + $0x29f8] sm:$0xff]
        %v1823 = vld [vmem:[#allocation7 + $0x2a00] sm:$0xff]
        %v1824 = vld [vmem:[#allocation7 + $0x2a08] sm:$0xff]
        %v1825 = vld [vmem:[#allocation7 + $0x2a10] sm:$0xff]
        %v1826 = vld [vmem:[#allocation7 + $0x2a18] sm:$0xff]
        %v1827 = vld [vmem:[#allocation7 + $0x2a20] sm:$0xff]
        %v1828 = vld [vmem:[#allocation7 + $0x2a28] sm:$0xff]
        %v1829 = vld [vmem:[#allocation7 + $0x2a30] sm:$0xff]
        %v1830 = vld [vmem:[#allocation7 + $0x2a38] sm:$0xff]
        %v1831 = vld [vmem:[#allocation7 + $0x2a40] sm:$0xff]
        %v1832 = vld [vmem:[#allocation7 + $0x2a48] sm:$0xff]
        %v1833 = vld [vmem:[#allocation7 + $0x2a50] sm:$0xff]
        %v1834 = vld [vmem:[#allocation7 + $0x2a58] sm:$0xff]
        %v1835 = vld [vmem:[#allocation7 + $0x2a60] sm:$0xff]
        %v1836 = vld [vmem:[#allocation7 + $0x2a68] sm:$0xff]
        %v1837 = vld [vmem:[#allocation7 + $0x2a70] sm:$0xff]
        %v1838 = vld [vmem:[#allocation7 + $0x2a78] sm:$0xff]
        %v1839 = vld [vmem:[#allocation7 + $0x2a80] sm:$0xff]
        %v1840 = vld [vmem:[#allocation7 + $0x2a88] sm:$0xff]
        %v1841 = vld [vmem:[#allocation7 + $0x2a90] sm:$0xff]
        %v1842 = vld [vmem:[#allocation7 + $0x2a98] sm:$0xff]
        %v1843 = vld [vmem:[#allocation7 + $0x2aa0] sm:$0xff]
        %v1844 = vld [vmem:[#allocation7 + $0x2aa8] sm:$0xff]
        %v1845 = vld [vmem:[#allocation7 + $0x2ab0] sm:$0xff]
        %v1846 = vld [vmem:[#allocation7 + $0x2ab8] sm:$0xff]
        %v1847 = vld [vmem:[#allocation7 + $0x2ac0] sm:$0xff]
        %v1848 = vld [vmem:[#allocation7 + $0x2ac8] sm:$0xff]
        %v1849 = vld [vmem:[#allocation7 + $0x2ad0] sm:$0xff]
        %v1850 = vld [vmem:[#allocation7 + $0x2ad8] sm:$0xff]
        %v1851 = vld [vmem:[#allocation7 + $0x2ae0] sm:$0xff]
        %v1852 = vld [vmem:[#allocation7 + $0x2ae8] sm:$0xff]
        %v1853 = vld [vmem:[#allocation7 + $0x2af0] sm:$0xff]
        %v1854 = vld [vmem:[#allocation7 + $0x2af8] sm:$0xff]
        %v1855 = vld [vmem:[#allocation7 + $0x2b00] sm:$0xff]
        %v1856 = vld [vmem:[#allocation7 + $0x2b08] sm:$0xff]
        %v1857 = vld [vmem:[#allocation7 + $0x2b10] sm:$0xff]
        %v1858 = vld [vmem:[#allocation7 + $0x2b18] sm:$0xff]
        %v1859 = vld [vmem:[#allocation7 + $0x2b20] sm:$0xff]
        %v1860 = vld [vmem:[#allocation7 + $0x2b28] sm:$0xff]
        %v1861 = vld [vmem:[#allocation7 + $0x2b30] sm:$0xff]
        %v1862 = vld [vmem:[#allocation7 + $0x2b38] sm:$0xff]
        %v1863 = vld [vmem:[#allocation7 + $0x2b40] sm:$0xff]
        %v1864 = vld [vmem:[#allocation7 + $0x2b48] sm:$0xff]
        %v1865 = vld [vmem:[#allocation7 + $0x2b50] sm:$0xff]
        %v1866 = vld [vmem:[#allocation7 + $0x2b58] sm:$0xff]
        %v1867 = vld [vmem:[#allocation7 + $0x2b60] sm:$0xff]
        %v1868 = vld [vmem:[#allocation7 + $0x2b68] sm:$0xff]
        %v1869 = vld [vmem:[#allocation7 + $0x2b70] sm:$0xff]
        %v1870 = vld [vmem:[#allocation7 + $0x2b78] sm:$0xff]
        %v1871 = vld [vmem:[#allocation7 + $0x2b80] sm:$0xff]
        %v1872 = vld [vmem:[#allocation7 + $0x2b88] sm:$0xff]
        %v1873 = vld [vmem:[#allocation7 + $0x2b90] sm:$0xff]
        %v1874 = vld [vmem:[#allocation7 + $0x2b98] sm:$0xff]
        %v1875 = vld [vmem:[#allocation7 + $0x2ba0] sm:$0xff]
        %v1876 = vld [vmem:[#allocation7 + $0x2ba8] sm:$0xff]
        %v1877 = vld [vmem:[#allocation7 + $0x2bb0] sm:$0xff]
        %v1878 = vld [vmem:[#allocation7 + $0x2bb8] sm:$0xff]
        %v1879 = vld [vmem:[#allocation7 + $0x2bc0] sm:$0xff]
        %v1880 = vld [vmem:[#allocation7 + $0x2bc8] sm:$0xff]
        %v1881 = vld [vmem:[#allocation7 + $0x2bd0] sm:$0xff]
        %v1882 = vld [vmem:[#allocation7 + $0x2bd8] sm:$0xff]
        %v1883 = vld [vmem:[#allocation7 + $0x2be0] sm:$0xff]
        %v1884 = vld [vmem:[#allocation7 + $0x2be8] sm:$0xff]
        %v1885 = vld [vmem:[#allocation7 + $0x2bf0] sm:$0xff]
        %v1886 = vld [vmem:[#allocation7 + $0x2bf8] sm:$0xff]
        %v1887 = vld [vmem:[#allocation7 + $0x2c00] sm:$0xff]
        %v1888 = vld [vmem:[#allocation7 + $0x2c08] sm:$0xff]
        %v1889 = vld [vmem:[#allocation7 + $0x2c10] sm:$0xff]
        %v1890 = vld [vmem:[#allocation7 + $0x2c18] sm:$0xff]
        %v1891 = vld [vmem:[#allocation7 + $0x2c20] sm:$0xff]
        %v1892 = vld [vmem:[#allocation7 + $0x2c28] sm:$0xff]
        %v1893 = vld [vmem:[#allocation7 + $0x2c30] sm:$0xff]
        %v1894 = vld [vmem:[#allocation7 + $0x2c38] sm:$0xff]
        %v1895 = vld [vmem:[#allocation7 + $0x2c40] sm:$0xff]
        %v1896 = vld [vmem:[#allocation7 + $0x2c48] sm:$0xff]
        %v1897 = vld [vmem:[#allocation7 + $0x2c50] sm:$0xff]
        %v1898 = vld [vmem:[#allocation7 + $0x2c58] sm:$0xff]
        %v1899 = vld [vmem:[#allocation7 + $0x2c60] sm:$0xff]
        %v1900 = vld [vmem:[#allocation7 + $0x2c68] sm:$0xff]
        %v1901 = vld [vmem:[#allocation7 + $0x2c70] sm:$0xff]
        %v1902 = vld [vmem:[#allocation7 + $0x2c78] sm:$0xff]
        %v1903 = vld [vmem:[#allocation7 + $0x2c80] sm:$0xff]
        %v1904 = vld [vmem:[#allocation7 + $0x2c88] sm:$0xff]
        %v1905 = vld [vmem:[#allocation7 + $0x2c90] sm:$0xff]
        %v1906 = vld [vmem:[#allocation7 + $0x2c98] sm:$0xff]
        %v1907 = vld [vmem:[#allocation7 + $0x2ca0] sm:$0xff]
        %v1908 = vld [vmem:[#allocation7 + $0x2ca8] sm:$0xff]
        %v1909 = vld [vmem:[#allocation7 + $0x2cb0] sm:$0xff]
        %v1910 = vld [vmem:[#allocation7 + $0x2cb8] sm:$0xff]
        %v1911 = vld [vmem:[#allocation7 + $0x2cc0] sm:$0xff]
        %v1912 = vld [vmem:[#allocation7 + $0x2cc8] sm:$0xff]
        %v1913 = vld [vmem:[#allocation7 + $0x2cd0] sm:$0xff]
        %v1914 = vld [vmem:[#allocation7 + $0x2cd8] sm:$0xff]
        %v1915 = vld [vmem:[#allocation7 + $0x2ce0] sm:$0xff]
        %v1916 = vld [vmem:[#allocation7 + $0x2ce8] sm:$0xff]
        %v1917 = vld [vmem:[#allocation7 + $0x2cf0] sm:$0xff]
        %v1918 = vld [vmem:[#allocation7 + $0x2cf8] sm:$0xff]
        %v1919 = vld [vmem:[#allocation7 + $0x2d00] sm:$0xff]
        %v1920 = vld [vmem:[#allocation7 + $0x2d08] sm:$0xff]
        %v1921 = vld [vmem:[#allocation7 + $0x2d10] sm:$0xff]
        %v1922 = vld [vmem:[#allocation7 + $0x2d18] sm:$0xff]
        %v1923 = vld [vmem:[#allocation7 + $0x2d20] sm:$0xff]
        %v1924 = vld [vmem:[#allocation7 + $0x2d28] sm:$0xff]
        %v1925 = vld [vmem:[#allocation7 + $0x2d30] sm:$0xff]
        %v1926 = vld [vmem:[#allocation7 + $0x2d38] sm:$0xff]
        %v1927 = vld [vmem:[#allocation7 + $0x2d40] sm:$0xff]
        %v1928 = vld [vmem:[#allocation7 + $0x2d48] sm:$0xff]
        %v1929 = vld [vmem:[#allocation7 + $0x2d50] sm:$0xff]
        %v1930 = vld [vmem:[#allocation7 + $0x2d58] sm:$0xff]
        %v1931 = vld [vmem:[#allocation7 + $0x2d60] sm:$0xff]
        %v1932 = vld [vmem:[#allocation7 + $0x2d68] sm:$0xff]
        %v1933 = vld [vmem:[#allocation7 + $0x2d70] sm:$0xff]
        %v1934 = vld [vmem:[#allocation7 + $0x2d78] sm:$0xff]
        %v1935 = vld [vmem:[#allocation7 + $0x2d80] sm:$0xff]
        %v1936 = vld [vmem:[#allocation7 + $0x2d88] sm:$0xff]
        %v1937 = vld [vmem:[#allocation7 + $0x2d90] sm:$0xff]
        %v1938 = vld [vmem:[#allocation7 + $0x2d98] sm:$0xff]
        %v1939 = vld [vmem:[#allocation7 + $0x2da0] sm:$0xff]
        %v1940 = vld [vmem:[#allocation7 + $0x2da8] sm:$0xff]
        %v1941 = vld [vmem:[#allocation7 + $0x2db0] sm:$0xff]
        %v1942 = vld [vmem:[#allocation7 + $0x2db8] sm:$0xff]
        %v1943 = vld [vmem:[#allocation7 + $0x2dc0] sm:$0xff]
        %v1944 = vld [vmem:[#allocation7 + $0x2dc8] sm:$0xff]
        %v1945 = vld [vmem:[#allocation7 + $0x2dd0] sm:$0xff]
        %v1946 = vld [vmem:[#allocation7 + $0x2dd8] sm:$0xff]
        %v1947 = vld [vmem:[#allocation7 + $0x2de0] sm:$0xff]
        %v1948 = vld [vmem:[#allocation7 + $0x2de8] sm:$0xff]
        %v1949 = vld [vmem:[#allocation7 + $0x2df0] sm:$0xff]
        %v1950 = vld [vmem:[#allocation7 + $0x2df8] sm:$0xff]
        %v1951 = vld [vmem:[#allocation7 + $0x2e00] sm:$0xff]
        %v1952 = vld [vmem:[#allocation7 + $0x2e08] sm:$0xff]
        %v1953 = vld [vmem:[#allocation7 + $0x2e10] sm:$0xff]
        %v1954 = vld [vmem:[#allocation7 + $0x2e18] sm:$0xff]
        %v1955 = vld [vmem:[#allocation7 + $0x2e20] sm:$0xff]
        %v1956 = vld [vmem:[#allocation7 + $0x2e28] sm:$0xff]
        %v1957 = vld [vmem:[#allocation7 + $0x2e30] sm:$0xff]
        %v1958 = vld [vmem:[#allocation7 + $0x2e38] sm:$0xff]
        %v1959 = vld [vmem:[#allocation7 + $0x2e40] sm:$0xff]
        %v1960 = vld [vmem:[#allocation7 + $0x2e48] sm:$0xff]
        %v1961 = vld [vmem:[#allocation7 + $0x2e50] sm:$0xff]
        %v1962 = vld [vmem:[#allocation7 + $0x2e58] sm:$0xff]
        %v1963 = vld [vmem:[#allocation7 + $0x2e60] sm:$0xff]
        %v1964 = vld [vmem:[#allocation7 + $0x2e68] sm:$0xff]
        %v1965 = vld [vmem:[#allocation7 + $0x2e70] sm:$0xff]
        %v1966 = vld [vmem:[#allocation7 + $0x2e78] sm:$0xff]
        %v1967 = vld [vmem:[#allocation7 + $0x2e80] sm:$0xff]
        %v1968 = vld [vmem:[#allocation7 + $0x2e88] sm:$0xff]
        %v1969 = vld [vmem:[#allocation7 + $0x2e90] sm:$0xff]
        %v1970 = vld [vmem:[#allocation7 + $0x2e98] sm:$0xff]
        %v1971 = vld [vmem:[#allocation7 + $0x2ea0] sm:$0xff]
        %v1972 = vld [vmem:[#allocation7 + $0x2ea8] sm:$0xff]
        %v1973 = vld [vmem:[#allocation7 + $0x2eb0] sm:$0xff]
        %v1974 = vld [vmem:[#allocation7 + $0x2eb8] sm:$0xff]
        %v1975 = vld [vmem:[#allocation7 + $0x2ec0] sm:$0xff]
        %v1976 = vld [vmem:[#allocation7 + $0x2ec8] sm:$0xff]
        %v1977 = vld [vmem:[#allocation7 + $0x2ed0] sm:$0xff]
        %v1978 = vld [vmem:[#allocation7 + $0x2ed8] sm:$0xff]
        %v1979 = vld [vmem:[#allocation7 + $0x2ee0] sm:$0xff]
        %v1980 = vld [vmem:[#allocation7 + $0x2ee8] sm:$0xff]
        %v1981 = vld [vmem:[#allocation7 + $0x2ef0] sm:$0xff]
        %v1982 = vld [vmem:[#allocation7 + $0x2ef8] sm:$0xff]
        %v1983 = vld [vmem:[#allocation7 + $0x2f00] sm:$0xff]
        %v1984 = vld [vmem:[#allocation7 + $0x2f08] sm:$0xff]
        %v1985 = vld [vmem:[#allocation7 + $0x2f10] sm:$0xff]
        %v1986 = vld [vmem:[#allocation7 + $0x2f18] sm:$0xff]
        %v1987 = vld [vmem:[#allocation7 + $0x2f20] sm:$0xff]
        %v1988 = vld [vmem:[#allocation7 + $0x2f28] sm:$0xff]
        %v1989 = vld [vmem:[#allocation7 + $0x2f30] sm:$0xff]
        %v1990 = vld [vmem:[#allocation7 + $0x2f38] sm:$0xff]
        %v1991 = vld [vmem:[#allocation7 + $0x2f40] sm:$0xff]
        %v1992 = vld [vmem:[#allocation7 + $0x2f48] sm:$0xff]
        %v1993 = vld [vmem:[#allocation7 + $0x2f50] sm:$0xff]
        %v1994 = vld [vmem:[#allocation7 + $0x2f58] sm:$0xff]
        %v1995 = vld [vmem:[#allocation7 + $0x2f60] sm:$0xff]
        %v1996 = vld [vmem:[#allocation7 + $0x2f68] sm:$0xff]
        %v1997 = vld [vmem:[#allocation7 + $0x2f70] sm:$0xff]
        %v1998 = vld [vmem:[#allocation7 + $0x2f78] sm:$0xff]
        %v1999 = vld [vmem:[#allocation7 + $0x2f80] sm:$0xff]
        %v2000 = vld [vmem:[#allocation7 + $0x2f88] sm:$0xff]
        %v2001 = vld [vmem:[#allocation7 + $0x2f90] sm:$0xff]
        %v2002 = vld [vmem:[#allocation7 + $0x2f98] sm:$0xff]
        %v2003 = vld [vmem:[#allocation7 + $0x2fa0] sm:$0xff]
        %v2004 = vld [vmem:[#allocation7 + $0x2fa8] sm:$0xff]
        %v2005 = vld [vmem:[#allocation7 + $0x2fb0] sm:$0xff]
        %v2006 = vld [vmem:[#allocation7 + $0x2fb8] sm:$0xff]
        %v2007 = vld [vmem:[#allocation7 + $0x2fc0] sm:$0xff]
        %v2008 = vld [vmem:[#allocation7 + $0x2fc8] sm:$0xff]
        %v2009 = vld [vmem:[#allocation7 + $0x2fd0] sm:$0xff]
        %v2010 = vld [vmem:[#allocation7 + $0x2fd8] sm:$0xff]
        %v2011 = vld [vmem:[#allocation7 + $0x2fe0] sm:$0xff]
        %v2012 = vld [vmem:[#allocation7 + $0x2fe8] sm:$0xff]
        %v2013 = vld [vmem:[#allocation7 + $0x2ff0] sm:$0xff]
        %v2014 = vld [vmem:[#allocation7 + $0x2ff8] sm:$0xff]
        %v2015 = vld [vmem:[#allocation7 + $0x3000] sm:$0xff]
        %v2016 = vld [vmem:[#allocation7 + $0x3008] sm:$0xff]
        %v2017 = vld [vmem:[#allocation7 + $0x3010] sm:$0xff]
        %v2018 = vld [vmem:[#allocation7 + $0x3018] sm:$0xff]
        %v2019 = vld [vmem:[#allocation7 + $0x3020] sm:$0xff]
        %v2020 = vld [vmem:[#allocation7 + $0x3028] sm:$0xff]
        %v2021 = vld [vmem:[#allocation7 + $0x3030] sm:$0xff]
        %v2022 = vld [vmem:[#allocation7 + $0x3038] sm:$0xff]
        %v2023 = vld [vmem:[#allocation7 + $0x3040] sm:$0xff]
        %v2024 = vld [vmem:[#allocation7 + $0x3048] sm:$0xff]
        %v2025 = vld [vmem:[#allocation7 + $0x3050] sm:$0xff]
        %v2026 = vld [vmem:[#allocation7 + $0x3058] sm:$0xff]
        %v2027 = vld [vmem:[#allocation7 + $0x3060] sm:$0xff]
        %v2028 = vld [vmem:[#allocation7 + $0x3068] sm:$0xff]
        %v2029 = vld [vmem:[#allocation7 + $0x3070] sm:$0xff]
        %v2030 = vld [vmem:[#allocation7 + $0x3078] sm:$0xff]
        %v2031 = vld [vmem:[#allocation7 + $0x3080] sm:$0xff]
        %v2032 = vld [vmem:[#allocation7 + $0x3088] sm:$0xff]
        %v2033 = vld [vmem:[#allocation7 + $0x3090] sm:$0xff]
        %v2034 = vld [vmem:[#allocation7 + $0x3098] sm:$0xff]
        %v2035 = vld [vmem:[#allocation7 + $0x30a0] sm:$0xff]
        %v2036 = vld [vmem:[#allocation7 + $0x30a8] sm:$0xff]
        %v2037 = vld [vmem:[#allocation7 + $0x30b0] sm:$0xff]
        %v2038 = vld [vmem:[#allocation7 + $0x30b8] sm:$0xff]
        %v2039 = vld [vmem:[#allocation7 + $0x30c0] sm:$0xff]
        %v2040 = vld [vmem:[#allocation7 + $0x30c8] sm:$0xff]
        %v2041 = vld [vmem:[#allocation7 + $0x30d0] sm:$0xff]
        %v2042 = vld [vmem:[#allocation7 + $0x30d8] sm:$0xff]
        %v2043 = vld [vmem:[#allocation7 + $0x30e0] sm:$0xff]
        %v2044 = vld [vmem:[#allocation7 + $0x30e8] sm:$0xff]
        %v2045 = vld [vmem:[#allocation7 + $0x30f0] sm:$0xff]
        %v2046 = vld [vmem:[#allocation7 + $0x30f8] sm:$0xff]
        %v2047 = vld [vmem:[#allocation7 + $0x3100] sm:$0xff]
        %v2048 = vld [vmem:[#allocation7 + $0x3108] sm:$0xff]
        %v2049 = vld [vmem:[#allocation7 + $0x3110] sm:$0xff]
        %v2050 = vld [vmem:[#allocation7 + $0x3118] sm:$0xff]
        %v2051 = vld [vmem:[#allocation7 + $0x3120] sm:$0xff]
        %v2052 = vld [vmem:[#allocation7 + $0x3128] sm:$0xff]
        %v2053 = vld [vmem:[#allocation7 + $0x3130] sm:$0xff]
        %v2054 = vld [vmem:[#allocation7 + $0x3138] sm:$0xff]
        %v2055 = vld [vmem:[#allocation7 + $0x3140] sm:$0xff]
        %v2056 = vld [vmem:[#allocation7 + $0x3148] sm:$0xff]
        %v2057 = vld [vmem:[#allocation7 + $0x3150] sm:$0xff]
        %v2058 = vld [vmem:[#allocation7 + $0x3158] sm:$0xff]
        %v2059 = vld [vmem:[#allocation7 + $0x3160] sm:$0xff]
        %v2060 = vld [vmem:[#allocation7 + $0x3168] sm:$0xff]
        %v2061 = vld [vmem:[#allocation7 + $0x3170] sm:$0xff]
        %v2062 = vld [vmem:[#allocation7 + $0x3178] sm:$0xff]
        %v2063 = vld [vmem:[#allocation7 + $0x3180] sm:$0xff]
        %v2064 = vld [vmem:[#allocation7 + $0x3188] sm:$0xff]
        %v2065 = vld [vmem:[#allocation7 + $0x3190] sm:$0xff]
        %v2066 = vld [vmem:[#allocation7 + $0x3198] sm:$0xff]
        %v2067 = vld [vmem:[#allocation7 + $0x31a0] sm:$0xff]
        %v2068 = vld [vmem:[#allocation7 + $0x31a8] sm:$0xff]
        %v2069 = vld [vmem:[#allocation7 + $0x31b0] sm:$0xff]
        %v2070 = vld [vmem:[#allocation7 + $0x31b8] sm:$0xff]
        %v2071 = vld [vmem:[#allocation7 + $0x31c0] sm:$0xff]
        %v2072 = vld [vmem:[#allocation7 + $0x31c8] sm:$0xff]
        %v2073 = vld [vmem:[#allocation7 + $0x31d0] sm:$0xff]
        %v2074 = vld [vmem:[#allocation7 + $0x31d8] sm:$0xff]
        %v2075 = vld [vmem:[#allocation7 + $0x31e0] sm:$0xff]
        %v2076 = vld [vmem:[#allocation7 + $0x31e8] sm:$0xff]
        %v2077 = vld [vmem:[#allocation7 + $0x31f0] sm:$0xff]
        %v2078 = vld [vmem:[#allocation7 + $0x31f8] sm:$0xff]
        %v2079 = vld [vmem:[#allocation7 + $0x3200] sm:$0xff]
        %v2080 = vld [vmem:[#allocation7 + $0x3208] sm:$0xff]
        %v2081 = vld [vmem:[#allocation7 + $0x3210] sm:$0xff]
        %v2082 = vld [vmem:[#allocation7 + $0x3218] sm:$0xff]
        %v2083 = vld [vmem:[#allocation7 + $0x3220] sm:$0xff]
        %v2084 = vld [vmem:[#allocation7 + $0x3228] sm:$0xff]
        %v2085 = vld [vmem:[#allocation7 + $0x3230] sm:$0xff]
        %v2086 = vld [vmem:[#allocation7 + $0x3238] sm:$0xff]
        %v2087 = vld [vmem:[#allocation7 + $0x3240] sm:$0xff]
        %v2088 = vld [vmem:[#allocation7 + $0x3248] sm:$0xff]
        %v2089 = vld [vmem:[#allocation7 + $0x3250] sm:$0xff]
        %v2090 = vld [vmem:[#allocation7 + $0x3258] sm:$0xff]
        %v2091 = vld [vmem:[#allocation7 + $0x3260] sm:$0xff]
        %v2092 = vld [vmem:[#allocation7 + $0x3268] sm:$0xff]
        %v2093 = vld [vmem:[#allocation7 + $0x3270] sm:$0xff]
        %v2094 = vld [vmem:[#allocation7 + $0x3278] sm:$0xff]
        %v2095 = vld [vmem:[#allocation7 + $0x3280] sm:$0xff]
        %v2096 = vld [vmem:[#allocation7 + $0x3288] sm:$0xff]
        %v2097 = vld [vmem:[#allocation7 + $0x3290] sm:$0xff]
        %v2098 = vld [vmem:[#allocation7 + $0x3298] sm:$0xff]
        %v2099 = vld [vmem:[#allocation7 + $0x32a0] sm:$0xff]
        %v2100 = vld [vmem:[#allocation7 + $0x32a8] sm:$0xff]
        %v2101 = vld [vmem:[#allocation7 + $0x32b0] sm:$0xff]
        %v2102 = vld [vmem:[#allocation7 + $0x32b8] sm:$0xff]
        %v2103 = vld [vmem:[#allocation7 + $0x32c0] sm:$0xff]
        %v2104 = vld [vmem:[#allocation7 + $0x32c8] sm:$0xff]
        %v2105 = vld [vmem:[#allocation7 + $0x32d0] sm:$0xff]
        %v2106 = vld [vmem:[#allocation7 + $0x32d8] sm:$0xff]
        %v2107 = vld [vmem:[#allocation7 + $0x32e0] sm:$0xff]
        %v2108 = vld [vmem:[#allocation7 + $0x32e8] sm:$0xff]
        %v2109 = vld [vmem:[#allocation7 + $0x32f0] sm:$0xff]
        %v2110 = vld [vmem:[#allocation7 + $0x32f8] sm:$0xff]
        %v2111 = vld [vmem:[#allocation7 + $0x3300] sm:$0xff]
        %v2112 = vld [vmem:[#allocation7 + $0x3308] sm:$0xff]
        %v2113 = vld [vmem:[#allocation7 + $0x3310] sm:$0xff]
        %v2114 = vld [vmem:[#allocation7 + $0x3318] sm:$0xff]
        %v2115 = vld [vmem:[#allocation7 + $0x3320] sm:$0xff]
        %v2116 = vld [vmem:[#allocation7 + $0x3328] sm:$0xff]
        %v2117 = vld [vmem:[#allocation7 + $0x3330] sm:$0xff]
        %v2118 = vld [vmem:[#allocation7 + $0x3338] sm:$0xff]
        %v2119 = vld [vmem:[#allocation7 + $0x3340] sm:$0xff]
        %v2120 = vld [vmem:[#allocation7 + $0x3348] sm:$0xff]
        %v2121 = vld [vmem:[#allocation7 + $0x3350] sm:$0xff]
        %v2122 = vld [vmem:[#allocation7 + $0x3358] sm:$0xff]
        %v2123 = vld [vmem:[#allocation7 + $0x3360] sm:$0xff]
        %v2124 = vld [vmem:[#allocation7 + $0x3368] sm:$0xff]
        %v2125 = vld [vmem:[#allocation7 + $0x3370] sm:$0xff]
        %v2126 = vld [vmem:[#allocation7 + $0x3378] sm:$0xff]
        %v2127 = vld [vmem:[#allocation7 + $0x3380] sm:$0xff]
        %v2128 = vld [vmem:[#allocation7 + $0x3388] sm:$0xff]
        %v2129 = vld [vmem:[#allocation7 + $0x3390] sm:$0xff]
        %v2130 = vld [vmem:[#allocation7 + $0x3398] sm:$0xff]
        %v2131 = vld [vmem:[#allocation7 + $0x33a0] sm:$0xff]
        %v2132 = vld [vmem:[#allocation7 + $0x33a8] sm:$0xff]
        %v2133 = vld [vmem:[#allocation7 + $0x33b0] sm:$0xff]
        %v2134 = vld [vmem:[#allocation7 + $0x33b8] sm:$0xff]
        %v2135 = vld [vmem:[#allocation7 + $0x33c0] sm:$0xff]
        %v2136 = vld [vmem:[#allocation7 + $0x33c8] sm:$0xff]
        %v2137 = vld [vmem:[#allocation7 + $0x33d0] sm:$0xff]
        %v2138 = vld [vmem:[#allocation7 + $0x33d8] sm:$0xff]
        %v2139 = vld [vmem:[#allocation7 + $0x33e0] sm:$0xff]
        %v2140 = vld [vmem:[#allocation7 + $0x33e8] sm:$0xff]
        %v2141 = vld [vmem:[#allocation7 + $0x33f0] sm:$0xff]
        %v2142 = vld [vmem:[#allocation7 + $0x33f8] sm:$0xff]
        %v2143 = vld [vmem:[#allocation7 + $0x3400] sm:$0xff]
        %v2144 = vld [vmem:[#allocation7 + $0x3408] sm:$0xff]
        %v2145 = vld [vmem:[#allocation7 + $0x3410] sm:$0xff]
        %v2146 = vld [vmem:[#allocation7 + $0x3418] sm:$0xff]
        %v2147 = vld [vmem:[#allocation7 + $0x3420] sm:$0xff]
        %v2148 = vld [vmem:[#allocation7 + $0x3428] sm:$0xff]
        %v2149 = vld [vmem:[#allocation7 + $0x3430] sm:$0xff]
        %v2150 = vld [vmem:[#allocation7 + $0x3438] sm:$0xff]
        %v2151 = vld [vmem:[#allocation7 + $0x3440] sm:$0xff]
        %v2152 = vld [vmem:[#allocation7 + $0x3448] sm:$0xff]
        %v2153 = vld [vmem:[#allocation7 + $0x3450] sm:$0xff]
        %v2154 = vld [vmem:[#allocation7 + $0x3458] sm:$0xff]
        %v2155 = vld [vmem:[#allocation7 + $0x3460] sm:$0xff]
        %v2156 = vld [vmem:[#allocation7 + $0x3468] sm:$0xff]
        %v2157 = vld [vmem:[#allocation7 + $0x3470] sm:$0xff]
        %v2158 = vld [vmem:[#allocation7 + $0x3478] sm:$0xff]
        %v2159 = vld [vmem:[#allocation7 + $0x3480] sm:$0xff]
        %v2160 = vld [vmem:[#allocation7 + $0x3488] sm:$0xff]
        %v2161 = vld [vmem:[#allocation7 + $0x3490] sm:$0xff]
        %v2162 = vld [vmem:[#allocation7 + $0x3498] sm:$0xff]
        %v2163 = vld [vmem:[#allocation7 + $0x34a0] sm:$0xff]
        %v2164 = vld [vmem:[#allocation7 + $0x34a8] sm:$0xff]
        %v2165 = vld [vmem:[#allocation7 + $0x34b0] sm:$0xff]
        %v2166 = vld [vmem:[#allocation7 + $0x34b8] sm:$0xff]
        %v2167 = vld [vmem:[#allocation7 + $0x34c0] sm:$0xff]
        %v2168 = vld [vmem:[#allocation7 + $0x34c8] sm:$0xff]
        %v2169 = vld [vmem:[#allocation7 + $0x34d0] sm:$0xff]
        %v2170 = vld [vmem:[#allocation7 + $0x34d8] sm:$0xff]
        %v2171 = vld [vmem:[#allocation7 + $0x34e0] sm:$0xff]
        %v2172 = vld [vmem:[#allocation7 + $0x34e8] sm:$0xff]
        %v2173 = vld [vmem:[#allocation7 + $0x34f0] sm:$0xff]
        %v2174 = vld [vmem:[#allocation7 + $0x34f8] sm:$0xff]
        %v2175 = vld [vmem:[#allocation7 + $0x3500] sm:$0xff]
        %v2176 = vld [vmem:[#allocation7 + $0x3508] sm:$0xff]
        %v2177 = vld [vmem:[#allocation7 + $0x3510] sm:$0xff]
        %v2178 = vld [vmem:[#allocation7 + $0x3518] sm:$0xff]
        %v2179 = vld [vmem:[#allocation7 + $0x3520] sm:$0xff]
        %v2180 = vld [vmem:[#allocation7 + $0x3528] sm:$0xff]
        %v2181 = vld [vmem:[#allocation7 + $0x3530] sm:$0xff]
        %v2182 = vld [vmem:[#allocation7 + $0x3538] sm:$0xff]
        %v2183 = vld [vmem:[#allocation7 + $0x3540] sm:$0xff]
        %v2184 = vld [vmem:[#allocation7 + $0x3548] sm:$0xff]
        %v2185 = vld [vmem:[#allocation7 + $0x3550] sm:$0xff]
        %v2186 = vld [vmem:[#allocation7 + $0x3558] sm:$0xff]
        %v2187 = vld [vmem:[#allocation7 + $0x3560] sm:$0xff]
        %v2188 = vld [vmem:[#allocation7 + $0x3568] sm:$0xff]
        %v2189 = vld [vmem:[#allocation7 + $0x3570] sm:$0xff]
        %v2190 = vld [vmem:[#allocation7 + $0x3578] sm:$0xff]
        %v2191 = vld [vmem:[#allocation7 + $0x3580] sm:$0xff]
        %v2192 = vld [vmem:[#allocation7 + $0x3588] sm:$0xff]
        %v2193 = vld [vmem:[#allocation7 + $0x3590] sm:$0xff]
        %v2194 = vld [vmem:[#allocation7 + $0x3598] sm:$0xff]
        %v2195 = vld [vmem:[#allocation7 + $0x35a0] sm:$0xff]
        %v2196 = vld [vmem:[#allocation7 + $0x35a8] sm:$0xff]
        %v2197 = vld [vmem:[#allocation7 + $0x35b0] sm:$0xff]
        %v2198 = vld [vmem:[#allocation7 + $0x35b8] sm:$0xff]
        %v2199 = vld [vmem:[#allocation7 + $0x35c0] sm:$0xff]
        %v2200 = vld [vmem:[#allocation7 + $0x35c8] sm:$0xff]
        %v2201 = vld [vmem:[#allocation7 + $0x35d0] sm:$0xff]
        %v2202 = vld [vmem:[#allocation7 + $0x35d8] sm:$0xff]
        %v2203 = vld [vmem:[#allocation7 + $0x35e0] sm:$0xff]
        %v2204 = vld [vmem:[#allocation7 + $0x35e8] sm:$0xff]
        %v2205 = vld [vmem:[#allocation7 + $0x35f0] sm:$0xff]
        %v2206 = vld [vmem:[#allocation7 + $0x35f8] sm:$0xff]
        %v2207 = vld [vmem:[#allocation8] sm:$0xff]
        %v2208 = vld [vmem:[#allocation8 + $0x8] sm:$0xff]
        %v2209 = vld [vmem:[#allocation8 + $0x10] sm:$0x3]
        %v2213 = vlaneseq
        %v2214 = vshrl.u32 %v2213, 7
        %v2215 = vsub.s32 0, %v2214
        %v2216 = vrot.slane %v2207, %v2215
        %v2217 = vlaneseq
        %v2218 = vshrl.u32 %v2217, 7
        %v2219 = vsub.s32 1, %v2218
        %v2220 = vrot.slane %v2207, %v2219
        %v2221 = vlaneseq
        %v2222 = vshrl.u32 %v2221, 7
        %v2223 = vsub.s32 2, %v2222
        %v2224 = vrot.slane %v2207, %v2223
        %v2225 = vlaneseq
        %v2226 = vshrl.u32 %v2225, 7
        %v2227 = vsub.s32 3, %v2226
        %v2228 = vrot.slane %v2207, %v2227
        %v2229 = vlaneseq
        %v2230 = vshrl.u32 %v2229, 7
        %v2231 = vsub.s32 4, %v2230
        %v2232 = vrot.slane %v2207, %v2231
        %v2233 = vlaneseq
        %v2234 = vshrl.u32 %v2233, 7
        %v2235 = vsub.s32 5, %v2234
        %v2236 = vrot.slane %v2207, %v2235
        %v2237 = vlaneseq
        %v2238 = vshrl.u32 %v2237, 7
        %v2239 = vsub.s32 6, %v2238
        %v2240 = vrot.slane %v2207, %v2239
        %v2241 = vlaneseq
        %v2242 = vshrl.u32 %v2241, 7
        %v2243 = vsub.s32 7, %v2242
        %v2244 = vrot.slane %v2207, %v2243
        %v2245 = vlaneseq
        %v2246 = vshrl.u32 %v2245, 7
        %v2247 = vsub.s32 0, %v2246
        %v2248 = vrot.slane %v2208, %v2247
        %v2249 = vlaneseq
        %v2250 = vshrl.u32 %v2249, 7
        %v2251 = vsub.s32 1, %v2250
        %v2252 = vrot.slane %v2208, %v2251
        %v2253 = vlaneseq
        %v2254 = vshrl.u32 %v2253, 7
        %v2255 = vsub.s32 2, %v2254
        %v2256 = vrot.slane %v2208, %v2255
        %v2257 = vlaneseq
        %v2258 = vshrl.u32 %v2257, 7
        %v2259 = vsub.s32 3, %v2258
        %v2260 = vrot.slane %v2208, %v2259
        %v2261 = vlaneseq
        %v2262 = vshrl.u32 %v2261, 7
        %v2263 = vsub.s32 4, %v2262
        %v2264 = vrot.slane %v2208, %v2263
        %v2265 = vlaneseq
        %v2266 = vshrl.u32 %v2265, 7
        %v2267 = vsub.s32 5, %v2266
        %v2268 = vrot.slane %v2208, %v2267
        %v2269 = vlaneseq
        %v2270 = vshrl.u32 %v2269, 7
        %v2271 = vsub.s32 6, %v2270
        %v2272 = vrot.slane %v2208, %v2271
        %v2273 = vlaneseq
        %v2274 = vshrl.u32 %v2273, 7
        %v2275 = vsub.s32 7, %v2274
        %v2276 = vrot.slane %v2208, %v2275
        %v2277 = vlaneseq
        %v2278 = vshrl.u32 %v2277, 7
        %v2279 = vsub.s32 0, %v2278
        %v2280 = vrot.slane %v2209, %v2279
        %v2281 = vlaneseq
        %v2282 = vshrl.u32 %v2281, 7
        %v2283 = vsub.s32 1, %v2282
        %v2284 = vrot.slane %v2209, %v2283
        %2303 = vmatprep.subr.mxu0 %v750
        %2304 = vmatpush1.msra.mxu0 %v749
        %2305 = vmatprep.subr.mxu0 %v732
        %2306 = vmatpush1.msra.mxu0 %v731
        %2307 = vmatprep.subr.mxu0 %v714
        %2308 = vmatpush1.msra.mxu0 %v713
        %2309 = vmatprep.subr.mxu0 %v696
        %2310 = vmatpush1.msra.mxu0 %v695
        %2311 = vmatprep.subr.mxu0 %v678
        %2312 = vmatpush1.msra.mxu0 %v677
        %2313 = vmatprep.subr.mxu0 %v660
        %2314 = vmatpush1.msra.mxu0 %v659
        %2315 = vmatprep.subr.mxu0 %v642
        %2316 = vmatpush1.msra.mxu0 %v641
        %2317 = vmatprep.subr.mxu0 %v624
        %2318 = vmatpush1.msra.mxu0 %v623
        %2319 = vmatprep.subr.mxu0 %v606
        %2320 = vmatpush1.msra.mxu0 %v605
        %2321 = vmatprep.subr.mxu0 %v588
        %2322 = vmatpush1.msra.mxu0 %v587
        %2323 = vmatprep.subr.mxu0 %v570
        %2324 = vmatpush1.msra.mxu0 %v569
        %2325 = vmatprep.subr.mxu0 %v552
        %2326 = vmatpush1.msra.mxu0 %v551
        %2327 = vmatprep.subr.mxu0 %v534
        %2328 = vmatpush1.msra.mxu0 %v533
        %2329 = vmatprep.subr.mxu0 %v516
        %2330 = vmatpush1.msra.mxu0 %v515
        %2331 = vmatprep.subr.mxu0 %v498
        %2332 = vmatpush1.msra.mxu0 %v497
        %2333 = vmatprep.subr.mxu0 %v480
        %2334 = vmatpush1.msra.mxu0 %v479
        %2335 = vmatprep.subr.mxu0 %v1038
        %2336 = vmatpush2.msra.mxu0 %v1037
        %2337 = vmatprep.subr.mxu0 %v1020
        %2338 = vmatpush2.msra.mxu0 %v1019
        %2339 = vmatprep.subr.mxu0 %v1002
        %2340 = vmatpush2.msra.mxu0 %v1001
        %2341 = vmatprep.subr.mxu0 %v984
        %2342 = vmatpush2.msra.mxu0 %v983
        %2343 = vmatprep.subr.mxu0 %v966
        %2344 = vmatpush2.msra.mxu0 %v965
        %2345 = vmatprep.subr.mxu0 %v948
        %2346 = vmatpush2.msra.mxu0 %v947
        %2347 = vmatprep.subr.mxu0 %v930
        %2348 = vmatpush2.msra.mxu0 %v929
        %2349 = vmatprep.subr.mxu0 %v912
        %2350 = vmatpush2.msra.mxu0 %v911
        %2351 = vmatprep.subr.mxu0 %v894
        %2352 = vmatpush2.msra.mxu0 %v893
        %2353 = vmatprep.subr.mxu0 %v876
        %2354 = vmatpush2.msra.mxu0 %v875
        %2355 = vmatprep.subr.mxu0 %v858
        %2356 = vmatpush2.msra.mxu0 %v857
        %2357 = vmatprep.subr.mxu0 %v840
        %2358 = vmatpush2.msra.mxu0 %v839
        %2359 = vmatprep.subr.mxu0 %v822
        %2360 = vmatpush2.msra.mxu0 %v821
        %2361 = vmatprep.subr.mxu0 %v804
        %2362 = vmatpush2.msra.mxu0 %v803
        %2363 = vmatprep.subr.mxu0 %v786
        %2364 = vmatpush2.msra.mxu0 %v785
        %2365 = vmatprep.subr.mxu0 %v768
        %2366 = vmatpush2.msra.mxu0 %v767
        %2367 = vmatprep.mubr.f32.mxu0 %v456
        %2368 = vmatmul.mubr.f32.gmra.mxu0 %v455
        %v2369 = vpop.f32.mrf.mxu0
        %v2370 = vadd.f32 %v2216, %v2369
        %v2371 = vpop.f32.mrf.mxu0
        %v2372 = vadd.f32 %v2220, %v2371
        %2373 = vmatprep.mubr.f32.mxu0 %v462
        %2374 = vmatmul.mubr.f32.gmra.mxu0 %v461
        %v2375 = vpop.f32.mrf.mxu0
        %v2376 = vadd.f32 %v2216, %v2375
        %v2377 = vpop.f32.mrf.mxu0
        %v2378 = vadd.f32 %v2220, %v2377
        %2379 = vmatprep.mubr.f32.mxu0 %v468
        %2380 = vmatmul.mubr.f32.gmra.mxu0 %v467
        %v2381 = vpop.f32.mrf.mxu0
        %v2382 = vadd.f32 %v2216, %v2381
        %v2383 = vpop.f32.mrf.mxu0
        %v2384 = vadd.f32 %v2220, %v2383
        %2385 = vmatprep.mubr.f32.mxu0 %v474
        %2386 = vmatmul.mubr.f32.gmra.mxu0 %v473
        %v2387 = vpop.f32.mrf.mxu0
        %v2388 = vadd.f32 %v2216, %v2387
        %v2389 = vpop.f32.mrf.mxu0
        %v2390 = vadd.f32 %v2220, %v2389
        %2391 = vdwg.mxu0
        %2392 = vmatprep.subr.mxu0 %v1326
        %2393 = vmatpush1.msra.mxu0 %v1325
        %2394 = vmatprep.subr.mxu0 %v1308
        %2395 = vmatpush1.msra.mxu0 %v1307
        %2396 = vmatprep.subr.mxu0 %v1290
        %2397 = vmatpush1.msra.mxu0 %v1289
        %2398 = vmatprep.subr.mxu0 %v1272
        %2399 = vmatpush1.msra.mxu0 %v1271
        %2400 = vmatprep.subr.mxu0 %v1254
        %2401 = vmatpush1.msra.mxu0 %v1253
        %2402 = vmatprep.subr.mxu0 %v1236
        %2403 = vmatpush1.msra.mxu0 %v1235
        %2404 = vmatprep.subr.mxu0 %v1218
        %2405 = vmatpush1.msra.mxu0 %v1217
        %2406 = vmatprep.subr.mxu0 %v1200
        %2407 = vmatpush1.msra.mxu0 %v1199
        %2408 = vmatprep.subr.mxu0 %v1182
        %2409 = vmatpush1.msra.mxu0 %v1181
        %2410 = vmatprep.subr.mxu0 %v1164
        %2411 = vmatpush1.msra.mxu0 %v1163
        %2412 = vmatprep.subr.mxu0 %v1146
        %2413 = vmatpush1.msra.mxu0 %v1145
        %2414 = vmatprep.subr.mxu0 %v1128
        %2415 = vmatpush1.msra.mxu0 %v1127
        %2416 = vmatprep.subr.mxu0 %v1110
        %2417 = vmatpush1.msra.mxu0 %v1109
        %2418 = vmatprep.subr.mxu0 %v1092
        %2419 = vmatpush1.msra.mxu0 %v1091
        %2420 = vmatprep.subr.mxu0 %v1074
        %2421 = vmatpush1.msra.mxu0 %v1073
        %2422 = vmatprep.subr.mxu0 %v1056
        %2423 = vmatpush1.msra.mxu0 %v1055
        %2424 = vmatprep.subr.mxu0 %v1614
        %2425 = vmatpush2.msra.mxu0 %v1613
        %2426 = vmatprep.subr.mxu0 %v1596
        %2427 = vmatpush2.msra.mxu0 %v1595
        %2428 = vmatprep.subr.mxu0 %v1578
        %2429 = vmatpush2.msra.mxu0 %v1577
        %2430 = vmatprep.subr.mxu0 %v1560
        %2431 = vmatpush2.msra.mxu0 %v1559
        %2432 = vmatprep.subr.mxu0 %v1542
        %2433 = vmatpush2.msra.mxu0 %v1541
        %2434 = vmatprep.subr.mxu0 %v1524
        %2435 = vmatpush2.msra.mxu0 %v1523
        %2436 = vmatprep.subr.mxu0 %v1506
        %2437 = vmatpush2.msra.mxu0 %v1505
        %2438 = vmatprep.subr.mxu0 %v1488
        %2439 = vmatpush2.msra.mxu0 %v1487
        %2440 = vmatprep.subr.mxu0 %v1470
        %2441 = vmatpush2.msra.mxu0 %v1469
        %2442 = vmatprep.subr.mxu0 %v1452
        %2443 = vmatpush2.msra.mxu0 %v1451
        %2444 = vmatprep.subr.mxu0 %v1434
        %2445 = vmatpush2.msra.mxu0 %v1433
        %2446 = vmatprep.subr.mxu0 %v1416
        %2447 = vmatpush2.msra.mxu0 %v1415
        %2448 = vmatprep.subr.mxu0 %v1398
        %2449 = vmatpush2.msra.mxu0 %v1397
        %2450 = vmatprep.subr.mxu0 %v1380
        %2451 = vmatpush2.msra.mxu0 %v1379
        %2452 = vmatprep.subr.mxu0 %v1362
        %2453 = vmatpush2.msra.mxu0 %v1361
        %2454 = vmatprep.subr.mxu0 %v1344
        %2455 = vmatpush2.msra.mxu0 %v1343
        %2456 = vmatprep.mubr.f32.mxu0 %v458
        %2457 = vmatmul.mubr.f32.gmra.mxu0 %v457
        %v2458 = vpop.f32.mrf.mxu0
        %v2459 = vadd.f32 %v2370, %v2458
        %v2460 = vpop.f32.mrf.mxu0
        %v2461 = vadd.f32 %v2372, %v2460
        %2462 = vmatprep.mubr.f32.mxu0 %v464
        %2463 = vmatmul.mubr.f32.gmra.mxu0 %v463
        %v2464 = vpop.f32.mrf.mxu0
        %v2465 = vadd.f32 %v2376, %v2464
        %v2466 = vpop.f32.mrf.mxu0
        %v2467 = vadd.f32 %v2378, %v2466
        %2468 = vmatprep.mubr.f32.mxu0 %v470
        %2469 = vmatmul.mubr.f32.gmra.mxu0 %v469
        %v2470 = vpop.f32.mrf.mxu0
        %v2471 = vadd.f32 %v2382, %v2470
        %v2472 = vpop.f32.mrf.mxu0
        %v2473 = vadd.f32 %v2384, %v2472
        %2474 = vmatprep.mubr.f32.mxu0 %v476
        %2475 = vmatmul.mubr.f32.gmra.mxu0 %v475
        %v2476 = vpop.f32.mrf.mxu0
        %v2477 = vadd.f32 %v2388, %v2476
        %v2478 = vpop.f32.mrf.mxu0
        %v2479 = vadd.f32 %v2390, %v2478
        %2480 = vdwg.mxu0
        %2481 = vmatprep.subr.mxu0 %v1902
        %2482 = vmatpush1.msra.mxu0 %v1901
        %2483 = vmatprep.subr.mxu0 %v1884
        %2484 = vmatpush1.msra.mxu0 %v1883
        %2485 = vmatprep.subr.mxu0 %v1866
        %2486 = vmatpush1.msra.mxu0 %v1865
        %2487 = vmatprep.subr.mxu0 %v1848
        %2488 = vmatpush1.msra.mxu0 %v1847
        %2489 = vmatprep.subr.mxu0 %v1830
        %2490 = vmatpush1.msra.mxu0 %v1829
        %2491 = vmatprep.subr.mxu0 %v1812
        %2492 = vmatpush1.msra.mxu0 %v1811
        %2493 = vmatprep.subr.mxu0 %v1794
        %2494 = vmatpush1.msra.mxu0 %v1793
        %2495 = vmatprep.subr.mxu0 %v1776
        %2496 = vmatpush1.msra.mxu0 %v1775
        %2497 = vmatprep.subr.mxu0 %v1758
        %2498 = vmatpush1.msra.mxu0 %v1757
        %2499 = vmatprep.subr.mxu0 %v1740
        %2500 = vmatpush1.msra.mxu0 %v1739
        %2501 = vmatprep.subr.mxu0 %v1722
        %2502 = vmatpush1.msra.mxu0 %v1721
        %2503 = vmatprep.subr.mxu0 %v1704
        %2504 = vmatpush1.msra.mxu0 %v1703
        %2505 = vmatprep.subr.mxu0 %v1686
        %2506 = vmatpush1.msra.mxu0 %v1685
        %2507 = vmatprep.subr.mxu0 %v1668
        %2508 = vmatpush1.msra.mxu0 %v1667
        %2509 = vmatprep.subr.mxu0 %v1650
        %2510 = vmatpush1.msra.mxu0 %v1649
        %2511 = vmatprep.subr.mxu0 %v1632
        %2512 = vmatpush1.msra.mxu0 %v1631
        %2513 = vmatprep.subr.mxu0 %v2190
        %2514 = vmatpush2.msra.mxu0 %v2189
        %2515 = vmatprep.subr.mxu0 %v2172
        %2516 = vmatpush2.msra.mxu0 %v2171
        %2517 = vmatprep.subr.mxu0 %v2154
        %2518 = vmatpush2.msra.mxu0 %v2153
        %2519 = vmatprep.subr.mxu0 %v2136
        %2520 = vmatpush2.msra.mxu0 %v2135
        %2521 = vmatprep.subr.mxu0 %v2118
        %2522 = vmatpush2.msra.mxu0 %v2117
        %2523 = vmatprep.subr.mxu0 %v2100
        %2524 = vmatpush2.msra.mxu0 %v2099
        %2525 = vmatprep.subr.mxu0 %v2082
        %2526 = vmatpush2.msra.mxu0 %v2081
        %2527 = vmatprep.subr.mxu0 %v2064
        %2528 = vmatpush2.msra.mxu0 %v2063
        %2529 = vmatprep.subr.mxu0 %v2046
        %2530 = vmatpush2.msra.mxu0 %v2045
        %2531 = vmatprep.subr.mxu0 %v2028
        %2532 = vmatpush2.msra.mxu0 %v2027
        %2533 = vmatprep.subr.mxu0 %v2010
        %2534 = vmatpush2.msra.mxu0 %v2009
        %2535 = vmatprep.subr.mxu0 %v1992
        %2536 = vmatpush2.msra.mxu0 %v1991
        %2537 = vmatprep.subr.mxu0 %v1974
        %2538 = vmatpush2.msra.mxu0 %v1973
        %2539 = vmatprep.subr.mxu0 %v1956
        %2540 = vmatpush2.msra.mxu0 %v1955
        %2541 = vmatprep.subr.mxu0 %v1938
        %2542 = vmatpush2.msra.mxu0 %v1937
        %2543 = vmatprep.subr.mxu0 %v1920
        %2544 = vmatpush2.msra.mxu0 %v1919
        %2545 = vmatprep.mubr.f32.mxu0 %v460
        %2546 = vmatmul.mubr.f32.gmra.mxu0 %v459
        %v2547 = vpop.f32.mrf.mxu0
        %v2548 = vadd.f32 %v2459, %v2547
        %v2549 = vpop.f32.mrf.mxu0
        %v2550 = vadd.f32 %v2461, %v2549
        %2551 = vmatprep.mubr.f32.mxu0 %v466
        %2552 = vmatmul.mubr.f32.gmra.mxu0 %v465
        %v2553 = vpop.f32.mrf.mxu0
        %v2554 = vadd.f32 %v2465, %v2553
        %v2555 = vpop.f32.mrf.mxu0
        %v2556 = vadd.f32 %v2467, %v2555
        %2557 = vmatprep.mubr.f32.mxu0 %v472
        %2558 = vmatmul.mubr.f32.gmra.mxu0 %v471
        %v2559 = vpop.f32.mrf.mxu0
        %v2560 = vadd.f32 %v2471, %v2559
        %v2561 = vpop.f32.mrf.mxu0
        %v2562 = vadd.f32 %v2473, %v2561
        %2563 = vmatprep.mubr.f32.mxu0 %v478
        %2564 = vmatmul.mubr.f32.gmra.mxu0 %v477
        %v2565 = vpop.f32.mrf.mxu0
        %v2566 = vadd.f32 %v2477, %v2565
        %v2567 = vpop.f32.mrf.mxu0
        %v2568 = vadd.f32 %v2479, %v2567
        %2569 = vdwg.mxu0
        %2570 = vmatprep.subr.mxu0 %v752
        %2571 = vmatpush1.msra.mxu0 %v751
        %2572 = vmatprep.subr.mxu0 %v734
        %2573 = vmatpush1.msra.mxu0 %v733
        %2574 = vmatprep.subr.mxu0 %v716
        %2575 = vmatpush1.msra.mxu0 %v715
        %2576 = vmatprep.subr.mxu0 %v698
        %2577 = vmatpush1.msra.mxu0 %v697
        %2578 = vmatprep.subr.mxu0 %v680
        %2579 = vmatpush1.msra.mxu0 %v679
        %2580 = vmatprep.subr.mxu0 %v662
        %2581 = vmatpush1.msra.mxu0 %v661
        %2582 = vmatprep.subr.mxu0 %v644
        %2583 = vmatpush1.msra.mxu0 %v643
        %2584 = vmatprep.subr.mxu0 %v626
        %2585 = vmatpush1.msra.mxu0 %v625
        %2586 = vmatprep.subr.mxu0 %v608
        %2587 = vmatpush1.msra.mxu0 %v607
        %2588 = vmatprep.subr.mxu0 %v590
        %2589 = vmatpush1.msra.mxu0 %v589
        %2590 = vmatprep.subr.mxu0 %v572
        %2591 = vmatpush1.msra.mxu0 %v571
        %2592 = vmatprep.subr.mxu0 %v554
        %2593 = vmatpush1.msra.mxu0 %v553
        %2594 = vmatprep.subr.mxu0 %v536
        %2595 = vmatpush1.msra.mxu0 %v535
        %2596 = vmatprep.subr.mxu0 %v518
        %2597 = vmatpush1.msra.mxu0 %v517
        %2598 = vmatprep.subr.mxu0 %v500
        %2599 = vmatpush1.msra.mxu0 %v499
        %2600 = vmatprep.subr.mxu0 %v482
        %2601 = vmatpush1.msra.mxu0 %v481
        %2602 = vmatprep.subr.mxu0 %v1040
        %2603 = vmatpush2.msra.mxu0 %v1039
        %2604 = vmatprep.subr.mxu0 %v1022
        %2605 = vmatpush2.msra.mxu0 %v1021
        %2606 = vmatprep.subr.mxu0 %v1004
        %2607 = vmatpush2.msra.mxu0 %v1003
        %2608 = vmatprep.subr.mxu0 %v986
        %2609 = vmatpush2.msra.mxu0 %v985
        %2610 = vmatprep.subr.mxu0 %v968
        %2611 = vmatpush2.msra.mxu0 %v967
        %2612 = vmatprep.subr.mxu0 %v950
        %2613 = vmatpush2.msra.mxu0 %v949
        %2614 = vmatprep.subr.mxu0 %v932
        %2615 = vmatpush2.msra.mxu0 %v931
        %2616 = vmatprep.subr.mxu0 %v914
        %2617 = vmatpush2.msra.mxu0 %v913
        %2618 = vmatprep.subr.mxu0 %v896
        %2619 = vmatpush2.msra.mxu0 %v895
        %2620 = vmatprep.subr.mxu0 %v878
        %2621 = vmatpush2.msra.mxu0 %v877
        %2622 = vmatprep.subr.mxu0 %v860
        %2623 = vmatpush2.msra.mxu0 %v859
        %2624 = vmatprep.subr.mxu0 %v842
        %2625 = vmatpush2.msra.mxu0 %v841
        %2626 = vmatprep.subr.mxu0 %v824
        %2627 = vmatpush2.msra.mxu0 %v823
        %2628 = vmatprep.subr.mxu0 %v806
        %2629 = vmatpush2.msra.mxu0 %v805
        %2630 = vmatprep.subr.mxu0 %v788
        %2631 = vmatpush2.msra.mxu0 %v787
        %2632 = vmatprep.subr.mxu0 %v770
        %2633 = vmatpush2.msra.mxu0 %v769
        %2634 = vmatprep.mubr.f32.mxu0 %v456
        %2635 = vmatmul.mubr.f32.gmra.mxu0 %v455
        %v2636 = vpop.f32.mrf.mxu0
        %v2637 = vadd.f32 %v2224, %v2636
        %v2638 = vpop.f32.mrf.mxu0
        %v2639 = vadd.f32 %v2228, %v2638
        %2640 = vmatprep.mubr.f32.mxu0 %v462
        %2641 = vmatmul.mubr.f32.gmra.mxu0 %v461
        %v2642 = vpop.f32.mrf.mxu0
        %v2643 = vadd.f32 %v2224, %v2642
        %v2644 = vpop.f32.mrf.mxu0
        %v2645 = vadd.f32 %v2228, %v2644
        %2646 = vmatprep.mubr.f32.mxu0 %v468
        %2647 = vmatmul.mubr.f32.gmra.mxu0 %v467
        %v2648 = vpop.f32.mrf.mxu0
        %v2649 = vadd.f32 %v2224, %v2648
        %v2650 = vpop.f32.mrf.mxu0
        %v2651 = vadd.f32 %v2228, %v2650
        %2652 = vmatprep.mubr.f32.mxu0 %v474
        %2653 = vmatmul.mubr.f32.gmra.mxu0 %v473
        %v2654 = vpop.f32.mrf.mxu0
        %v2655 = vadd.f32 %v2224, %v2654
        %v2656 = vpop.f32.mrf.mxu0
        %v2657 = vadd.f32 %v2228, %v2656
        %2658 = vdwg.mxu0
        %2659 = vmatprep.subr.mxu0 %v1328
        %2660 = vmatpush1.msra.mxu0 %v1327
        %2661 = vmatprep.subr.mxu0 %v1310
        %2662 = vmatpush1.msra.mxu0 %v1309
        %2663 = vmatprep.subr.mxu0 %v1292
        %2664 = vmatpush1.msra.mxu0 %v1291
        %2665 = vmatprep.subr.mxu0 %v1274
        %2666 = vmatpush1.msra.mxu0 %v1273
        %2667 = vmatprep.subr.mxu0 %v1256
        %2668 = vmatpush1.msra.mxu0 %v1255
        %2669 = vmatprep.subr.mxu0 %v1238
        %2670 = vmatpush1.msra.mxu0 %v1237
        %2671 = vmatprep.subr.mxu0 %v1220
        %2672 = vmatpush1.msra.mxu0 %v1219
        %2673 = vmatprep.subr.mxu0 %v1202
        %2674 = vmatpush1.msra.mxu0 %v1201
        %2675 = vmatprep.subr.mxu0 %v1184
        %2676 = vmatpush1.msra.mxu0 %v1183
        %2677 = vmatprep.subr.mxu0 %v1166
        %2678 = vmatpush1.msra.mxu0 %v1165
        %2679 = vmatprep.subr.mxu0 %v1148
        %2680 = vmatpush1.msra.mxu0 %v1147
        %2681 = vmatprep.subr.mxu0 %v1130
        %2682 = vmatpush1.msra.mxu0 %v1129
        %2683 = vmatprep.subr.mxu0 %v1112
        %2684 = vmatpush1.msra.mxu0 %v1111
        %2685 = vmatprep.subr.mxu0 %v1094
        %2686 = vmatpush1.msra.mxu0 %v1093
        %2687 = vmatprep.subr.mxu0 %v1076
        %2688 = vmatpush1.msra.mxu0 %v1075
        %2689 = vmatprep.subr.mxu0 %v1058
        %2690 = vmatpush1.msra.mxu0 %v1057
        %2691 = vmatprep.subr.mxu0 %v1616
        %2692 = vmatpush2.msra.mxu0 %v1615
        %2693 = vmatprep.subr.mxu0 %v1598
        %2694 = vmatpush2.msra.mxu0 %v1597
        %2695 = vmatprep.subr.mxu0 %v1580
        %2696 = vmatpush2.msra.mxu0 %v1579
        %2697 = vmatprep.subr.mxu0 %v1562
        %2698 = vmatpush2.msra.mxu0 %v1561
        %2699 = vmatprep.subr.mxu0 %v1544
        %2700 = vmatpush2.msra.mxu0 %v1543
        %2701 = vmatprep.subr.mxu0 %v1526
        %2702 = vmatpush2.msra.mxu0 %v1525
        %2703 = vmatprep.subr.mxu0 %v1508
        %2704 = vmatpush2.msra.mxu0 %v1507
        %2705 = vmatprep.subr.mxu0 %v1490
        %2706 = vmatpush2.msra.mxu0 %v1489
        %2707 = vmatprep.subr.mxu0 %v1472
        %2708 = vmatpush2.msra.mxu0 %v1471
        %2709 = vmatprep.subr.mxu0 %v1454
        %2710 = vmatpush2.msra.mxu0 %v1453
        %2711 = vmatprep.subr.mxu0 %v1436
        %2712 = vmatpush2.msra.mxu0 %v1435
        %2713 = vmatprep.subr.mxu0 %v1418
        %2714 = vmatpush2.msra.mxu0 %v1417
        %2715 = vmatprep.subr.mxu0 %v1400
        %2716 = vmatpush2.msra.mxu0 %v1399
        %2717 = vmatprep.subr.mxu0 %v1382
        %2718 = vmatpush2.msra.mxu0 %v1381
        %2719 = vmatprep.subr.mxu0 %v1364
        %2720 = vmatpush2.msra.mxu0 %v1363
        %2721 = vmatprep.subr.mxu0 %v1346
        %2722 = vmatpush2.msra.mxu0 %v1345
        %2723 = vmatprep.mubr.f32.mxu0 %v458
        %2724 = vmatmul.mubr.f32.gmra.mxu0 %v457
        %v2725 = vpop.f32.mrf.mxu0
        %v2726 = vadd.f32 %v2637, %v2725
        %v2727 = vpop.f32.mrf.mxu0
        %v2728 = vadd.f32 %v2639, %v2727
        %2729 = vmatprep.mubr.f32.mxu0 %v464
        %2730 = vmatmul.mubr.f32.gmra.mxu0 %v463
        %v2731 = vpop.f32.mrf.mxu0
        %v2732 = vadd.f32 %v2643, %v2731
        %v2733 = vpop.f32.mrf.mxu0
        %v2734 = vadd.f32 %v2645, %v2733
        %2735 = vmatprep.mubr.f32.mxu0 %v470
        %2736 = vmatmul.mubr.f32.gmra.mxu0 %v469
        %v2737 = vpop.f32.mrf.mxu0
        %v2738 = vadd.f32 %v2649, %v2737
        %v2739 = vpop.f32.mrf.mxu0
        %v2740 = vadd.f32 %v2651, %v2739
        %2741 = vmatprep.mubr.f32.mxu0 %v476
        %2742 = vmatmul.mubr.f32.gmra.mxu0 %v475
        %v2743 = vpop.f32.mrf.mxu0
        %v2744 = vadd.f32 %v2655, %v2743
        %v2745 = vpop.f32.mrf.mxu0
        %v2746 = vadd.f32 %v2657, %v2745
        %2747 = vdwg.mxu0
        %2748 = vmatprep.subr.mxu0 %v1904
        %2749 = vmatpush1.msra.mxu0 %v1903
        %2750 = vmatprep.subr.mxu0 %v1886
        %2751 = vmatpush1.msra.mxu0 %v1885
        %2752 = vmatprep.subr.mxu0 %v1868
        %2753 = vmatpush1.msra.mxu0 %v1867
        %2754 = vmatprep.subr.mxu0 %v1850
        %2755 = vmatpush1.msra.mxu0 %v1849
        %2756 = vmatprep.subr.mxu0 %v1832
        %2757 = vmatpush1.msra.mxu0 %v1831
        %2758 = vmatprep.subr.mxu0 %v1814
        %2759 = vmatpush1.msra.mxu0 %v1813
        %2760 = vmatprep.subr.mxu0 %v1796
        %2761 = vmatpush1.msra.mxu0 %v1795
        %2762 = vmatprep.subr.mxu0 %v1778
        %2763 = vmatpush1.msra.mxu0 %v1777
        %2764 = vmatprep.subr.mxu0 %v1760
        %2765 = vmatpush1.msra.mxu0 %v1759
        %2766 = vmatprep.subr.mxu0 %v1742
        %2767 = vmatpush1.msra.mxu0 %v1741
        %2768 = vmatprep.subr.mxu0 %v1724
        %2769 = vmatpush1.msra.mxu0 %v1723
        %2770 = vmatprep.subr.mxu0 %v1706
        %2771 = vmatpush1.msra.mxu0 %v1705
        %2772 = vmatprep.subr.mxu0 %v1688
        %2773 = vmatpush1.msra.mxu0 %v1687
        %2774 = vmatprep.subr.mxu0 %v1670
        %2775 = vmatpush1.msra.mxu0 %v1669
        %2776 = vmatprep.subr.mxu0 %v1652
        %2777 = vmatpush1.msra.mxu0 %v1651
        %2778 = vmatprep.subr.mxu0 %v1634
        %2779 = vmatpush1.msra.mxu0 %v1633
        %2780 = vmatprep.subr.mxu0 %v2192
        %2781 = vmatpush2.msra.mxu0 %v2191
        %2782 = vmatprep.subr.mxu0 %v2174
        %2783 = vmatpush2.msra.mxu0 %v2173
        %2784 = vmatprep.subr.mxu0 %v2156
        %2785 = vmatpush2.msra.mxu0 %v2155
        %2786 = vmatprep.subr.mxu0 %v2138
        %2787 = vmatpush2.msra.mxu0 %v2137
        %2788 = vmatprep.subr.mxu0 %v2120
        %2789 = vmatpush2.msra.mxu0 %v2119
        %2790 = vmatprep.subr.mxu0 %v2102
        %2791 = vmatpush2.msra.mxu0 %v2101
        %2792 = vmatprep.subr.mxu0 %v2084
        %2793 = vmatpush2.msra.mxu0 %v2083
        %2794 = vmatprep.subr.mxu0 %v2066
        %2795 = vmatpush2.msra.mxu0 %v2065
        %2796 = vmatprep.subr.mxu0 %v2048
        %2797 = vmatpush2.msra.mxu0 %v2047
        %2798 = vmatprep.subr.mxu0 %v2030
        %2799 = vmatpush2.msra.mxu0 %v2029
        %2800 = vmatprep.subr.mxu0 %v2012
        %2801 = vmatpush2.msra.mxu0 %v2011
        %2802 = vmatprep.subr.mxu0 %v1994
        %2803 = vmatpush2.msra.mxu0 %v1993
        %2804 = vmatprep.subr.mxu0 %v1976
        %2805 = vmatpush2.msra.mxu0 %v1975
        %2806 = vmatprep.subr.mxu0 %v1958
        %2807 = vmatpush2.msra.mxu0 %v1957
        %2808 = vmatprep.subr.mxu0 %v1940
        %2809 = vmatpush2.msra.mxu0 %v1939
        %2810 = vmatprep.subr.mxu0 %v1922
        %2811 = vmatpush2.msra.mxu0 %v1921
        %2812 = vmatprep.mubr.f32.mxu0 %v460
        %2813 = vmatmul.mubr.f32.gmra.mxu0 %v459
        %v2814 = vpop.f32.mrf.mxu0
        %v2815 = vadd.f32 %v2726, %v2814
        %v2816 = vpop.f32.mrf.mxu0
        %v2817 = vadd.f32 %v2728, %v2816
        %2818 = vmatprep.mubr.f32.mxu0 %v466
        %2819 = vmatmul.mubr.f32.gmra.mxu0 %v465
        %v2820 = vpop.f32.mrf.mxu0
        %v2821 = vadd.f32 %v2732, %v2820
        %v2822 = vpop.f32.mrf.mxu0
        %v2823 = vadd.f32 %v2734, %v2822
        %2824 = vmatprep.mubr.f32.mxu0 %v472
        %2825 = vmatmul.mubr.f32.gmra.mxu0 %v471
        %v2826 = vpop.f32.mrf.mxu0
        %v2827 = vadd.f32 %v2738, %v2826
        %v2828 = vpop.f32.mrf.mxu0
        %v2829 = vadd.f32 %v2740, %v2828
        %2830 = vmatprep.mubr.f32.mxu0 %v478
        %2831 = vmatmul.mubr.f32.gmra.mxu0 %v477
        %v2832 = vpop.f32.mrf.mxu0
        %v2833 = vadd.f32 %v2744, %v2832
        %v2834 = vpop.f32.mrf.mxu0
        %v2835 = vadd.f32 %v2746, %v2834
        %2836 = vdwg.mxu0
        %2837 = vmatprep.subr.mxu0 %v754
        %2838 = vmatpush1.msra.mxu0 %v753
        %2839 = vmatprep.subr.mxu0 %v736
        %2840 = vmatpush1.msra.mxu0 %v735
        %2841 = vmatprep.subr.mxu0 %v718
        %2842 = vmatpush1.msra.mxu0 %v717
        %2843 = vmatprep.subr.mxu0 %v700
        %2844 = vmatpush1.msra.mxu0 %v699
        %2845 = vmatprep.subr.mxu0 %v682
        %2846 = vmatpush1.msra.mxu0 %v681
        %2847 = vmatprep.subr.mxu0 %v664
        %2848 = vmatpush1.msra.mxu0 %v663
        %2849 = vmatprep.subr.mxu0 %v646
        %2850 = vmatpush1.msra.mxu0 %v645
        %2851 = vmatprep.subr.mxu0 %v628
        %2852 = vmatpush1.msra.mxu0 %v627
        %2853 = vmatprep.subr.mxu0 %v610
        %2854 = vmatpush1.msra.mxu0 %v609
        %2855 = vmatprep.subr.mxu0 %v592
        %2856 = vmatpush1.msra.mxu0 %v591
        %2857 = vmatprep.subr.mxu0 %v574
        %2858 = vmatpush1.msra.mxu0 %v573
        %2859 = vmatprep.subr.mxu0 %v556
        %2860 = vmatpush1.msra.mxu0 %v555
        %2861 = vmatprep.subr.mxu0 %v538
        %2862 = vmatpush1.msra.mxu0 %v537
        %2863 = vmatprep.subr.mxu0 %v520
        %2864 = vmatpush1.msra.mxu0 %v519
        %2865 = vmatprep.subr.mxu0 %v502
        %2866 = vmatpush1.msra.mxu0 %v501
        %2867 = vmatprep.subr.mxu0 %v484
        %2868 = vmatpush1.msra.mxu0 %v483
        %2869 = vmatprep.subr.mxu0 %v1042
        %2870 = vmatpush2.msra.mxu0 %v1041
        %2871 = vmatprep.subr.mxu0 %v1024
        %2872 = vmatpush2.msra.mxu0 %v1023
        %2873 = vmatprep.subr.mxu0 %v1006
        %2874 = vmatpush2.msra.mxu0 %v1005
        %2875 = vmatprep.subr.mxu0 %v988
        %2876 = vmatpush2.msra.mxu0 %v987
        %2877 = vmatprep.subr.mxu0 %v970
        %2878 = vmatpush2.msra.mxu0 %v969
        %2879 = vmatprep.subr.mxu0 %v952
        %2880 = vmatpush2.msra.mxu0 %v951
        %2881 = vmatprep.subr.mxu0 %v934
        %2882 = vmatpush2.msra.mxu0 %v933
        %2883 = vmatprep.subr.mxu0 %v916
        %2884 = vmatpush2.msra.mxu0 %v915
        %2885 = vmatprep.subr.mxu0 %v898
        %2886 = vmatpush2.msra.mxu0 %v897
        %2887 = vmatprep.subr.mxu0 %v880
        %2888 = vmatpush2.msra.mxu0 %v879
        %2889 = vmatprep.subr.mxu0 %v862
        %2890 = vmatpush2.msra.mxu0 %v861
        %2891 = vmatprep.subr.mxu0 %v844
        %2892 = vmatpush2.msra.mxu0 %v843
        %2893 = vmatprep.subr.mxu0 %v826
        %2894 = vmatpush2.msra.mxu0 %v825
        %2895 = vmatprep.subr.mxu0 %v808
        %2896 = vmatpush2.msra.mxu0 %v807
        %2897 = vmatprep.subr.mxu0 %v790
        %2898 = vmatpush2.msra.mxu0 %v789
        %2899 = vmatprep.subr.mxu0 %v772
        %2900 = vmatpush2.msra.mxu0 %v771
        %2901 = vmatprep.mubr.f32.mxu0 %v456
        %2902 = vmatmul.mubr.f32.gmra.mxu0 %v455
        %v2903 = vpop.f32.mrf.mxu0
        %v2904 = vadd.f32 %v2232, %v2903
        %v2905 = vpop.f32.mrf.mxu0
        %v2906 = vadd.f32 %v2236, %v2905
        %2907 = vmatprep.mubr.f32.mxu0 %v462
        %2908 = vmatmul.mubr.f32.gmra.mxu0 %v461
        %v2909 = vpop.f32.mrf.mxu0
        %v2910 = vadd.f32 %v2232, %v2909
        %v2911 = vpop.f32.mrf.mxu0
        %v2912 = vadd.f32 %v2236, %v2911
        %2913 = vmatprep.mubr.f32.mxu0 %v468
        %2914 = vmatmul.mubr.f32.gmra.mxu0 %v467
        %v2915 = vpop.f32.mrf.mxu0
        %v2916 = vadd.f32 %v2232, %v2915
        %v2917 = vpop.f32.mrf.mxu0
        %v2918 = vadd.f32 %v2236, %v2917
        %2919 = vmatprep.mubr.f32.mxu0 %v474
        %2920 = vmatmul.mubr.f32.gmra.mxu0 %v473
        %v2921 = vpop.f32.mrf.mxu0
        %v2922 = vadd.f32 %v2232, %v2921
        %v2923 = vpop.f32.mrf.mxu0
        %v2924 = vadd.f32 %v2236, %v2923
        %2925 = vdwg.mxu0
        %2926 = vmatprep.subr.mxu0 %v1330
        %2927 = vmatpush1.msra.mxu0 %v1329
        %2928 = vmatprep.subr.mxu0 %v1312
        %2929 = vmatpush1.msra.mxu0 %v1311
        %2930 = vmatprep.subr.mxu0 %v1294
        %2931 = vmatpush1.msra.mxu0 %v1293
        %2932 = vmatprep.subr.mxu0 %v1276
        %2933 = vmatpush1.msra.mxu0 %v1275
        %2934 = vmatprep.subr.mxu0 %v1258
        %2935 = vmatpush1.msra.mxu0 %v1257
        %2936 = vmatprep.subr.mxu0 %v1240
        %2937 = vmatpush1.msra.mxu0 %v1239
        %2938 = vmatprep.subr.mxu0 %v1222
        %2939 = vmatpush1.msra.mxu0 %v1221
        %2940 = vmatprep.subr.mxu0 %v1204
        %2941 = vmatpush1.msra.mxu0 %v1203
        %2942 = vmatprep.subr.mxu0 %v1186
        %2943 = vmatpush1.msra.mxu0 %v1185
        %2944 = vmatprep.subr.mxu0 %v1168
        %2945 = vmatpush1.msra.mxu0 %v1167
        %2946 = vmatprep.subr.mxu0 %v1150
        %2947 = vmatpush1.msra.mxu0 %v1149
        %2948 = vmatprep.subr.mxu0 %v1132
        %2949 = vmatpush1.msra.mxu0 %v1131
        %2950 = vmatprep.subr.mxu0 %v1114
        %2951 = vmatpush1.msra.mxu0 %v1113
        %2952 = vmatprep.subr.mxu0 %v1096
        %2953 = vmatpush1.msra.mxu0 %v1095
        %2954 = vmatprep.subr.mxu0 %v1078
        %2955 = vmatpush1.msra.mxu0 %v1077
        %2956 = vmatprep.subr.mxu0 %v1060
        %2957 = vmatpush1.msra.mxu0 %v1059
        %2958 = vmatprep.subr.mxu0 %v1618
        %2959 = vmatpush2.msra.mxu0 %v1617
        %2960 = vmatprep.subr.mxu0 %v1600
        %2961 = vmatpush2.msra.mxu0 %v1599
        %2962 = vmatprep.subr.mxu0 %v1582
        %2963 = vmatpush2.msra.mxu0 %v1581
        %2964 = vmatprep.subr.mxu0 %v1564
        %2965 = vmatpush2.msra.mxu0 %v1563
        %2966 = vmatprep.subr.mxu0 %v1546
        %2967 = vmatpush2.msra.mxu0 %v1545
        %2968 = vmatprep.subr.mxu0 %v1528
        %2969 = vmatpush2.msra.mxu0 %v1527
        %2970 = vmatprep.subr.mxu0 %v1510
        %2971 = vmatpush2.msra.mxu0 %v1509
        %2972 = vmatprep.subr.mxu0 %v1492
        %2973 = vmatpush2.msra.mxu0 %v1491
        %2974 = vmatprep.subr.mxu0 %v1474
        %2975 = vmatpush2.msra.mxu0 %v1473
        %2976 = vmatprep.subr.mxu0 %v1456
        %2977 = vmatpush2.msra.mxu0 %v1455
        %2978 = vmatprep.subr.mxu0 %v1438
        %2979 = vmatpush2.msra.mxu0 %v1437
        %2980 = vmatprep.subr.mxu0 %v1420
        %2981 = vmatpush2.msra.mxu0 %v1419
        %2982 = vmatprep.subr.mxu0 %v1402
        %2983 = vmatpush2.msra.mxu0 %v1401
        %2984 = vmatprep.subr.mxu0 %v1384
        %2985 = vmatpush2.msra.mxu0 %v1383
        %2986 = vmatprep.subr.mxu0 %v1366
        %2987 = vmatpush2.msra.mxu0 %v1365
        %2988 = vmatprep.subr.mxu0 %v1348
        %2989 = vmatpush2.msra.mxu0 %v1347
        %2990 = vmatprep.mubr.f32.mxu0 %v458
        %2991 = vmatmul.mubr.f32.gmra.mxu0 %v457
        %v2992 = vpop.f32.mrf.mxu0
        %v2993 = vadd.f32 %v2904, %v2992
        %v2994 = vpop.f32.mrf.mxu0
        %v2995 = vadd.f32 %v2906, %v2994
        %2996 = vmatprep.mubr.f32.mxu0 %v464
        %2997 = vmatmul.mubr.f32.gmra.mxu0 %v463
        %v2998 = vpop.f32.mrf.mxu0
        %v2999 = vadd.f32 %v2910, %v2998
        %v3000 = vpop.f32.mrf.mxu0
        %v3001 = vadd.f32 %v2912, %v3000
        %3002 = vmatprep.mubr.f32.mxu0 %v470
        %3003 = vmatmul.mubr.f32.gmra.mxu0 %v469
        %v3004 = vpop.f32.mrf.mxu0
        %v3005 = vadd.f32 %v2916, %v3004
        %v3006 = vpop.f32.mrf.mxu0
        %v3007 = vadd.f32 %v2918, %v3006
        %3008 = vmatprep.mubr.f32.mxu0 %v476
        %3009 = vmatmul.mubr.f32.gmra.mxu0 %v475
        %v3010 = vpop.f32.mrf.mxu0
        %v3011 = vadd.f32 %v2922, %v3010
        %v3012 = vpop.f32.mrf.mxu0
        %v3013 = vadd.f32 %v2924, %v3012
        %3014 = vdwg.mxu0
        %3015 = vmatprep.subr.mxu0 %v1906
        %3016 = vmatpush1.msra.mxu0 %v1905
        %3017 = vmatprep.subr.mxu0 %v1888
        %3018 = vmatpush1.msra.mxu0 %v1887
        %3019 = vmatprep.subr.mxu0 %v1870
        %3020 = vmatpush1.msra.mxu0 %v1869
        %3021 = vmatprep.subr.mxu0 %v1852
        %3022 = vmatpush1.msra.mxu0 %v1851
        %3023 = vmatprep.subr.mxu0 %v1834
        %3024 = vmatpush1.msra.mxu0 %v1833
        %3025 = vmatprep.subr.mxu0 %v1816
        %3026 = vmatpush1.msra.mxu0 %v1815
        %3027 = vmatprep.subr.mxu0 %v1798
        %3028 = vmatpush1.msra.mxu0 %v1797
        %3029 = vmatprep.subr.mxu0 %v1780
        %3030 = vmatpush1.msra.mxu0 %v1779
        %3031 = vmatprep.subr.mxu0 %v1762
        %3032 = vmatpush1.msra.mxu0 %v1761
        %3033 = vmatprep.subr.mxu0 %v1744
        %3034 = vmatpush1.msra.mxu0 %v1743
        %3035 = vmatprep.subr.mxu0 %v1726
        %3036 = vmatpush1.msra.mxu0 %v1725
        %3037 = vmatprep.subr.mxu0 %v1708
        %3038 = vmatpush1.msra.mxu0 %v1707
        %3039 = vmatprep.subr.mxu0 %v1690
        %3040 = vmatpush1.msra.mxu0 %v1689
        %3041 = vmatprep.subr.mxu0 %v1672
        %3042 = vmatpush1.msra.mxu0 %v1671
        %3043 = vmatprep.subr.mxu0 %v1654
        %3044 = vmatpush1.msra.mxu0 %v1653
        %3045 = vmatprep.subr.mxu0 %v1636
        %3046 = vmatpush1.msra.mxu0 %v1635
        %3047 = vmatprep.subr.mxu0 %v2194
        %3048 = vmatpush2.msra.mxu0 %v2193
        %3049 = vmatprep.subr.mxu0 %v2176
        %3050 = vmatpush2.msra.mxu0 %v2175
        %3051 = vmatprep.subr.mxu0 %v2158
        %3052 = vmatpush2.msra.mxu0 %v2157
        %3053 = vmatprep.subr.mxu0 %v2140
        %3054 = vmatpush2.msra.mxu0 %v2139
        %3055 = vmatprep.subr.mxu0 %v2122
        %3056 = vmatpush2.msra.mxu0 %v2121
        %3057 = vmatprep.subr.mxu0 %v2104
        %3058 = vmatpush2.msra.mxu0 %v2103
        %3059 = vmatprep.subr.mxu0 %v2086
        %3060 = vmatpush2.msra.mxu0 %v2085
        %3061 = vmatprep.subr.mxu0 %v2068
        %3062 = vmatpush2.msra.mxu0 %v2067
        %3063 = vmatprep.subr.mxu0 %v2050
        %3064 = vmatpush2.msra.mxu0 %v2049
        %3065 = vmatprep.subr.mxu0 %v2032
        %3066 = vmatpush2.msra.mxu0 %v2031
        %3067 = vmatprep.subr.mxu0 %v2014
        %3068 = vmatpush2.msra.mxu0 %v2013
        %3069 = vmatprep.subr.mxu0 %v1996
        %3070 = vmatpush2.msra.mxu0 %v1995
        %3071 = vmatprep.subr.mxu0 %v1978
        %3072 = vmatpush2.msra.mxu0 %v1977
        %3073 = vmatprep.subr.mxu0 %v1960
        %3074 = vmatpush2.msra.mxu0 %v1959
        %3075 = vmatprep.subr.mxu0 %v1942
        %3076 = vmatpush2.msra.mxu0 %v1941
        %3077 = vmatprep.subr.mxu0 %v1924
        %3078 = vmatpush2.msra.mxu0 %v1923
        %3079 = vmatprep.mubr.f32.mxu0 %v460
        %3080 = vmatmul.mubr.f32.gmra.mxu0 %v459
        %v3081 = vpop.f32.mrf.mxu0
        %v3082 = vadd.f32 %v2993, %v3081
        %v3083 = vpop.f32.mrf.mxu0
        %v3084 = vadd.f32 %v2995, %v3083
        %3085 = vmatprep.mubr.f32.mxu0 %v466
        %3086 = vmatmul.mubr.f32.gmra.mxu0 %v465
        %v3087 = vpop.f32.mrf.mxu0
        %v3088 = vadd.f32 %v2999, %v3087
        %v3089 = vpop.f32.mrf.mxu0
        %v3090 = vadd.f32 %v3001, %v3089
        %3091 = vmatprep.mubr.f32.mxu0 %v472
        %3092 = vmatmul.mubr.f32.gmra.mxu0 %v471
        %v3093 = vpop.f32.mrf.mxu0
        %v3094 = vadd.f32 %v3005, %v3093
        %v3095 = vpop.f32.mrf.mxu0
        %v3096 = vadd.f32 %v3007, %v3095
        %3097 = vmatprep.mubr.f32.mxu0 %v478
        %3098 = vmatmul.mubr.f32.gmra.mxu0 %v477
        %v3099 = vpop.f32.mrf.mxu0
        %v3100 = vadd.f32 %v3011, %v3099
        %v3101 = vpop.f32.mrf.mxu0
        %v3102 = vadd.f32 %v3013, %v3101
        %3103 = vdwg.mxu0
        %3104 = vmatprep.subr.mxu0 %v756
        %3105 = vmatpush1.msra.mxu0 %v755
        %3106 = vmatprep.subr.mxu0 %v738
        %3107 = vmatpush1.msra.mxu0 %v737
        %3108 = vmatprep.subr.mxu0 %v720
        %3109 = vmatpush1.msra.mxu0 %v719
        %3110 = vmatprep.subr.mxu0 %v702
        %3111 = vmatpush1.msra.mxu0 %v701
        %3112 = vmatprep.subr.mxu0 %v684
        %3113 = vmatpush1.msra.mxu0 %v683
        %3114 = vmatprep.subr.mxu0 %v666
        %3115 = vmatpush1.msra.mxu0 %v665
        %3116 = vmatprep.subr.mxu0 %v648
        %3117 = vmatpush1.msra.mxu0 %v647
        %3118 = vmatprep.subr.mxu0 %v630
        %3119 = vmatpush1.msra.mxu0 %v629
        %3120 = vmatprep.subr.mxu0 %v612
        %3121 = vmatpush1.msra.mxu0 %v611
        %3122 = vmatprep.subr.mxu0 %v594
        %3123 = vmatpush1.msra.mxu0 %v593
        %3124 = vmatprep.subr.mxu0 %v576
        %3125 = vmatpush1.msra.mxu0 %v575
        %3126 = vmatprep.subr.mxu0 %v558
        %3127 = vmatpush1.msra.mxu0 %v557
        %3128 = vmatprep.subr.mxu0 %v540
        %3129 = vmatpush1.msra.mxu0 %v539
        %3130 = vmatprep.subr.mxu0 %v522
        %3131 = vmatpush1.msra.mxu0 %v521
        %3132 = vmatprep.subr.mxu0 %v504
        %3133 = vmatpush1.msra.mxu0 %v503
        %3134 = vmatprep.subr.mxu0 %v486
        %3135 = vmatpush1.msra.mxu0 %v485
        %3136 = vmatprep.subr.mxu0 %v1044
        %3137 = vmatpush2.msra.mxu0 %v1043
        %3138 = vmatprep.subr.mxu0 %v1026
        %3139 = vmatpush2.msra.mxu0 %v1025
        %3140 = vmatprep.subr.mxu0 %v1008
        %3141 = vmatpush2.msra.mxu0 %v1007
        %3142 = vmatprep.subr.mxu0 %v990
        %3143 = vmatpush2.msra.mxu0 %v989
        %3144 = vmatprep.subr.mxu0 %v972
        %3145 = vmatpush2.msra.mxu0 %v971
        %3146 = vmatprep.subr.mxu0 %v954
        %3147 = vmatpush2.msra.mxu0 %v953
        %3148 = vmatprep.subr.mxu0 %v936
        %3149 = vmatpush2.msra.mxu0 %v935
        %3150 = vmatprep.subr.mxu0 %v918
        %3151 = vmatpush2.msra.mxu0 %v917
        %3152 = vmatprep.subr.mxu0 %v900
        %3153 = vmatpush2.msra.mxu0 %v899
        %3154 = vmatprep.subr.mxu0 %v882
        %3155 = vmatpush2.msra.mxu0 %v881
        %3156 = vmatprep.subr.mxu0 %v864
        %3157 = vmatpush2.msra.mxu0 %v863
        %3158 = vmatprep.subr.mxu0 %v846
        %3159 = vmatpush2.msra.mxu0 %v845
        %3160 = vmatprep.subr.mxu0 %v828
        %3161 = vmatpush2.msra.mxu0 %v827
        %3162 = vmatprep.subr.mxu0 %v810
        %3163 = vmatpush2.msra.mxu0 %v809
        %3164 = vmatprep.subr.mxu0 %v792
        %3165 = vmatpush2.msra.mxu0 %v791
        %3166 = vmatprep.subr.mxu0 %v774
        %3167 = vmatpush2.msra.mxu0 %v773
        %3168 = vmatprep.mubr.f32.mxu0 %v456
        %3169 = vmatmul.mubr.f32.gmra.mxu0 %v455
        %v3170 = vpop.f32.mrf.mxu0
        %v3171 = vadd.f32 %v2240, %v3170
        %v3172 = vpop.f32.mrf.mxu0
        %v3173 = vadd.f32 %v2244, %v3172
        %3174 = vmatprep.mubr.f32.mxu0 %v462
        %3175 = vmatmul.mubr.f32.gmra.mxu0 %v461
        %v3176 = vpop.f32.mrf.mxu0
        %v3177 = vadd.f32 %v2240, %v3176
        %v3178 = vpop.f32.mrf.mxu0
        %v3179 = vadd.f32 %v2244, %v3178
        %3180 = vmatprep.mubr.f32.mxu0 %v468
        %3181 = vmatmul.mubr.f32.gmra.mxu0 %v467
        %v3182 = vpop.f32.mrf.mxu0
        %v3183 = vadd.f32 %v2240, %v3182
        %v3184 = vpop.f32.mrf.mxu0
        %v3185 = vadd.f32 %v2244, %v3184
        %3186 = vmatprep.mubr.f32.mxu0 %v474
        %3187 = vmatmul.mubr.f32.gmra.mxu0 %v473
        %v3188 = vpop.f32.mrf.mxu0
        %v3189 = vadd.f32 %v2240, %v3188
        %v3190 = vpop.f32.mrf.mxu0
        %v3191 = vadd.f32 %v2244, %v3190
        %3192 = vdwg.mxu0
        %3193 = vmatprep.subr.mxu0 %v1332
        %3194 = vmatpush1.msra.mxu0 %v1331
        %3195 = vmatprep.subr.mxu0 %v1314
        %3196 = vmatpush1.msra.mxu0 %v1313
        %3197 = vmatprep.subr.mxu0 %v1296
        %3198 = vmatpush1.msra.mxu0 %v1295
        %3199 = vmatprep.subr.mxu0 %v1278
        %3200 = vmatpush1.msra.mxu0 %v1277
        %3201 = vmatprep.subr.mxu0 %v1260
        %3202 = vmatpush1.msra.mxu0 %v1259
        %3203 = vmatprep.subr.mxu0 %v1242
        %3204 = vmatpush1.msra.mxu0 %v1241
        %3205 = vmatprep.subr.mxu0 %v1224
        %3206 = vmatpush1.msra.mxu0 %v1223
        %3207 = vmatprep.subr.mxu0 %v1206
        %3208 = vmatpush1.msra.mxu0 %v1205
        %3209 = vmatprep.subr.mxu0 %v1188
        %3210 = vmatpush1.msra.mxu0 %v1187
        %3211 = vmatprep.subr.mxu0 %v1170
        %3212 = vmatpush1.msra.mxu0 %v1169
        %3213 = vmatprep.subr.mxu0 %v1152
        %3214 = vmatpush1.msra.mxu0 %v1151
        %3215 = vmatprep.subr.mxu0 %v1134
        %3216 = vmatpush1.msra.mxu0 %v1133
        %3217 = vmatprep.subr.mxu0 %v1116
        %3218 = vmatpush1.msra.mxu0 %v1115
        %3219 = vmatprep.subr.mxu0 %v1098
        %3220 = vmatpush1.msra.mxu0 %v1097
        %3221 = vmatprep.subr.mxu0 %v1080
        %3222 = vmatpush1.msra.mxu0 %v1079
        %3223 = vmatprep.subr.mxu0 %v1062
        %3224 = vmatpush1.msra.mxu0 %v1061
        %3225 = vmatprep.subr.mxu0 %v1620
        %3226 = vmatpush2.msra.mxu0 %v1619
        %3227 = vmatprep.subr.mxu0 %v1602
        %3228 = vmatpush2.msra.mxu0 %v1601
        %3229 = vmatprep.subr.mxu0 %v1584
        %3230 = vmatpush2.msra.mxu0 %v1583
        %3231 = vmatprep.subr.mxu0 %v1566
        %3232 = vmatpush2.msra.mxu0 %v1565
        %3233 = vmatprep.subr.mxu0 %v1548
        %3234 = vmatpush2.msra.mxu0 %v1547
        %3235 = vmatprep.subr.mxu0 %v1530
        %3236 = vmatpush2.msra.mxu0 %v1529
        %3237 = vmatprep.subr.mxu0 %v1512
        %3238 = vmatpush2.msra.mxu0 %v1511
        %3239 = vmatprep.subr.mxu0 %v1494
        %3240 = vmatpush2.msra.mxu0 %v1493
        %3241 = vmatprep.subr.mxu0 %v1476
        %3242 = vmatpush2.msra.mxu0 %v1475
        %3243 = vmatprep.subr.mxu0 %v1458
        %3244 = vmatpush2.msra.mxu0 %v1457
        %3245 = vmatprep.subr.mxu0 %v1440
        %3246 = vmatpush2.msra.mxu0 %v1439
        %3247 = vmatprep.subr.mxu0 %v1422
        %3248 = vmatpush2.msra.mxu0 %v1421
        %3249 = vmatprep.subr.mxu0 %v1404
        %3250 = vmatpush2.msra.mxu0 %v1403
        %3251 = vmatprep.subr.mxu0 %v1386
        %3252 = vmatpush2.msra.mxu0 %v1385
        %3253 = vmatprep.subr.mxu0 %v1368
        %3254 = vmatpush2.msra.mxu0 %v1367
        %3255 = vmatprep.subr.mxu0 %v1350
        %3256 = vmatpush2.msra.mxu0 %v1349
        %3257 = vmatprep.mubr.f32.mxu0 %v458
        %3258 = vmatmul.mubr.f32.gmra.mxu0 %v457
        %v3259 = vpop.f32.mrf.mxu0
        %v3260 = vadd.f32 %v3171, %v3259
        %v3261 = vpop.f32.mrf.mxu0
        %v3262 = vadd.f32 %v3173, %v3261
        %3263 = vmatprep.mubr.f32.mxu0 %v464
        %3264 = vmatmul.mubr.f32.gmra.mxu0 %v463
        %v3265 = vpop.f32.mrf.mxu0
        %v3266 = vadd.f32 %v3177, %v3265
        %v3267 = vpop.f32.mrf.mxu0
        %v3268 = vadd.f32 %v3179, %v3267
        %3269 = vmatprep.mubr.f32.mxu0 %v470
        %3270 = vmatmul.mubr.f32.gmra.mxu0 %v469
        %v3271 = vpop.f32.mrf.mxu0
        %v3272 = vadd.f32 %v3183, %v3271
        %v3273 = vpop.f32.mrf.mxu0
        %v3274 = vadd.f32 %v3185, %v3273
        %3275 = vmatprep.mubr.f32.mxu0 %v476
        %3276 = vmatmul.mubr.f32.gmra.mxu0 %v475
        %v3277 = vpop.f32.mrf.mxu0
        %v3278 = vadd.f32 %v3189, %v3277
        %v3279 = vpop.f32.mrf.mxu0
        %v3280 = vadd.f32 %v3191, %v3279
        %3281 = vdwg.mxu0
        %3282 = vmatprep.subr.mxu0 %v1908
        %3283 = vmatpush1.msra.mxu0 %v1907
        %3284 = vmatprep.subr.mxu0 %v1890
        %3285 = vmatpush1.msra.mxu0 %v1889
        %3286 = vmatprep.subr.mxu0 %v1872
        %3287 = vmatpush1.msra.mxu0 %v1871
        %3288 = vmatprep.subr.mxu0 %v1854
        %3289 = vmatpush1.msra.mxu0 %v1853
        %3290 = vmatprep.subr.mxu0 %v1836
        %3291 = vmatpush1.msra.mxu0 %v1835
        %3292 = vmatprep.subr.mxu0 %v1818
        %3293 = vmatpush1.msra.mxu0 %v1817
        %3294 = vmatprep.subr.mxu0 %v1800
        %3295 = vmatpush1.msra.mxu0 %v1799
        %3296 = vmatprep.subr.mxu0 %v1782
        %3297 = vmatpush1.msra.mxu0 %v1781
        %3298 = vmatprep.subr.mxu0 %v1764
        %3299 = vmatpush1.msra.mxu0 %v1763
        %3300 = vmatprep.subr.mxu0 %v1746
        %3301 = vmatpush1.msra.mxu0 %v1745
        %3302 = vmatprep.subr.mxu0 %v1728
        %3303 = vmatpush1.msra.mxu0 %v1727
        %3304 = vmatprep.subr.mxu0 %v1710
        %3305 = vmatpush1.msra.mxu0 %v1709
        %3306 = vmatprep.subr.mxu0 %v1692
        %3307 = vmatpush1.msra.mxu0 %v1691
        %3308 = vmatprep.subr.mxu0 %v1674
        %3309 = vmatpush1.msra.mxu0 %v1673
        %3310 = vmatprep.subr.mxu0 %v1656
        %3311 = vmatpush1.msra.mxu0 %v1655
        %3312 = vmatprep.subr.mxu0 %v1638
        %3313 = vmatpush1.msra.mxu0 %v1637
        %3314 = vmatprep.subr.mxu0 %v2196
        %3315 = vmatpush2.msra.mxu0 %v2195
        %3316 = vmatprep.subr.mxu0 %v2178
        %3317 = vmatpush2.msra.mxu0 %v2177
        %3318 = vmatprep.subr.mxu0 %v2160
        %3319 = vmatpush2.msra.mxu0 %v2159
        %3320 = vmatprep.subr.mxu0 %v2142
        %3321 = vmatpush2.msra.mxu0 %v2141
        %3322 = vmatprep.subr.mxu0 %v2124
        %3323 = vmatpush2.msra.mxu0 %v2123
        %3324 = vmatprep.subr.mxu0 %v2106
        %3325 = vmatpush2.msra.mxu0 %v2105
        %3326 = vmatprep.subr.mxu0 %v2088
        %3327 = vmatpush2.msra.mxu0 %v2087
        %3328 = vmatprep.subr.mxu0 %v2070
        %3329 = vmatpush2.msra.mxu0 %v2069
        %3330 = vmatprep.subr.mxu0 %v2052
        %3331 = vmatpush2.msra.mxu0 %v2051
        %3332 = vmatprep.subr.mxu0 %v2034
        %3333 = vmatpush2.msra.mxu0 %v2033
        %3334 = vmatprep.subr.mxu0 %v2016
        %3335 = vmatpush2.msra.mxu0 %v2015
        %3336 = vmatprep.subr.mxu0 %v1998
        %3337 = vmatpush2.msra.mxu0 %v1997
        %3338 = vmatprep.subr.mxu0 %v1980
        %3339 = vmatpush2.msra.mxu0 %v1979
        %3340 = vmatprep.subr.mxu0 %v1962
        %3341 = vmatpush2.msra.mxu0 %v1961
        %3342 = vmatprep.subr.mxu0 %v1944
        %3343 = vmatpush2.msra.mxu0 %v1943
        %3344 = vmatprep.subr.mxu0 %v1926
        %3345 = vmatpush2.msra.mxu0 %v1925
        %3346 = vmatprep.mubr.f32.mxu0 %v460
        %3347 = vmatmul.mubr.f32.gmra.mxu0 %v459
        %v3348 = vpop.f32.mrf.mxu0
        %v3349 = vadd.f32 %v3260, %v3348
        %v3350 = vpop.f32.mrf.mxu0
        %v3351 = vadd.f32 %v3262, %v3350
        %3352 = vmatprep.mubr.f32.mxu0 %v466
        %3353 = vmatmul.mubr.f32.gmra.mxu0 %v465
        %v3354 = vpop.f32.mrf.mxu0
        %v3355 = vadd.f32 %v3266, %v3354
        %v3356 = vpop.f32.mrf.mxu0
        %v3357 = vadd.f32 %v3268, %v3356
        %3358 = vmatprep.mubr.f32.mxu0 %v472
        %3359 = vmatmul.mubr.f32.gmra.mxu0 %v471
        %v3360 = vpop.f32.mrf.mxu0
        %v3361 = vadd.f32 %v3272, %v3360
        %v3362 = vpop.f32.mrf.mxu0
        %v3363 = vadd.f32 %v3274, %v3362
        %3364 = vmatprep.mubr.f32.mxu0 %v478
        %3365 = vmatmul.mubr.f32.gmra.mxu0 %v477
        %v3366 = vpop.f32.mrf.mxu0
        %v3367 = vadd.f32 %v3278, %v3366
        %v3368 = vpop.f32.mrf.mxu0
        %v3369 = vadd.f32 %v3280, %v3368
        %3370 = vdwg.mxu0
        %3371 = vmatprep.subr.mxu0 %v758
        %3372 = vmatpush1.msra.mxu0 %v757
        %3373 = vmatprep.subr.mxu0 %v740
        %3374 = vmatpush1.msra.mxu0 %v739
        %3375 = vmatprep.subr.mxu0 %v722
        %3376 = vmatpush1.msra.mxu0 %v721
        %3377 = vmatprep.subr.mxu0 %v704
        %3378 = vmatpush1.msra.mxu0 %v703
        %3379 = vmatprep.subr.mxu0 %v686
        %3380 = vmatpush1.msra.mxu0 %v685
        %3381 = vmatprep.subr.mxu0 %v668
        %3382 = vmatpush1.msra.mxu0 %v667
        %3383 = vmatprep.subr.mxu0 %v650
        %3384 = vmatpush1.msra.mxu0 %v649
        %3385 = vmatprep.subr.mxu0 %v632
        %3386 = vmatpush1.msra.mxu0 %v631
        %3387 = vmatprep.subr.mxu0 %v614
        %3388 = vmatpush1.msra.mxu0 %v613
        %3389 = vmatprep.subr.mxu0 %v596
        %3390 = vmatpush1.msra.mxu0 %v595
        %3391 = vmatprep.subr.mxu0 %v578
        %3392 = vmatpush1.msra.mxu0 %v577
        %3393 = vmatprep.subr.mxu0 %v560
        %3394 = vmatpush1.msra.mxu0 %v559
        %3395 = vmatprep.subr.mxu0 %v542
        %3396 = vmatpush1.msra.mxu0 %v541
        %3397 = vmatprep.subr.mxu0 %v524
        %3398 = vmatpush1.msra.mxu0 %v523
        %3399 = vmatprep.subr.mxu0 %v506
        %3400 = vmatpush1.msra.mxu0 %v505
        %3401 = vmatprep.subr.mxu0 %v488
        %3402 = vmatpush1.msra.mxu0 %v487
        %3403 = vmatprep.subr.mxu0 %v1046
        %3404 = vmatpush2.msra.mxu0 %v1045
        %3405 = vmatprep.subr.mxu0 %v1028
        %3406 = vmatpush2.msra.mxu0 %v1027
        %3407 = vmatprep.subr.mxu0 %v1010
        %3408 = vmatpush2.msra.mxu0 %v1009
        %3409 = vmatprep.subr.mxu0 %v992
        %3410 = vmatpush2.msra.mxu0 %v991
        %3411 = vmatprep.subr.mxu0 %v974
        %3412 = vmatpush2.msra.mxu0 %v973
        %3413 = vmatprep.subr.mxu0 %v956
        %3414 = vmatpush2.msra.mxu0 %v955
        %3415 = vmatprep.subr.mxu0 %v938
        %3416 = vmatpush2.msra.mxu0 %v937
        %3417 = vmatprep.subr.mxu0 %v920
        %3418 = vmatpush2.msra.mxu0 %v919
        %3419 = vmatprep.subr.mxu0 %v902
        %3420 = vmatpush2.msra.mxu0 %v901
        %3421 = vmatprep.subr.mxu0 %v884
        %3422 = vmatpush2.msra.mxu0 %v883
        %3423 = vmatprep.subr.mxu0 %v866
        %3424 = vmatpush2.msra.mxu0 %v865
        %3425 = vmatprep.subr.mxu0 %v848
        %3426 = vmatpush2.msra.mxu0 %v847
        %3427 = vmatprep.subr.mxu0 %v830
        %3428 = vmatpush2.msra.mxu0 %v829
        %3429 = vmatprep.subr.mxu0 %v812
        %3430 = vmatpush2.msra.mxu0 %v811
        %3431 = vmatprep.subr.mxu0 %v794
        %3432 = vmatpush2.msra.mxu0 %v793
        %3433 = vmatprep.subr.mxu0 %v776
        %3434 = vmatpush2.msra.mxu0 %v775
        %3435 = vmatprep.mubr.f32.mxu0 %v456
        %3436 = vmatmul.mubr.f32.gmra.mxu0 %v455
        %v3437 = vpop.f32.mrf.mxu0
        %v3438 = vadd.f32 %v2248, %v3437
        %v3439 = vpop.f32.mrf.mxu0
        %v3440 = vadd.f32 %v2252, %v3439
        %3441 = vmatprep.mubr.f32.mxu0 %v462
        %3442 = vmatmul.mubr.f32.gmra.mxu0 %v461
        %v3443 = vpop.f32.mrf.mxu0
        %v3444 = vadd.f32 %v2248, %v3443
        %v3445 = vpop.f32.mrf.mxu0
        %v3446 = vadd.f32 %v2252, %v3445
        %3447 = vmatprep.mubr.f32.mxu0 %v468
        %3448 = vmatmul.mubr.f32.gmra.mxu0 %v467
        %v3449 = vpop.f32.mrf.mxu0
        %v3450 = vadd.f32 %v2248, %v3449
        %v3451 = vpop.f32.mrf.mxu0
        %v3452 = vadd.f32 %v2252, %v3451
        %3453 = vmatprep.mubr.f32.mxu0 %v474
        %3454 = vmatmul.mubr.f32.gmra.mxu0 %v473
        %v3455 = vpop.f32.mrf.mxu0
        %v3456 = vadd.f32 %v2248, %v3455
        %v3457 = vpop.f32.mrf.mxu0
        %v3458 = vadd.f32 %v2252, %v3457
        %3459 = vdwg.mxu0
        %3460 = vmatprep.subr.mxu0 %v1334
        %3461 = vmatpush1.msra.mxu0 %v1333
        %3462 = vmatprep.subr.mxu0 %v1316
        %3463 = vmatpush1.msra.mxu0 %v1315
        %3464 = vmatprep.subr.mxu0 %v1298
        %3465 = vmatpush1.msra.mxu0 %v1297
        %3466 = vmatprep.subr.mxu0 %v1280
        %3467 = vmatpush1.msra.mxu0 %v1279
        %3468 = vmatprep.subr.mxu0 %v1262
        %3469 = vmatpush1.msra.mxu0 %v1261
        %3470 = vmatprep.subr.mxu0 %v1244
        %3471 = vmatpush1.msra.mxu0 %v1243
        %3472 = vmatprep.subr.mxu0 %v1226
        %3473 = vmatpush1.msra.mxu0 %v1225
        %3474 = vmatprep.subr.mxu0 %v1208
        %3475 = vmatpush1.msra.mxu0 %v1207
        %3476 = vmatprep.subr.mxu0 %v1190
        %3477 = vmatpush1.msra.mxu0 %v1189
        %3478 = vmatprep.subr.mxu0 %v1172
        %3479 = vmatpush1.msra.mxu0 %v1171
        %3480 = vmatprep.subr.mxu0 %v1154
        %3481 = vmatpush1.msra.mxu0 %v1153
        %3482 = vmatprep.subr.mxu0 %v1136
        %3483 = vmatpush1.msra.mxu0 %v1135
        %3484 = vmatprep.subr.mxu0 %v1118
        %3485 = vmatpush1.msra.mxu0 %v1117
        %3486 = vmatprep.subr.mxu0 %v1100
        %3487 = vmatpush1.msra.mxu0 %v1099
        %3488 = vmatprep.subr.mxu0 %v1082
        %3489 = vmatpush1.msra.mxu0 %v1081
        %3490 = vmatprep.subr.mxu0 %v1064
        %3491 = vmatpush1.msra.mxu0 %v1063
        %3492 = vmatprep.subr.mxu0 %v1622
        %3493 = vmatpush2.msra.mxu0 %v1621
        %3494 = vmatprep.subr.mxu0 %v1604
        %3495 = vmatpush2.msra.mxu0 %v1603
        %3496 = vmatprep.subr.mxu0 %v1586
        %3497 = vmatpush2.msra.mxu0 %v1585
        %3498 = vmatprep.subr.mxu0 %v1568
        %3499 = vmatpush2.msra.mxu0 %v1567
        %3500 = vmatprep.subr.mxu0 %v1550
        %3501 = vmatpush2.msra.mxu0 %v1549
        %3502 = vmatprep.subr.mxu0 %v1532
        %3503 = vmatpush2.msra.mxu0 %v1531
        %3504 = vmatprep.subr.mxu0 %v1514
        %3505 = vmatpush2.msra.mxu0 %v1513
        %3506 = vmatprep.subr.mxu0 %v1496
        %3507 = vmatpush2.msra.mxu0 %v1495
        %3508 = vmatprep.subr.mxu0 %v1478
        %3509 = vmatpush2.msra.mxu0 %v1477
        %3510 = vmatprep.subr.mxu0 %v1460
        %3511 = vmatpush2.msra.mxu0 %v1459
        %3512 = vmatprep.subr.mxu0 %v1442
        %3513 = vmatpush2.msra.mxu0 %v1441
        %3514 = vmatprep.subr.mxu0 %v1424
        %3515 = vmatpush2.msra.mxu0 %v1423
        %3516 = vmatprep.subr.mxu0 %v1406
        %3517 = vmatpush2.msra.mxu0 %v1405
        %3518 = vmatprep.subr.mxu0 %v1388
        %3519 = vmatpush2.msra.mxu0 %v1387
        %3520 = vmatprep.subr.mxu0 %v1370
        %3521 = vmatpush2.msra.mxu0 %v1369
        %3522 = vmatprep.subr.mxu0 %v1352
        %3523 = vmatpush2.msra.mxu0 %v1351
        %3524 = vmatprep.mubr.f32.mxu0 %v458
        %3525 = vmatmul.mubr.f32.gmra.mxu0 %v457
        %v3526 = vpop.f32.mrf.mxu0
        %v3527 = vadd.f32 %v3438, %v3526
        %v3528 = vpop.f32.mrf.mxu0
        %v3529 = vadd.f32 %v3440, %v3528
        %3530 = vmatprep.mubr.f32.mxu0 %v464
        %3531 = vmatmul.mubr.f32.gmra.mxu0 %v463
        %v3532 = vpop.f32.mrf.mxu0
        %v3533 = vadd.f32 %v3444, %v3532
        %v3534 = vpop.f32.mrf.mxu0
        %v3535 = vadd.f32 %v3446, %v3534
        %3536 = vmatprep.mubr.f32.mxu0 %v470
        %3537 = vmatmul.mubr.f32.gmra.mxu0 %v469
        %v3538 = vpop.f32.mrf.mxu0
        %v3539 = vadd.f32 %v3450, %v3538
        %v3540 = vpop.f32.mrf.mxu0
        %v3541 = vadd.f32 %v3452, %v3540
        %3542 = vmatprep.mubr.f32.mxu0 %v476
        %3543 = vmatmul.mubr.f32.gmra.mxu0 %v475
        %v3544 = vpop.f32.mrf.mxu0
        %v3545 = vadd.f32 %v3456, %v3544
        %v3546 = vpop.f32.mrf.mxu0
        %v3547 = vadd.f32 %v3458, %v3546
        %3548 = vdwg.mxu0
        %3549 = vmatprep.subr.mxu0 %v1910
        %3550 = vmatpush1.msra.mxu0 %v1909
        %3551 = vmatprep.subr.mxu0 %v1892
        %3552 = vmatpush1.msra.mxu0 %v1891
        %3553 = vmatprep.subr.mxu0 %v1874
        %3554 = vmatpush1.msra.mxu0 %v1873
        %3555 = vmatprep.subr.mxu0 %v1856
        %3556 = vmatpush1.msra.mxu0 %v1855
        %3557 = vmatprep.subr.mxu0 %v1838
        %3558 = vmatpush1.msra.mxu0 %v1837
        %3559 = vmatprep.subr.mxu0 %v1820
        %3560 = vmatpush1.msra.mxu0 %v1819
        %3561 = vmatprep.subr.mxu0 %v1802
        %3562 = vmatpush1.msra.mxu0 %v1801
        %3563 = vmatprep.subr.mxu0 %v1784
        %3564 = vmatpush1.msra.mxu0 %v1783
        %3565 = vmatprep.subr.mxu0 %v1766
        %3566 = vmatpush1.msra.mxu0 %v1765
        %3567 = vmatprep.subr.mxu0 %v1748
        %3568 = vmatpush1.msra.mxu0 %v1747
        %3569 = vmatprep.subr.mxu0 %v1730
        %3570 = vmatpush1.msra.mxu0 %v1729
        %3571 = vmatprep.subr.mxu0 %v1712
        %3572 = vmatpush1.msra.mxu0 %v1711
        %3573 = vmatprep.subr.mxu0 %v1694
        %3574 = vmatpush1.msra.mxu0 %v1693
        %3575 = vmatprep.subr.mxu0 %v1676
        %3576 = vmatpush1.msra.mxu0 %v1675
        %3577 = vmatprep.subr.mxu0 %v1658
        %3578 = vmatpush1.msra.mxu0 %v1657
        %3579 = vmatprep.subr.mxu0 %v1640
        %3580 = vmatpush1.msra.mxu0 %v1639
        %3581 = vmatprep.subr.mxu0 %v2198
        %3582 = vmatpush2.msra.mxu0 %v2197
        %3583 = vmatprep.subr.mxu0 %v2180
        %3584 = vmatpush2.msra.mxu0 %v2179
        %3585 = vmatprep.subr.mxu0 %v2162
        %3586 = vmatpush2.msra.mxu0 %v2161
        %3587 = vmatprep.subr.mxu0 %v2144
        %3588 = vmatpush2.msra.mxu0 %v2143
        %3589 = vmatprep.subr.mxu0 %v2126
        %3590 = vmatpush2.msra.mxu0 %v2125
        %3591 = vmatprep.subr.mxu0 %v2108
        %3592 = vmatpush2.msra.mxu0 %v2107
        %3593 = vmatprep.subr.mxu0 %v2090
        %3594 = vmatpush2.msra.mxu0 %v2089
        %3595 = vmatprep.subr.mxu0 %v2072
        %3596 = vmatpush2.msra.mxu0 %v2071
        %3597 = vmatprep.subr.mxu0 %v2054
        %3598 = vmatpush2.msra.mxu0 %v2053
        %3599 = vmatprep.subr.mxu0 %v2036
        %3600 = vmatpush2.msra.mxu0 %v2035
        %3601 = vmatprep.subr.mxu0 %v2018
        %3602 = vmatpush2.msra.mxu0 %v2017
        %3603 = vmatprep.subr.mxu0 %v2000
        %3604 = vmatpush2.msra.mxu0 %v1999
        %3605 = vmatprep.subr.mxu0 %v1982
        %3606 = vmatpush2.msra.mxu0 %v1981
        %3607 = vmatprep.subr.mxu0 %v1964
        %3608 = vmatpush2.msra.mxu0 %v1963
        %3609 = vmatprep.subr.mxu0 %v1946
        %3610 = vmatpush2.msra.mxu0 %v1945
        %3611 = vmatprep.subr.mxu0 %v1928
        %3612 = vmatpush2.msra.mxu0 %v1927
        %3613 = vmatprep.mubr.f32.mxu0 %v460
        %3614 = vmatmul.mubr.f32.gmra.mxu0 %v459
        %v3615 = vpop.f32.mrf.mxu0
        %v3616 = vadd.f32 %v3527, %v3615
        %v3617 = vpop.f32.mrf.mxu0
        %v3618 = vadd.f32 %v3529, %v3617
        %3619 = vmatprep.mubr.f32.mxu0 %v466
        %3620 = vmatmul.mubr.f32.gmra.mxu0 %v465
        %v3621 = vpop.f32.mrf.mxu0
        %v3622 = vadd.f32 %v3533, %v3621
        %v3623 = vpop.f32.mrf.mxu0
        %v3624 = vadd.f32 %v3535, %v3623
        %3625 = vmatprep.mubr.f32.mxu0 %v472
        %3626 = vmatmul.mubr.f32.gmra.mxu0 %v471
        %v3627 = vpop.f32.mrf.mxu0
        %v3628 = vadd.f32 %v3539, %v3627
        %v3629 = vpop.f32.mrf.mxu0
        %v3630 = vadd.f32 %v3541, %v3629
        %3631 = vmatprep.mubr.f32.mxu0 %v478
        %3632 = vmatmul.mubr.f32.gmra.mxu0 %v477
        %v3633 = vpop.f32.mrf.mxu0
        %v3634 = vadd.f32 %v3545, %v3633
        %v3635 = vpop.f32.mrf.mxu0
        %v3636 = vadd.f32 %v3547, %v3635
        %3637 = vdwg.mxu0
        %3638 = vmatprep.subr.mxu0 %v760
        %3639 = vmatpush1.msra.mxu0 %v759
        %3640 = vmatprep.subr.mxu0 %v742
        %3641 = vmatpush1.msra.mxu0 %v741
        %3642 = vmatprep.subr.mxu0 %v724
        %3643 = vmatpush1.msra.mxu0 %v723
        %3644 = vmatprep.subr.mxu0 %v706
        %3645 = vmatpush1.msra.mxu0 %v705
        %3646 = vmatprep.subr.mxu0 %v688
        %3647 = vmatpush1.msra.mxu0 %v687
        %3648 = vmatprep.subr.mxu0 %v670
        %3649 = vmatpush1.msra.mxu0 %v669
        %3650 = vmatprep.subr.mxu0 %v652
        %3651 = vmatpush1.msra.mxu0 %v651
        %3652 = vmatprep.subr.mxu0 %v634
        %3653 = vmatpush1.msra.mxu0 %v633
        %3654 = vmatprep.subr.mxu0 %v616
        %3655 = vmatpush1.msra.mxu0 %v615
        %3656 = vmatprep.subr.mxu0 %v598
        %3657 = vmatpush1.msra.mxu0 %v597
        %3658 = vmatprep.subr.mxu0 %v580
        %3659 = vmatpush1.msra.mxu0 %v579
        %3660 = vmatprep.subr.mxu0 %v562
        %3661 = vmatpush1.msra.mxu0 %v561
        %3662 = vmatprep.subr.mxu0 %v544
        %3663 = vmatpush1.msra.mxu0 %v543
        %3664 = vmatprep.subr.mxu0 %v526
        %3665 = vmatpush1.msra.mxu0 %v525
        %3666 = vmatprep.subr.mxu0 %v508
        %3667 = vmatpush1.msra.mxu0 %v507
        %3668 = vmatprep.subr.mxu0 %v490
        %3669 = vmatpush1.msra.mxu0 %v489
        %3670 = vmatprep.subr.mxu0 %v1048
        %3671 = vmatpush2.msra.mxu0 %v1047
        %3672 = vmatprep.subr.mxu0 %v1030
        %3673 = vmatpush2.msra.mxu0 %v1029
        %3674 = vmatprep.subr.mxu0 %v1012
        %3675 = vmatpush2.msra.mxu0 %v1011
        %3676 = vmatprep.subr.mxu0 %v994
        %3677 = vmatpush2.msra.mxu0 %v993
        %3678 = vmatprep.subr.mxu0 %v976
        %3679 = vmatpush2.msra.mxu0 %v975
        %3680 = vmatprep.subr.mxu0 %v958
        %3681 = vmatpush2.msra.mxu0 %v957
        %3682 = vmatprep.subr.mxu0 %v940
        %3683 = vmatpush2.msra.mxu0 %v939
        %3684 = vmatprep.subr.mxu0 %v922
        %3685 = vmatpush2.msra.mxu0 %v921
        %3686 = vmatprep.subr.mxu0 %v904
        %3687 = vmatpush2.msra.mxu0 %v903
        %3688 = vmatprep.subr.mxu0 %v886
        %3689 = vmatpush2.msra.mxu0 %v885
        %3690 = vmatprep.subr.mxu0 %v868
        %3691 = vmatpush2.msra.mxu0 %v867
        %3692 = vmatprep.subr.mxu0 %v850
        %3693 = vmatpush2.msra.mxu0 %v849
        %3694 = vmatprep.subr.mxu0 %v832
        %3695 = vmatpush2.msra.mxu0 %v831
        %3696 = vmatprep.subr.mxu0 %v814
        %3697 = vmatpush2.msra.mxu0 %v813
        %3698 = vmatprep.subr.mxu0 %v796
        %3699 = vmatpush2.msra.mxu0 %v795
        %3700 = vmatprep.subr.mxu0 %v778
        %3701 = vmatpush2.msra.mxu0 %v777
        %3702 = vmatprep.mubr.f32.mxu0 %v456
        %3703 = vmatmul.mubr.f32.gmra.mxu0 %v455
        %v3704 = vpop.f32.mrf.mxu0
        %v3705 = vadd.f32 %v2256, %v3704
        %v3706 = vpop.f32.mrf.mxu0
        %v3707 = vadd.f32 %v2260, %v3706
        %3708 = vmatprep.mubr.f32.mxu0 %v462
        %3709 = vmatmul.mubr.f32.gmra.mxu0 %v461
        %v3710 = vpop.f32.mrf.mxu0
        %v3711 = vadd.f32 %v2256, %v3710
        %v3712 = vpop.f32.mrf.mxu0
        %v3713 = vadd.f32 %v2260, %v3712
        %3714 = vmatprep.mubr.f32.mxu0 %v468
        %3715 = vmatmul.mubr.f32.gmra.mxu0 %v467
        %v3716 = vpop.f32.mrf.mxu0
        %v3717 = vadd.f32 %v2256, %v3716
        %v3718 = vpop.f32.mrf.mxu0
        %v3719 = vadd.f32 %v2260, %v3718
        %3720 = vmatprep.mubr.f32.mxu0 %v474
        %3721 = vmatmul.mubr.f32.gmra.mxu0 %v473
        %v3722 = vpop.f32.mrf.mxu0
        %v3723 = vadd.f32 %v2256, %v3722
        %v3724 = vpop.f32.mrf.mxu0
        %v3725 = vadd.f32 %v2260, %v3724
        %3726 = vdwg.mxu0
        %3727 = vmatprep.subr.mxu0 %v1336
        %3728 = vmatpush1.msra.mxu0 %v1335
        %3729 = vmatprep.subr.mxu0 %v1318
        %3730 = vmatpush1.msra.mxu0 %v1317
        %3731 = vmatprep.subr.mxu0 %v1300
        %3732 = vmatpush1.msra.mxu0 %v1299
        %3733 = vmatprep.subr.mxu0 %v1282
        %3734 = vmatpush1.msra.mxu0 %v1281
        %3735 = vmatprep.subr.mxu0 %v1264
        %3736 = vmatpush1.msra.mxu0 %v1263
        %3737 = vmatprep.subr.mxu0 %v1246
        %3738 = vmatpush1.msra.mxu0 %v1245
        %3739 = vmatprep.subr.mxu0 %v1228
        %3740 = vmatpush1.msra.mxu0 %v1227
        %3741 = vmatprep.subr.mxu0 %v1210
        %3742 = vmatpush1.msra.mxu0 %v1209
        %3743 = vmatprep.subr.mxu0 %v1192
        %3744 = vmatpush1.msra.mxu0 %v1191
        %3745 = vmatprep.subr.mxu0 %v1174
        %3746 = vmatpush1.msra.mxu0 %v1173
        %3747 = vmatprep.subr.mxu0 %v1156
        %3748 = vmatpush1.msra.mxu0 %v1155
        %3749 = vmatprep.subr.mxu0 %v1138
        %3750 = vmatpush1.msra.mxu0 %v1137
        %3751 = vmatprep.subr.mxu0 %v1120
        %3752 = vmatpush1.msra.mxu0 %v1119
        %3753 = vmatprep.subr.mxu0 %v1102
        %3754 = vmatpush1.msra.mxu0 %v1101
        %3755 = vmatprep.subr.mxu0 %v1084
        %3756 = vmatpush1.msra.mxu0 %v1083
        %3757 = vmatprep.subr.mxu0 %v1066
        %3758 = vmatpush1.msra.mxu0 %v1065
        %3759 = vmatprep.subr.mxu0 %v1624
        %3760 = vmatpush2.msra.mxu0 %v1623
        %3761 = vmatprep.subr.mxu0 %v1606
        %3762 = vmatpush2.msra.mxu0 %v1605
        %3763 = vmatprep.subr.mxu0 %v1588
        %3764 = vmatpush2.msra.mxu0 %v1587
        %3765 = vmatprep.subr.mxu0 %v1570
        %3766 = vmatpush2.msra.mxu0 %v1569
        %3767 = vmatprep.subr.mxu0 %v1552
        %3768 = vmatpush2.msra.mxu0 %v1551
        %3769 = vmatprep.subr.mxu0 %v1534
        %3770 = vmatpush2.msra.mxu0 %v1533
        %3771 = vmatprep.subr.mxu0 %v1516
        %3772 = vmatpush2.msra.mxu0 %v1515
        %3773 = vmatprep.subr.mxu0 %v1498
        %3774 = vmatpush2.msra.mxu0 %v1497
        %3775 = vmatprep.subr.mxu0 %v1480
        %3776 = vmatpush2.msra.mxu0 %v1479
        %3777 = vmatprep.subr.mxu0 %v1462
        %3778 = vmatpush2.msra.mxu0 %v1461
        %3779 = vmatprep.subr.mxu0 %v1444
        %3780 = vmatpush2.msra.mxu0 %v1443
        %3781 = vmatprep.subr.mxu0 %v1426
        %3782 = vmatpush2.msra.mxu0 %v1425
        %3783 = vmatprep.subr.mxu0 %v1408
        %3784 = vmatpush2.msra.mxu0 %v1407
        %3785 = vmatprep.subr.mxu0 %v1390
        %3786 = vmatpush2.msra.mxu0 %v1389
        %3787 = vmatprep.subr.mxu0 %v1372
        %3788 = vmatpush2.msra.mxu0 %v1371
        %3789 = vmatprep.subr.mxu0 %v1354
        %3790 = vmatpush2.msra.mxu0 %v1353
        %3791 = vmatprep.mubr.f32.mxu0 %v458
        %3792 = vmatmul.mubr.f32.gmra.mxu0 %v457
        %v3793 = vpop.f32.mrf.mxu0
        %v3794 = vadd.f32 %v3705, %v3793
        %v3795 = vpop.f32.mrf.mxu0
        %v3796 = vadd.f32 %v3707, %v3795
        %3797 = vmatprep.mubr.f32.mxu0 %v464
        %3798 = vmatmul.mubr.f32.gmra.mxu0 %v463
        %v3799 = vpop.f32.mrf.mxu0
        %v3800 = vadd.f32 %v3711, %v3799
        %v3801 = vpop.f32.mrf.mxu0
        %v3802 = vadd.f32 %v3713, %v3801
        %3803 = vmatprep.mubr.f32.mxu0 %v470
        %3804 = vmatmul.mubr.f32.gmra.mxu0 %v469
        %v3805 = vpop.f32.mrf.mxu0
        %v3806 = vadd.f32 %v3717, %v3805
        %v3807 = vpop.f32.mrf.mxu0
        %v3808 = vadd.f32 %v3719, %v3807
        %3809 = vmatprep.mubr.f32.mxu0 %v476
        %3810 = vmatmul.mubr.f32.gmra.mxu0 %v475
        %v3811 = vpop.f32.mrf.mxu0
        %v3812 = vadd.f32 %v3723, %v3811
        %v3813 = vpop.f32.mrf.mxu0
        %v3814 = vadd.f32 %v3725, %v3813
        %3815 = vdwg.mxu0
        %3816 = vmatprep.subr.mxu0 %v1912
        %3817 = vmatpush1.msra.mxu0 %v1911
        %3818 = vmatprep.subr.mxu0 %v1894
        %3819 = vmatpush1.msra.mxu0 %v1893
        %3820 = vmatprep.subr.mxu0 %v1876
        %3821 = vmatpush1.msra.mxu0 %v1875
        %3822 = vmatprep.subr.mxu0 %v1858
        %3823 = vmatpush1.msra.mxu0 %v1857
        %3824 = vmatprep.subr.mxu0 %v1840
        %3825 = vmatpush1.msra.mxu0 %v1839
        %3826 = vmatprep.subr.mxu0 %v1822
        %3827 = vmatpush1.msra.mxu0 %v1821
        %3828 = vmatprep.subr.mxu0 %v1804
        %3829 = vmatpush1.msra.mxu0 %v1803
        %3830 = vmatprep.subr.mxu0 %v1786
        %3831 = vmatpush1.msra.mxu0 %v1785
        %3832 = vmatprep.subr.mxu0 %v1768
        %3833 = vmatpush1.msra.mxu0 %v1767
        %3834 = vmatprep.subr.mxu0 %v1750
        %3835 = vmatpush1.msra.mxu0 %v1749
        %3836 = vmatprep.subr.mxu0 %v1732
        %3837 = vmatpush1.msra.mxu0 %v1731
        %3838 = vmatprep.subr.mxu0 %v1714
        %3839 = vmatpush1.msra.mxu0 %v1713
        %3840 = vmatprep.subr.mxu0 %v1696
        %3841 = vmatpush1.msra.mxu0 %v1695
        %3842 = vmatprep.subr.mxu0 %v1678
        %3843 = vmatpush1.msra.mxu0 %v1677
        %3844 = vmatprep.subr.mxu0 %v1660
        %3845 = vmatpush1.msra.mxu0 %v1659
        %3846 = vmatprep.subr.mxu0 %v1642
        %3847 = vmatpush1.msra.mxu0 %v1641
        %3848 = vmatprep.subr.mxu0 %v2200
        %3849 = vmatpush2.msra.mxu0 %v2199
        %3850 = vmatprep.subr.mxu0 %v2182
        %3851 = vmatpush2.msra.mxu0 %v2181
        %3852 = vmatprep.subr.mxu0 %v2164
        %3853 = vmatpush2.msra.mxu0 %v2163
        %3854 = vmatprep.subr.mxu0 %v2146
        %3855 = vmatpush2.msra.mxu0 %v2145
        %3856 = vmatprep.subr.mxu0 %v2128
        %3857 = vmatpush2.msra.mxu0 %v2127
        %3858 = vmatprep.subr.mxu0 %v2110
        %3859 = vmatpush2.msra.mxu0 %v2109
        %3860 = vmatprep.subr.mxu0 %v2092
        %3861 = vmatpush2.msra.mxu0 %v2091
        %3862 = vmatprep.subr.mxu0 %v2074
        %3863 = vmatpush2.msra.mxu0 %v2073
        %3864 = vmatprep.subr.mxu0 %v2056
        %3865 = vmatpush2.msra.mxu0 %v2055
        %3866 = vmatprep.subr.mxu0 %v2038
        %3867 = vmatpush2.msra.mxu0 %v2037
        %3868 = vmatprep.subr.mxu0 %v2020
        %3869 = vmatpush2.msra.mxu0 %v2019
        %3870 = vmatprep.subr.mxu0 %v2002
        %3871 = vmatpush2.msra.mxu0 %v2001
        %3872 = vmatprep.subr.mxu0 %v1984
        %3873 = vmatpush2.msra.mxu0 %v1983
        %3874 = vmatprep.subr.mxu0 %v1966
        %3875 = vmatpush2.msra.mxu0 %v1965
        %3876 = vmatprep.subr.mxu0 %v1948
        %3877 = vmatpush2.msra.mxu0 %v1947
        %3878 = vmatprep.subr.mxu0 %v1930
        %3879 = vmatpush2.msra.mxu0 %v1929
        %3880 = vmatprep.mubr.f32.mxu0 %v460
        %3881 = vmatmul.mubr.f32.gmra.mxu0 %v459
        %v3882 = vpop.f32.mrf.mxu0
        %v3883 = vadd.f32 %v3794, %v3882
        %v3884 = vpop.f32.mrf.mxu0
        %v3885 = vadd.f32 %v3796, %v3884
        %3886 = vmatprep.mubr.f32.mxu0 %v466
        %3887 = vmatmul.mubr.f32.gmra.mxu0 %v465
        %v3888 = vpop.f32.mrf.mxu0
        %v3889 = vadd.f32 %v3800, %v3888
        %v3890 = vpop.f32.mrf.mxu0
        %v3891 = vadd.f32 %v3802, %v3890
        %3892 = vmatprep.mubr.f32.mxu0 %v472
        %3893 = vmatmul.mubr.f32.gmra.mxu0 %v471
        %v3894 = vpop.f32.mrf.mxu0
        %v3895 = vadd.f32 %v3806, %v3894
        %v3896 = vpop.f32.mrf.mxu0
        %v3897 = vadd.f32 %v3808, %v3896
        %3898 = vmatprep.mubr.f32.mxu0 %v478
        %3899 = vmatmul.mubr.f32.gmra.mxu0 %v477
        %v3900 = vpop.f32.mrf.mxu0
        %v3901 = vadd.f32 %v3812, %v3900
        %v3902 = vpop.f32.mrf.mxu0
        %v3903 = vadd.f32 %v3814, %v3902
        %3904 = vdwg.mxu0
        %3905 = vmatprep.subr.mxu0 %v762
        %3906 = vmatpush1.msra.mxu0 %v761
        %3907 = vmatprep.subr.mxu0 %v744
        %3908 = vmatpush1.msra.mxu0 %v743
        %3909 = vmatprep.subr.mxu0 %v726
        %3910 = vmatpush1.msra.mxu0 %v725
        %3911 = vmatprep.subr.mxu0 %v708
        %3912 = vmatpush1.msra.mxu0 %v707
        %3913 = vmatprep.subr.mxu0 %v690
        %3914 = vmatpush1.msra.mxu0 %v689
        %3915 = vmatprep.subr.mxu0 %v672
        %3916 = vmatpush1.msra.mxu0 %v671
        %3917 = vmatprep.subr.mxu0 %v654
        %3918 = vmatpush1.msra.mxu0 %v653
        %3919 = vmatprep.subr.mxu0 %v636
        %3920 = vmatpush1.msra.mxu0 %v635
        %3921 = vmatprep.subr.mxu0 %v618
        %3922 = vmatpush1.msra.mxu0 %v617
        %3923 = vmatprep.subr.mxu0 %v600
        %3924 = vmatpush1.msra.mxu0 %v599
        %3925 = vmatprep.subr.mxu0 %v582
        %3926 = vmatpush1.msra.mxu0 %v581
        %3927 = vmatprep.subr.mxu0 %v564
        %3928 = vmatpush1.msra.mxu0 %v563
        %3929 = vmatprep.subr.mxu0 %v546
        %3930 = vmatpush1.msra.mxu0 %v545
        %3931 = vmatprep.subr.mxu0 %v528
        %3932 = vmatpush1.msra.mxu0 %v527
        %3933 = vmatprep.subr.mxu0 %v510
        %3934 = vmatpush1.msra.mxu0 %v509
        %3935 = vmatprep.subr.mxu0 %v492
        %3936 = vmatpush1.msra.mxu0 %v491
        %3937 = vmatprep.subr.mxu0 %v1050
        %3938 = vmatpush2.msra.mxu0 %v1049
        %3939 = vmatprep.subr.mxu0 %v1032
        %3940 = vmatpush2.msra.mxu0 %v1031
        %3941 = vmatprep.subr.mxu0 %v1014
        %3942 = vmatpush2.msra.mxu0 %v1013
        %3943 = vmatprep.subr.mxu0 %v996
        %3944 = vmatpush2.msra.mxu0 %v995
        %3945 = vmatprep.subr.mxu0 %v978
        %3946 = vmatpush2.msra.mxu0 %v977
        %3947 = vmatprep.subr.mxu0 %v960
        %3948 = vmatpush2.msra.mxu0 %v959
        %3949 = vmatprep.subr.mxu0 %v942
        %3950 = vmatpush2.msra.mxu0 %v941
        %3951 = vmatprep.subr.mxu0 %v924
        %3952 = vmatpush2.msra.mxu0 %v923
        %3953 = vmatprep.subr.mxu0 %v906
        %3954 = vmatpush2.msra.mxu0 %v905
        %3955 = vmatprep.subr.mxu0 %v888
        %3956 = vmatpush2.msra.mxu0 %v887
        %3957 = vmatprep.subr.mxu0 %v870
        %3958 = vmatpush2.msra.mxu0 %v869
        %3959 = vmatprep.subr.mxu0 %v852
        %3960 = vmatpush2.msra.mxu0 %v851
        %3961 = vmatprep.subr.mxu0 %v834
        %3962 = vmatpush2.msra.mxu0 %v833
        %3963 = vmatprep.subr.mxu0 %v816
        %3964 = vmatpush2.msra.mxu0 %v815
        %3965 = vmatprep.subr.mxu0 %v798
        %3966 = vmatpush2.msra.mxu0 %v797
        %3967 = vmatprep.subr.mxu0 %v780
        %3968 = vmatpush2.msra.mxu0 %v779
        %3969 = vmatprep.mubr.f32.mxu0 %v456
        %3970 = vmatmul.mubr.f32.gmra.mxu0 %v455
        %v3971 = vpop.f32.mrf.mxu0
        %v3972 = vadd.f32 %v2264, %v3971
        %v3973 = vpop.f32.mrf.mxu0
        %v3974 = vadd.f32 %v2268, %v3973
        %3975 = vmatprep.mubr.f32.mxu0 %v462
        %3976 = vmatmul.mubr.f32.gmra.mxu0 %v461
        %v3977 = vpop.f32.mrf.mxu0
        %v3978 = vadd.f32 %v2264, %v3977
        %v3979 = vpop.f32.mrf.mxu0
        %v3980 = vadd.f32 %v2268, %v3979
        %3981 = vmatprep.mubr.f32.mxu0 %v468
        %3982 = vmatmul.mubr.f32.gmra.mxu0 %v467
        %v3983 = vpop.f32.mrf.mxu0
        %v3984 = vadd.f32 %v2264, %v3983
        %v3985 = vpop.f32.mrf.mxu0
        %v3986 = vadd.f32 %v2268, %v3985
        %3987 = vmatprep.mubr.f32.mxu0 %v474
        %3988 = vmatmul.mubr.f32.gmra.mxu0 %v473
        %v3989 = vpop.f32.mrf.mxu0
        %v3990 = vadd.f32 %v2264, %v3989
        %v3991 = vpop.f32.mrf.mxu0
        %v3992 = vadd.f32 %v2268, %v3991
        %3993 = vdwg.mxu0
        %3994 = vmatprep.subr.mxu0 %v1338
        %3995 = vmatpush1.msra.mxu0 %v1337
        %3996 = vmatprep.subr.mxu0 %v1320
        %3997 = vmatpush1.msra.mxu0 %v1319
        %3998 = vmatprep.subr.mxu0 %v1302
        %3999 = vmatpush1.msra.mxu0 %v1301
        %4000 = vmatprep.subr.mxu0 %v1284
        %4001 = vmatpush1.msra.mxu0 %v1283
        %4002 = vmatprep.subr.mxu0 %v1266
        %4003 = vmatpush1.msra.mxu0 %v1265
        %4004 = vmatprep.subr.mxu0 %v1248
        %4005 = vmatpush1.msra.mxu0 %v1247
        %4006 = vmatprep.subr.mxu0 %v1230
        %4007 = vmatpush1.msra.mxu0 %v1229
        %4008 = vmatprep.subr.mxu0 %v1212
        %4009 = vmatpush1.msra.mxu0 %v1211
        %4010 = vmatprep.subr.mxu0 %v1194
        %4011 = vmatpush1.msra.mxu0 %v1193
        %4012 = vmatprep.subr.mxu0 %v1176
        %4013 = vmatpush1.msra.mxu0 %v1175
        %4014 = vmatprep.subr.mxu0 %v1158
        %4015 = vmatpush1.msra.mxu0 %v1157
        %4016 = vmatprep.subr.mxu0 %v1140
        %4017 = vmatpush1.msra.mxu0 %v1139
        %4018 = vmatprep.subr.mxu0 %v1122
        %4019 = vmatpush1.msra.mxu0 %v1121
        %4020 = vmatprep.subr.mxu0 %v1104
        %4021 = vmatpush1.msra.mxu0 %v1103
        %4022 = vmatprep.subr.mxu0 %v1086
        %4023 = vmatpush1.msra.mxu0 %v1085
        %4024 = vmatprep.subr.mxu0 %v1068
        %4025 = vmatpush1.msra.mxu0 %v1067
        %4026 = vmatprep.subr.mxu0 %v1626
        %4027 = vmatpush2.msra.mxu0 %v1625
        %4028 = vmatprep.subr.mxu0 %v1608
        %4029 = vmatpush2.msra.mxu0 %v1607
        %4030 = vmatprep.subr.mxu0 %v1590
        %4031 = vmatpush2.msra.mxu0 %v1589
        %4032 = vmatprep.subr.mxu0 %v1572
        %4033 = vmatpush2.msra.mxu0 %v1571
        %4034 = vmatprep.subr.mxu0 %v1554
        %4035 = vmatpush2.msra.mxu0 %v1553
        %4036 = vmatprep.subr.mxu0 %v1536
        %4037 = vmatpush2.msra.mxu0 %v1535
        %4038 = vmatprep.subr.mxu0 %v1518
        %4039 = vmatpush2.msra.mxu0 %v1517
        %4040 = vmatprep.subr.mxu0 %v1500
        %4041 = vmatpush2.msra.mxu0 %v1499
        %4042 = vmatprep.subr.mxu0 %v1482
        %4043 = vmatpush2.msra.mxu0 %v1481
        %4044 = vmatprep.subr.mxu0 %v1464
        %4045 = vmatpush2.msra.mxu0 %v1463
        %4046 = vmatprep.subr.mxu0 %v1446
        %4047 = vmatpush2.msra.mxu0 %v1445
        %4048 = vmatprep.subr.mxu0 %v1428
        %4049 = vmatpush2.msra.mxu0 %v1427
        %4050 = vmatprep.subr.mxu0 %v1410
        %4051 = vmatpush2.msra.mxu0 %v1409
        %4052 = vmatprep.subr.mxu0 %v1392
        %4053 = vmatpush2.msra.mxu0 %v1391
        %4054 = vmatprep.subr.mxu0 %v1374
        %4055 = vmatpush2.msra.mxu0 %v1373
        %4056 = vmatprep.subr.mxu0 %v1356
        %4057 = vmatpush2.msra.mxu0 %v1355
        %4058 = vmatprep.mubr.f32.mxu0 %v458
        %4059 = vmatmul.mubr.f32.gmra.mxu0 %v457
        %v4060 = vpop.f32.mrf.mxu0
        %v4061 = vadd.f32 %v3972, %v4060
        %v4062 = vpop.f32.mrf.mxu0
        %v4063 = vadd.f32 %v3974, %v4062
        %4064 = vmatprep.mubr.f32.mxu0 %v464
        %4065 = vmatmul.mubr.f32.gmra.mxu0 %v463
        %v4066 = vpop.f32.mrf.mxu0
        %v4067 = vadd.f32 %v3978, %v4066
        %v4068 = vpop.f32.mrf.mxu0
        %v4069 = vadd.f32 %v3980, %v4068
        %4070 = vmatprep.mubr.f32.mxu0 %v470
        %4071 = vmatmul.mubr.f32.gmra.mxu0 %v469
        %v4072 = vpop.f32.mrf.mxu0
        %v4073 = vadd.f32 %v3984, %v4072
        %v4074 = vpop.f32.mrf.mxu0
        %v4075 = vadd.f32 %v3986, %v4074
        %4076 = vmatprep.mubr.f32.mxu0 %v476
        %4077 = vmatmul.mubr.f32.gmra.mxu0 %v475
        %v4078 = vpop.f32.mrf.mxu0
        %v4079 = vadd.f32 %v3990, %v4078
        %v4080 = vpop.f32.mrf.mxu0
        %v4081 = vadd.f32 %v3992, %v4080
        %4082 = vdwg.mxu0
        %4083 = vmatprep.subr.mxu0 %v1914
        %4084 = vmatpush1.msra.mxu0 %v1913
        %4085 = vmatprep.subr.mxu0 %v1896
        %4086 = vmatpush1.msra.mxu0 %v1895
        %4087 = vmatprep.subr.mxu0 %v1878
        %4088 = vmatpush1.msra.mxu0 %v1877
        %4089 = vmatprep.subr.mxu0 %v1860
        %4090 = vmatpush1.msra.mxu0 %v1859
        %4091 = vmatprep.subr.mxu0 %v1842
        %4092 = vmatpush1.msra.mxu0 %v1841
        %4093 = vmatprep.subr.mxu0 %v1824
        %4094 = vmatpush1.msra.mxu0 %v1823
        %4095 = vmatprep.subr.mxu0 %v1806
        %4096 = vmatpush1.msra.mxu0 %v1805
        %4097 = vmatprep.subr.mxu0 %v1788
        %4098 = vmatpush1.msra.mxu0 %v1787
        %4099 = vmatprep.subr.mxu0 %v1770
        %4100 = vmatpush1.msra.mxu0 %v1769
        %4101 = vmatprep.subr.mxu0 %v1752
        %4102 = vmatpush1.msra.mxu0 %v1751
        %4103 = vmatprep.subr.mxu0 %v1734
        %4104 = vmatpush1.msra.mxu0 %v1733
        %4105 = vmatprep.subr.mxu0 %v1716
        %4106 = vmatpush1.msra.mxu0 %v1715
        %4107 = vmatprep.subr.mxu0 %v1698
        %4108 = vmatpush1.msra.mxu0 %v1697
        %4109 = vmatprep.subr.mxu0 %v1680
        %4110 = vmatpush1.msra.mxu0 %v1679
        %4111 = vmatprep.subr.mxu0 %v1662
        %4112 = vmatpush1.msra.mxu0 %v1661
        %4113 = vmatprep.subr.mxu0 %v1644
        %4114 = vmatpush1.msra.mxu0 %v1643
        %4115 = vmatprep.subr.mxu0 %v2202
        %4116 = vmatpush2.msra.mxu0 %v2201
        %4117 = vmatprep.subr.mxu0 %v2184
        %4118 = vmatpush2.msra.mxu0 %v2183
        %4119 = vmatprep.subr.mxu0 %v2166
        %4120 = vmatpush2.msra.mxu0 %v2165
        %4121 = vmatprep.subr.mxu0 %v2148
        %4122 = vmatpush2.msra.mxu0 %v2147
        %4123 = vmatprep.subr.mxu0 %v2130
        %4124 = vmatpush2.msra.mxu0 %v2129
        %4125 = vmatprep.subr.mxu0 %v2112
        %4126 = vmatpush2.msra.mxu0 %v2111
        %4127 = vmatprep.subr.mxu0 %v2094
        %4128 = vmatpush2.msra.mxu0 %v2093
        %4129 = vmatprep.subr.mxu0 %v2076
        %4130 = vmatpush2.msra.mxu0 %v2075
        %4131 = vmatprep.subr.mxu0 %v2058
        %4132 = vmatpush2.msra.mxu0 %v2057
        %4133 = vmatprep.subr.mxu0 %v2040
        %4134 = vmatpush2.msra.mxu0 %v2039
        %4135 = vmatprep.subr.mxu0 %v2022
        %4136 = vmatpush2.msra.mxu0 %v2021
        %4137 = vmatprep.subr.mxu0 %v2004
        %4138 = vmatpush2.msra.mxu0 %v2003
        %4139 = vmatprep.subr.mxu0 %v1986
        %4140 = vmatpush2.msra.mxu0 %v1985
        %4141 = vmatprep.subr.mxu0 %v1968
        %4142 = vmatpush2.msra.mxu0 %v1967
        %4143 = vmatprep.subr.mxu0 %v1950
        %4144 = vmatpush2.msra.mxu0 %v1949
        %4145 = vmatprep.subr.mxu0 %v1932
        %4146 = vmatpush2.msra.mxu0 %v1931
        %4147 = vmatprep.mubr.f32.mxu0 %v460
        %4148 = vmatmul.mubr.f32.gmra.mxu0 %v459
        %v4149 = vpop.f32.mrf.mxu0
        %v4150 = vadd.f32 %v4061, %v4149
        %v4151 = vpop.f32.mrf.mxu0
        %v4152 = vadd.f32 %v4063, %v4151
        %4153 = vmatprep.mubr.f32.mxu0 %v466
        %4154 = vmatmul.mubr.f32.gmra.mxu0 %v465
        %v4155 = vpop.f32.mrf.mxu0
        %v4156 = vadd.f32 %v4067, %v4155
        %v4157 = vpop.f32.mrf.mxu0
        %v4158 = vadd.f32 %v4069, %v4157
        %4159 = vmatprep.mubr.f32.mxu0 %v472
        %4160 = vmatmul.mubr.f32.gmra.mxu0 %v471
        %v4161 = vpop.f32.mrf.mxu0
        %v4162 = vadd.f32 %v4073, %v4161
        %v4163 = vpop.f32.mrf.mxu0
        %v4164 = vadd.f32 %v4075, %v4163
        %4165 = vmatprep.mubr.f32.mxu0 %v478
        %4166 = vmatmul.mubr.f32.gmra.mxu0 %v477
        %v4167 = vpop.f32.mrf.mxu0
        %v4168 = vadd.f32 %v4079, %v4167
        %v4169 = vpop.f32.mrf.mxu0
        %v4170 = vadd.f32 %v4081, %v4169
        %4171 = vdwg.mxu0
        %4172 = vmatprep.subr.mxu0 %v764
        %4173 = vmatpush1.msra.mxu0 %v763
        %4174 = vmatprep.subr.mxu0 %v746
        %4175 = vmatpush1.msra.mxu0 %v745
        %4176 = vmatprep.subr.mxu0 %v728
        %4177 = vmatpush1.msra.mxu0 %v727
        %4178 = vmatprep.subr.mxu0 %v710
        %4179 = vmatpush1.msra.mxu0 %v709
        %4180 = vmatprep.subr.mxu0 %v692
        %4181 = vmatpush1.msra.mxu0 %v691
        %4182 = vmatprep.subr.mxu0 %v674
        %4183 = vmatpush1.msra.mxu0 %v673
        %4184 = vmatprep.subr.mxu0 %v656
        %4185 = vmatpush1.msra.mxu0 %v655
        %4186 = vmatprep.subr.mxu0 %v638
        %4187 = vmatpush1.msra.mxu0 %v637
        %4188 = vmatprep.subr.mxu0 %v620
        %4189 = vmatpush1.msra.mxu0 %v619
        %4190 = vmatprep.subr.mxu0 %v602
        %4191 = vmatpush1.msra.mxu0 %v601
        %4192 = vmatprep.subr.mxu0 %v584
        %4193 = vmatpush1.msra.mxu0 %v583
        %4194 = vmatprep.subr.mxu0 %v566
        %4195 = vmatpush1.msra.mxu0 %v565
        %4196 = vmatprep.subr.mxu0 %v548
        %4197 = vmatpush1.msra.mxu0 %v547
        %4198 = vmatprep.subr.mxu0 %v530
        %4199 = vmatpush1.msra.mxu0 %v529
        %4200 = vmatprep.subr.mxu0 %v512
        %4201 = vmatpush1.msra.mxu0 %v511
        %4202 = vmatprep.subr.mxu0 %v494
        %4203 = vmatpush1.msra.mxu0 %v493
        %4204 = vmatprep.subr.mxu0 %v1052
        %4205 = vmatpush2.msra.mxu0 %v1051
        %4206 = vmatprep.subr.mxu0 %v1034
        %4207 = vmatpush2.msra.mxu0 %v1033
        %4208 = vmatprep.subr.mxu0 %v1016
        %4209 = vmatpush2.msra.mxu0 %v1015
        %4210 = vmatprep.subr.mxu0 %v998
        %4211 = vmatpush2.msra.mxu0 %v997
        %4212 = vmatprep.subr.mxu0 %v980
        %4213 = vmatpush2.msra.mxu0 %v979
        %4214 = vmatprep.subr.mxu0 %v962
        %4215 = vmatpush2.msra.mxu0 %v961
        %4216 = vmatprep.subr.mxu0 %v944
        %4217 = vmatpush2.msra.mxu0 %v943
        %4218 = vmatprep.subr.mxu0 %v926
        %4219 = vmatpush2.msra.mxu0 %v925
        %4220 = vmatprep.subr.mxu0 %v908
        %4221 = vmatpush2.msra.mxu0 %v907
        %4222 = vmatprep.subr.mxu0 %v890
        %4223 = vmatpush2.msra.mxu0 %v889
        %4224 = vmatprep.subr.mxu0 %v872
        %4225 = vmatpush2.msra.mxu0 %v871
        %4226 = vmatprep.subr.mxu0 %v854
        %4227 = vmatpush2.msra.mxu0 %v853
        %4228 = vmatprep.subr.mxu0 %v836
        %4229 = vmatpush2.msra.mxu0 %v835
        %4230 = vmatprep.subr.mxu0 %v818
        %4231 = vmatpush2.msra.mxu0 %v817
        %4232 = vmatprep.subr.mxu0 %v800
        %4233 = vmatpush2.msra.mxu0 %v799
        %4234 = vmatprep.subr.mxu0 %v782
        %4235 = vmatpush2.msra.mxu0 %v781
        %4236 = vmatprep.mubr.f32.mxu0 %v456
        %4237 = vmatmul.mubr.f32.gmra.mxu0 %v455
        %v4238 = vpop.f32.mrf.mxu0
        %v4239 = vadd.f32 %v2272, %v4238
        %v4240 = vpop.f32.mrf.mxu0
        %v4241 = vadd.f32 %v2276, %v4240
        %4242 = vmatprep.mubr.f32.mxu0 %v462
        %4243 = vmatmul.mubr.f32.gmra.mxu0 %v461
        %v4244 = vpop.f32.mrf.mxu0
        %v4245 = vadd.f32 %v2272, %v4244
        %v4246 = vpop.f32.mrf.mxu0
        %v4247 = vadd.f32 %v2276, %v4246
        %4248 = vmatprep.mubr.f32.mxu0 %v468
        %4249 = vmatmul.mubr.f32.gmra.mxu0 %v467
        %v4250 = vpop.f32.mrf.mxu0
        %v4251 = vadd.f32 %v2272, %v4250
        %v4252 = vpop.f32.mrf.mxu0
        %v4253 = vadd.f32 %v2276, %v4252
        %4254 = vmatprep.mubr.f32.mxu0 %v474
        %4255 = vmatmul.mubr.f32.gmra.mxu0 %v473
        %v4256 = vpop.f32.mrf.mxu0
        %v4257 = vadd.f32 %v2272, %v4256
        %v4258 = vpop.f32.mrf.mxu0
        %v4259 = vadd.f32 %v2276, %v4258
        %4260 = vdwg.mxu0
        %4261 = vmatprep.subr.mxu0 %v1340
        %4262 = vmatpush1.msra.mxu0 %v1339
        %4263 = vmatprep.subr.mxu0 %v1322
        %4264 = vmatpush1.msra.mxu0 %v1321
        %4265 = vmatprep.subr.mxu0 %v1304
        %4266 = vmatpush1.msra.mxu0 %v1303
        %4267 = vmatprep.subr.mxu0 %v1286
        %4268 = vmatpush1.msra.mxu0 %v1285
        %4269 = vmatprep.subr.mxu0 %v1268
        %4270 = vmatpush1.msra.mxu0 %v1267
        %4271 = vmatprep.subr.mxu0 %v1250
        %4272 = vmatpush1.msra.mxu0 %v1249
        %4273 = vmatprep.subr.mxu0 %v1232
        %4274 = vmatpush1.msra.mxu0 %v1231
        %4275 = vmatprep.subr.mxu0 %v1214
        %4276 = vmatpush1.msra.mxu0 %v1213
        %4277 = vmatprep.subr.mxu0 %v1196
        %4278 = vmatpush1.msra.mxu0 %v1195
        %4279 = vmatprep.subr.mxu0 %v1178
        %4280 = vmatpush1.msra.mxu0 %v1177
        %4281 = vmatprep.subr.mxu0 %v1160
        %4282 = vmatpush1.msra.mxu0 %v1159
        %4283 = vmatprep.subr.mxu0 %v1142
        %4284 = vmatpush1.msra.mxu0 %v1141
        %4285 = vmatprep.subr.mxu0 %v1124
        %4286 = vmatpush1.msra.mxu0 %v1123
        %4287 = vmatprep.subr.mxu0 %v1106
        %4288 = vmatpush1.msra.mxu0 %v1105
        %4289 = vmatprep.subr.mxu0 %v1088
        %4290 = vmatpush1.msra.mxu0 %v1087
        %4291 = vmatprep.subr.mxu0 %v1070
        %4292 = vmatpush1.msra.mxu0 %v1069
        %4293 = vmatprep.subr.mxu0 %v1628
        %4294 = vmatpush2.msra.mxu0 %v1627
        %4295 = vmatprep.subr.mxu0 %v1610
        %4296 = vmatpush2.msra.mxu0 %v1609
        %4297 = vmatprep.subr.mxu0 %v1592
        %4298 = vmatpush2.msra.mxu0 %v1591
        %4299 = vmatprep.subr.mxu0 %v1574
        %4300 = vmatpush2.msra.mxu0 %v1573
        %4301 = vmatprep.subr.mxu0 %v1556
        %4302 = vmatpush2.msra.mxu0 %v1555
        %4303 = vmatprep.subr.mxu0 %v1538
        %4304 = vmatpush2.msra.mxu0 %v1537
        %4305 = vmatprep.subr.mxu0 %v1520
        %4306 = vmatpush2.msra.mxu0 %v1519
        %4307 = vmatprep.subr.mxu0 %v1502
        %4308 = vmatpush2.msra.mxu0 %v1501
        %4309 = vmatprep.subr.mxu0 %v1484
        %4310 = vmatpush2.msra.mxu0 %v1483
        %4311 = vmatprep.subr.mxu0 %v1466
        %4312 = vmatpush2.msra.mxu0 %v1465
        %4313 = vmatprep.subr.mxu0 %v1448
        %4314 = vmatpush2.msra.mxu0 %v1447
        %4315 = vmatprep.subr.mxu0 %v1430
        %4316 = vmatpush2.msra.mxu0 %v1429
        %4317 = vmatprep.subr.mxu0 %v1412
        %4318 = vmatpush2.msra.mxu0 %v1411
        %4319 = vmatprep.subr.mxu0 %v1394
        %4320 = vmatpush2.msra.mxu0 %v1393
        %4321 = vmatprep.subr.mxu0 %v1376
        %4322 = vmatpush2.msra.mxu0 %v1375
        %4323 = vmatprep.subr.mxu0 %v1358
        %4324 = vmatpush2.msra.mxu0 %v1357
        %4325 = vmatprep.mubr.f32.mxu0 %v458
        %4326 = vmatmul.mubr.f32.gmra.mxu0 %v457
        %v4327 = vpop.f32.mrf.mxu0
        %v4328 = vadd.f32 %v4239, %v4327
        %v4329 = vpop.f32.mrf.mxu0
        %v4330 = vadd.f32 %v4241, %v4329
        %4331 = vmatprep.mubr.f32.mxu0 %v464
        %4332 = vmatmul.mubr.f32.gmra.mxu0 %v463
        %v4333 = vpop.f32.mrf.mxu0
        %v4334 = vadd.f32 %v4245, %v4333
        %v4335 = vpop.f32.mrf.mxu0
        %v4336 = vadd.f32 %v4247, %v4335
        %4337 = vmatprep.mubr.f32.mxu0 %v470
        %4338 = vmatmul.mubr.f32.gmra.mxu0 %v469
        %v4339 = vpop.f32.mrf.mxu0
        %v4340 = vadd.f32 %v4251, %v4339
        %v4341 = vpop.f32.mrf.mxu0
        %v4342 = vadd.f32 %v4253, %v4341
        %4343 = vmatprep.mubr.f32.mxu0 %v476
        %4344 = vmatmul.mubr.f32.gmra.mxu0 %v475
        %v4345 = vpop.f32.mrf.mxu0
        %v4346 = vadd.f32 %v4257, %v4345
        %v4347 = vpop.f32.mrf.mxu0
        %v4348 = vadd.f32 %v4259, %v4347
        %4349 = vdwg.mxu0
        %4350 = vmatprep.subr.mxu0 %v1916
        %4351 = vmatpush1.msra.mxu0 %v1915
        %4352 = vmatprep.subr.mxu0 %v1898
        %4353 = vmatpush1.msra.mxu0 %v1897
        %4354 = vmatprep.subr.mxu0 %v1880
        %4355 = vmatpush1.msra.mxu0 %v1879
        %4356 = vmatprep.subr.mxu0 %v1862
        %4357 = vmatpush1.msra.mxu0 %v1861
        %4358 = vmatprep.subr.mxu0 %v1844
        %4359 = vmatpush1.msra.mxu0 %v1843
        %4360 = vmatprep.subr.mxu0 %v1826
        %4361 = vmatpush1.msra.mxu0 %v1825
        %4362 = vmatprep.subr.mxu0 %v1808
        %4363 = vmatpush1.msra.mxu0 %v1807
        %4364 = vmatprep.subr.mxu0 %v1790
        %4365 = vmatpush1.msra.mxu0 %v1789
        %4366 = vmatprep.subr.mxu0 %v1772
        %4367 = vmatpush1.msra.mxu0 %v1771
        %4368 = vmatprep.subr.mxu0 %v1754
        %4369 = vmatpush1.msra.mxu0 %v1753
        %4370 = vmatprep.subr.mxu0 %v1736
        %4371 = vmatpush1.msra.mxu0 %v1735
        %4372 = vmatprep.subr.mxu0 %v1718
        %4373 = vmatpush1.msra.mxu0 %v1717
        %4374 = vmatprep.subr.mxu0 %v1700
        %4375 = vmatpush1.msra.mxu0 %v1699
        %4376 = vmatprep.subr.mxu0 %v1682
        %4377 = vmatpush1.msra.mxu0 %v1681
        %4378 = vmatprep.subr.mxu0 %v1664
        %4379 = vmatpush1.msra.mxu0 %v1663
        %4380 = vmatprep.subr.mxu0 %v1646
        %4381 = vmatpush1.msra.mxu0 %v1645
        %4382 = vmatprep.subr.mxu0 %v2204
        %4383 = vmatpush2.msra.mxu0 %v2203
        %4384 = vmatprep.subr.mxu0 %v2186
        %4385 = vmatpush2.msra.mxu0 %v2185
        %4386 = vmatprep.subr.mxu0 %v2168
        %4387 = vmatpush2.msra.mxu0 %v2167
        %4388 = vmatprep.subr.mxu0 %v2150
        %4389 = vmatpush2.msra.mxu0 %v2149
        %4390 = vmatprep.subr.mxu0 %v2132
        %4391 = vmatpush2.msra.mxu0 %v2131
        %4392 = vmatprep.subr.mxu0 %v2114
        %4393 = vmatpush2.msra.mxu0 %v2113
        %4394 = vmatprep.subr.mxu0 %v2096
        %4395 = vmatpush2.msra.mxu0 %v2095
        %4396 = vmatprep.subr.mxu0 %v2078
        %4397 = vmatpush2.msra.mxu0 %v2077
        %4398 = vmatprep.subr.mxu0 %v2060
        %4399 = vmatpush2.msra.mxu0 %v2059
        %4400 = vmatprep.subr.mxu0 %v2042
        %4401 = vmatpush2.msra.mxu0 %v2041
        %4402 = vmatprep.subr.mxu0 %v2024
        %4403 = vmatpush2.msra.mxu0 %v2023
        %4404 = vmatprep.subr.mxu0 %v2006
        %4405 = vmatpush2.msra.mxu0 %v2005
        %4406 = vmatprep.subr.mxu0 %v1988
        %4407 = vmatpush2.msra.mxu0 %v1987
        %4408 = vmatprep.subr.mxu0 %v1970
        %4409 = vmatpush2.msra.mxu0 %v1969
        %4410 = vmatprep.subr.mxu0 %v1952
        %4411 = vmatpush2.msra.mxu0 %v1951
        %4412 = vmatprep.subr.mxu0 %v1934
        %4413 = vmatpush2.msra.mxu0 %v1933
        %4414 = vmatprep.mubr.f32.mxu0 %v460
        %4415 = vmatmul.mubr.f32.gmra.mxu0 %v459
        %v4416 = vpop.f32.mrf.mxu0
        %v4417 = vadd.f32 %v4328, %v4416
        %v4418 = vpop.f32.mrf.mxu0
        %v4419 = vadd.f32 %v4330, %v4418
        %4420 = vmatprep.mubr.f32.mxu0 %v466
        %4421 = vmatmul.mubr.f32.gmra.mxu0 %v465
        %v4422 = vpop.f32.mrf.mxu0
        %v4423 = vadd.f32 %v4334, %v4422
        %v4424 = vpop.f32.mrf.mxu0
        %v4425 = vadd.f32 %v4336, %v4424
        %4426 = vmatprep.mubr.f32.mxu0 %v472
        %4427 = vmatmul.mubr.f32.gmra.mxu0 %v471
        %v4428 = vpop.f32.mrf.mxu0
        %v4429 = vadd.f32 %v4340, %v4428
        %v4430 = vpop.f32.mrf.mxu0
        %v4431 = vadd.f32 %v4342, %v4430
        %4432 = vmatprep.mubr.f32.mxu0 %v478
        %4433 = vmatmul.mubr.f32.gmra.mxu0 %v477
        %v4434 = vpop.f32.mrf.mxu0
        %v4435 = vadd.f32 %v4346, %v4434
        %v4436 = vpop.f32.mrf.mxu0
        %v4437 = vadd.f32 %v4348, %v4436
        %4438 = vdwg.mxu0
        %4439 = vmatprep.subr.mxu0 %v766
        %4440 = vmatpush1.msra.mxu0 %v765
        %4441 = vmatprep.subr.mxu0 %v748
        %4442 = vmatpush1.msra.mxu0 %v747
        %4443 = vmatprep.subr.mxu0 %v730
        %4444 = vmatpush1.msra.mxu0 %v729
        %4445 = vmatprep.subr.mxu0 %v712
        %4446 = vmatpush1.msra.mxu0 %v711
        %4447 = vmatprep.subr.mxu0 %v694
        %4448 = vmatpush1.msra.mxu0 %v693
        %4449 = vmatprep.subr.mxu0 %v676
        %4450 = vmatpush1.msra.mxu0 %v675
        %4451 = vmatprep.subr.mxu0 %v658
        %4452 = vmatpush1.msra.mxu0 %v657
        %4453 = vmatprep.subr.mxu0 %v640
        %4454 = vmatpush1.msra.mxu0 %v639
        %4455 = vmatprep.subr.mxu0 %v622
        %4456 = vmatpush1.msra.mxu0 %v621
        %4457 = vmatprep.subr.mxu0 %v604
        %4458 = vmatpush1.msra.mxu0 %v603
        %4459 = vmatprep.subr.mxu0 %v586
        %4460 = vmatpush1.msra.mxu0 %v585
        %4461 = vmatprep.subr.mxu0 %v568
        %4462 = vmatpush1.msra.mxu0 %v567
        %4463 = vmatprep.subr.mxu0 %v550
        %4464 = vmatpush1.msra.mxu0 %v549
        %4465 = vmatprep.subr.mxu0 %v532
        %4466 = vmatpush1.msra.mxu0 %v531
        %4467 = vmatprep.subr.mxu0 %v514
        %4468 = vmatpush1.msra.mxu0 %v513
        %4469 = vmatprep.subr.mxu0 %v496
        %4470 = vmatpush1.msra.mxu0 %v495
        %4471 = vmatprep.subr.mxu0 %v1054
        %4472 = vmatpush2.msra.mxu0 %v1053
        %4473 = vmatprep.subr.mxu0 %v1036
        %4474 = vmatpush2.msra.mxu0 %v1035
        %4475 = vmatprep.subr.mxu0 %v1018
        %4476 = vmatpush2.msra.mxu0 %v1017
        %4477 = vmatprep.subr.mxu0 %v1000
        %4478 = vmatpush2.msra.mxu0 %v999
        %4479 = vmatprep.subr.mxu0 %v982
        %4480 = vmatpush2.msra.mxu0 %v981
        %4481 = vmatprep.subr.mxu0 %v964
        %4482 = vmatpush2.msra.mxu0 %v963
        %4483 = vmatprep.subr.mxu0 %v946
        %4484 = vmatpush2.msra.mxu0 %v945
        %4485 = vmatprep.subr.mxu0 %v928
        %4486 = vmatpush2.msra.mxu0 %v927
        %4487 = vmatprep.subr.mxu0 %v910
        %4488 = vmatpush2.msra.mxu0 %v909
        %4489 = vmatprep.subr.mxu0 %v892
        %4490 = vmatpush2.msra.mxu0 %v891
        %4491 = vmatprep.subr.mxu0 %v874
        %4492 = vmatpush2.msra.mxu0 %v873
        %4493 = vmatprep.subr.mxu0 %v856
        %4494 = vmatpush2.msra.mxu0 %v855
        %4495 = vmatprep.subr.mxu0 %v838
        %4496 = vmatpush2.msra.mxu0 %v837
        %4497 = vmatprep.subr.mxu0 %v820
        %4498 = vmatpush2.msra.mxu0 %v819
        %4499 = vmatprep.subr.mxu0 %v802
        %4500 = vmatpush2.msra.mxu0 %v801
        %4501 = vmatprep.subr.mxu0 %v784
        %4502 = vmatpush2.msra.mxu0 %v783
        %4503 = vmatprep.mubr.f32.mxu0 %v456
        %4504 = vmatmul.mubr.f32.gmra.mxu0 %v455
        %v4505 = vpop.f32.mrf.mxu0
        %v4506 = vadd.f32 %v2280, %v4505
        %v4507 = vpop.f32.mrf.mxu0
        %v4508 = vadd.f32 %v2284, %v4507
        %4509 = vmatprep.mubr.f32.mxu0 %v462
        %4510 = vmatmul.mubr.f32.gmra.mxu0 %v461
        %v4511 = vpop.f32.mrf.mxu0
        %v4512 = vadd.f32 %v2280, %v4511
        %v4513 = vpop.f32.mrf.mxu0
        %v4514 = vadd.f32 %v2284, %v4513
        %4515 = vmatprep.mubr.f32.mxu0 %v468
        %4516 = vmatmul.mubr.f32.gmra.mxu0 %v467
        %v4517 = vpop.f32.mrf.mxu0
        %v4518 = vadd.f32 %v2280, %v4517
        %v4519 = vpop.f32.mrf.mxu0
        %v4520 = vadd.f32 %v2284, %v4519
        %4521 = vmatprep.mubr.f32.mxu0 %v474
        %4522 = vmatmul.mubr.f32.gmra.mxu0 %v473
        %v4523 = vpop.f32.mrf.mxu0
        %v4524 = vadd.f32 %v2280, %v4523
        %v4525 = vpop.f32.mrf.mxu0
        %v4526 = vadd.f32 %v2284, %v4525
        %4527 = vdwg.mxu0
        %4528 = vmatprep.subr.mxu0 %v1342
        %4529 = vmatpush1.msra.mxu0 %v1341
        %4530 = vmatprep.subr.mxu0 %v1324
        %4531 = vmatpush1.msra.mxu0 %v1323
        %4532 = vmatprep.subr.mxu0 %v1306
        %4533 = vmatpush1.msra.mxu0 %v1305
        %4534 = vmatprep.subr.mxu0 %v1288
        %4535 = vmatpush1.msra.mxu0 %v1287
        %4536 = vmatprep.subr.mxu0 %v1270
        %4537 = vmatpush1.msra.mxu0 %v1269
        %4538 = vmatprep.subr.mxu0 %v1252
        %4539 = vmatpush1.msra.mxu0 %v1251
        %4540 = vmatprep.subr.mxu0 %v1234
        %4541 = vmatpush1.msra.mxu0 %v1233
        %4542 = vmatprep.subr.mxu0 %v1216
        %4543 = vmatpush1.msra.mxu0 %v1215
        %4544 = vmatprep.subr.mxu0 %v1198
        %4545 = vmatpush1.msra.mxu0 %v1197
        %4546 = vmatprep.subr.mxu0 %v1180
        %4547 = vmatpush1.msra.mxu0 %v1179
        %4548 = vmatprep.subr.mxu0 %v1162
        %4549 = vmatpush1.msra.mxu0 %v1161
        %4550 = vmatprep.subr.mxu0 %v1144
        %4551 = vmatpush1.msra.mxu0 %v1143
        %4552 = vmatprep.subr.mxu0 %v1126
        %4553 = vmatpush1.msra.mxu0 %v1125
        %4554 = vmatprep.subr.mxu0 %v1108
        %4555 = vmatpush1.msra.mxu0 %v1107
        %4556 = vmatprep.subr.mxu0 %v1090
        %4557 = vmatpush1.msra.mxu0 %v1089
        %4558 = vmatprep.subr.mxu0 %v1072
        %4559 = vmatpush1.msra.mxu0 %v1071
        %4560 = vmatprep.subr.mxu0 %v1630
        %4561 = vmatpush2.msra.mxu0 %v1629
        %4562 = vmatprep.subr.mxu0 %v1612
        %4563 = vmatpush2.msra.mxu0 %v1611
        %4564 = vmatprep.subr.mxu0 %v1594
        %4565 = vmatpush2.msra.mxu0 %v1593
        %4566 = vmatprep.subr.mxu0 %v1576
        %4567 = vmatpush2.msra.mxu0 %v1575
        %4568 = vmatprep.subr.mxu0 %v1558
        %4569 = vmatpush2.msra.mxu0 %v1557
        %4570 = vmatprep.subr.mxu0 %v1540
        %4571 = vmatpush2.msra.mxu0 %v1539
        %4572 = vmatprep.subr.mxu0 %v1522
        %4573 = vmatpush2.msra.mxu0 %v1521
        %4574 = vmatprep.subr.mxu0 %v1504
        %4575 = vmatpush2.msra.mxu0 %v1503
        %4576 = vmatprep.subr.mxu0 %v1486
        %4577 = vmatpush2.msra.mxu0 %v1485
        %4578 = vmatprep.subr.mxu0 %v1468
        %4579 = vmatpush2.msra.mxu0 %v1467
        %4580 = vmatprep.subr.mxu0 %v1450
        %4581 = vmatpush2.msra.mxu0 %v1449
        %4582 = vmatprep.subr.mxu0 %v1432
        %4583 = vmatpush2.msra.mxu0 %v1431
        %4584 = vmatprep.subr.mxu0 %v1414
        %4585 = vmatpush2.msra.mxu0 %v1413
        %4586 = vmatprep.subr.mxu0 %v1396
        %4587 = vmatpush2.msra.mxu0 %v1395
        %4588 = vmatprep.subr.mxu0 %v1378
        %4589 = vmatpush2.msra.mxu0 %v1377
        %4590 = vmatprep.subr.mxu0 %v1360
        %4591 = vmatpush2.msra.mxu0 %v1359
        %4592 = vmatprep.mubr.f32.mxu0 %v458
        %4593 = vmatmul.mubr.f32.gmra.mxu0 %v457
        %v4594 = vpop.f32.mrf.mxu0
        %v4595 = vadd.f32 %v4506, %v4594
        %v4596 = vpop.f32.mrf.mxu0
        %v4597 = vadd.f32 %v4508, %v4596
        %4598 = vmatprep.mubr.f32.mxu0 %v464
        %4599 = vmatmul.mubr.f32.gmra.mxu0 %v463
        %v4600 = vpop.f32.mrf.mxu0
        %v4601 = vadd.f32 %v4512, %v4600
        %v4602 = vpop.f32.mrf.mxu0
        %v4603 = vadd.f32 %v4514, %v4602
        %4604 = vmatprep.mubr.f32.mxu0 %v470
        %4605 = vmatmul.mubr.f32.gmra.mxu0 %v469
        %v4606 = vpop.f32.mrf.mxu0
        %v4607 = vadd.f32 %v4518, %v4606
        %v4608 = vpop.f32.mrf.mxu0
        %v4609 = vadd.f32 %v4520, %v4608
        %4610 = vmatprep.mubr.f32.mxu0 %v476
        %4611 = vmatmul.mubr.f32.gmra.mxu0 %v475
        %v4612 = vpop.f32.mrf.mxu0
        %v4613 = vadd.f32 %v4524, %v4612
        %v4614 = vpop.f32.mrf.mxu0
        %v4615 = vadd.f32 %v4526, %v4614
        %4616 = vdwg.mxu0
        %4617 = vmatprep.subr.mxu0 %v1918
        %4618 = vmatpush1.msra.mxu0 %v1917
        %4619 = vmatprep.subr.mxu0 %v1900
        %4620 = vmatpush1.msra.mxu0 %v1899
        %4621 = vmatprep.subr.mxu0 %v1882
        %4622 = vmatpush1.msra.mxu0 %v1881
        %4623 = vmatprep.subr.mxu0 %v1864
        %4624 = vmatpush1.msra.mxu0 %v1863
        %4625 = vmatprep.subr.mxu0 %v1846
        %4626 = vmatpush1.msra.mxu0 %v1845
        %4627 = vmatprep.subr.mxu0 %v1828
        %4628 = vmatpush1.msra.mxu0 %v1827
        %4629 = vmatprep.subr.mxu0 %v1810
        %4630 = vmatpush1.msra.mxu0 %v1809
        %4631 = vmatprep.subr.mxu0 %v1792
        %4632 = vmatpush1.msra.mxu0 %v1791
        %4633 = vmatprep.subr.mxu0 %v1774
        %4634 = vmatpush1.msra.mxu0 %v1773
        %4635 = vmatprep.subr.mxu0 %v1756
        %4636 = vmatpush1.msra.mxu0 %v1755
        %4637 = vmatprep.subr.mxu0 %v1738
        %4638 = vmatpush1.msra.mxu0 %v1737
        %4639 = vmatprep.subr.mxu0 %v1720
        %4640 = vmatpush1.msra.mxu0 %v1719
        %4641 = vmatprep.subr.mxu0 %v1702
        %4642 = vmatpush1.msra.mxu0 %v1701
        %4643 = vmatprep.subr.mxu0 %v1684
        %4644 = vmatpush1.msra.mxu0 %v1683
        %4645 = vmatprep.subr.mxu0 %v1666
        %4646 = vmatpush1.msra.mxu0 %v1665
        %4647 = vmatprep.subr.mxu0 %v1648
        %4648 = vmatpush1.msra.mxu0 %v1647
        %4649 = vmatprep.subr.mxu0 %v2206
        %4650 = vmatpush2.msra.mxu0 %v2205
        %4651 = vmatprep.subr.mxu0 %v2188
        %4652 = vmatpush2.msra.mxu0 %v2187
        %4653 = vmatprep.subr.mxu0 %v2170
        %4654 = vmatpush2.msra.mxu0 %v2169
        %4655 = vmatprep.subr.mxu0 %v2152
        %4656 = vmatpush2.msra.mxu0 %v2151
        %4657 = vmatprep.subr.mxu0 %v2134
        %4658 = vmatpush2.msra.mxu0 %v2133
        %4659 = vmatprep.subr.mxu0 %v2116
        %4660 = vmatpush2.msra.mxu0 %v2115
        %4661 = vmatprep.subr.mxu0 %v2098
        %4662 = vmatpush2.msra.mxu0 %v2097
        %4663 = vmatprep.subr.mxu0 %v2080
        %4664 = vmatpush2.msra.mxu0 %v2079
        %4665 = vmatprep.subr.mxu0 %v2062
        %4666 = vmatpush2.msra.mxu0 %v2061
        %4667 = vmatprep.subr.mxu0 %v2044
        %4668 = vmatpush2.msra.mxu0 %v2043
        %4669 = vmatprep.subr.mxu0 %v2026
        %4670 = vmatpush2.msra.mxu0 %v2025
        %4671 = vmatprep.subr.mxu0 %v2008
        %4672 = vmatpush2.msra.mxu0 %v2007
        %4673 = vmatprep.subr.mxu0 %v1990
        %4674 = vmatpush2.msra.mxu0 %v1989
        %4675 = vmatprep.subr.mxu0 %v1972
        %4676 = vmatpush2.msra.mxu0 %v1971
        %4677 = vmatprep.subr.mxu0 %v1954
        %4678 = vmatpush2.msra.mxu0 %v1953
        %4679 = vmatprep.subr.mxu0 %v1936
        %4680 = vmatpush2.msra.mxu0 %v1935
        %4681 = vmatprep.mubr.f32.mxu0 %v460
        %4682 = vmatmul.mubr.f32.gmra.mxu0 %v459
        %v4683 = vpop.f32.mrf.mxu0
        %v4684 = vadd.f32 %v4595, %v4683
        %v4685 = vpop.f32.mrf.mxu0
        %v4686 = vadd.f32 %v4597, %v4685
        %4687 = vmatprep.mubr.f32.mxu0 %v466
        %4688 = vmatmul.mubr.f32.gmra.mxu0 %v465
        %v4689 = vpop.f32.mrf.mxu0
        %v4690 = vadd.f32 %v4601, %v4689
        %v4691 = vpop.f32.mrf.mxu0
        %v4692 = vadd.f32 %v4603, %v4691
        %4693 = vmatprep.mubr.f32.mxu0 %v472
        %4694 = vmatmul.mubr.f32.gmra.mxu0 %v471
        %v4695 = vpop.f32.mrf.mxu0
        %v4696 = vadd.f32 %v4607, %v4695
        %v4697 = vpop.f32.mrf.mxu0
        %v4698 = vadd.f32 %v4609, %v4697
        %4699 = vmatprep.mubr.f32.mxu0 %v478
        %4700 = vmatmul.mubr.f32.gmra.mxu0 %v477
        %v4701 = vpop.f32.mrf.mxu0
        %v4702 = vadd.f32 %v4613, %v4701
        %v4703 = vpop.f32.mrf.mxu0
        %v4704 = vadd.f32 %v4615, %v4703
        %4705 = vdwg.mxu0
        %v4706 = vmul.f32 %v2548, 0.05
        %v4707 = vmul.f32 %v2550, 0.05
        %v4708 = vmul.f32 %v2815, 0.05
        %v4709 = vmul.f32 %v2817, 0.05
        %v4710 = vmul.f32 %v3082, 0.05
        %v4711 = vmul.f32 %v3084, 0.05
        %v4712 = vmul.f32 %v2554, 0.05
        %v4713 = vmul.f32 %v2556, 0.05
        %v4714 = vmul.f32 %v2821, 0.05
        %v4715 = vmul.f32 %v2823, 0.05
        %v4716 = vmul.f32 %v3088, 0.05
        %v4717 = vmul.f32 %v3090, 0.05
        %v4718 = vmul.f32 %v2560, 0.05
        %v4719 = vmul.f32 %v2562, 0.05
        %v4720 = vmul.f32 %v2827, 0.05
        %v4721 = vmul.f32 %v2829, 0.05
        %v4722 = vmul.f32 %v3094, 0.05
        %v4723 = vmul.f32 %v3096, 0.05
        %v4724 = vmul.f32 %v2566, 0.05
        %v4725 = vmul.f32 %v2568, 0.05
        %v4726 = vmul.f32 %v2833, 0.05
        %v4727 = vmul.f32 %v2835, 0.05
        %v4728 = vmul.f32 %v3100, 0.05
        %v4729 = vmul.f32 %v3102, 0.05
        %v4730 = vld [vmem:[%s451] sm:$0xff]
        %v4731 = vld [vmem:[%s451 + $0x8] sm:$0xff]
        %v4732 = vld [vmem:[%s451 + $0x10] sm:$0xff]
        %v4733 = vld [vmem:[%s451 + $0x18] sm:$0xff]
        %vm4734 = vcmp.gt.f32.partialorder %v4730, 0.5
        %vm4735 = vcmp.gt.f32.partialorder %v4731, 0.5
        %vm4736 = vcmp.gt.f32.partialorder %v4732, 0.5
        %vm4737 = vcmp.gt.f32.partialorder %v4733, 0.5
        %v4738 = vlaneseq
        %v4739 = vshrl.u32 %v4738, 7
        %v4740 = vlaneseq
        %v4741 = vand.u32 %v4740, 127
        %vm4742 = vcmp.gt.s32.totalorder %v4741, %v4739
        %v4743 = vsel %vm4742, 1, 0
        %vm4744 = vcmp.eq.s32.totalorder %v4743, 1
        %v4745 = vsel %vm4734, 1, 0
        %v4746 = vsel %vm4735, 1, 0
        %v4747 = vsel %vm4736, 1, 0
        %v4748 = vsel %vm4737, 1, 0
        %4749 = vset.pattern.permute.xlu0 0
        %4750 = vperm.xlu0 %4749, %v4745
        %v4751 = vpop.permute.xlu0 %4750
        %4752 = vset.pattern.permute.xlu0 0
        %4753 = vperm.xlu0 %4752, %v4746
        %v4754 = vpop.permute.xlu0 %4753
        %4755 = vset.pattern.permute.xlu0 0
        %4756 = vperm.xlu0 %4755, %v4747
        %v4757 = vpop.permute.xlu0 %4756
        %4758 = vset.pattern.permute.xlu0 0
        %4759 = vperm.xlu0 %4758, %v4748
        %v4760 = vpop.permute.xlu0 %4759
        %vm4761 = vcmp.eq.s32.totalorder %v4751, 1
        %vm4762 = vcmp.eq.s32.totalorder %v4754, 1
        %vm4763 = vcmp.eq.s32.totalorder %v4757, 1
        %vm4764 = vcmp.eq.s32.totalorder %v4760, 1
        %vm4765 = vmor %vm4744, %vm4761
        %vm4766 = vmor %vm4744, %vm4762
        %vm4767 = vmor %vm4744, %vm4763
        %vm4768 = vmor %vm4744, %vm4764
        %vm4769 = vcmask 523264
        %v4771 = vsel %vm4769, %v4707, 0
        %v4774 = vsel %vm4769, %v3351, 0
        %4776 = vmatprep.subr.mxu0 0.0
        %4777 = vmatpush1.xpose.msra.mxu0 0.0
        %4778 = vmatprep.subr.mxu0 0.0
        %4779 = vmatpush1.xpose.msra.mxu0 0.0
        %4780 = vmatprep.subr.mxu0 0.0
        %4781 = vmatpush1.xpose.msra.mxu0 0.0
        %4782 = vmatprep.subr.mxu0 0.0
        %4783 = vmatpush1.xpose.msra.mxu0 0.0
        %4784 = vmatprep.subr.mxu0 0.0
        %4785 = vmatpush1.xpose.msra.mxu0 0.0
        %4786 = vmatprep.subr.mxu0 0.0
        %4787 = vmatpush1.xpose.msra.mxu0 0.0
        %4788 = vmatprep.subr.mxu0 0.0
        %4789 = vmatpush1.xpose.msra.mxu0 0.0
        %4790 = vmatprep.subr.mxu0 0.0
        %4791 = vmatpush1.xpose.msra.mxu0 0.0
        %4792 = vmatprep.subr.mxu0 0.0
        %4793 = vmatpush1.xpose.msra.mxu0 0.0
        %4794 = vmatprep.subr.mxu0 0.0
        %4795 = vmatpush1.xpose.msra.mxu0 0.0
        %4796 = vmatprep.subr.mxu0 0.0
        %4797 = vmatpush1.xpose.msra.mxu0 0.0
        %4798 = vmatprep.subr.mxu0 0.0
        %4799 = vmatpush1.xpose.msra.mxu0 0.0
        %4800 = vmatprep.subr.mxu0 0.0
        %4801 = vmatpush1.xpose.msra.mxu0 0.0
        %4802 = vmatprep.subr.mxu0 0.0
        %4803 = vmatpush1.xpose.msra.mxu0 0.0
        %4804 = vmatprep.subr.mxu0 0.0
        %4805 = vmatpush1.xpose.msra.mxu0 0.0
        %4806 = vmatprep.subr.mxu0 %v4774
        %4807 = vmatpush1.xpose.msra.mxu0 %v3349
        %4808 = vmatprep.subr.mxu0 0.0
        %4809 = vmatpush2.xpose.msra.mxu0 0.0
        %4810 = vmatprep.subr.mxu0 0.0
        %4811 = vmatpush2.xpose.msra.mxu0 0.0
        %4812 = vmatprep.subr.mxu0 0.0
        %4813 = vmatpush2.xpose.msra.mxu0 0.0
        %4814 = vmatprep.subr.mxu0 0.0
        %4815 = vmatpush2.xpose.msra.mxu0 0.0
        %4816 = vmatprep.subr.mxu0 0.0
        %4817 = vmatpush2.xpose.msra.mxu0 0.0
        %4818 = vmatprep.subr.mxu0 0.0
        %4819 = vmatpush2.xpose.msra.mxu0 0.0
        %4820 = vmatprep.subr.mxu0 0.0
        %4821 = vmatpush2.xpose.msra.mxu0 0.0
        %4822 = vmatprep.subr.mxu0 0.0
        %4823 = vmatpush2.xpose.msra.mxu0 0.0
        %4824 = vmatprep.subr.mxu0 0.0
        %4825 = vmatpush2.xpose.msra.mxu0 0.0
        %4826 = vmatprep.subr.mxu0 0.0
        %4827 = vmatpush2.xpose.msra.mxu0 0.0
        %4828 = vmatprep.subr.mxu0 0.0
        %4829 = vmatpush2.xpose.msra.mxu0 0.0
        %4830 = vmatprep.subr.mxu0 0.0
        %4831 = vmatpush2.xpose.msra.mxu0 0.0
        %4832 = vmatprep.subr.mxu0 0.0
        %4833 = vmatpush2.xpose.msra.mxu0 0.0
        %4834 = vmatprep.subr.mxu0 0.0
        %4835 = vmatpush2.xpose.msra.mxu0 0.0
        %4836 = vmatprep.subr.mxu0 0.0
        %4837 = vmatpush2.xpose.msra.mxu0 0.0
        %4838 = vmatprep.subr.mxu0 0.0
        %4839 = vmatpush2.xpose.msra.mxu0 0.0
        %4840 = vmatprep.mubr.f32.mxu0 %v4771
        %4841 = vmatmul.mubr.f32.gmra.mxu0 %v4706
        %v4842 = vpop.f32.mrf.mxu0
        %v4843 = vadd.f32 0.0, %v4842
        %v4844 = vpop.f32.mrf.mxu0
        %4845 = vdwg.mxu0
        %v4847 = vsel %vm4769, %v4713, 0
        %v4850 = vsel %vm4769, %v3357, 0
        %4852 = vmatprep.subr.mxu0 0.0
        %4853 = vmatpush1.xpose.msra.mxu0 0.0
        %4854 = vmatprep.subr.mxu0 0.0
        %4855 = vmatpush1.xpose.msra.mxu0 0.0
        %4856 = vmatprep.subr.mxu0 0.0
        %4857 = vmatpush1.xpose.msra.mxu0 0.0
        %4858 = vmatprep.subr.mxu0 0.0
        %4859 = vmatpush1.xpose.msra.mxu0 0.0
        %4860 = vmatprep.subr.mxu0 0.0
        %4861 = vmatpush1.xpose.msra.mxu0 0.0
        %4862 = vmatprep.subr.mxu0 0.0
        %4863 = vmatpush1.xpose.msra.mxu0 0.0
        %4864 = vmatprep.subr.mxu0 0.0
        %4865 = vmatpush1.xpose.msra.mxu0 0.0
        %4866 = vmatprep.subr.mxu0 0.0
        %4867 = vmatpush1.xpose.msra.mxu0 0.0
        %4868 = vmatprep.subr.mxu0 0.0
        %4869 = vmatpush1.xpose.msra.mxu0 0.0
        %4870 = vmatprep.subr.mxu0 0.0
        %4871 = vmatpush1.xpose.msra.mxu0 0.0
        %4872 = vmatprep.subr.mxu0 0.0
        %4873 = vmatpush1.xpose.msra.mxu0 0.0
        %4874 = vmatprep.subr.mxu0 0.0
        %4875 = vmatpush1.xpose.msra.mxu0 0.0
        %4876 = vmatprep.subr.mxu0 0.0
        %4877 = vmatpush1.xpose.msra.mxu0 0.0
        %4878 = vmatprep.subr.mxu0 0.0
        %4879 = vmatpush1.xpose.msra.mxu0 0.0
        %4880 = vmatprep.subr.mxu0 0.0
        %4881 = vmatpush1.xpose.msra.mxu0 0.0
        %4882 = vmatprep.subr.mxu0 %v4850
        %4883 = vmatpush1.xpose.msra.mxu0 %v3355
        %4884 = vmatprep.subr.mxu0 0.0
        %4885 = vmatpush2.xpose.msra.mxu0 0.0
        %4886 = vmatprep.subr.mxu0 0.0
        %4887 = vmatpush2.xpose.msra.mxu0 0.0
        %4888 = vmatprep.subr.mxu0 0.0
        %4889 = vmatpush2.xpose.msra.mxu0 0.0
        %4890 = vmatprep.subr.mxu0 0.0
        %4891 = vmatpush2.xpose.msra.mxu0 0.0
        %4892 = vmatprep.subr.mxu0 0.0
        %4893 = vmatpush2.xpose.msra.mxu0 0.0
        %4894 = vmatprep.subr.mxu0 0.0
        %4895 = vmatpush2.xpose.msra.mxu0 0.0
        %4896 = vmatprep.subr.mxu0 0.0
        %4897 = vmatpush2.xpose.msra.mxu0 0.0
        %4898 = vmatprep.subr.mxu0 0.0
        %4899 = vmatpush2.xpose.msra.mxu0 0.0
        %4900 = vmatprep.subr.mxu0 0.0
        %4901 = vmatpush2.xpose.msra.mxu0 0.0
        %4902 = vmatprep.subr.mxu0 0.0
        %4903 = vmatpush2.xpose.msra.mxu0 0.0
        %4904 = vmatprep.subr.mxu0 0.0
        %4905 = vmatpush2.xpose.msra.mxu0 0.0
        %4906 = vmatprep.subr.mxu0 0.0
        %4907 = vmatpush2.xpose.msra.mxu0 0.0
        %4908 = vmatprep.subr.mxu0 0.0
        %4909 = vmatpush2.xpose.msra.mxu0 0.0
        %4910 = vmatprep.subr.mxu0 0.0
        %4911 = vmatpush2.xpose.msra.mxu0 0.0
        %4912 = vmatprep.subr.mxu0 0.0
        %4913 = vmatpush2.xpose.msra.mxu0 0.0
        %4914 = vmatprep.subr.mxu0 0.0
        %4915 = vmatpush2.xpose.msra.mxu0 0.0
        %4916 = vmatprep.mubr.f32.mxu0 %v4847
        %4917 = vmatmul.mubr.f32.gmra.mxu0 %v4712
        %v4918 = vpop.f32.mrf.mxu0
        %v4919 = vadd.f32 0.0, %v4918
        %v4920 = vpop.f32.mrf.mxu0
        %4921 = vdwg.mxu0
        %v4923 = vsel %vm4769, %v4719, 0
        %v4926 = vsel %vm4769, %v3363, 0
        %4928 = vmatprep.subr.mxu0 0.0
        %4929 = vmatpush1.xpose.msra.mxu0 0.0
        %4930 = vmatprep.subr.mxu0 0.0
        %4931 = vmatpush1.xpose.msra.mxu0 0.0
        %4932 = vmatprep.subr.mxu0 0.0
        %4933 = vmatpush1.xpose.msra.mxu0 0.0
        %4934 = vmatprep.subr.mxu0 0.0
        %4935 = vmatpush1.xpose.msra.mxu0 0.0
        %4936 = vmatprep.subr.mxu0 0.0
        %4937 = vmatpush1.xpose.msra.mxu0 0.0
        %4938 = vmatprep.subr.mxu0 0.0
        %4939 = vmatpush1.xpose.msra.mxu0 0.0
        %4940 = vmatprep.subr.mxu0 0.0
        %4941 = vmatpush1.xpose.msra.mxu0 0.0
        %4942 = vmatprep.subr.mxu0 0.0
        %4943 = vmatpush1.xpose.msra.mxu0 0.0
        %4944 = vmatprep.subr.mxu0 0.0
        %4945 = vmatpush1.xpose.msra.mxu0 0.0
        %4946 = vmatprep.subr.mxu0 0.0
        %4947 = vmatpush1.xpose.msra.mxu0 0.0
        %4948 = vmatprep.subr.mxu0 0.0
        %4949 = vmatpush1.xpose.msra.mxu0 0.0
        %4950 = vmatprep.subr.mxu0 0.0
        %4951 = vmatpush1.xpose.msra.mxu0 0.0
        %4952 = vmatprep.subr.mxu0 0.0
        %4953 = vmatpush1.xpose.msra.mxu0 0.0
        %4954 = vmatprep.subr.mxu0 0.0
        %4955 = vmatpush1.xpose.msra.mxu0 0.0
        %4956 = vmatprep.subr.mxu0 0.0
        %4957 = vmatpush1.xpose.msra.mxu0 0.0
        %4958 = vmatprep.subr.mxu0 %v4926
        %4959 = vmatpush1.xpose.msra.mxu0 %v3361
        %4960 = vmatprep.subr.mxu0 0.0
        %4961 = vmatpush2.xpose.msra.mxu0 0.0
        %4962 = vmatprep.subr.mxu0 0.0
        %4963 = vmatpush2.xpose.msra.mxu0 0.0
        %4964 = vmatprep.subr.mxu0 0.0
        %4965 = vmatpush2.xpose.msra.mxu0 0.0
        %4966 = vmatprep.subr.mxu0 0.0
        %4967 = vmatpush2.xpose.msra.mxu0 0.0
        %4968 = vmatprep.subr.mxu0 0.0
        %4969 = vmatpush2.xpose.msra.mxu0 0.0
        %4970 = vmatprep.subr.mxu0 0.0
        %4971 = vmatpush2.xpose.msra.mxu0 0.0
        %4972 = vmatprep.subr.mxu0 0.0
        %4973 = vmatpush2.xpose.msra.mxu0 0.0
        %4974 = vmatprep.subr.mxu0 0.0
        %4975 = vmatpush2.xpose.msra.mxu0 0.0
        %4976 = vmatprep.subr.mxu0 0.0
        %4977 = vmatpush2.xpose.msra.mxu0 0.0
        %4978 = vmatprep.subr.mxu0 0.0
        %4979 = vmatpush2.xpose.msra.mxu0 0.0
        %4980 = vmatprep.subr.mxu0 0.0
        %4981 = vmatpush2.xpose.msra.mxu0 0.0
        %4982 = vmatprep.subr.mxu0 0.0
        %4983 = vmatpush2.xpose.msra.mxu0 0.0
        %4984 = vmatprep.subr.mxu0 0.0
        %4985 = vmatpush2.xpose.msra.mxu0 0.0
        %4986 = vmatprep.subr.mxu0 0.0
        %4987 = vmatpush2.xpose.msra.mxu0 0.0
        %4988 = vmatprep.subr.mxu0 0.0
        %4989 = vmatpush2.xpose.msra.mxu0 0.0
        %4990 = vmatprep.subr.mxu0 0.0
        %4991 = vmatpush2.xpose.msra.mxu0 0.0
        %4992 = vmatprep.mubr.f32.mxu0 %v4923
        %4993 = vmatmul.mubr.f32.gmra.mxu0 %v4718
        %v4994 = vpop.f32.mrf.mxu0
        %v4995 = vadd.f32 0.0, %v4994
        %v4996 = vpop.f32.mrf.mxu0
        %4997 = vdwg.mxu0
        %v4999 = vsel %vm4769, %v4725, 0
        %v5002 = vsel %vm4769, %v3369, 0
        %5004 = vmatprep.subr.mxu0 0.0
        %5005 = vmatpush1.xpose.msra.mxu0 0.0
        %5006 = vmatprep.subr.mxu0 0.0
        %5007 = vmatpush1.xpose.msra.mxu0 0.0
        %5008 = vmatprep.subr.mxu0 0.0
        %5009 = vmatpush1.xpose.msra.mxu0 0.0
        %5010 = vmatprep.subr.mxu0 0.0
        %5011 = vmatpush1.xpose.msra.mxu0 0.0
        %5012 = vmatprep.subr.mxu0 0.0
        %5013 = vmatpush1.xpose.msra.mxu0 0.0
        %5014 = vmatprep.subr.mxu0 0.0
        %5015 = vmatpush1.xpose.msra.mxu0 0.0
        %5016 = vmatprep.subr.mxu0 0.0
        %5017 = vmatpush1.xpose.msra.mxu0 0.0
        %5018 = vmatprep.subr.mxu0 0.0
        %5019 = vmatpush1.xpose.msra.mxu0 0.0
        %5020 = vmatprep.subr.mxu0 0.0
        %5021 = vmatpush1.xpose.msra.mxu0 0.0
        %5022 = vmatprep.subr.mxu0 0.0
        %5023 = vmatpush1.xpose.msra.mxu0 0.0
        %5024 = vmatprep.subr.mxu0 0.0
        %5025 = vmatpush1.xpose.msra.mxu0 0.0
        %5026 = vmatprep.subr.mxu0 0.0
        %5027 = vmatpush1.xpose.msra.mxu0 0.0
        %5028 = vmatprep.subr.mxu0 0.0
        %5029 = vmatpush1.xpose.msra.mxu0 0.0
        %5030 = vmatprep.subr.mxu0 0.0
        %5031 = vmatpush1.xpose.msra.mxu0 0.0
        %5032 = vmatprep.subr.mxu0 0.0
        %5033 = vmatpush1.xpose.msra.mxu0 0.0
        %5034 = vmatprep.subr.mxu0 %v5002
        %5035 = vmatpush1.xpose.msra.mxu0 %v3367
        %5036 = vmatprep.subr.mxu0 0.0
        %5037 = vmatpush2.xpose.msra.mxu0 0.0
        %5038 = vmatprep.subr.mxu0 0.0
        %5039 = vmatpush2.xpose.msra.mxu0 0.0
        %5040 = vmatprep.subr.mxu0 0.0
        %5041 = vmatpush2.xpose.msra.mxu0 0.0
        %5042 = vmatprep.subr.mxu0 0.0
        %5043 = vmatpush2.xpose.msra.mxu0 0.0
        %5044 = vmatprep.subr.mxu0 0.0
        %5045 = vmatpush2.xpose.msra.mxu0 0.0
        %5046 = vmatprep.subr.mxu0 0.0
        %5047 = vmatpush2.xpose.msra.mxu0 0.0
        %5048 = vmatprep.subr.mxu0 0.0
        %5049 = vmatpush2.xpose.msra.mxu0 0.0
        %5050 = vmatprep.subr.mxu0 0.0
        %5051 = vmatpush2.xpose.msra.mxu0 0.0
        %5052 = vmatprep.subr.mxu0 0.0
        %5053 = vmatpush2.xpose.msra.mxu0 0.0
        %5054 = vmatprep.subr.mxu0 0.0
        %5055 = vmatpush2.xpose.msra.mxu0 0.0
        %5056 = vmatprep.subr.mxu0 0.0
        %5057 = vmatpush2.xpose.msra.mxu0 0.0
        %5058 = vmatprep.subr.mxu0 0.0
        %5059 = vmatpush2.xpose.msra.mxu0 0.0
        %5060 = vmatprep.subr.mxu0 0.0
        %5061 = vmatpush2.xpose.msra.mxu0 0.0
        %5062 = vmatprep.subr.mxu0 0.0
        %5063 = vmatpush2.xpose.msra.mxu0 0.0
        %5064 = vmatprep.subr.mxu0 0.0
        %5065 = vmatpush2.xpose.msra.mxu0 0.0
        %5066 = vmatprep.subr.mxu0 0.0
        %5067 = vmatpush2.xpose.msra.mxu0 0.0
        %5068 = vmatprep.mubr.f32.mxu0 %v4999
        %5069 = vmatmul.mubr.f32.gmra.mxu0 %v4724
        %v5070 = vpop.f32.mrf.mxu0
        %v5071 = vadd.f32 0.0, %v5070
        %v5072 = vpop.f32.mrf.mxu0
        %5073 = vdwg.mxu0
        %v5074 = vsel %vm4765, -1e+09, %v4843
        %v5075 = vsel %vm4766, -1e+09, %v4919
        %v5076 = vsel %vm4767, -1e+09, %v4995
        %v5077 = vsel %vm4768, -1e+09, %v5071
        %vm5078 = vcmask 64512
        %v5079 = vsel %vm5078, %v5074, -inf
        %v5080 = vrot.slane %v5079, 4
        %v5081 = vmax.f32 %v5079, %v5080
        %v5082 = vrot.slane %v5081, 2
        %v5083 = vmax.f32 %v5081, %v5082
        %v5084 = vrot.slane %v5083, 1
        %v5085 = vmax.f32 %v5083, %v5084
        %v5086 = vsel %vm5078, %v5075, -inf
        %v5087 = vrot.slane %v5086, 4
        %v5088 = vmax.f32 %v5086, %v5087
        %v5089 = vrot.slane %v5088, 2
        %v5090 = vmax.f32 %v5088, %v5089
        %v5091 = vrot.slane %v5090, 1
        %v5092 = vmax.f32 %v5090, %v5091
        %v5093 = vsel %vm5078, %v5076, -inf
        %v5094 = vrot.slane %v5093, 4
        %v5095 = vmax.f32 %v5093, %v5094
        %v5096 = vrot.slane %v5095, 2
        %v5097 = vmax.f32 %v5095, %v5096
        %v5098 = vrot.slane %v5097, 1
        %v5099 = vmax.f32 %v5097, %v5098
        %v5100 = vsel %vm5078, %v5077, -inf
        %v5101 = vrot.slane %v5100, 4
        %v5102 = vmax.f32 %v5100, %v5101
        %v5103 = vrot.slane %v5102, 2
        %v5104 = vmax.f32 %v5102, %v5103
        %v5105 = vrot.slane %v5104, 1
        %v5106 = vmax.f32 %v5104, %v5105
        %v5107 = vsub.f32 %v5074, %v5085
        %v5108 = vsub.f32 %v5075, %v5092
        %v5109 = vsub.f32 %v5076, %v5099
        %v5110 = vsub.f32 %v5077, %v5106
        %v5111 = vmul.f32 %v5107, 1.442695
        %v5112 = vpow.pop %v5111
        %v5113 = vmul.f32 %v5108, 1.442695
        %v5114 = vpow.pop %v5113
        %v5115 = vmul.f32 %v5109, 1.442695
        %v5116 = vpow.pop %v5115
        %v5117 = vmul.f32 %v5110, 1.442695
        %v5118 = vpow.pop %v5117
        %v5119 = vsel %vm5078, %v5112, 0.0
        %v5120 = vrot.slane %v5119, 4
        %v5121 = vadd.f32 %v5119, %v5120
        %v5122 = vrot.slane %v5121, 2
        %v5123 = vadd.f32 %v5121, %v5122
        %v5124 = vrot.slane %v5123, 1
        %v5125 = vadd.f32 %v5123, %v5124
        %v5126 = vsel %vm5078, %v5114, 0.0
        %v5127 = vrot.slane %v5126, 4
        %v5128 = vadd.f32 %v5126, %v5127
        %v5129 = vrot.slane %v5128, 2
        %v5130 = vadd.f32 %v5128, %v5129
        %v5131 = vrot.slane %v5130, 1
        %v5132 = vadd.f32 %v5130, %v5131
        %v5133 = vsel %vm5078, %v5116, 0.0
        %v5134 = vrot.slane %v5133, 4
        %v5135 = vadd.f32 %v5133, %v5134
        %v5136 = vrot.slane %v5135, 2
        %v5137 = vadd.f32 %v5135, %v5136
        %v5138 = vrot.slane %v5137, 1
        %v5139 = vadd.f32 %v5137, %v5138
        %v5140 = vsel %vm5078, %v5118, 0.0
        %v5141 = vrot.slane %v5140, 4
        %v5142 = vadd.f32 %v5140, %v5141
        %v5143 = vrot.slane %v5142, 2
        %v5144 = vadd.f32 %v5142, %v5143
        %v5145 = vrot.slane %v5144, 1
        %v5146 = vadd.f32 %v5144, %v5145
        %v5147 = vrcp.pop %v5125
        %v5148 = vmul.f32 %v5112, %v5147
        %v5149 = vrcp.pop %v5132
        %v5150 = vmul.f32 %v5114, %v5149
        %v5151 = vrcp.pop %v5139
        %v5152 = vmul.f32 %v5116, %v5151
        %v5153 = vrcp.pop %v5146
        %v5154 = vmul.f32 %v5118, %v5153
        %v5156 = vsel %vm5078, %v5148, 0
        %5158 = vmatprep.subr.mxu0 0.0
        %5159 = vmatpush1.msra.mxu0 0.0
        %5160 = vmatprep.subr.mxu0 0.0
        %5161 = vmatpush1.msra.mxu0 0.0
        %5162 = vmatprep.subr.mxu0 0.0
        %5163 = vmatpush1.msra.mxu0 0.0
        %5164 = vmatprep.subr.mxu0 0.0
        %5165 = vmatpush1.msra.mxu0 0.0
        %5166 = vmatprep.subr.mxu0 0.0
        %5167 = vmatpush1.msra.mxu0 0.0
        %5168 = vmatprep.subr.mxu0 0.0
        %5169 = vmatpush1.msra.mxu0 0.0
        %5170 = vmatprep.subr.mxu0 0.0
        %5171 = vmatpush1.msra.mxu0 0.0
        %5172 = vmatprep.subr.mxu0 0.0
        %5173 = vmatpush1.msra.mxu0 0.0
        %5174 = vmatprep.subr.mxu0 0.0
        %5175 = vmatpush1.msra.mxu0 0.0
        %5176 = vmatprep.subr.mxu0 0.0
        %5177 = vmatpush1.msra.mxu0 0.0
        %5178 = vmatprep.subr.mxu0 0.0
        %5179 = vmatpush1.msra.mxu0 0.0
        %5180 = vmatprep.subr.mxu0 0.0
        %5181 = vmatpush1.msra.mxu0 0.0
        %5182 = vmatprep.subr.mxu0 0.0
        %5183 = vmatpush1.msra.mxu0 0.0
        %5184 = vmatprep.subr.mxu0 0.0
        %5185 = vmatpush1.msra.mxu0 0.0
        %5186 = vmatprep.subr.mxu0 0.0
        %5187 = vmatpush1.msra.mxu0 0.0
        %5188 = vmatprep.subr.mxu0 %v4152
        %5189 = vmatpush1.msra.mxu0 %v4150
        %5190 = vmatprep.subr.mxu0 0.0
        %5191 = vmatpush2.msra.mxu0 0.0
        %5192 = vmatprep.subr.mxu0 0.0
        %5193 = vmatpush2.msra.mxu0 0.0
        %5194 = vmatprep.subr.mxu0 0.0
        %5195 = vmatpush2.msra.mxu0 0.0
        %5196 = vmatprep.subr.mxu0 0.0
        %5197 = vmatpush2.msra.mxu0 0.0
        %5198 = vmatprep.subr.mxu0 0.0
        %5199 = vmatpush2.msra.mxu0 0.0
        %5200 = vmatprep.subr.mxu0 0.0
        %5201 = vmatpush2.msra.mxu0 0.0
        %5202 = vmatprep.subr.mxu0 0.0
        %5203 = vmatpush2.msra.mxu0 0.0
        %5204 = vmatprep.subr.mxu0 0.0
        %5205 = vmatpush2.msra.mxu0 0.0
        %5206 = vmatprep.subr.mxu0 0.0
        %5207 = vmatpush2.msra.mxu0 0.0
        %5208 = vmatprep.subr.mxu0 0.0
        %5209 = vmatpush2.msra.mxu0 0.0
        %5210 = vmatprep.subr.mxu0 0.0
        %5211 = vmatpush2.msra.mxu0 0.0
        %5212 = vmatprep.subr.mxu0 0.0
        %5213 = vmatpush2.msra.mxu0 0.0
        %5214 = vmatprep.subr.mxu0 0.0
        %5215 = vmatpush2.msra.mxu0 0.0
        %5216 = vmatprep.subr.mxu0 0.0
        %5217 = vmatpush2.msra.mxu0 0.0
        %5218 = vmatprep.subr.mxu0 0.0
        %5219 = vmatpush2.msra.mxu0 0.0
        %5220 = vmatprep.subr.mxu0 0.0
        %5221 = vmatpush2.msra.mxu0 0.0
        %5222 = vmatprep.mubr.f32.mxu0 0.0
        %5223 = vmatmul.mubr.f32.gmra.mxu0 %v5156
        %v5224 = vpop.f32.mrf.mxu0
        %v5225 = vadd.f32 0.0, %v5224
        %v5226 = vpop.f32.mrf.mxu0
        %v5227 = vadd.f32 0.0, %v5226
        %5228 = vdwg.mxu0
        %v5230 = vsel %vm5078, %v5150, 0
        %5232 = vmatprep.subr.mxu0 0.0
        %5233 = vmatpush1.msra.mxu0 0.0
        %5234 = vmatprep.subr.mxu0 0.0
        %5235 = vmatpush1.msra.mxu0 0.0
        %5236 = vmatprep.subr.mxu0 0.0
        %5237 = vmatpush1.msra.mxu0 0.0
        %5238 = vmatprep.subr.mxu0 0.0
        %5239 = vmatpush1.msra.mxu0 0.0
        %5240 = vmatprep.subr.mxu0 0.0
        %5241 = vmatpush1.msra.mxu0 0.0
        %5242 = vmatprep.subr.mxu0 0.0
        %5243 = vmatpush1.msra.mxu0 0.0
        %5244 = vmatprep.subr.mxu0 0.0
        %5245 = vmatpush1.msra.mxu0 0.0
        %5246 = vmatprep.subr.mxu0 0.0
        %5247 = vmatpush1.msra.mxu0 0.0
        %5248 = vmatprep.subr.mxu0 0.0
        %5249 = vmatpush1.msra.mxu0 0.0
        %5250 = vmatprep.subr.mxu0 0.0
        %5251 = vmatpush1.msra.mxu0 0.0
        %5252 = vmatprep.subr.mxu0 0.0
        %5253 = vmatpush1.msra.mxu0 0.0
        %5254 = vmatprep.subr.mxu0 0.0
        %5255 = vmatpush1.msra.mxu0 0.0
        %5256 = vmatprep.subr.mxu0 0.0
        %5257 = vmatpush1.msra.mxu0 0.0
        %5258 = vmatprep.subr.mxu0 0.0
        %5259 = vmatpush1.msra.mxu0 0.0
        %5260 = vmatprep.subr.mxu0 0.0
        %5261 = vmatpush1.msra.mxu0 0.0
        %5262 = vmatprep.subr.mxu0 %v4158
        %5263 = vmatpush1.msra.mxu0 %v4156
        %5264 = vmatprep.subr.mxu0 0.0
        %5265 = vmatpush2.msra.mxu0 0.0
        %5266 = vmatprep.subr.mxu0 0.0
        %5267 = vmatpush2.msra.mxu0 0.0
        %5268 = vmatprep.subr.mxu0 0.0
        %5269 = vmatpush2.msra.mxu0 0.0
        %5270 = vmatprep.subr.mxu0 0.0
        %5271 = vmatpush2.msra.mxu0 0.0
        %5272 = vmatprep.subr.mxu0 0.0
        %5273 = vmatpush2.msra.mxu0 0.0
        %5274 = vmatprep.subr.mxu0 0.0
        %5275 = vmatpush2.msra.mxu0 0.0
        %5276 = vmatprep.subr.mxu0 0.0
        %5277 = vmatpush2.msra.mxu0 0.0
        %5278 = vmatprep.subr.mxu0 0.0
        %5279 = vmatpush2.msra.mxu0 0.0
        %5280 = vmatprep.subr.mxu0 0.0
        %5281 = vmatpush2.msra.mxu0 0.0
        %5282 = vmatprep.subr.mxu0 0.0
        %5283 = vmatpush2.msra.mxu0 0.0
        %5284 = vmatprep.subr.mxu0 0.0
        %5285 = vmatpush2.msra.mxu0 0.0
        %5286 = vmatprep.subr.mxu0 0.0
        %5287 = vmatpush2.msra.mxu0 0.0
        %5288 = vmatprep.subr.mxu0 0.0
        %5289 = vmatpush2.msra.mxu0 0.0
        %5290 = vmatprep.subr.mxu0 0.0
        %5291 = vmatpush2.msra.mxu0 0.0
        %5292 = vmatprep.subr.mxu0 0.0
        %5293 = vmatpush2.msra.mxu0 0.0
        %5294 = vmatprep.subr.mxu0 0.0
        %5295 = vmatpush2.msra.mxu0 0.0
        %5296 = vmatprep.mubr.f32.mxu0 0.0
        %5297 = vmatmul.mubr.f32.gmra.mxu0 %v5230
        %v5298 = vpop.f32.mrf.mxu0
        %v5299 = vadd.f32 0.0, %v5298
        %v5300 = vpop.f32.mrf.mxu0
        %v5301 = vadd.f32 0.0, %v5300
        %5302 = vdwg.mxu0
        %v5304 = vsel %vm5078, %v5152, 0
        %5306 = vmatprep.subr.mxu0 0.0
        %5307 = vmatpush1.msra.mxu0 0.0
        %5308 = vmatprep.subr.mxu0 0.0
        %5309 = vmatpush1.msra.mxu0 0.0
        %5310 = vmatprep.subr.mxu0 0.0
        %5311 = vmatpush1.msra.mxu0 0.0
        %5312 = vmatprep.subr.mxu0 0.0
        %5313 = vmatpush1.msra.mxu0 0.0
        %5314 = vmatprep.subr.mxu0 0.0
        %5315 = vmatpush1.msra.mxu0 0.0
        %5316 = vmatprep.subr.mxu0 0.0
        %5317 = vmatpush1.msra.mxu0 0.0
        %5318 = vmatprep.subr.mxu0 0.0
        %5319 = vmatpush1.msra.mxu0 0.0
        %5320 = vmatprep.subr.mxu0 0.0
        %5321 = vmatpush1.msra.mxu0 0.0
        %5322 = vmatprep.subr.mxu0 0.0
        %5323 = vmatpush1.msra.mxu0 0.0
        %5324 = vmatprep.subr.mxu0 0.0
        %5325 = vmatpush1.msra.mxu0 0.0
        %5326 = vmatprep.subr.mxu0 0.0
        %5327 = vmatpush1.msra.mxu0 0.0
        %5328 = vmatprep.subr.mxu0 0.0
        %5329 = vmatpush1.msra.mxu0 0.0
        %5330 = vmatprep.subr.mxu0 0.0
        %5331 = vmatpush1.msra.mxu0 0.0
        %5332 = vmatprep.subr.mxu0 0.0
        %5333 = vmatpush1.msra.mxu0 0.0
        %5334 = vmatprep.subr.mxu0 0.0
        %5335 = vmatpush1.msra.mxu0 0.0
        %5336 = vmatprep.subr.mxu0 %v4164
        %5337 = vmatpush1.msra.mxu0 %v4162
        %5338 = vmatprep.subr.mxu0 0.0
        %5339 = vmatpush2.msra.mxu0 0.0
        %5340 = vmatprep.subr.mxu0 0.0
        %5341 = vmatpush2.msra.mxu0 0.0
        %5342 = vmatprep.subr.mxu0 0.0
        %5343 = vmatpush2.msra.mxu0 0.0
        %5344 = vmatprep.subr.mxu0 0.0
        %5345 = vmatpush2.msra.mxu0 0.0
        %5346 = vmatprep.subr.mxu0 0.0
        %5347 = vmatpush2.msra.mxu0 0.0
        %5348 = vmatprep.subr.mxu0 0.0
        %5349 = vmatpush2.msra.mxu0 0.0
        %5350 = vmatprep.subr.mxu0 0.0
        %5351 = vmatpush2.msra.mxu0 0.0
        %5352 = vmatprep.subr.mxu0 0.0
        %5353 = vmatpush2.msra.mxu0 0.0
        %5354 = vmatprep.subr.mxu0 0.0
        %5355 = vmatpush2.msra.mxu0 0.0
        %5356 = vmatprep.subr.mxu0 0.0
        %5357 = vmatpush2.msra.mxu0 0.0
        %5358 = vmatprep.subr.mxu0 0.0
        %5359 = vmatpush2.msra.mxu0 0.0
        %5360 = vmatprep.subr.mxu0 0.0
        %5361 = vmatpush2.msra.mxu0 0.0
        %5362 = vmatprep.subr.mxu0 0.0
        %5363 = vmatpush2.msra.mxu0 0.0
        %5364 = vmatprep.subr.mxu0 0.0
        %5365 = vmatpush2.msra.mxu0 0.0
        %5366 = vmatprep.subr.mxu0 0.0
        %5367 = vmatpush2.msra.mxu0 0.0
        %5368 = vmatprep.subr.mxu0 0.0
        %5369 = vmatpush2.msra.mxu0 0.0
        %5370 = vmatprep.mubr.f32.mxu0 0.0
        %5371 = vmatmul.mubr.f32.gmra.mxu0 %v5304
        %v5372 = vpop.f32.mrf.mxu0
        %v5373 = vadd.f32 0.0, %v5372
        %v5374 = vpop.f32.mrf.mxu0
        %v5375 = vadd.f32 0.0, %v5374
        %5376 = vdwg.mxu0
        %v5378 = vsel %vm5078, %v5154, 0
        %5380 = vmatprep.subr.mxu0 0.0
        %5381 = vmatpush1.msra.mxu0 0.0
        %5382 = vmatprep.subr.mxu0 0.0
        %5383 = vmatpush1.msra.mxu0 0.0
        %5384 = vmatprep.subr.mxu0 0.0
        %5385 = vmatpush1.msra.mxu0 0.0
        %5386 = vmatprep.subr.mxu0 0.0
        %5387 = vmatpush1.msra.mxu0 0.0
        %5388 = vmatprep.subr.mxu0 0.0
        %5389 = vmatpush1.msra.mxu0 0.0
        %5390 = vmatprep.subr.mxu0 0.0
        %5391 = vmatpush1.msra.mxu0 0.0
        %5392 = vmatprep.subr.mxu0 0.0
        %5393 = vmatpush1.msra.mxu0 0.0
        %5394 = vmatprep.subr.mxu0 0.0
        %5395 = vmatpush1.msra.mxu0 0.0
        %5396 = vmatprep.subr.mxu0 0.0
        %5397 = vmatpush1.msra.mxu0 0.0
        %5398 = vmatprep.subr.mxu0 0.0
        %5399 = vmatpush1.msra.mxu0 0.0
        %5400 = vmatprep.subr.mxu0 0.0
        %5401 = vmatpush1.msra.mxu0 0.0
        %5402 = vmatprep.subr.mxu0 0.0
        %5403 = vmatpush1.msra.mxu0 0.0
        %5404 = vmatprep.subr.mxu0 0.0
        %5405 = vmatpush1.msra.mxu0 0.0
        %5406 = vmatprep.subr.mxu0 0.0
        %5407 = vmatpush1.msra.mxu0 0.0
        %5408 = vmatprep.subr.mxu0 0.0
        %5409 = vmatpush1.msra.mxu0 0.0
        %5410 = vmatprep.subr.mxu0 %v4170
        %5411 = vmatpush1.msra.mxu0 %v4168
        %5412 = vmatprep.subr.mxu0 0.0
        %5413 = vmatpush2.msra.mxu0 0.0
        %5414 = vmatprep.subr.mxu0 0.0
        %5415 = vmatpush2.msra.mxu0 0.0
        %5416 = vmatprep.subr.mxu0 0.0
        %5417 = vmatpush2.msra.mxu0 0.0
        %5418 = vmatprep.subr.mxu0 0.0
        %5419 = vmatpush2.msra.mxu0 0.0
        %5420 = vmatprep.subr.mxu0 0.0
        %5421 = vmatpush2.msra.mxu0 0.0
        %5422 = vmatprep.subr.mxu0 0.0
        %5423 = vmatpush2.msra.mxu0 0.0
        %5424 = vmatprep.subr.mxu0 0.0
        %5425 = vmatpush2.msra.mxu0 0.0
        %5426 = vmatprep.subr.mxu0 0.0
        %5427 = vmatpush2.msra.mxu0 0.0
        %5428 = vmatprep.subr.mxu0 0.0
        %5429 = vmatpush2.msra.mxu0 0.0
        %5430 = vmatprep.subr.mxu0 0.0
        %5431 = vmatpush2.msra.mxu0 0.0
        %5432 = vmatprep.subr.mxu0 0.0
        %5433 = vmatpush2.msra.mxu0 0.0
        %5434 = vmatprep.subr.mxu0 0.0
        %5435 = vmatpush2.msra.mxu0 0.0
        %5436 = vmatprep.subr.mxu0 0.0
        %5437 = vmatpush2.msra.mxu0 0.0
        %5438 = vmatprep.subr.mxu0 0.0
        %5439 = vmatpush2.msra.mxu0 0.0
        %5440 = vmatprep.subr.mxu0 0.0
        %5441 = vmatpush2.msra.mxu0 0.0
        %5442 = vmatprep.subr.mxu0 0.0
        %5443 = vmatpush2.msra.mxu0 0.0
        %5444 = vmatprep.mubr.f32.mxu0 0.0
        %5445 = vmatmul.mubr.f32.gmra.mxu0 %v5378
        %v5446 = vpop.f32.mrf.mxu0
        %v5447 = vadd.f32 0.0, %v5446
        %v5448 = vpop.f32.mrf.mxu0
        %v5449 = vadd.f32 0.0, %v5448
        %5450 = vdwg.mxu0
        %5452 = vrot.lane.b32.xlu0 %v4707, 64
        %v5453 = vpop.permute.xlu0 %5452
        %5454 = vrot.lane.b32.xlu0 %v4708, 64
        %v5455 = vpop.permute.xlu0 %5454
        %v5456 = vsel %vm4769, %v5453, %v5455
        %5459 = vrot.lane.b32.xlu0 %v3351, 64
        %v5460 = vpop.permute.xlu0 %5459
        %5461 = vrot.lane.b32.xlu0 %v3616, 64
        %v5462 = vpop.permute.xlu0 %5461
        %v5463 = vsel %vm4769, %v5460, %v5462
        %v5465 = vsel %vm4769, %v5455, 0
        %v5467 = vsel %vm4769, %v5462, 0
        %5469 = vmatprep.subr.mxu0 0.0
        %5470 = vmatpush1.xpose.msra.mxu0 0.0
        %5471 = vmatprep.subr.mxu0 0.0
        %5472 = vmatpush1.xpose.msra.mxu0 0.0
        %5473 = vmatprep.subr.mxu0 0.0
        %5474 = vmatpush1.xpose.msra.mxu0 0.0
        %5475 = vmatprep.subr.mxu0 0.0
        %5476 = vmatpush1.xpose.msra.mxu0 0.0
        %5477 = vmatprep.subr.mxu0 0.0
        %5478 = vmatpush1.xpose.msra.mxu0 0.0
        %5479 = vmatprep.subr.mxu0 0.0
        %5480 = vmatpush1.xpose.msra.mxu0 0.0
        %5481 = vmatprep.subr.mxu0 0.0
        %5482 = vmatpush1.xpose.msra.mxu0 0.0
        %5483 = vmatprep.subr.mxu0 0.0
        %5484 = vmatpush1.xpose.msra.mxu0 0.0
        %5485 = vmatprep.subr.mxu0 0.0
        %5486 = vmatpush1.xpose.msra.mxu0 0.0
        %5487 = vmatprep.subr.mxu0 0.0
        %5488 = vmatpush1.xpose.msra.mxu0 0.0
        %5489 = vmatprep.subr.mxu0 0.0
        %5490 = vmatpush1.xpose.msra.mxu0 0.0
        %5491 = vmatprep.subr.mxu0 0.0
        %5492 = vmatpush1.xpose.msra.mxu0 0.0
        %5493 = vmatprep.subr.mxu0 0.0
        %5494 = vmatpush1.xpose.msra.mxu0 0.0
        %5495 = vmatprep.subr.mxu0 0.0
        %5496 = vmatpush1.xpose.msra.mxu0 0.0
        %5497 = vmatprep.subr.mxu0 0.0
        %5498 = vmatpush1.xpose.msra.mxu0 0.0
        %5499 = vmatprep.subr.mxu0 %v5467
        %5500 = vmatpush1.xpose.msra.mxu0 %v5463
        %5501 = vmatprep.subr.mxu0 0.0
        %5502 = vmatpush2.xpose.msra.mxu0 0.0
        %5503 = vmatprep.subr.mxu0 0.0
        %5504 = vmatpush2.xpose.msra.mxu0 0.0
        %5505 = vmatprep.subr.mxu0 0.0
        %5506 = vmatpush2.xpose.msra.mxu0 0.0
        %5507 = vmatprep.subr.mxu0 0.0
        %5508 = vmatpush2.xpose.msra.mxu0 0.0
        %5509 = vmatprep.subr.mxu0 0.0
        %5510 = vmatpush2.xpose.msra.mxu0 0.0
        %5511 = vmatprep.subr.mxu0 0.0
        %5512 = vmatpush2.xpose.msra.mxu0 0.0
        %5513 = vmatprep.subr.mxu0 0.0
        %5514 = vmatpush2.xpose.msra.mxu0 0.0
        %5515 = vmatprep.subr.mxu0 0.0
        %5516 = vmatpush2.xpose.msra.mxu0 0.0
        %5517 = vmatprep.subr.mxu0 0.0
        %5518 = vmatpush2.xpose.msra.mxu0 0.0
        %5519 = vmatprep.subr.mxu0 0.0
        %5520 = vmatpush2.xpose.msra.mxu0 0.0
        %5521 = vmatprep.subr.mxu0 0.0
        %5522 = vmatpush2.xpose.msra.mxu0 0.0
        %5523 = vmatprep.subr.mxu0 0.0
        %5524 = vmatpush2.xpose.msra.mxu0 0.0
        %5525 = vmatprep.subr.mxu0 0.0
        %5526 = vmatpush2.xpose.msra.mxu0 0.0
        %5527 = vmatprep.subr.mxu0 0.0
        %5528 = vmatpush2.xpose.msra.mxu0 0.0
        %5529 = vmatprep.subr.mxu0 0.0
        %5530 = vmatpush2.xpose.msra.mxu0 0.0
        %5531 = vmatprep.subr.mxu0 0.0
        %5532 = vmatpush2.xpose.msra.mxu0 0.0
        %5533 = vmatprep.mubr.f32.mxu0 %v5465
        %5534 = vmatmul.mubr.f32.gmra.mxu0 %v5456
        %v5535 = vpop.f32.mrf.mxu0
        %v5536 = vadd.f32 0.0, %v5535
        %v5537 = vpop.f32.mrf.mxu0
        %5538 = vdwg.mxu0
        %5540 = vrot.lane.b32.xlu0 %v4713, 64
        %v5541 = vpop.permute.xlu0 %5540
        %5542 = vrot.lane.b32.xlu0 %v4714, 64
        %v5543 = vpop.permute.xlu0 %5542
        %v5544 = vsel %vm4769, %v5541, %v5543
        %5547 = vrot.lane.b32.xlu0 %v3357, 64
        %v5548 = vpop.permute.xlu0 %5547
        %5549 = vrot.lane.b32.xlu0 %v3622, 64
        %v5550 = vpop.permute.xlu0 %5549
        %v5551 = vsel %vm4769, %v5548, %v5550
        %v5553 = vsel %vm4769, %v5543, 0
        %v5555 = vsel %vm4769, %v5550, 0
        %5557 = vmatprep.subr.mxu0 0.0
        %5558 = vmatpush1.xpose.msra.mxu0 0.0
        %5559 = vmatprep.subr.mxu0 0.0
        %5560 = vmatpush1.xpose.msra.mxu0 0.0
        %5561 = vmatprep.subr.mxu0 0.0
        %5562 = vmatpush1.xpose.msra.mxu0 0.0
        %5563 = vmatprep.subr.mxu0 0.0
        %5564 = vmatpush1.xpose.msra.mxu0 0.0
        %5565 = vmatprep.subr.mxu0 0.0
        %5566 = vmatpush1.xpose.msra.mxu0 0.0
        %5567 = vmatprep.subr.mxu0 0.0
        %5568 = vmatpush1.xpose.msra.mxu0 0.0
        %5569 = vmatprep.subr.mxu0 0.0
        %5570 = vmatpush1.xpose.msra.mxu0 0.0
        %5571 = vmatprep.subr.mxu0 0.0
        %5572 = vmatpush1.xpose.msra.mxu0 0.0
        %5573 = vmatprep.subr.mxu0 0.0
        %5574 = vmatpush1.xpose.msra.mxu0 0.0
        %5575 = vmatprep.subr.mxu0 0.0
        %5576 = vmatpush1.xpose.msra.mxu0 0.0
        %5577 = vmatprep.subr.mxu0 0.0
        %5578 = vmatpush1.xpose.msra.mxu0 0.0
        %5579 = vmatprep.subr.mxu0 0.0
        %5580 = vmatpush1.xpose.msra.mxu0 0.0
        %5581 = vmatprep.subr.mxu0 0.0
        %5582 = vmatpush1.xpose.msra.mxu0 0.0
        %5583 = vmatprep.subr.mxu0 0.0
        %5584 = vmatpush1.xpose.msra.mxu0 0.0
        %5585 = vmatprep.subr.mxu0 0.0
        %5586 = vmatpush1.xpose.msra.mxu0 0.0
        %5587 = vmatprep.subr.mxu0 %v5555
        %5588 = vmatpush1.xpose.msra.mxu0 %v5551
        %5589 = vmatprep.subr.mxu0 0.0
        %5590 = vmatpush2.xpose.msra.mxu0 0.0
        %5591 = vmatprep.subr.mxu0 0.0
        %5592 = vmatpush2.xpose.msra.mxu0 0.0
        %5593 = vmatprep.subr.mxu0 0.0
        %5594 = vmatpush2.xpose.msra.mxu0 0.0
        %5595 = vmatprep.subr.mxu0 0.0
        %5596 = vmatpush2.xpose.msra.mxu0 0.0
        %5597 = vmatprep.subr.mxu0 0.0
        %5598 = vmatpush2.xpose.msra.mxu0 0.0
        %5599 = vmatprep.subr.mxu0 0.0
        %5600 = vmatpush2.xpose.msra.mxu0 0.0
        %5601 = vmatprep.subr.mxu0 0.0
        %5602 = vmatpush2.xpose.msra.mxu0 0.0
        %5603 = vmatprep.subr.mxu0 0.0
        %5604 = vmatpush2.xpose.msra.mxu0 0.0
        %5605 = vmatprep.subr.mxu0 0.0
        %5606 = vmatpush2.xpose.msra.mxu0 0.0
        %5607 = vmatprep.subr.mxu0 0.0
        %5608 = vmatpush2.xpose.msra.mxu0 0.0
        %5609 = vmatprep.subr.mxu0 0.0
        %5610 = vmatpush2.xpose.msra.mxu0 0.0
        %5611 = vmatprep.subr.mxu0 0.0
        %5612 = vmatpush2.xpose.msra.mxu0 0.0
        %5613 = vmatprep.subr.mxu0 0.0
        %5614 = vmatpush2.xpose.msra.mxu0 0.0
        %5615 = vmatprep.subr.mxu0 0.0
        %5616 = vmatpush2.xpose.msra.mxu0 0.0
        %5617 = vmatprep.subr.mxu0 0.0
        %5618 = vmatpush2.xpose.msra.mxu0 0.0
        %5619 = vmatprep.subr.mxu0 0.0
        %5620 = vmatpush2.xpose.msra.mxu0 0.0
        %5621 = vmatprep.mubr.f32.mxu0 %v5553
        %5622 = vmatmul.mubr.f32.gmra.mxu0 %v5544
        %v5623 = vpop.f32.mrf.mxu0
        %v5624 = vadd.f32 0.0, %v5623
        %v5625 = vpop.f32.mrf.mxu0
        %5626 = vdwg.mxu0
        %5628 = vrot.lane.b32.xlu0 %v4719, 64
        %v5629 = vpop.permute.xlu0 %5628
        %5630 = vrot.lane.b32.xlu0 %v4720, 64
        %v5631 = vpop.permute.xlu0 %5630
        %v5632 = vsel %vm4769, %v5629, %v5631
        %5635 = vrot.lane.b32.xlu0 %v3363, 64
        %v5636 = vpop.permute.xlu0 %5635
        %5637 = vrot.lane.b32.xlu0 %v3628, 64
        %v5638 = vpop.permute.xlu0 %5637
        %v5639 = vsel %vm4769, %v5636, %v5638
        %v5641 = vsel %vm4769, %v5631, 0
        %v5643 = vsel %vm4769, %v5638, 0
        %5645 = vmatprep.subr.mxu0 0.0
        %5646 = vmatpush1.xpose.msra.mxu0 0.0
        %5647 = vmatprep.subr.mxu0 0.0
        %5648 = vmatpush1.xpose.msra.mxu0 0.0
        %5649 = vmatprep.subr.mxu0 0.0
        %5650 = vmatpush1.xpose.msra.mxu0 0.0
        %5651 = vmatprep.subr.mxu0 0.0
        %5652 = vmatpush1.xpose.msra.mxu0 0.0
        %5653 = vmatprep.subr.mxu0 0.0
        %5654 = vmatpush1.xpose.msra.mxu0 0.0
        %5655 = vmatprep.subr.mxu0 0.0
        %5656 = vmatpush1.xpose.msra.mxu0 0.0
        %5657 = vmatprep.subr.mxu0 0.0
        %5658 = vmatpush1.xpose.msra.mxu0 0.0
        %5659 = vmatprep.subr.mxu0 0.0
        %5660 = vmatpush1.xpose.msra.mxu0 0.0
        %5661 = vmatprep.subr.mxu0 0.0
        %5662 = vmatpush1.xpose.msra.mxu0 0.0
        %5663 = vmatprep.subr.mxu0 0.0
        %5664 = vmatpush1.xpose.msra.mxu0 0.0
        %5665 = vmatprep.subr.mxu0 0.0
        %5666 = vmatpush1.xpose.msra.mxu0 0.0
        %5667 = vmatprep.subr.mxu0 0.0
        %5668 = vmatpush1.xpose.msra.mxu0 0.0
        %5669 = vmatprep.subr.mxu0 0.0
        %5670 = vmatpush1.xpose.msra.mxu0 0.0
        %5671 = vmatprep.subr.mxu0 0.0
        %5672 = vmatpush1.xpose.msra.mxu0 0.0
        %5673 = vmatprep.subr.mxu0 0.0
        %5674 = vmatpush1.xpose.msra.mxu0 0.0
        %5675 = vmatprep.subr.mxu0 %v5643
        %5676 = vmatpush1.xpose.msra.mxu0 %v5639
        %5677 = vmatprep.subr.mxu0 0.0
        %5678 = vmatpush2.xpose.msra.mxu0 0.0
        %5679 = vmatprep.subr.mxu0 0.0
        %5680 = vmatpush2.xpose.msra.mxu0 0.0
        %5681 = vmatprep.subr.mxu0 0.0
        %5682 = vmatpush2.xpose.msra.mxu0 0.0
        %5683 = vmatprep.subr.mxu0 0.0
        %5684 = vmatpush2.xpose.msra.mxu0 0.0
        %5685 = vmatprep.subr.mxu0 0.0
        %5686 = vmatpush2.xpose.msra.mxu0 0.0
        %5687 = vmatprep.subr.mxu0 0.0
        %5688 = vmatpush2.xpose.msra.mxu0 0.0
        %5689 = vmatprep.subr.mxu0 0.0
        %5690 = vmatpush2.xpose.msra.mxu0 0.0
        %5691 = vmatprep.subr.mxu0 0.0
        %5692 = vmatpush2.xpose.msra.mxu0 0.0
        %5693 = vmatprep.subr.mxu0 0.0
        %5694 = vmatpush2.xpose.msra.mxu0 0.0
        %5695 = vmatprep.subr.mxu0 0.0
        %5696 = vmatpush2.xpose.msra.mxu0 0.0
        %5697 = vmatprep.subr.mxu0 0.0
        %5698 = vmatpush2.xpose.msra.mxu0 0.0
        %5699 = vmatprep.subr.mxu0 0.0
        %5700 = vmatpush2.xpose.msra.mxu0 0.0
        %5701 = vmatprep.subr.mxu0 0.0
        %5702 = vmatpush2.xpose.msra.mxu0 0.0
        %5703 = vmatprep.subr.mxu0 0.0
        %5704 = vmatpush2.xpose.msra.mxu0 0.0
        %5705 = vmatprep.subr.mxu0 0.0
        %5706 = vmatpush2.xpose.msra.mxu0 0.0
        %5707 = vmatprep.subr.mxu0 0.0
        %5708 = vmatpush2.xpose.msra.mxu0 0.0
        %5709 = vmatprep.mubr.f32.mxu0 %v5641
        %5710 = vmatmul.mubr.f32.gmra.mxu0 %v5632
        %v5711 = vpop.f32.mrf.mxu0
        %v5712 = vadd.f32 0.0, %v5711
        %v5713 = vpop.f32.mrf.mxu0
        %5714 = vdwg.mxu0
        %5716 = vrot.lane.b32.xlu0 %v4725, 64
        %v5717 = vpop.permute.xlu0 %5716
        %5718 = vrot.lane.b32.xlu0 %v4726, 64
        %v5719 = vpop.permute.xlu0 %5718
        %v5720 = vsel %vm4769, %v5717, %v5719
        %5723 = vrot.lane.b32.xlu0 %v3369, 64
        %v5724 = vpop.permute.xlu0 %5723
        %5725 = vrot.lane.b32.xlu0 %v3634, 64
        %v5726 = vpop.permute.xlu0 %5725
        %v5727 = vsel %vm4769, %v5724, %v5726
        %v5729 = vsel %vm4769, %v5719, 0
        %v5731 = vsel %vm4769, %v5726, 0
        %5733 = vmatprep.subr.mxu0 0.0
        %5734 = vmatpush1.xpose.msra.mxu0 0.0
        %5735 = vmatprep.subr.mxu0 0.0
        %5736 = vmatpush1.xpose.msra.mxu0 0.0
        %5737 = vmatprep.subr.mxu0 0.0
        %5738 = vmatpush1.xpose.msra.mxu0 0.0
        %5739 = vmatprep.subr.mxu0 0.0
        %5740 = vmatpush1.xpose.msra.mxu0 0.0
        %5741 = vmatprep.subr.mxu0 0.0
        %5742 = vmatpush1.xpose.msra.mxu0 0.0
        %5743 = vmatprep.subr.mxu0 0.0
        %5744 = vmatpush1.xpose.msra.mxu0 0.0
        %5745 = vmatprep.subr.mxu0 0.0
        %5746 = vmatpush1.xpose.msra.mxu0 0.0
        %5747 = vmatprep.subr.mxu0 0.0
        %5748 = vmatpush1.xpose.msra.mxu0 0.0
        %5749 = vmatprep.subr.mxu0 0.0
        %5750 = vmatpush1.xpose.msra.mxu0 0.0
        %5751 = vmatprep.subr.mxu0 0.0
        %5752 = vmatpush1.xpose.msra.mxu0 0.0
        %5753 = vmatprep.subr.mxu0 0.0
        %5754 = vmatpush1.xpose.msra.mxu0 0.0
        %5755 = vmatprep.subr.mxu0 0.0
        %5756 = vmatpush1.xpose.msra.mxu0 0.0
        %5757 = vmatprep.subr.mxu0 0.0
        %5758 = vmatpush1.xpose.msra.mxu0 0.0
        %5759 = vmatprep.subr.mxu0 0.0
        %5760 = vmatpush1.xpose.msra.mxu0 0.0
        %5761 = vmatprep.subr.mxu0 0.0
        %5762 = vmatpush1.xpose.msra.mxu0 0.0
        %5763 = vmatprep.subr.mxu0 %v5731
        %5764 = vmatpush1.xpose.msra.mxu0 %v5727
        %5765 = vmatprep.subr.mxu0 0.0
        %5766 = vmatpush2.xpose.msra.mxu0 0.0
        %5767 = vmatprep.subr.mxu0 0.0
        %5768 = vmatpush2.xpose.msra.mxu0 0.0
        %5769 = vmatprep.subr.mxu0 0.0
        %5770 = vmatpush2.xpose.msra.mxu0 0.0
        %5771 = vmatprep.subr.mxu0 0.0
        %5772 = vmatpush2.xpose.msra.mxu0 0.0
        %5773 = vmatprep.subr.mxu0 0.0
        %5774 = vmatpush2.xpose.msra.mxu0 0.0
        %5775 = vmatprep.subr.mxu0 0.0
        %5776 = vmatpush2.xpose.msra.mxu0 0.0
        %5777 = vmatprep.subr.mxu0 0.0
        %5778 = vmatpush2.xpose.msra.mxu0 0.0
        %5779 = vmatprep.subr.mxu0 0.0
        %5780 = vmatpush2.xpose.msra.mxu0 0.0
        %5781 = vmatprep.subr.mxu0 0.0
        %5782 = vmatpush2.xpose.msra.mxu0 0.0
        %5783 = vmatprep.subr.mxu0 0.0
        %5784 = vmatpush2.xpose.msra.mxu0 0.0
        %5785 = vmatprep.subr.mxu0 0.0
        %5786 = vmatpush2.xpose.msra.mxu0 0.0
        %5787 = vmatprep.subr.mxu0 0.0
        %5788 = vmatpush2.xpose.msra.mxu0 0.0
        %5789 = vmatprep.subr.mxu0 0.0
        %5790 = vmatpush2.xpose.msra.mxu0 0.0
        %5791 = vmatprep.subr.mxu0 0.0
        %5792 = vmatpush2.xpose.msra.mxu0 0.0
        %5793 = vmatprep.subr.mxu0 0.0
        %5794 = vmatpush2.xpose.msra.mxu0 0.0
        %5795 = vmatprep.subr.mxu0 0.0
        %5796 = vmatpush2.xpose.msra.mxu0 0.0
        %5797 = vmatprep.mubr.f32.mxu0 %v5729
        %5798 = vmatmul.mubr.f32.gmra.mxu0 %v5720
        %v5799 = vpop.f32.mrf.mxu0
        %v5800 = vadd.f32 0.0, %v5799
        %v5801 = vpop.f32.mrf.mxu0
        %5802 = vdwg.mxu0
        %v5803 = vsel %vm4765, -1e+09, %v5536
        %v5804 = vsel %vm4766, -1e+09, %v5624
        %v5805 = vsel %vm4767, -1e+09, %v5712
        %v5806 = vsel %vm4768, -1e+09, %v5800
        %v5807 = vsel %vm5078, %v5803, -inf
        %v5808 = vrot.slane %v5807, 4
        %v5809 = vmax.f32 %v5807, %v5808
        %v5810 = vrot.slane %v5809, 2
        %v5811 = vmax.f32 %v5809, %v5810
        %v5812 = vrot.slane %v5811, 1
        %v5813 = vmax.f32 %v5811, %v5812
        %v5814 = vsel %vm5078, %v5804, -inf
        %v5815 = vrot.slane %v5814, 4
        %v5816 = vmax.f32 %v5814, %v5815
        %v5817 = vrot.slane %v5816, 2
        %v5818 = vmax.f32 %v5816, %v5817
        %v5819 = vrot.slane %v5818, 1
        %v5820 = vmax.f32 %v5818, %v5819
        %v5821 = vsel %vm5078, %v5805, -inf
        %v5822 = vrot.slane %v5821, 4
        %v5823 = vmax.f32 %v5821, %v5822
        %v5824 = vrot.slane %v5823, 2
        %v5825 = vmax.f32 %v5823, %v5824
        %v5826 = vrot.slane %v5825, 1
        %v5827 = vmax.f32 %v5825, %v5826
        %v5828 = vsel %vm5078, %v5806, -inf
        %v5829 = vrot.slane %v5828, 4
        %v5830 = vmax.f32 %v5828, %v5829
        %v5831 = vrot.slane %v5830, 2
        %v5832 = vmax.f32 %v5830, %v5831
        %v5833 = vrot.slane %v5832, 1
        %v5834 = vmax.f32 %v5832, %v5833
        %v5835 = vsub.f32 %v5803, %v5813
        %v5836 = vsub.f32 %v5804, %v5820
        %v5837 = vsub.f32 %v5805, %v5827
        %v5838 = vsub.f32 %v5806, %v5834
        %v5839 = vmul.f32 %v5835, 1.442695
        %v5840 = vpow.pop %v5839
        %v5841 = vmul.f32 %v5836, 1.442695
        %v5842 = vpow.pop %v5841
        %v5843 = vmul.f32 %v5837, 1.442695
        %v5844 = vpow.pop %v5843
        %v5845 = vmul.f32 %v5838, 1.442695
        %v5846 = vpow.pop %v5845
        %v5847 = vsel %vm5078, %v5840, 0.0
        %v5848 = vrot.slane %v5847, 4
        %v5849 = vadd.f32 %v5847, %v5848
        %v5850 = vrot.slane %v5849, 2
        %v5851 = vadd.f32 %v5849, %v5850
        %v5852 = vrot.slane %v5851, 1
        %v5853 = vadd.f32 %v5851, %v5852
        %v5854 = vsel %vm5078, %v5842, 0.0
        %v5855 = vrot.slane %v5854, 4
        %v5856 = vadd.f32 %v5854, %v5855
        %v5857 = vrot.slane %v5856, 2
        %v5858 = vadd.f32 %v5856, %v5857
        %v5859 = vrot.slane %v5858, 1
        %v5860 = vadd.f32 %v5858, %v5859
        %v5861 = vsel %vm5078, %v5844, 0.0
        %v5862 = vrot.slane %v5861, 4
        %v5863 = vadd.f32 %v5861, %v5862
        %v5864 = vrot.slane %v5863, 2
        %v5865 = vadd.f32 %v5863, %v5864
        %v5866 = vrot.slane %v5865, 1
        %v5867 = vadd.f32 %v5865, %v5866
        %v5868 = vsel %vm5078, %v5846, 0.0
        %v5869 = vrot.slane %v5868, 4
        %v5870 = vadd.f32 %v5868, %v5869
        %v5871 = vrot.slane %v5870, 2
        %v5872 = vadd.f32 %v5870, %v5871
        %v5873 = vrot.slane %v5872, 1
        %v5874 = vadd.f32 %v5872, %v5873
        %v5875 = vrcp.pop %v5853
        %v5876 = vmul.f32 %v5840, %v5875
        %v5877 = vrcp.pop %v5860
        %v5878 = vmul.f32 %v5842, %v5877
        %v5879 = vrcp.pop %v5867
        %v5880 = vmul.f32 %v5844, %v5879
        %v5881 = vrcp.pop %v5874
        %v5882 = vmul.f32 %v5846, %v5881
        %5885 = vrot.lane.b32.xlu0 %v4152, 64
        %v5886 = vpop.permute.xlu0 %5885
        %5887 = vrot.lane.b32.xlu0 %v4417, 64
        %v5888 = vpop.permute.xlu0 %5887
        %v5889 = vsel %vm4769, %v5886, %v5888
        %v5893 = vsel %vm5078, %v5876, 0
        %5895 = vmatprep.subr.mxu0 0.0
        %5896 = vmatpush1.msra.mxu0 0.0
        %5897 = vmatprep.subr.mxu0 0.0
        %5898 = vmatpush1.msra.mxu0 0.0
        %5899 = vmatprep.subr.mxu0 0.0
        %5900 = vmatpush1.msra.mxu0 0.0
        %5901 = vmatprep.subr.mxu0 0.0
        %5902 = vmatpush1.msra.mxu0 0.0
        %5903 = vmatprep.subr.mxu0 0.0
        %5904 = vmatpush1.msra.mxu0 0.0
        %5905 = vmatprep.subr.mxu0 0.0
        %5906 = vmatpush1.msra.mxu0 0.0
        %5907 = vmatprep.subr.mxu0 0.0
        %5908 = vmatpush1.msra.mxu0 0.0
        %5909 = vmatprep.subr.mxu0 0.0
        %5910 = vmatpush1.msra.mxu0 0.0
        %5911 = vmatprep.subr.mxu0 0.0
        %5912 = vmatpush1.msra.mxu0 0.0
        %5913 = vmatprep.subr.mxu0 0.0
        %5914 = vmatpush1.msra.mxu0 0.0
        %5915 = vmatprep.subr.mxu0 0.0
        %5916 = vmatpush1.msra.mxu0 0.0
        %5917 = vmatprep.subr.mxu0 0.0
        %5918 = vmatpush1.msra.mxu0 0.0
        %5919 = vmatprep.subr.mxu0 0.0
        %5920 = vmatpush1.msra.mxu0 0.0
        %5921 = vmatprep.subr.mxu0 0.0
        %5922 = vmatpush1.msra.mxu0 0.0
        %5923 = vmatprep.subr.mxu0 0.0
        %5924 = vmatpush1.msra.mxu0 0.0
        %5925 = vmatprep.subr.mxu0 %v5888
        %5926 = vmatpush1.msra.mxu0 %v5889
        %5927 = vmatprep.subr.mxu0 0.0
        %5928 = vmatpush2.msra.mxu0 0.0
        %5929 = vmatprep.subr.mxu0 0.0
        %5930 = vmatpush2.msra.mxu0 0.0
        %5931 = vmatprep.subr.mxu0 0.0
        %5932 = vmatpush2.msra.mxu0 0.0
        %5933 = vmatprep.subr.mxu0 0.0
        %5934 = vmatpush2.msra.mxu0 0.0
        %5935 = vmatprep.subr.mxu0 0.0
        %5936 = vmatpush2.msra.mxu0 0.0
        %5937 = vmatprep.subr.mxu0 0.0
        %5938 = vmatpush2.msra.mxu0 0.0
        %5939 = vmatprep.subr.mxu0 0.0
        %5940 = vmatpush2.msra.mxu0 0.0
        %5941 = vmatprep.subr.mxu0 0.0
        %5942 = vmatpush2.msra.mxu0 0.0
        %5943 = vmatprep.subr.mxu0 0.0
        %5944 = vmatpush2.msra.mxu0 0.0
        %5945 = vmatprep.subr.mxu0 0.0
        %5946 = vmatpush2.msra.mxu0 0.0
        %5947 = vmatprep.subr.mxu0 0.0
        %5948 = vmatpush2.msra.mxu0 0.0
        %5949 = vmatprep.subr.mxu0 0.0
        %5950 = vmatpush2.msra.mxu0 0.0
        %5951 = vmatprep.subr.mxu0 0.0
        %5952 = vmatpush2.msra.mxu0 0.0
        %5953 = vmatprep.subr.mxu0 0.0
        %5954 = vmatpush2.msra.mxu0 0.0
        %5955 = vmatprep.subr.mxu0 0.0
        %5956 = vmatpush2.msra.mxu0 0.0
        %5957 = vmatprep.subr.mxu0 0.0
        %5958 = vmatpush2.msra.mxu0 0.0
        %5959 = vmatprep.mubr.f32.mxu0 0.0
        %5960 = vmatmul.mubr.f32.gmra.mxu0 %v5893
        %v5961 = vpop.f32.mrf.mxu0
        %v5962 = vadd.f32 0.0, %v5961
        %v5963 = vpop.f32.mrf.mxu0
        %v5964 = vadd.f32 0.0, %v5963
        %5965 = vdwg.mxu0
        %5968 = vrot.lane.b32.xlu0 %v4158, 64
        %v5969 = vpop.permute.xlu0 %5968
        %5970 = vrot.lane.b32.xlu0 %v4423, 64
        %v5971 = vpop.permute.xlu0 %5970
        %v5972 = vsel %vm4769, %v5969, %v5971
        %v5976 = vsel %vm5078, %v5878, 0
        %5978 = vmatprep.subr.mxu0 0.0
        %5979 = vmatpush1.msra.mxu0 0.0
        %5980 = vmatprep.subr.mxu0 0.0
        %5981 = vmatpush1.msra.mxu0 0.0
        %5982 = vmatprep.subr.mxu0 0.0
        %5983 = vmatpush1.msra.mxu0 0.0
        %5984 = vmatprep.subr.mxu0 0.0
        %5985 = vmatpush1.msra.mxu0 0.0
        %5986 = vmatprep.subr.mxu0 0.0
        %5987 = vmatpush1.msra.mxu0 0.0
        %5988 = vmatprep.subr.mxu0 0.0
        %5989 = vmatpush1.msra.mxu0 0.0
        %5990 = vmatprep.subr.mxu0 0.0
        %5991 = vmatpush1.msra.mxu0 0.0
        %5992 = vmatprep.subr.mxu0 0.0
        %5993 = vmatpush1.msra.mxu0 0.0
        %5994 = vmatprep.subr.mxu0 0.0
        %5995 = vmatpush1.msra.mxu0 0.0
        %5996 = vmatprep.subr.mxu0 0.0
        %5997 = vmatpush1.msra.mxu0 0.0
        %5998 = vmatprep.subr.mxu0 0.0
        %5999 = vmatpush1.msra.mxu0 0.0
        %6000 = vmatprep.subr.mxu0 0.0
        %6001 = vmatpush1.msra.mxu0 0.0
        %6002 = vmatprep.subr.mxu0 0.0
        %6003 = vmatpush1.msra.mxu0 0.0
        %6004 = vmatprep.subr.mxu0 0.0
        %6005 = vmatpush1.msra.mxu0 0.0
        %6006 = vmatprep.subr.mxu0 0.0
        %6007 = vmatpush1.msra.mxu0 0.0
        %6008 = vmatprep.subr.mxu0 %v5971
        %6009 = vmatpush1.msra.mxu0 %v5972
        %6010 = vmatprep.subr.mxu0 0.0
        %6011 = vmatpush2.msra.mxu0 0.0
        %6012 = vmatprep.subr.mxu0 0.0
        %6013 = vmatpush2.msra.mxu0 0.0
        %6014 = vmatprep.subr.mxu0 0.0
        %6015 = vmatpush2.msra.mxu0 0.0
        %6016 = vmatprep.subr.mxu0 0.0
        %6017 = vmatpush2.msra.mxu0 0.0
        %6018 = vmatprep.subr.mxu0 0.0
        %6019 = vmatpush2.msra.mxu0 0.0
        %6020 = vmatprep.subr.mxu0 0.0
        %6021 = vmatpush2.msra.mxu0 0.0
        %6022 = vmatprep.subr.mxu0 0.0
        %6023 = vmatpush2.msra.mxu0 0.0
        %6024 = vmatprep.subr.mxu0 0.0
        %6025 = vmatpush2.msra.mxu0 0.0
        %6026 = vmatprep.subr.mxu0 0.0
        %6027 = vmatpush2.msra.mxu0 0.0
        %6028 = vmatprep.subr.mxu0 0.0
        %6029 = vmatpush2.msra.mxu0 0.0
        %6030 = vmatprep.subr.mxu0 0.0
        %6031 = vmatpush2.msra.mxu0 0.0
        %6032 = vmatprep.subr.mxu0 0.0
        %6033 = vmatpush2.msra.mxu0 0.0
        %6034 = vmatprep.subr.mxu0 0.0
        %6035 = vmatpush2.msra.mxu0 0.0
        %6036 = vmatprep.subr.mxu0 0.0
        %6037 = vmatpush2.msra.mxu0 0.0
        %6038 = vmatprep.subr.mxu0 0.0
        %6039 = vmatpush2.msra.mxu0 0.0
        %6040 = vmatprep.subr.mxu0 0.0
        %6041 = vmatpush2.msra.mxu0 0.0
        %6042 = vmatprep.mubr.f32.mxu0 0.0
        %6043 = vmatmul.mubr.f32.gmra.mxu0 %v5976
        %v6044 = vpop.f32.mrf.mxu0
        %v6045 = vadd.f32 0.0, %v6044
        %v6046 = vpop.f32.mrf.mxu0
        %v6047 = vadd.f32 0.0, %v6046
        %6048 = vdwg.mxu0
        %6051 = vrot.lane.b32.xlu0 %v4164, 64
        %v6052 = vpop.permute.xlu0 %6051
        %6053 = vrot.lane.b32.xlu0 %v4429, 64
        %v6054 = vpop.permute.xlu0 %6053
        %v6055 = vsel %vm4769, %v6052, %v6054
        %v6059 = vsel %vm5078, %v5880, 0
        %6061 = vmatprep.subr.mxu0 0.0
        %6062 = vmatpush1.msra.mxu0 0.0
        %6063 = vmatprep.subr.mxu0 0.0
        %6064 = vmatpush1.msra.mxu0 0.0
        %6065 = vmatprep.subr.mxu0 0.0
        %6066 = vmatpush1.msra.mxu0 0.0
        %6067 = vmatprep.subr.mxu0 0.0
        %6068 = vmatpush1.msra.mxu0 0.0
        %6069 = vmatprep.subr.mxu0 0.0
        %6070 = vmatpush1.msra.mxu0 0.0
        %6071 = vmatprep.subr.mxu0 0.0
        %6072 = vmatpush1.msra.mxu0 0.0
        %6073 = vmatprep.subr.mxu0 0.0
        %6074 = vmatpush1.msra.mxu0 0.0
        %6075 = vmatprep.subr.mxu0 0.0
        %6076 = vmatpush1.msra.mxu0 0.0
        %6077 = vmatprep.subr.mxu0 0.0
        %6078 = vmatpush1.msra.mxu0 0.0
        %6079 = vmatprep.subr.mxu0 0.0
        %6080 = vmatpush1.msra.mxu0 0.0
        %6081 = vmatprep.subr.mxu0 0.0
        %6082 = vmatpush1.msra.mxu0 0.0
        %6083 = vmatprep.subr.mxu0 0.0
        %6084 = vmatpush1.msra.mxu0 0.0
        %6085 = vmatprep.subr.mxu0 0.0
        %6086 = vmatpush1.msra.mxu0 0.0
        %6087 = vmatprep.subr.mxu0 0.0
        %6088 = vmatpush1.msra.mxu0 0.0
        %6089 = vmatprep.subr.mxu0 0.0
        %6090 = vmatpush1.msra.mxu0 0.0
        %6091 = vmatprep.subr.mxu0 %v6054
        %6092 = vmatpush1.msra.mxu0 %v6055
        %6093 = vmatprep.subr.mxu0 0.0
        %6094 = vmatpush2.msra.mxu0 0.0
        %6095 = vmatprep.subr.mxu0 0.0
        %6096 = vmatpush2.msra.mxu0 0.0
        %6097 = vmatprep.subr.mxu0 0.0
        %6098 = vmatpush2.msra.mxu0 0.0
        %6099 = vmatprep.subr.mxu0 0.0
        %6100 = vmatpush2.msra.mxu0 0.0
        %6101 = vmatprep.subr.mxu0 0.0
        %6102 = vmatpush2.msra.mxu0 0.0
        %6103 = vmatprep.subr.mxu0 0.0
        %6104 = vmatpush2.msra.mxu0 0.0
        %6105 = vmatprep.subr.mxu0 0.0
        %6106 = vmatpush2.msra.mxu0 0.0
        %6107 = vmatprep.subr.mxu0 0.0
        %6108 = vmatpush2.msra.mxu0 0.0
        %6109 = vmatprep.subr.mxu0 0.0
        %6110 = vmatpush2.msra.mxu0 0.0
        %6111 = vmatprep.subr.mxu0 0.0
        %6112 = vmatpush2.msra.mxu0 0.0
        %6113 = vmatprep.subr.mxu0 0.0
        %6114 = vmatpush2.msra.mxu0 0.0
        %6115 = vmatprep.subr.mxu0 0.0
        %6116 = vmatpush2.msra.mxu0 0.0
        %6117 = vmatprep.subr.mxu0 0.0
        %6118 = vmatpush2.msra.mxu0 0.0
        %6119 = vmatprep.subr.mxu0 0.0
        %6120 = vmatpush2.msra.mxu0 0.0
        %6121 = vmatprep.subr.mxu0 0.0
        %6122 = vmatpush2.msra.mxu0 0.0
        %6123 = vmatprep.subr.mxu0 0.0
        %6124 = vmatpush2.msra.mxu0 0.0
        %6125 = vmatprep.mubr.f32.mxu0 0.0
        %6126 = vmatmul.mubr.f32.gmra.mxu0 %v6059
        %v6127 = vpop.f32.mrf.mxu0
        %v6128 = vadd.f32 0.0, %v6127
        %v6129 = vpop.f32.mrf.mxu0
        %v6130 = vadd.f32 0.0, %v6129
        %6131 = vdwg.mxu0
        %6134 = vrot.lane.b32.xlu0 %v4170, 64
        %v6135 = vpop.permute.xlu0 %6134
        %6136 = vrot.lane.b32.xlu0 %v4435, 64
        %v6137 = vpop.permute.xlu0 %6136
        %v6138 = vsel %vm4769, %v6135, %v6137
        %v6142 = vsel %vm5078, %v5882, 0
        %6144 = vmatprep.subr.mxu0 0.0
        %6145 = vmatpush1.msra.mxu0 0.0
        %6146 = vmatprep.subr.mxu0 0.0
        %6147 = vmatpush1.msra.mxu0 0.0
        %6148 = vmatprep.subr.mxu0 0.0
        %6149 = vmatpush1.msra.mxu0 0.0
        %6150 = vmatprep.subr.mxu0 0.0
        %6151 = vmatpush1.msra.mxu0 0.0
        %6152 = vmatprep.subr.mxu0 0.0
        %6153 = vmatpush1.msra.mxu0 0.0
        %6154 = vmatprep.subr.mxu0 0.0
        %6155 = vmatpush1.msra.mxu0 0.0
        %6156 = vmatprep.subr.mxu0 0.0
        %6157 = vmatpush1.msra.mxu0 0.0
        %6158 = vmatprep.subr.mxu0 0.0
        %6159 = vmatpush1.msra.mxu0 0.0
        %6160 = vmatprep.subr.mxu0 0.0
        %6161 = vmatpush1.msra.mxu0 0.0
        %6162 = vmatprep.subr.mxu0 0.0
        %6163 = vmatpush1.msra.mxu0 0.0
        %6164 = vmatprep.subr.mxu0 0.0
        %6165 = vmatpush1.msra.mxu0 0.0
        %6166 = vmatprep.subr.mxu0 0.0
        %6167 = vmatpush1.msra.mxu0 0.0
        %6168 = vmatprep.subr.mxu0 0.0
        %6169 = vmatpush1.msra.mxu0 0.0
        %6170 = vmatprep.subr.mxu0 0.0
        %6171 = vmatpush1.msra.mxu0 0.0
        %6172 = vmatprep.subr.mxu0 0.0
        %6173 = vmatpush1.msra.mxu0 0.0
        %6174 = vmatprep.subr.mxu0 %v6137
        %6175 = vmatpush1.msra.mxu0 %v6138
        %6176 = vmatprep.subr.mxu0 0.0
        %6177 = vmatpush2.msra.mxu0 0.0
        %6178 = vmatprep.subr.mxu0 0.0
        %6179 = vmatpush2.msra.mxu0 0.0
        %6180 = vmatprep.subr.mxu0 0.0
        %6181 = vmatpush2.msra.mxu0 0.0
        %6182 = vmatprep.subr.mxu0 0.0
        %6183 = vmatpush2.msra.mxu0 0.0
        %6184 = vmatprep.subr.mxu0 0.0
        %6185 = vmatpush2.msra.mxu0 0.0
        %6186 = vmatprep.subr.mxu0 0.0
        %6187 = vmatpush2.msra.mxu0 0.0
        %6188 = vmatprep.subr.mxu0 0.0
        %6189 = vmatpush2.msra.mxu0 0.0
        %6190 = vmatprep.subr.mxu0 0.0
        %6191 = vmatpush2.msra.mxu0 0.0
        %6192 = vmatprep.subr.mxu0 0.0
        %6193 = vmatpush2.msra.mxu0 0.0
        %6194 = vmatprep.subr.mxu0 0.0
        %6195 = vmatpush2.msra.mxu0 0.0
        %6196 = vmatprep.subr.mxu0 0.0
        %6197 = vmatpush2.msra.mxu0 0.0
        %6198 = vmatprep.subr.mxu0 0.0
        %6199 = vmatpush2.msra.mxu0 0.0
        %6200 = vmatprep.subr.mxu0 0.0
        %6201 = vmatpush2.msra.mxu0 0.0
        %6202 = vmatprep.subr.mxu0 0.0
        %6203 = vmatpush2.msra.mxu0 0.0
        %6204 = vmatprep.subr.mxu0 0.0
        %6205 = vmatpush2.msra.mxu0 0.0
        %6206 = vmatprep.subr.mxu0 0.0
        %6207 = vmatpush2.msra.mxu0 0.0
        %6208 = vmatprep.mubr.f32.mxu0 0.0
        %6209 = vmatmul.mubr.f32.gmra.mxu0 %v6142
        %v6210 = vpop.f32.mrf.mxu0
        %v6211 = vadd.f32 0.0, %v6210
        %v6212 = vpop.f32.mrf.mxu0
        %v6213 = vadd.f32 0.0, %v6212
        %6214 = vdwg.mxu0
        %v6216 = vsel %vm4769, %v4710, 0
        %v6219 = vsel %vm4769, %v3883, 0
        %6221 = vmatprep.subr.mxu0 0.0
        %6222 = vmatpush1.xpose.msra.mxu0 0.0
        %6223 = vmatprep.subr.mxu0 0.0
        %6224 = vmatpush1.xpose.msra.mxu0 0.0
        %6225 = vmatprep.subr.mxu0 0.0
        %6226 = vmatpush1.xpose.msra.mxu0 0.0
        %6227 = vmatprep.subr.mxu0 0.0
        %6228 = vmatpush1.xpose.msra.mxu0 0.0
        %6229 = vmatprep.subr.mxu0 0.0
        %6230 = vmatpush1.xpose.msra.mxu0 0.0
        %6231 = vmatprep.subr.mxu0 0.0
        %6232 = vmatpush1.xpose.msra.mxu0 0.0
        %6233 = vmatprep.subr.mxu0 0.0
        %6234 = vmatpush1.xpose.msra.mxu0 0.0
        %6235 = vmatprep.subr.mxu0 0.0
        %6236 = vmatpush1.xpose.msra.mxu0 0.0
        %6237 = vmatprep.subr.mxu0 0.0
        %6238 = vmatpush1.xpose.msra.mxu0 0.0
        %6239 = vmatprep.subr.mxu0 0.0
        %6240 = vmatpush1.xpose.msra.mxu0 0.0
        %6241 = vmatprep.subr.mxu0 0.0
        %6242 = vmatpush1.xpose.msra.mxu0 0.0
        %6243 = vmatprep.subr.mxu0 0.0
        %6244 = vmatpush1.xpose.msra.mxu0 0.0
        %6245 = vmatprep.subr.mxu0 0.0
        %6246 = vmatpush1.xpose.msra.mxu0 0.0
        %6247 = vmatprep.subr.mxu0 0.0
        %6248 = vmatpush1.xpose.msra.mxu0 0.0
        %6249 = vmatprep.subr.mxu0 0.0
        %6250 = vmatpush1.xpose.msra.mxu0 0.0
        %6251 = vmatprep.subr.mxu0 %v6219
        %6252 = vmatpush1.xpose.msra.mxu0 %v3618
        %6253 = vmatprep.subr.mxu0 0.0
        %6254 = vmatpush2.xpose.msra.mxu0 0.0
        %6255 = vmatprep.subr.mxu0 0.0
        %6256 = vmatpush2.xpose.msra.mxu0 0.0
        %6257 = vmatprep.subr.mxu0 0.0
        %6258 = vmatpush2.xpose.msra.mxu0 0.0
        %6259 = vmatprep.subr.mxu0 0.0
        %6260 = vmatpush2.xpose.msra.mxu0 0.0
        %6261 = vmatprep.subr.mxu0 0.0
        %6262 = vmatpush2.xpose.msra.mxu0 0.0
        %6263 = vmatprep.subr.mxu0 0.0
        %6264 = vmatpush2.xpose.msra.mxu0 0.0
        %6265 = vmatprep.subr.mxu0 0.0
        %6266 = vmatpush2.xpose.msra.mxu0 0.0
        %6267 = vmatprep.subr.mxu0 0.0
        %6268 = vmatpush2.xpose.msra.mxu0 0.0
        %6269 = vmatprep.subr.mxu0 0.0
        %6270 = vmatpush2.xpose.msra.mxu0 0.0
        %6271 = vmatprep.subr.mxu0 0.0
        %6272 = vmatpush2.xpose.msra.mxu0 0.0
        %6273 = vmatprep.subr.mxu0 0.0
        %6274 = vmatpush2.xpose.msra.mxu0 0.0
        %6275 = vmatprep.subr.mxu0 0.0
        %6276 = vmatpush2.xpose.msra.mxu0 0.0
        %6277 = vmatprep.subr.mxu0 0.0
        %6278 = vmatpush2.xpose.msra.mxu0 0.0
        %6279 = vmatprep.subr.mxu0 0.0
        %6280 = vmatpush2.xpose.msra.mxu0 0.0
        %6281 = vmatprep.subr.mxu0 0.0
        %6282 = vmatpush2.xpose.msra.mxu0 0.0
        %6283 = vmatprep.subr.mxu0 0.0
        %6284 = vmatpush2.xpose.msra.mxu0 0.0
        %6285 = vmatprep.mubr.f32.mxu0 %v6216
        %6286 = vmatmul.mubr.f32.gmra.mxu0 %v4709
        %v6287 = vpop.f32.mrf.mxu0
        %v6288 = vadd.f32 0.0, %v6287
        %v6289 = vpop.f32.mrf.mxu0
        %6290 = vdwg.mxu0
        %v6292 = vsel %vm4769, %v4716, 0
        %v6295 = vsel %vm4769, %v3889, 0
        %6297 = vmatprep.subr.mxu0 0.0
        %6298 = vmatpush1.xpose.msra.mxu0 0.0
        %6299 = vmatprep.subr.mxu0 0.0
        %6300 = vmatpush1.xpose.msra.mxu0 0.0
        %6301 = vmatprep.subr.mxu0 0.0
        %6302 = vmatpush1.xpose.msra.mxu0 0.0
        %6303 = vmatprep.subr.mxu0 0.0
        %6304 = vmatpush1.xpose.msra.mxu0 0.0
        %6305 = vmatprep.subr.mxu0 0.0
        %6306 = vmatpush1.xpose.msra.mxu0 0.0
        %6307 = vmatprep.subr.mxu0 0.0
        %6308 = vmatpush1.xpose.msra.mxu0 0.0
        %6309 = vmatprep.subr.mxu0 0.0
        %6310 = vmatpush1.xpose.msra.mxu0 0.0
        %6311 = vmatprep.subr.mxu0 0.0
        %6312 = vmatpush1.xpose.msra.mxu0 0.0
        %6313 = vmatprep.subr.mxu0 0.0
        %6314 = vmatpush1.xpose.msra.mxu0 0.0
        %6315 = vmatprep.subr.mxu0 0.0
        %6316 = vmatpush1.xpose.msra.mxu0 0.0
        %6317 = vmatprep.subr.mxu0 0.0
        %6318 = vmatpush1.xpose.msra.mxu0 0.0
        %6319 = vmatprep.subr.mxu0 0.0
        %6320 = vmatpush1.xpose.msra.mxu0 0.0
        %6321 = vmatprep.subr.mxu0 0.0
        %6322 = vmatpush1.xpose.msra.mxu0 0.0
        %6323 = vmatprep.subr.mxu0 0.0
        %6324 = vmatpush1.xpose.msra.mxu0 0.0
        %6325 = vmatprep.subr.mxu0 0.0
        %6326 = vmatpush1.xpose.msra.mxu0 0.0
        %6327 = vmatprep.subr.mxu0 %v6295
        %6328 = vmatpush1.xpose.msra.mxu0 %v3624
        %6329 = vmatprep.subr.mxu0 0.0
        %6330 = vmatpush2.xpose.msra.mxu0 0.0
        %6331 = vmatprep.subr.mxu0 0.0
        %6332 = vmatpush2.xpose.msra.mxu0 0.0
        %6333 = vmatprep.subr.mxu0 0.0
        %6334 = vmatpush2.xpose.msra.mxu0 0.0
        %6335 = vmatprep.subr.mxu0 0.0
        %6336 = vmatpush2.xpose.msra.mxu0 0.0
        %6337 = vmatprep.subr.mxu0 0.0
        %6338 = vmatpush2.xpose.msra.mxu0 0.0
        %6339 = vmatprep.subr.mxu0 0.0
        %6340 = vmatpush2.xpose.msra.mxu0 0.0
        %6341 = vmatprep.subr.mxu0 0.0
        %6342 = vmatpush2.xpose.msra.mxu0 0.0
        %6343 = vmatprep.subr.mxu0 0.0
        %6344 = vmatpush2.xpose.msra.mxu0 0.0
        %6345 = vmatprep.subr.mxu0 0.0
        %6346 = vmatpush2.xpose.msra.mxu0 0.0
        %6347 = vmatprep.subr.mxu0 0.0
        %6348 = vmatpush2.xpose.msra.mxu0 0.0
        %6349 = vmatprep.subr.mxu0 0.0
        %6350 = vmatpush2.xpose.msra.mxu0 0.0
        %6351 = vmatprep.subr.mxu0 0.0
        %6352 = vmatpush2.xpose.msra.mxu0 0.0
        %6353 = vmatprep.subr.mxu0 0.0
        %6354 = vmatpush2.xpose.msra.mxu0 0.0
        %6355 = vmatprep.subr.mxu0 0.0
        %6356 = vmatpush2.xpose.msra.mxu0 0.0
        %6357 = vmatprep.subr.mxu0 0.0
        %6358 = vmatpush2.xpose.msra.mxu0 0.0
        %6359 = vmatprep.subr.mxu0 0.0
        %6360 = vmatpush2.xpose.msra.mxu0 0.0
        %6361 = vmatprep.mubr.f32.mxu0 %v6292
        %6362 = vmatmul.mubr.f32.gmra.mxu0 %v4715
        %v6363 = vpop.f32.mrf.mxu0
        %v6364 = vadd.f32 0.0, %v6363
        %v6365 = vpop.f32.mrf.mxu0
        %6366 = vdwg.mxu0
        %v6368 = vsel %vm4769, %v4722, 0
        %v6371 = vsel %vm4769, %v3895, 0
        %6373 = vmatprep.subr.mxu0 0.0
        %6374 = vmatpush1.xpose.msra.mxu0 0.0
        %6375 = vmatprep.subr.mxu0 0.0
        %6376 = vmatpush1.xpose.msra.mxu0 0.0
        %6377 = vmatprep.subr.mxu0 0.0
        %6378 = vmatpush1.xpose.msra.mxu0 0.0
        %6379 = vmatprep.subr.mxu0 0.0
        %6380 = vmatpush1.xpose.msra.mxu0 0.0
        %6381 = vmatprep.subr.mxu0 0.0
        %6382 = vmatpush1.xpose.msra.mxu0 0.0
        %6383 = vmatprep.subr.mxu0 0.0
        %6384 = vmatpush1.xpose.msra.mxu0 0.0
        %6385 = vmatprep.subr.mxu0 0.0
        %6386 = vmatpush1.xpose.msra.mxu0 0.0
        %6387 = vmatprep.subr.mxu0 0.0
        %6388 = vmatpush1.xpose.msra.mxu0 0.0
        %6389 = vmatprep.subr.mxu0 0.0
        %6390 = vmatpush1.xpose.msra.mxu0 0.0
        %6391 = vmatprep.subr.mxu0 0.0
        %6392 = vmatpush1.xpose.msra.mxu0 0.0
        %6393 = vmatprep.subr.mxu0 0.0
        %6394 = vmatpush1.xpose.msra.mxu0 0.0
        %6395 = vmatprep.subr.mxu0 0.0
        %6396 = vmatpush1.xpose.msra.mxu0 0.0
        %6397 = vmatprep.subr.mxu0 0.0
        %6398 = vmatpush1.xpose.msra.mxu0 0.0
        %6399 = vmatprep.subr.mxu0 0.0
        %6400 = vmatpush1.xpose.msra.mxu0 0.0
        %6401 = vmatprep.subr.mxu0 0.0
        %6402 = vmatpush1.xpose.msra.mxu0 0.0
        %6403 = vmatprep.subr.mxu0 %v6371
        %6404 = vmatpush1.xpose.msra.mxu0 %v3630
        %6405 = vmatprep.subr.mxu0 0.0
        %6406 = vmatpush2.xpose.msra.mxu0 0.0
        %6407 = vmatprep.subr.mxu0 0.0
        %6408 = vmatpush2.xpose.msra.mxu0 0.0
        %6409 = vmatprep.subr.mxu0 0.0
        %6410 = vmatpush2.xpose.msra.mxu0 0.0
        %6411 = vmatprep.subr.mxu0 0.0
        %6412 = vmatpush2.xpose.msra.mxu0 0.0
        %6413 = vmatprep.subr.mxu0 0.0
        %6414 = vmatpush2.xpose.msra.mxu0 0.0
        %6415 = vmatprep.subr.mxu0 0.0
        %6416 = vmatpush2.xpose.msra.mxu0 0.0
        %6417 = vmatprep.subr.mxu0 0.0
        %6418 = vmatpush2.xpose.msra.mxu0 0.0
        %6419 = vmatprep.subr.mxu0 0.0
        %6420 = vmatpush2.xpose.msra.mxu0 0.0
        %6421 = vmatprep.subr.mxu0 0.0
        %6422 = vmatpush2.xpose.msra.mxu0 0.0
        %6423 = vmatprep.subr.mxu0 0.0
        %6424 = vmatpush2.xpose.msra.mxu0 0.0
        %6425 = vmatprep.subr.mxu0 0.0
        %6426 = vmatpush2.xpose.msra.mxu0 0.0
        %6427 = vmatprep.subr.mxu0 0.0
        %6428 = vmatpush2.xpose.msra.mxu0 0.0
        %6429 = vmatprep.subr.mxu0 0.0
        %6430 = vmatpush2.xpose.msra.mxu0 0.0
        %6431 = vmatprep.subr.mxu0 0.0
        %6432 = vmatpush2.xpose.msra.mxu0 0.0
        %6433 = vmatprep.subr.mxu0 0.0
        %6434 = vmatpush2.xpose.msra.mxu0 0.0
        %6435 = vmatprep.subr.mxu0 0.0
        %6436 = vmatpush2.xpose.msra.mxu0 0.0
        %6437 = vmatprep.mubr.f32.mxu0 %v6368
        %6438 = vmatmul.mubr.f32.gmra.mxu0 %v4721
        %v6439 = vpop.f32.mrf.mxu0
        %v6440 = vadd.f32 0.0, %v6439
        %v6441 = vpop.f32.mrf.mxu0
        %6442 = vdwg.mxu0
        %v6444 = vsel %vm4769, %v4728, 0
        %v6447 = vsel %vm4769, %v3901, 0
        %6449 = vmatprep.subr.mxu0 0.0
        %6450 = vmatpush1.xpose.msra.mxu0 0.0
        %6451 = vmatprep.subr.mxu0 0.0
        %6452 = vmatpush1.xpose.msra.mxu0 0.0
        %6453 = vmatprep.subr.mxu0 0.0
        %6454 = vmatpush1.xpose.msra.mxu0 0.0
        %6455 = vmatprep.subr.mxu0 0.0
        %6456 = vmatpush1.xpose.msra.mxu0 0.0
        %6457 = vmatprep.subr.mxu0 0.0
        %6458 = vmatpush1.xpose.msra.mxu0 0.0
        %6459 = vmatprep.subr.mxu0 0.0
        %6460 = vmatpush1.xpose.msra.mxu0 0.0
        %6461 = vmatprep.subr.mxu0 0.0
        %6462 = vmatpush1.xpose.msra.mxu0 0.0
        %6463 = vmatprep.subr.mxu0 0.0
        %6464 = vmatpush1.xpose.msra.mxu0 0.0
        %6465 = vmatprep.subr.mxu0 0.0
        %6466 = vmatpush1.xpose.msra.mxu0 0.0
        %6467 = vmatprep.subr.mxu0 0.0
        %6468 = vmatpush1.xpose.msra.mxu0 0.0
        %6469 = vmatprep.subr.mxu0 0.0
        %6470 = vmatpush1.xpose.msra.mxu0 0.0
        %6471 = vmatprep.subr.mxu0 0.0
        %6472 = vmatpush1.xpose.msra.mxu0 0.0
        %6473 = vmatprep.subr.mxu0 0.0
        %6474 = vmatpush1.xpose.msra.mxu0 0.0
        %6475 = vmatprep.subr.mxu0 0.0
        %6476 = vmatpush1.xpose.msra.mxu0 0.0
        %6477 = vmatprep.subr.mxu0 0.0
        %6478 = vmatpush1.xpose.msra.mxu0 0.0
        %6479 = vmatprep.subr.mxu0 %v6447
        %6480 = vmatpush1.xpose.msra.mxu0 %v3636
        %6481 = vmatprep.subr.mxu0 0.0
        %6482 = vmatpush2.xpose.msra.mxu0 0.0
        %6483 = vmatprep.subr.mxu0 0.0
        %6484 = vmatpush2.xpose.msra.mxu0 0.0
        %6485 = vmatprep.subr.mxu0 0.0
        %6486 = vmatpush2.xpose.msra.mxu0 0.0
        %6487 = vmatprep.subr.mxu0 0.0
        %6488 = vmatpush2.xpose.msra.mxu0 0.0
        %6489 = vmatprep.subr.mxu0 0.0
        %6490 = vmatpush2.xpose.msra.mxu0 0.0
        %6491 = vmatprep.subr.mxu0 0.0
        %6492 = vmatpush2.xpose.msra.mxu0 0.0
        %6493 = vmatprep.subr.mxu0 0.0
        %6494 = vmatpush2.xpose.msra.mxu0 0.0
        %6495 = vmatprep.subr.mxu0 0.0
        %6496 = vmatpush2.xpose.msra.mxu0 0.0
        %6497 = vmatprep.subr.mxu0 0.0
        %6498 = vmatpush2.xpose.msra.mxu0 0.0
        %6499 = vmatprep.subr.mxu0 0.0
        %6500 = vmatpush2.xpose.msra.mxu0 0.0
        %6501 = vmatprep.subr.mxu0 0.0
        %6502 = vmatpush2.xpose.msra.mxu0 0.0
        %6503 = vmatprep.subr.mxu0 0.0
        %6504 = vmatpush2.xpose.msra.mxu0 0.0
        %6505 = vmatprep.subr.mxu0 0.0
        %6506 = vmatpush2.xpose.msra.mxu0 0.0
        %6507 = vmatprep.subr.mxu0 0.0
        %6508 = vmatpush2.xpose.msra.mxu0 0.0
        %6509 = vmatprep.subr.mxu0 0.0
        %6510 = vmatpush2.xpose.msra.mxu0 0.0
        %6511 = vmatprep.subr.mxu0 0.0
        %6512 = vmatpush2.xpose.msra.mxu0 0.0
        %6513 = vmatprep.mubr.f32.mxu0 %v6444
        %6514 = vmatmul.mubr.f32.gmra.mxu0 %v4727
        %v6515 = vpop.f32.mrf.mxu0
        %v6516 = vadd.f32 0.0, %v6515
        %v6517 = vpop.f32.mrf.mxu0
        %6518 = vdwg.mxu0
        %v6519 = vsel %vm4765, -1e+09, %v6288
        %v6520 = vsel %vm4766, -1e+09, %v6364
        %v6521 = vsel %vm4767, -1e+09, %v6440
        %v6522 = vsel %vm4768, -1e+09, %v6516
        %v6523 = vsel %vm5078, %v6519, -inf
        %v6524 = vrot.slane %v6523, 4
        %v6525 = vmax.f32 %v6523, %v6524
        %v6526 = vrot.slane %v6525, 2
        %v6527 = vmax.f32 %v6525, %v6526
        %v6528 = vrot.slane %v6527, 1
        %v6529 = vmax.f32 %v6527, %v6528
        %v6530 = vsel %vm5078, %v6520, -inf
        %v6531 = vrot.slane %v6530, 4
        %v6532 = vmax.f32 %v6530, %v6531
        %v6533 = vrot.slane %v6532, 2
        %v6534 = vmax.f32 %v6532, %v6533
        %v6535 = vrot.slane %v6534, 1
        %v6536 = vmax.f32 %v6534, %v6535
        %v6537 = vsel %vm5078, %v6521, -inf
        %v6538 = vrot.slane %v6537, 4
        %v6539 = vmax.f32 %v6537, %v6538
        %v6540 = vrot.slane %v6539, 2
        %v6541 = vmax.f32 %v6539, %v6540
        %v6542 = vrot.slane %v6541, 1
        %v6543 = vmax.f32 %v6541, %v6542
        %v6544 = vsel %vm5078, %v6522, -inf
        %v6545 = vrot.slane %v6544, 4
        %v6546 = vmax.f32 %v6544, %v6545
        %v6547 = vrot.slane %v6546, 2
        %v6548 = vmax.f32 %v6546, %v6547
        %v6549 = vrot.slane %v6548, 1
        %v6550 = vmax.f32 %v6548, %v6549
        %v6551 = vsub.f32 %v6519, %v6529
        %v6552 = vsub.f32 %v6520, %v6536
        %v6553 = vsub.f32 %v6521, %v6543
        %v6554 = vsub.f32 %v6522, %v6550
        %v6555 = vmul.f32 %v6551, 1.442695
        %v6556 = vpow.pop %v6555
        %v6557 = vmul.f32 %v6552, 1.442695
        %v6558 = vpow.pop %v6557
        %v6559 = vmul.f32 %v6553, 1.442695
        %v6560 = vpow.pop %v6559
        %v6561 = vmul.f32 %v6554, 1.442695
        %v6562 = vpow.pop %v6561
        %v6563 = vsel %vm5078, %v6556, 0.0
        %v6564 = vrot.slane %v6563, 4
        %v6565 = vadd.f32 %v6563, %v6564
        %v6566 = vrot.slane %v6565, 2
        %v6567 = vadd.f32 %v6565, %v6566
        %v6568 = vrot.slane %v6567, 1
        %v6569 = vadd.f32 %v6567, %v6568
        %v6570 = vsel %vm5078, %v6558, 0.0
        %v6571 = vrot.slane %v6570, 4
        %v6572 = vadd.f32 %v6570, %v6571
        %v6573 = vrot.slane %v6572, 2
        %v6574 = vadd.f32 %v6572, %v6573
        %v6575 = vrot.slane %v6574, 1
        %v6576 = vadd.f32 %v6574, %v6575
        %v6577 = vsel %vm5078, %v6560, 0.0
        %v6578 = vrot.slane %v6577, 4
        %v6579 = vadd.f32 %v6577, %v6578
        %v6580 = vrot.slane %v6579, 2
        %v6581 = vadd.f32 %v6579, %v6580
        %v6582 = vrot.slane %v6581, 1
        %v6583 = vadd.f32 %v6581, %v6582
        %v6584 = vsel %vm5078, %v6562, 0.0
        %v6585 = vrot.slane %v6584, 4
        %v6586 = vadd.f32 %v6584, %v6585
        %v6587 = vrot.slane %v6586, 2
        %v6588 = vadd.f32 %v6586, %v6587
        %v6589 = vrot.slane %v6588, 1
        %v6590 = vadd.f32 %v6588, %v6589
        %v6591 = vrcp.pop %v6569
        %v6592 = vmul.f32 %v6556, %v6591
        %v6593 = vrcp.pop %v6576
        %v6594 = vmul.f32 %v6558, %v6593
        %v6595 = vrcp.pop %v6583
        %v6596 = vmul.f32 %v6560, %v6595
        %v6597 = vrcp.pop %v6590
        %v6598 = vmul.f32 %v6562, %v6597
        %v6600 = vsel %vm5078, %v6592, 0
        %6602 = vmatprep.subr.mxu0 0.0
        %6603 = vmatpush1.msra.mxu0 0.0
        %6604 = vmatprep.subr.mxu0 0.0
        %6605 = vmatpush1.msra.mxu0 0.0
        %6606 = vmatprep.subr.mxu0 0.0
        %6607 = vmatpush1.msra.mxu0 0.0
        %6608 = vmatprep.subr.mxu0 0.0
        %6609 = vmatpush1.msra.mxu0 0.0
        %6610 = vmatprep.subr.mxu0 0.0
        %6611 = vmatpush1.msra.mxu0 0.0
        %6612 = vmatprep.subr.mxu0 0.0
        %6613 = vmatpush1.msra.mxu0 0.0
        %6614 = vmatprep.subr.mxu0 0.0
        %6615 = vmatpush1.msra.mxu0 0.0
        %6616 = vmatprep.subr.mxu0 0.0
        %6617 = vmatpush1.msra.mxu0 0.0
        %6618 = vmatprep.subr.mxu0 0.0
        %6619 = vmatpush1.msra.mxu0 0.0
        %6620 = vmatprep.subr.mxu0 0.0
        %6621 = vmatpush1.msra.mxu0 0.0
        %6622 = vmatprep.subr.mxu0 0.0
        %6623 = vmatpush1.msra.mxu0 0.0
        %6624 = vmatprep.subr.mxu0 0.0
        %6625 = vmatpush1.msra.mxu0 0.0
        %6626 = vmatprep.subr.mxu0 0.0
        %6627 = vmatpush1.msra.mxu0 0.0
        %6628 = vmatprep.subr.mxu0 0.0
        %6629 = vmatpush1.msra.mxu0 0.0
        %6630 = vmatprep.subr.mxu0 0.0
        %6631 = vmatpush1.msra.mxu0 0.0
        %6632 = vmatprep.subr.mxu0 %v4684
        %6633 = vmatpush1.msra.mxu0 %v4419
        %6634 = vmatprep.subr.mxu0 0.0
        %6635 = vmatpush2.msra.mxu0 0.0
        %6636 = vmatprep.subr.mxu0 0.0
        %6637 = vmatpush2.msra.mxu0 0.0
        %6638 = vmatprep.subr.mxu0 0.0
        %6639 = vmatpush2.msra.mxu0 0.0
        %6640 = vmatprep.subr.mxu0 0.0
        %6641 = vmatpush2.msra.mxu0 0.0
        %6642 = vmatprep.subr.mxu0 0.0
        %6643 = vmatpush2.msra.mxu0 0.0
        %6644 = vmatprep.subr.mxu0 0.0
        %6645 = vmatpush2.msra.mxu0 0.0
        %6646 = vmatprep.subr.mxu0 0.0
        %6647 = vmatpush2.msra.mxu0 0.0
        %6648 = vmatprep.subr.mxu0 0.0
        %6649 = vmatpush2.msra.mxu0 0.0
        %6650 = vmatprep.subr.mxu0 0.0
        %6651 = vmatpush2.msra.mxu0 0.0
        %6652 = vmatprep.subr.mxu0 0.0
        %6653 = vmatpush2.msra.mxu0 0.0
        %6654 = vmatprep.subr.mxu0 0.0
        %6655 = vmatpush2.msra.mxu0 0.0
        %6656 = vmatprep.subr.mxu0 0.0
        %6657 = vmatpush2.msra.mxu0 0.0
        %6658 = vmatprep.subr.mxu0 0.0
        %6659 = vmatpush2.msra.mxu0 0.0
        %6660 = vmatprep.subr.mxu0 0.0
        %6661 = vmatpush2.msra.mxu0 0.0
        %6662 = vmatprep.subr.mxu0 0.0
        %6663 = vmatpush2.msra.mxu0 0.0
        %6664 = vmatprep.subr.mxu0 0.0
        %6665 = vmatpush2.msra.mxu0 0.0
        %6666 = vmatprep.mubr.f32.mxu0 0.0
        %6667 = vmatmul.mubr.f32.gmra.mxu0 %v6600
        %v6668 = vpop.f32.mrf.mxu0
        %v6669 = vadd.f32 0.0, %v6668
        %v6670 = vpop.f32.mrf.mxu0
        %v6671 = vadd.f32 0.0, %v6670
        %6672 = vdwg.mxu0
        %v6674 = vsel %vm5078, %v6594, 0
        %6676 = vmatprep.subr.mxu0 0.0
        %6677 = vmatpush1.msra.mxu0 0.0
        %6678 = vmatprep.subr.mxu0 0.0
        %6679 = vmatpush1.msra.mxu0 0.0
        %6680 = vmatprep.subr.mxu0 0.0
        %6681 = vmatpush1.msra.mxu0 0.0
        %6682 = vmatprep.subr.mxu0 0.0
        %6683 = vmatpush1.msra.mxu0 0.0
        %6684 = vmatprep.subr.mxu0 0.0
        %6685 = vmatpush1.msra.mxu0 0.0
        %6686 = vmatprep.subr.mxu0 0.0
        %6687 = vmatpush1.msra.mxu0 0.0
        %6688 = vmatprep.subr.mxu0 0.0
        %6689 = vmatpush1.msra.mxu0 0.0
        %6690 = vmatprep.subr.mxu0 0.0
        %6691 = vmatpush1.msra.mxu0 0.0
        %6692 = vmatprep.subr.mxu0 0.0
        %6693 = vmatpush1.msra.mxu0 0.0
        %6694 = vmatprep.subr.mxu0 0.0
        %6695 = vmatpush1.msra.mxu0 0.0
        %6696 = vmatprep.subr.mxu0 0.0
        %6697 = vmatpush1.msra.mxu0 0.0
        %6698 = vmatprep.subr.mxu0 0.0
        %6699 = vmatpush1.msra.mxu0 0.0
        %6700 = vmatprep.subr.mxu0 0.0
        %6701 = vmatpush1.msra.mxu0 0.0
        %6702 = vmatprep.subr.mxu0 0.0
        %6703 = vmatpush1.msra.mxu0 0.0
        %6704 = vmatprep.subr.mxu0 0.0
        %6705 = vmatpush1.msra.mxu0 0.0
        %6706 = vmatprep.subr.mxu0 %v4690
        %6707 = vmatpush1.msra.mxu0 %v4425
        %6708 = vmatprep.subr.mxu0 0.0
        %6709 = vmatpush2.msra.mxu0 0.0
        %6710 = vmatprep.subr.mxu0 0.0
        %6711 = vmatpush2.msra.mxu0 0.0
        %6712 = vmatprep.subr.mxu0 0.0
        %6713 = vmatpush2.msra.mxu0 0.0
        %6714 = vmatprep.subr.mxu0 0.0
        %6715 = vmatpush2.msra.mxu0 0.0
        %6716 = vmatprep.subr.mxu0 0.0
        %6717 = vmatpush2.msra.mxu0 0.0
        %6718 = vmatprep.subr.mxu0 0.0
        %6719 = vmatpush2.msra.mxu0 0.0
        %6720 = vmatprep.subr.mxu0 0.0
        %6721 = vmatpush2.msra.mxu0 0.0
        %6722 = vmatprep.subr.mxu0 0.0
        %6723 = vmatpush2.msra.mxu0 0.0
        %6724 = vmatprep.subr.mxu0 0.0
        %6725 = vmatpush2.msra.mxu0 0.0
        %6726 = vmatprep.subr.mxu0 0.0
        %6727 = vmatpush2.msra.mxu0 0.0
        %6728 = vmatprep.subr.mxu0 0.0
        %6729 = vmatpush2.msra.mxu0 0.0
        %6730 = vmatprep.subr.mxu0 0.0
        %6731 = vmatpush2.msra.mxu0 0.0
        %6732 = vmatprep.subr.mxu0 0.0
        %6733 = vmatpush2.msra.mxu0 0.0
        %6734 = vmatprep.subr.mxu0 0.0
        %6735 = vmatpush2.msra.mxu0 0.0
        %6736 = vmatprep.subr.mxu0 0.0
        %6737 = vmatpush2.msra.mxu0 0.0
        %6738 = vmatprep.subr.mxu0 0.0
        %6739 = vmatpush2.msra.mxu0 0.0
        %6740 = vmatprep.mubr.f32.mxu0 0.0
        %6741 = vmatmul.mubr.f32.gmra.mxu0 %v6674
        %v6742 = vpop.f32.mrf.mxu0
        %v6743 = vadd.f32 0.0, %v6742
        %v6744 = vpop.f32.mrf.mxu0
        %v6745 = vadd.f32 0.0, %v6744
        %6746 = vdwg.mxu0
        %v6748 = vsel %vm5078, %v6596, 0
        %6750 = vmatprep.subr.mxu0 0.0
        %6751 = vmatpush1.msra.mxu0 0.0
        %6752 = vmatprep.subr.mxu0 0.0
        %6753 = vmatpush1.msra.mxu0 0.0
        %6754 = vmatprep.subr.mxu0 0.0
        %6755 = vmatpush1.msra.mxu0 0.0
        %6756 = vmatprep.subr.mxu0 0.0
        %6757 = vmatpush1.msra.mxu0 0.0
        %6758 = vmatprep.subr.mxu0 0.0
        %6759 = vmatpush1.msra.mxu0 0.0
        %6760 = vmatprep.subr.mxu0 0.0
        %6761 = vmatpush1.msra.mxu0 0.0
        %6762 = vmatprep.subr.mxu0 0.0
        %6763 = vmatpush1.msra.mxu0 0.0
        %6764 = vmatprep.subr.mxu0 0.0
        %6765 = vmatpush1.msra.mxu0 0.0
        %6766 = vmatprep.subr.mxu0 0.0
        %6767 = vmatpush1.msra.mxu0 0.0
        %6768 = vmatprep.subr.mxu0 0.0
        %6769 = vmatpush1.msra.mxu0 0.0
        %6770 = vmatprep.subr.mxu0 0.0
        %6771 = vmatpush1.msra.mxu0 0.0
        %6772 = vmatprep.subr.mxu0 0.0
        %6773 = vmatpush1.msra.mxu0 0.0
        %6774 = vmatprep.subr.mxu0 0.0
        %6775 = vmatpush1.msra.mxu0 0.0
        %6776 = vmatprep.subr.mxu0 0.0
        %6777 = vmatpush1.msra.mxu0 0.0
        %6778 = vmatprep.subr.mxu0 0.0
        %6779 = vmatpush1.msra.mxu0 0.0
        %6780 = vmatprep.subr.mxu0 %v4696
        %6781 = vmatpush1.msra.mxu0 %v4431
        %6782 = vmatprep.subr.mxu0 0.0
        %6783 = vmatpush2.msra.mxu0 0.0
        %6784 = vmatprep.subr.mxu0 0.0
        %6785 = vmatpush2.msra.mxu0 0.0
        %6786 = vmatprep.subr.mxu0 0.0
        %6787 = vmatpush2.msra.mxu0 0.0
        %6788 = vmatprep.subr.mxu0 0.0
        %6789 = vmatpush2.msra.mxu0 0.0
        %6790 = vmatprep.subr.mxu0 0.0
        %6791 = vmatpush2.msra.mxu0 0.0
        %6792 = vmatprep.subr.mxu0 0.0
        %6793 = vmatpush2.msra.mxu0 0.0
        %6794 = vmatprep.subr.mxu0 0.0
        %6795 = vmatpush2.msra.mxu0 0.0
        %6796 = vmatprep.subr.mxu0 0.0
        %6797 = vmatpush2.msra.mxu0 0.0
        %6798 = vmatprep.subr.mxu0 0.0
        %6799 = vmatpush2.msra.mxu0 0.0
        %6800 = vmatprep.subr.mxu0 0.0
        %6801 = vmatpush2.msra.mxu0 0.0
        %6802 = vmatprep.subr.mxu0 0.0
        %6803 = vmatpush2.msra.mxu0 0.0
        %6804 = vmatprep.subr.mxu0 0.0
        %6805 = vmatpush2.msra.mxu0 0.0
        %6806 = vmatprep.subr.mxu0 0.0
        %6807 = vmatpush2.msra.mxu0 0.0
        %6808 = vmatprep.subr.mxu0 0.0
        %6809 = vmatpush2.msra.mxu0 0.0
        %6810 = vmatprep.subr.mxu0 0.0
        %6811 = vmatpush2.msra.mxu0 0.0
        %6812 = vmatprep.subr.mxu0 0.0
        %6813 = vmatpush2.msra.mxu0 0.0
        %6814 = vmatprep.mubr.f32.mxu0 0.0
        %6815 = vmatmul.mubr.f32.gmra.mxu0 %v6748
        %v6816 = vpop.f32.mrf.mxu0
        %v6817 = vadd.f32 0.0, %v6816
        %v6818 = vpop.f32.mrf.mxu0
        %v6819 = vadd.f32 0.0, %v6818
        %6820 = vdwg.mxu0
        %v6822 = vsel %vm5078, %v6598, 0
        %6824 = vmatprep.subr.mxu0 0.0
        %6825 = vmatpush1.msra.mxu0 0.0
        %6826 = vmatprep.subr.mxu0 0.0
        %6827 = vmatpush1.msra.mxu0 0.0
        %6828 = vmatprep.subr.mxu0 0.0
        %6829 = vmatpush1.msra.mxu0 0.0
        %6830 = vmatprep.subr.mxu0 0.0
        %6831 = vmatpush1.msra.mxu0 0.0
        %6832 = vmatprep.subr.mxu0 0.0
        %6833 = vmatpush1.msra.mxu0 0.0
        %6834 = vmatprep.subr.mxu0 0.0
        %6835 = vmatpush1.msra.mxu0 0.0
        %6836 = vmatprep.subr.mxu0 0.0
        %6837 = vmatpush1.msra.mxu0 0.0
        %6838 = vmatprep.subr.mxu0 0.0
        %6839 = vmatpush1.msra.mxu0 0.0
        %6840 = vmatprep.subr.mxu0 0.0
        %6841 = vmatpush1.msra.mxu0 0.0
        %6842 = vmatprep.subr.mxu0 0.0
        %6843 = vmatpush1.msra.mxu0 0.0
        %6844 = vmatprep.subr.mxu0 0.0
        %6845 = vmatpush1.msra.mxu0 0.0
        %6846 = vmatprep.subr.mxu0 0.0
        %6847 = vmatpush1.msra.mxu0 0.0
        %6848 = vmatprep.subr.mxu0 0.0
        %6849 = vmatpush1.msra.mxu0 0.0
        %6850 = vmatprep.subr.mxu0 0.0
        %6851 = vmatpush1.msra.mxu0 0.0
        %6852 = vmatprep.subr.mxu0 0.0
        %6853 = vmatpush1.msra.mxu0 0.0
        %6854 = vmatprep.subr.mxu0 %v4702
        %6855 = vmatpush1.msra.mxu0 %v4437
        %6856 = vmatprep.subr.mxu0 0.0
        %6857 = vmatpush2.msra.mxu0 0.0
        %6858 = vmatprep.subr.mxu0 0.0
        %6859 = vmatpush2.msra.mxu0 0.0
        %6860 = vmatprep.subr.mxu0 0.0
        %6861 = vmatpush2.msra.mxu0 0.0
        %6862 = vmatprep.subr.mxu0 0.0
        %6863 = vmatpush2.msra.mxu0 0.0
        %6864 = vmatprep.subr.mxu0 0.0
        %6865 = vmatpush2.msra.mxu0 0.0
        %6866 = vmatprep.subr.mxu0 0.0
        %6867 = vmatpush2.msra.mxu0 0.0
        %6868 = vmatprep.subr.mxu0 0.0
        %6869 = vmatpush2.msra.mxu0 0.0
        %6870 = vmatprep.subr.mxu0 0.0
        %6871 = vmatpush2.msra.mxu0 0.0
        %6872 = vmatprep.subr.mxu0 0.0
        %6873 = vmatpush2.msra.mxu0 0.0
        %6874 = vmatprep.subr.mxu0 0.0
        %6875 = vmatpush2.msra.mxu0 0.0
        %6876 = vmatprep.subr.mxu0 0.0
        %6877 = vmatpush2.msra.mxu0 0.0
        %6878 = vmatprep.subr.mxu0 0.0
        %6879 = vmatpush2.msra.mxu0 0.0
        %6880 = vmatprep.subr.mxu0 0.0
        %6881 = vmatpush2.msra.mxu0 0.0
        %6882 = vmatprep.subr.mxu0 0.0
        %6883 = vmatpush2.msra.mxu0 0.0
        %6884 = vmatprep.subr.mxu0 0.0
        %6885 = vmatpush2.msra.mxu0 0.0
        %6886 = vmatprep.subr.mxu0 0.0
        %6887 = vmatpush2.msra.mxu0 0.0
        %6888 = vmatprep.mubr.f32.mxu0 0.0
        %6889 = vmatmul.mubr.f32.gmra.mxu0 %v6822
        %v6890 = vpop.f32.mrf.mxu0
        %v6891 = vadd.f32 0.0, %v6890
        %v6892 = vpop.f32.mrf.mxu0
        %v6893 = vadd.f32 0.0, %v6892
        %6894 = vdwg.mxu0
        %6896 = vrot.lane.b32.xlu0 %v4710, 64
        %v6897 = vpop.permute.xlu0 %6896
        %6898 = vrot.lane.b32.xlu0 %v4711, 64
        %v6899 = vpop.permute.xlu0 %6898
        %v6900 = vsel %vm4769, %v6897, %v6899
        %6903 = vrot.lane.b32.xlu0 %v3883, 64
        %v6904 = vpop.permute.xlu0 %6903
        %6905 = vrot.lane.b32.xlu0 %v3885, 64
        %v6906 = vpop.permute.xlu0 %6905
        %v6907 = vsel %vm4769, %v6904, %v6906
        %v6909 = vsel %vm4769, %v6899, 0
        %v6911 = vsel %vm4769, %v6906, 0
        %6913 = vmatprep.subr.mxu0 0.0
        %6914 = vmatpush1.xpose.msra.mxu0 0.0
        %6915 = vmatprep.subr.mxu0 0.0
        %6916 = vmatpush1.xpose.msra.mxu0 0.0
        %6917 = vmatprep.subr.mxu0 0.0
        %6918 = vmatpush1.xpose.msra.mxu0 0.0
        %6919 = vmatprep.subr.mxu0 0.0
        %6920 = vmatpush1.xpose.msra.mxu0 0.0
        %6921 = vmatprep.subr.mxu0 0.0
        %6922 = vmatpush1.xpose.msra.mxu0 0.0
        %6923 = vmatprep.subr.mxu0 0.0
        %6924 = vmatpush1.xpose.msra.mxu0 0.0
        %6925 = vmatprep.subr.mxu0 0.0
        %6926 = vmatpush1.xpose.msra.mxu0 0.0
        %6927 = vmatprep.subr.mxu0 0.0
        %6928 = vmatpush1.xpose.msra.mxu0 0.0
        %6929 = vmatprep.subr.mxu0 0.0
        %6930 = vmatpush1.xpose.msra.mxu0 0.0
        %6931 = vmatprep.subr.mxu0 0.0
        %6932 = vmatpush1.xpose.msra.mxu0 0.0
        %6933 = vmatprep.subr.mxu0 0.0
        %6934 = vmatpush1.xpose.msra.mxu0 0.0
        %6935 = vmatprep.subr.mxu0 0.0
        %6936 = vmatpush1.xpose.msra.mxu0 0.0
        %6937 = vmatprep.subr.mxu0 0.0
        %6938 = vmatpush1.xpose.msra.mxu0 0.0
        %6939 = vmatprep.subr.mxu0 0.0
        %6940 = vmatpush1.xpose.msra.mxu0 0.0
        %6941 = vmatprep.subr.mxu0 0.0
        %6942 = vmatpush1.xpose.msra.mxu0 0.0
        %6943 = vmatprep.subr.mxu0 %v6911
        %6944 = vmatpush1.xpose.msra.mxu0 %v6907
        %6945 = vmatprep.subr.mxu0 0.0
        %6946 = vmatpush2.xpose.msra.mxu0 0.0
        %6947 = vmatprep.subr.mxu0 0.0
        %6948 = vmatpush2.xpose.msra.mxu0 0.0
        %6949 = vmatprep.subr.mxu0 0.0
        %6950 = vmatpush2.xpose.msra.mxu0 0.0
        %6951 = vmatprep.subr.mxu0 0.0
        %6952 = vmatpush2.xpose.msra.mxu0 0.0
        %6953 = vmatprep.subr.mxu0 0.0
        %6954 = vmatpush2.xpose.msra.mxu0 0.0
        %6955 = vmatprep.subr.mxu0 0.0
        %6956 = vmatpush2.xpose.msra.mxu0 0.0
        %6957 = vmatprep.subr.mxu0 0.0
        %6958 = vmatpush2.xpose.msra.mxu0 0.0
        %6959 = vmatprep.subr.mxu0 0.0
        %6960 = vmatpush2.xpose.msra.mxu0 0.0
        %6961 = vmatprep.subr.mxu0 0.0
        %6962 = vmatpush2.xpose.msra.mxu0 0.0
        %6963 = vmatprep.subr.mxu0 0.0
        %6964 = vmatpush2.xpose.msra.mxu0 0.0
        %6965 = vmatprep.subr.mxu0 0.0
        %6966 = vmatpush2.xpose.msra.mxu0 0.0
        %6967 = vmatprep.subr.mxu0 0.0
        %6968 = vmatpush2.xpose.msra.mxu0 0.0
        %6969 = vmatprep.subr.mxu0 0.0
        %6970 = vmatpush2.xpose.msra.mxu0 0.0
        %6971 = vmatprep.subr.mxu0 0.0
        %6972 = vmatpush2.xpose.msra.mxu0 0.0
        %6973 = vmatprep.subr.mxu0 0.0
        %6974 = vmatpush2.xpose.msra.mxu0 0.0
        %6975 = vmatprep.subr.mxu0 0.0
        %6976 = vmatpush2.xpose.msra.mxu0 0.0
        %6977 = vmatprep.mubr.f32.mxu0 %v6909
        %6978 = vmatmul.mubr.f32.gmra.mxu0 %v6900
        %v6979 = vpop.f32.mrf.mxu0
        %v6980 = vadd.f32 0.0, %v6979
        %v6981 = vpop.f32.mrf.mxu0
        %6982 = vdwg.mxu0
        %6984 = vrot.lane.b32.xlu0 %v4716, 64
        %v6985 = vpop.permute.xlu0 %6984
        %6986 = vrot.lane.b32.xlu0 %v4717, 64
        %v6987 = vpop.permute.xlu0 %6986
        %v6988 = vsel %vm4769, %v6985, %v6987
        %6991 = vrot.lane.b32.xlu0 %v3889, 64
        %v6992 = vpop.permute.xlu0 %6991
        %6993 = vrot.lane.b32.xlu0 %v3891, 64
        %v6994 = vpop.permute.xlu0 %6993
        %v6995 = vsel %vm4769, %v6992, %v6994
        %v6997 = vsel %vm4769, %v6987, 0
        %v6999 = vsel %vm4769, %v6994, 0
        %7001 = vmatprep.subr.mxu0 0.0
        %7002 = vmatpush1.xpose.msra.mxu0 0.0
        %7003 = vmatprep.subr.mxu0 0.0
        %7004 = vmatpush1.xpose.msra.mxu0 0.0
        %7005 = vmatprep.subr.mxu0 0.0
        %7006 = vmatpush1.xpose.msra.mxu0 0.0
        %7007 = vmatprep.subr.mxu0 0.0
        %7008 = vmatpush1.xpose.msra.mxu0 0.0
        %7009 = vmatprep.subr.mxu0 0.0
        %7010 = vmatpush1.xpose.msra.mxu0 0.0
        %7011 = vmatprep.subr.mxu0 0.0
        %7012 = vmatpush1.xpose.msra.mxu0 0.0
        %7013 = vmatprep.subr.mxu0 0.0
        %7014 = vmatpush1.xpose.msra.mxu0 0.0
        %7015 = vmatprep.subr.mxu0 0.0
        %7016 = vmatpush1.xpose.msra.mxu0 0.0
        %7017 = vmatprep.subr.mxu0 0.0
        %7018 = vmatpush1.xpose.msra.mxu0 0.0
        %7019 = vmatprep.subr.mxu0 0.0
        %7020 = vmatpush1.xpose.msra.mxu0 0.0
        %7021 = vmatprep.subr.mxu0 0.0
        %7022 = vmatpush1.xpose.msra.mxu0 0.0
        %7023 = vmatprep.subr.mxu0 0.0
        %7024 = vmatpush1.xpose.msra.mxu0 0.0
        %7025 = vmatprep.subr.mxu0 0.0
        %7026 = vmatpush1.xpose.msra.mxu0 0.0
        %7027 = vmatprep.subr.mxu0 0.0
        %7028 = vmatpush1.xpose.msra.mxu0 0.0
        %7029 = vmatprep.subr.mxu0 0.0
        %7030 = vmatpush1.xpose.msra.mxu0 0.0
        %7031 = vmatprep.subr.mxu0 %v6999
        %7032 = vmatpush1.xpose.msra.mxu0 %v6995
        %7033 = vmatprep.subr.mxu0 0.0
        %7034 = vmatpush2.xpose.msra.mxu0 0.0
        %7035 = vmatprep.subr.mxu0 0.0
        %7036 = vmatpush2.xpose.msra.mxu0 0.0
        %7037 = vmatprep.subr.mxu0 0.0
        %7038 = vmatpush2.xpose.msra.mxu0 0.0
        %7039 = vmatprep.subr.mxu0 0.0
        %7040 = vmatpush2.xpose.msra.mxu0 0.0
        %7041 = vmatprep.subr.mxu0 0.0
        %7042 = vmatpush2.xpose.msra.mxu0 0.0
        %7043 = vmatprep.subr.mxu0 0.0
        %7044 = vmatpush2.xpose.msra.mxu0 0.0
        %7045 = vmatprep.subr.mxu0 0.0
        %7046 = vmatpush2.xpose.msra.mxu0 0.0
        %7047 = vmatprep.subr.mxu0 0.0
        %7048 = vmatpush2.xpose.msra.mxu0 0.0
        %7049 = vmatprep.subr.mxu0 0.0
        %7050 = vmatpush2.xpose.msra.mxu0 0.0
        %7051 = vmatprep.subr.mxu0 0.0
        %7052 = vmatpush2.xpose.msra.mxu0 0.0
        %7053 = vmatprep.subr.mxu0 0.0
        %7054 = vmatpush2.xpose.msra.mxu0 0.0
        %7055 = vmatprep.subr.mxu0 0.0
        %7056 = vmatpush2.xpose.msra.mxu0 0.0
        %7057 = vmatprep.subr.mxu0 0.0
        %7058 = vmatpush2.xpose.msra.mxu0 0.0
        %7059 = vmatprep.subr.mxu0 0.0
        %7060 = vmatpush2.xpose.msra.mxu0 0.0
        %7061 = vmatprep.subr.mxu0 0.0
        %7062 = vmatpush2.xpose.msra.mxu0 0.0
        %7063 = vmatprep.subr.mxu0 0.0
        %7064 = vmatpush2.xpose.msra.mxu0 0.0
        %7065 = vmatprep.mubr.f32.mxu0 %v6997
        %7066 = vmatmul.mubr.f32.gmra.mxu0 %v6988
        %v7067 = vpop.f32.mrf.mxu0
        %v7068 = vadd.f32 0.0, %v7067
        %v7069 = vpop.f32.mrf.mxu0
        %7070 = vdwg.mxu0
        %7072 = vrot.lane.b32.xlu0 %v4722, 64
        %v7073 = vpop.permute.xlu0 %7072
        %7074 = vrot.lane.b32.xlu0 %v4723, 64
        %v7075 = vpop.permute.xlu0 %7074
        %v7076 = vsel %vm4769, %v7073, %v7075
        %7079 = vrot.lane.b32.xlu0 %v3895, 64
        %v7080 = vpop.permute.xlu0 %7079
        %7081 = vrot.lane.b32.xlu0 %v3897, 64
        %v7082 = vpop.permute.xlu0 %7081
        %v7083 = vsel %vm4769, %v7080, %v7082
        %v7085 = vsel %vm4769, %v7075, 0
        %v7087 = vsel %vm4769, %v7082, 0
        %7089 = vmatprep.subr.mxu0 0.0
        %7090 = vmatpush1.xpose.msra.mxu0 0.0
        %7091 = vmatprep.subr.mxu0 0.0
        %7092 = vmatpush1.xpose.msra.mxu0 0.0
        %7093 = vmatprep.subr.mxu0 0.0
        %7094 = vmatpush1.xpose.msra.mxu0 0.0
        %7095 = vmatprep.subr.mxu0 0.0
        %7096 = vmatpush1.xpose.msra.mxu0 0.0
        %7097 = vmatprep.subr.mxu0 0.0
        %7098 = vmatpush1.xpose.msra.mxu0 0.0
        %7099 = vmatprep.subr.mxu0 0.0
        %7100 = vmatpush1.xpose.msra.mxu0 0.0
        %7101 = vmatprep.subr.mxu0 0.0
        %7102 = vmatpush1.xpose.msra.mxu0 0.0
        %7103 = vmatprep.subr.mxu0 0.0
        %7104 = vmatpush1.xpose.msra.mxu0 0.0
        %7105 = vmatprep.subr.mxu0 0.0
        %7106 = vmatpush1.xpose.msra.mxu0 0.0
        %7107 = vmatprep.subr.mxu0 0.0
        %7108 = vmatpush1.xpose.msra.mxu0 0.0
        %7109 = vmatprep.subr.mxu0 0.0
        %7110 = vmatpush1.xpose.msra.mxu0 0.0
        %7111 = vmatprep.subr.mxu0 0.0
        %7112 = vmatpush1.xpose.msra.mxu0 0.0
        %7113 = vmatprep.subr.mxu0 0.0
        %7114 = vmatpush1.xpose.msra.mxu0 0.0
        %7115 = vmatprep.subr.mxu0 0.0
        %7116 = vmatpush1.xpose.msra.mxu0 0.0
        %7117 = vmatprep.subr.mxu0 0.0
        %7118 = vmatpush1.xpose.msra.mxu0 0.0
        %7119 = vmatprep.subr.mxu0 %v7087
        %7120 = vmatpush1.xpose.msra.mxu0 %v7083
        %7121 = vmatprep.subr.mxu0 0.0
        %7122 = vmatpush2.xpose.msra.mxu0 0.0
        %7123 = vmatprep.subr.mxu0 0.0
        %7124 = vmatpush2.xpose.msra.mxu0 0.0
        %7125 = vmatprep.subr.mxu0 0.0
        %7126 = vmatpush2.xpose.msra.mxu0 0.0
        %7127 = vmatprep.subr.mxu0 0.0
        %7128 = vmatpush2.xpose.msra.mxu0 0.0
        %7129 = vmatprep.subr.mxu0 0.0
        %7130 = vmatpush2.xpose.msra.mxu0 0.0
        %7131 = vmatprep.subr.mxu0 0.0
        %7132 = vmatpush2.xpose.msra.mxu0 0.0
        %7133 = vmatprep.subr.mxu0 0.0
        %7134 = vmatpush2.xpose.msra.mxu0 0.0
        %7135 = vmatprep.subr.mxu0 0.0
        %7136 = vmatpush2.xpose.msra.mxu0 0.0
        %7137 = vmatprep.subr.mxu0 0.0
        %7138 = vmatpush2.xpose.msra.mxu0 0.0
        %7139 = vmatprep.subr.mxu0 0.0
        %7140 = vmatpush2.xpose.msra.mxu0 0.0
        %7141 = vmatprep.subr.mxu0 0.0
        %7142 = vmatpush2.xpose.msra.mxu0 0.0
        %7143 = vmatprep.subr.mxu0 0.0
        %7144 = vmatpush2.xpose.msra.mxu0 0.0
        %7145 = vmatprep.subr.mxu0 0.0
        %7146 = vmatpush2.xpose.msra.mxu0 0.0
        %7147 = vmatprep.subr.mxu0 0.0
        %7148 = vmatpush2.xpose.msra.mxu0 0.0
        %7149 = vmatprep.subr.mxu0 0.0
        %7150 = vmatpush2.xpose.msra.mxu0 0.0
        %7151 = vmatprep.subr.mxu0 0.0
        %7152 = vmatpush2.xpose.msra.mxu0 0.0
        %7153 = vmatprep.mubr.f32.mxu0 %v7085
        %7154 = vmatmul.mubr.f32.gmra.mxu0 %v7076
        %v7155 = vpop.f32.mrf.mxu0
        %v7156 = vadd.f32 0.0, %v7155
        %v7157 = vpop.f32.mrf.mxu0
        %7158 = vdwg.mxu0
        %7160 = vrot.lane.b32.xlu0 %v4728, 64
        %v7161 = vpop.permute.xlu0 %7160
        %7162 = vrot.lane.b32.xlu0 %v4729, 64
        %v7163 = vpop.permute.xlu0 %7162
        %v7164 = vsel %vm4769, %v7161, %v7163
        %7167 = vrot.lane.b32.xlu0 %v3901, 64
        %v7168 = vpop.permute.xlu0 %7167
        %7169 = vrot.lane.b32.xlu0 %v3903, 64
        %v7170 = vpop.permute.xlu0 %7169
        %v7171 = vsel %vm4769, %v7168, %v7170
        %v7173 = vsel %vm4769, %v7163, 0
        %v7175 = vsel %vm4769, %v7170, 0
        %7177 = vmatprep.subr.mxu0 0.0
        %7178 = vmatpush1.xpose.msra.mxu0 0.0
        %7179 = vmatprep.subr.mxu0 0.0
        %7180 = vmatpush1.xpose.msra.mxu0 0.0
        %7181 = vmatprep.subr.mxu0 0.0
        %7182 = vmatpush1.xpose.msra.mxu0 0.0
        %7183 = vmatprep.subr.mxu0 0.0
        %7184 = vmatpush1.xpose.msra.mxu0 0.0
        %7185 = vmatprep.subr.mxu0 0.0
        %7186 = vmatpush1.xpose.msra.mxu0 0.0
        %7187 = vmatprep.subr.mxu0 0.0
        %7188 = vmatpush1.xpose.msra.mxu0 0.0
        %7189 = vmatprep.subr.mxu0 0.0
        %7190 = vmatpush1.xpose.msra.mxu0 0.0
        %7191 = vmatprep.subr.mxu0 0.0
        %7192 = vmatpush1.xpose.msra.mxu0 0.0
        %7193 = vmatprep.subr.mxu0 0.0
        %7194 = vmatpush1.xpose.msra.mxu0 0.0
        %7195 = vmatprep.subr.mxu0 0.0
        %7196 = vmatpush1.xpose.msra.mxu0 0.0
        %7197 = vmatprep.subr.mxu0 0.0
        %7198 = vmatpush1.xpose.msra.mxu0 0.0
        %7199 = vmatprep.subr.mxu0 0.0
        %7200 = vmatpush1.xpose.msra.mxu0 0.0
        %7201 = vmatprep.subr.mxu0 0.0
        %7202 = vmatpush1.xpose.msra.mxu0 0.0
        %7203 = vmatprep.subr.mxu0 0.0
        %7204 = vmatpush1.xpose.msra.mxu0 0.0
        %7205 = vmatprep.subr.mxu0 0.0
        %7206 = vmatpush1.xpose.msra.mxu0 0.0
        %7207 = vmatprep.subr.mxu0 %v7175
        %7208 = vmatpush1.xpose.msra.mxu0 %v7171
        %7209 = vmatprep.subr.mxu0 0.0
        %7210 = vmatpush2.xpose.msra.mxu0 0.0
        %7211 = vmatprep.subr.mxu0 0.0
        %7212 = vmatpush2.xpose.msra.mxu0 0.0
        %7213 = vmatprep.subr.mxu0 0.0
        %7214 = vmatpush2.xpose.msra.mxu0 0.0
        %7215 = vmatprep.subr.mxu0 0.0
        %7216 = vmatpush2.xpose.msra.mxu0 0.0
        %7217 = vmatprep.subr.mxu0 0.0
        %7218 = vmatpush2.xpose.msra.mxu0 0.0
        %7219 = vmatprep.subr.mxu0 0.0
        %7220 = vmatpush2.xpose.msra.mxu0 0.0
        %7221 = vmatprep.subr.mxu0 0.0
        %7222 = vmatpush2.xpose.msra.mxu0 0.0
        %7223 = vmatprep.subr.mxu0 0.0
        %7224 = vmatpush2.xpose.msra.mxu0 0.0
        %7225 = vmatprep.subr.mxu0 0.0
        %7226 = vmatpush2.xpose.msra.mxu0 0.0
        %7227 = vmatprep.subr.mxu0 0.0
        %7228 = vmatpush2.xpose.msra.mxu0 0.0
        %7229 = vmatprep.subr.mxu0 0.0
        %7230 = vmatpush2.xpose.msra.mxu0 0.0
        %7231 = vmatprep.subr.mxu0 0.0
        %7232 = vmatpush2.xpose.msra.mxu0 0.0
        %7233 = vmatprep.subr.mxu0 0.0
        %7234 = vmatpush2.xpose.msra.mxu0 0.0
        %7235 = vmatprep.subr.mxu0 0.0
        %7236 = vmatpush2.xpose.msra.mxu0 0.0
        %7237 = vmatprep.subr.mxu0 0.0
        %7238 = vmatpush2.xpose.msra.mxu0 0.0
        %7239 = vmatprep.subr.mxu0 0.0
        %7240 = vmatpush2.xpose.msra.mxu0 0.0
        %7241 = vmatprep.mubr.f32.mxu0 %v7173
        %7242 = vmatmul.mubr.f32.gmra.mxu0 %v7164
        %v7243 = vpop.f32.mrf.mxu0
        %v7244 = vadd.f32 0.0, %v7243
        %v7245 = vpop.f32.mrf.mxu0
        %7246 = vdwg.mxu0
        %v7247 = vsel %vm4765, -1e+09, %v6980
        %v7248 = vsel %vm4766, -1e+09, %v7068
        %v7249 = vsel %vm4767, -1e+09, %v7156
        %v7250 = vsel %vm4768, -1e+09, %v7244
        %v7251 = vsel %vm5078, %v7247, -inf
        %v7252 = vrot.slane %v7251, 4
        %v7253 = vmax.f32 %v7251, %v7252
        %v7254 = vrot.slane %v7253, 2
        %v7255 = vmax.f32 %v7253, %v7254
        %v7256 = vrot.slane %v7255, 1
        %v7257 = vmax.f32 %v7255, %v7256
        %v7258 = vsel %vm5078, %v7248, -inf
        %v7259 = vrot.slane %v7258, 4
        %v7260 = vmax.f32 %v7258, %v7259
        %v7261 = vrot.slane %v7260, 2
        %v7262 = vmax.f32 %v7260, %v7261
        %v7263 = vrot.slane %v7262, 1
        %v7264 = vmax.f32 %v7262, %v7263
        %v7265 = vsel %vm5078, %v7249, -inf
        %v7266 = vrot.slane %v7265, 4
        %v7267 = vmax.f32 %v7265, %v7266
        %v7268 = vrot.slane %v7267, 2
        %v7269 = vmax.f32 %v7267, %v7268
        %v7270 = vrot.slane %v7269, 1
        %v7271 = vmax.f32 %v7269, %v7270
        %v7272 = vsel %vm5078, %v7250, -inf
        %v7273 = vrot.slane %v7272, 4
        %v7274 = vmax.f32 %v7272, %v7273
        %v7275 = vrot.slane %v7274, 2
        %v7276 = vmax.f32 %v7274, %v7275
        %v7277 = vrot.slane %v7276, 1
        %v7278 = vmax.f32 %v7276, %v7277
        %v7279 = vsub.f32 %v7247, %v7257
        %v7280 = vsub.f32 %v7248, %v7264
        %v7281 = vsub.f32 %v7249, %v7271
        %v7282 = vsub.f32 %v7250, %v7278
        %v7283 = vmul.f32 %v7279, 1.442695
        %v7284 = vpow.pop %v7283
        %v7285 = vmul.f32 %v7280, 1.442695
        %v7286 = vpow.pop %v7285
        %v7287 = vmul.f32 %v7281, 1.442695
        %v7288 = vpow.pop %v7287
        %v7289 = vmul.f32 %v7282, 1.442695
        %v7290 = vpow.pop %v7289
        %v7291 = vsel %vm5078, %v7284, 0.0
        %v7292 = vrot.slane %v7291, 4
        %v7293 = vadd.f32 %v7291, %v7292
        %v7294 = vrot.slane %v7293, 2
        %v7295 = vadd.f32 %v7293, %v7294
        %v7296 = vrot.slane %v7295, 1
        %v7297 = vadd.f32 %v7295, %v7296
        %v7298 = vsel %vm5078, %v7286, 0.0
        %v7299 = vrot.slane %v7298, 4
        %v7300 = vadd.f32 %v7298, %v7299
        %v7301 = vrot.slane %v7300, 2
        %v7302 = vadd.f32 %v7300, %v7301
        %v7303 = vrot.slane %v7302, 1
        %v7304 = vadd.f32 %v7302, %v7303
        %v7305 = vsel %vm5078, %v7288, 0.0
        %v7306 = vrot.slane %v7305, 4
        %v7307 = vadd.f32 %v7305, %v7306
        %v7308 = vrot.slane %v7307, 2
        %v7309 = vadd.f32 %v7307, %v7308
        %v7310 = vrot.slane %v7309, 1
        %v7311 = vadd.f32 %v7309, %v7310
        %v7312 = vsel %vm5078, %v7290, 0.0
        %v7313 = vrot.slane %v7312, 4
        %v7314 = vadd.f32 %v7312, %v7313
        %v7315 = vrot.slane %v7314, 2
        %v7316 = vadd.f32 %v7314, %v7315
        %v7317 = vrot.slane %v7316, 1
        %v7318 = vadd.f32 %v7316, %v7317
        %v7319 = vrcp.pop %v7297
        %v7320 = vmul.f32 %v7284, %v7319
        %v7321 = vrcp.pop %v7304
        %v7322 = vmul.f32 %v7286, %v7321
        %v7323 = vrcp.pop %v7311
        %v7324 = vmul.f32 %v7288, %v7323
        %v7325 = vrcp.pop %v7318
        %v7326 = vmul.f32 %v7290, %v7325
        %7329 = vrot.lane.b32.xlu0 %v4684, 64
        %v7330 = vpop.permute.xlu0 %7329
        %7331 = vrot.lane.b32.xlu0 %v4686, 64
        %v7332 = vpop.permute.xlu0 %7331
        %v7333 = vsel %vm4769, %v7330, %v7332
        %v7337 = vsel %vm5078, %v7320, 0
        %7339 = vmatprep.subr.mxu0 0.0
        %7340 = vmatpush1.msra.mxu0 0.0
        %7341 = vmatprep.subr.mxu0 0.0
        %7342 = vmatpush1.msra.mxu0 0.0
        %7343 = vmatprep.subr.mxu0 0.0
        %7344 = vmatpush1.msra.mxu0 0.0
        %7345 = vmatprep.subr.mxu0 0.0
        %7346 = vmatpush1.msra.mxu0 0.0
        %7347 = vmatprep.subr.mxu0 0.0
        %7348 = vmatpush1.msra.mxu0 0.0
        %7349 = vmatprep.subr.mxu0 0.0
        %7350 = vmatpush1.msra.mxu0 0.0
        %7351 = vmatprep.subr.mxu0 0.0
        %7352 = vmatpush1.msra.mxu0 0.0
        %7353 = vmatprep.subr.mxu0 0.0
        %7354 = vmatpush1.msra.mxu0 0.0
        %7355 = vmatprep.subr.mxu0 0.0
        %7356 = vmatpush1.msra.mxu0 0.0
        %7357 = vmatprep.subr.mxu0 0.0
        %7358 = vmatpush1.msra.mxu0 0.0
        %7359 = vmatprep.subr.mxu0 0.0
        %7360 = vmatpush1.msra.mxu0 0.0
        %7361 = vmatprep.subr.mxu0 0.0
        %7362 = vmatpush1.msra.mxu0 0.0
        %7363 = vmatprep.subr.mxu0 0.0
        %7364 = vmatpush1.msra.mxu0 0.0
        %7365 = vmatprep.subr.mxu0 0.0
        %7366 = vmatpush1.msra.mxu0 0.0
        %7367 = vmatprep.subr.mxu0 0.0
        %7368 = vmatpush1.msra.mxu0 0.0
        %7369 = vmatprep.subr.mxu0 %v7332
        %7370 = vmatpush1.msra.mxu0 %v7333
        %7371 = vmatprep.subr.mxu0 0.0
        %7372 = vmatpush2.msra.mxu0 0.0
        %7373 = vmatprep.subr.mxu0 0.0
        %7374 = vmatpush2.msra.mxu0 0.0
        %7375 = vmatprep.subr.mxu0 0.0
        %7376 = vmatpush2.msra.mxu0 0.0
        %7377 = vmatprep.subr.mxu0 0.0
        %7378 = vmatpush2.msra.mxu0 0.0
        %7379 = vmatprep.subr.mxu0 0.0
        %7380 = vmatpush2.msra.mxu0 0.0
        %7381 = vmatprep.subr.mxu0 0.0
        %7382 = vmatpush2.msra.mxu0 0.0
        %7383 = vmatprep.subr.mxu0 0.0
        %7384 = vmatpush2.msra.mxu0 0.0
        %7385 = vmatprep.subr.mxu0 0.0
        %7386 = vmatpush2.msra.mxu0 0.0
        %7387 = vmatprep.subr.mxu0 0.0
        %7388 = vmatpush2.msra.mxu0 0.0
        %7389 = vmatprep.subr.mxu0 0.0
        %7390 = vmatpush2.msra.mxu0 0.0
        %7391 = vmatprep.subr.mxu0 0.0
        %7392 = vmatpush2.msra.mxu0 0.0
        %7393 = vmatprep.subr.mxu0 0.0
        %7394 = vmatpush2.msra.mxu0 0.0
        %7395 = vmatprep.subr.mxu0 0.0
        %7396 = vmatpush2.msra.mxu0 0.0
        %7397 = vmatprep.subr.mxu0 0.0
        %7398 = vmatpush2.msra.mxu0 0.0
        %7399 = vmatprep.subr.mxu0 0.0
        %7400 = vmatpush2.msra.mxu0 0.0
        %7401 = vmatprep.subr.mxu0 0.0
        %7402 = vmatpush2.msra.mxu0 0.0
        %7403 = vmatprep.mubr.f32.mxu0 0.0
        %7404 = vmatmul.mubr.f32.gmra.mxu0 %v7337
        %v7405 = vpop.f32.mrf.mxu0
        %v7406 = vadd.f32 0.0, %v7405
        %v7407 = vpop.f32.mrf.mxu0
        %v7408 = vadd.f32 0.0, %v7407
        %7409 = vdwg.mxu0
        %7412 = vrot.lane.b32.xlu0 %v4690, 64
        %v7413 = vpop.permute.xlu0 %7412
        %7414 = vrot.lane.b32.xlu0 %v4692, 64
        %v7415 = vpop.permute.xlu0 %7414
        %v7416 = vsel %vm4769, %v7413, %v7415
        %v7420 = vsel %vm5078, %v7322, 0
        %7422 = vmatprep.subr.mxu0 0.0
        %7423 = vmatpush1.msra.mxu0 0.0
        %7424 = vmatprep.subr.mxu0 0.0
        %7425 = vmatpush1.msra.mxu0 0.0
        %7426 = vmatprep.subr.mxu0 0.0
        %7427 = vmatpush1.msra.mxu0 0.0
        %7428 = vmatprep.subr.mxu0 0.0
        %7429 = vmatpush1.msra.mxu0 0.0
        %7430 = vmatprep.subr.mxu0 0.0
        %7431 = vmatpush1.msra.mxu0 0.0
        %7432 = vmatprep.subr.mxu0 0.0
        %7433 = vmatpush1.msra.mxu0 0.0
        %7434 = vmatprep.subr.mxu0 0.0
        %7435 = vmatpush1.msra.mxu0 0.0
        %7436 = vmatprep.subr.mxu0 0.0
        %7437 = vmatpush1.msra.mxu0 0.0
        %7438 = vmatprep.subr.mxu0 0.0
        %7439 = vmatpush1.msra.mxu0 0.0
        %7440 = vmatprep.subr.mxu0 0.0
        %7441 = vmatpush1.msra.mxu0 0.0
        %7442 = vmatprep.subr.mxu0 0.0
        %7443 = vmatpush1.msra.mxu0 0.0
        %7444 = vmatprep.subr.mxu0 0.0
        %7445 = vmatpush1.msra.mxu0 0.0
        %7446 = vmatprep.subr.mxu0 0.0
        %7447 = vmatpush1.msra.mxu0 0.0
        %7448 = vmatprep.subr.mxu0 0.0
        %7449 = vmatpush1.msra.mxu0 0.0
        %7450 = vmatprep.subr.mxu0 0.0
        %7451 = vmatpush1.msra.mxu0 0.0
        %7452 = vmatprep.subr.mxu0 %v7415
        %7453 = vmatpush1.msra.mxu0 %v7416
        %7454 = vmatprep.subr.mxu0 0.0
        %7455 = vmatpush2.msra.mxu0 0.0
        %7456 = vmatprep.subr.mxu0 0.0
        %7457 = vmatpush2.msra.mxu0 0.0
        %7458 = vmatprep.subr.mxu0 0.0
        %7459 = vmatpush2.msra.mxu0 0.0
        %7460 = vmatprep.subr.mxu0 0.0
        %7461 = vmatpush2.msra.mxu0 0.0
        %7462 = vmatprep.subr.mxu0 0.0
        %7463 = vmatpush2.msra.mxu0 0.0
        %7464 = vmatprep.subr.mxu0 0.0
        %7465 = vmatpush2.msra.mxu0 0.0
        %7466 = vmatprep.subr.mxu0 0.0
        %7467 = vmatpush2.msra.mxu0 0.0
        %7468 = vmatprep.subr.mxu0 0.0
        %7469 = vmatpush2.msra.mxu0 0.0
        %7470 = vmatprep.subr.mxu0 0.0
        %7471 = vmatpush2.msra.mxu0 0.0
        %7472 = vmatprep.subr.mxu0 0.0
        %7473 = vmatpush2.msra.mxu0 0.0
        %7474 = vmatprep.subr.mxu0 0.0
        %7475 = vmatpush2.msra.mxu0 0.0
        %7476 = vmatprep.subr.mxu0 0.0
        %7477 = vmatpush2.msra.mxu0 0.0
        %7478 = vmatprep.subr.mxu0 0.0
        %7479 = vmatpush2.msra.mxu0 0.0
        %7480 = vmatprep.subr.mxu0 0.0
        %7481 = vmatpush2.msra.mxu0 0.0
        %7482 = vmatprep.subr.mxu0 0.0
        %7483 = vmatpush2.msra.mxu0 0.0
        %7484 = vmatprep.subr.mxu0 0.0
        %7485 = vmatpush2.msra.mxu0 0.0
        %7486 = vmatprep.mubr.f32.mxu0 0.0
        %7487 = vmatmul.mubr.f32.gmra.mxu0 %v7420
        %v7488 = vpop.f32.mrf.mxu0
        %v7489 = vadd.f32 0.0, %v7488
        %v7490 = vpop.f32.mrf.mxu0
        %v7491 = vadd.f32 0.0, %v7490
        %7492 = vdwg.mxu0
        %7495 = vrot.lane.b32.xlu0 %v4696, 64
        %v7496 = vpop.permute.xlu0 %7495
        %7497 = vrot.lane.b32.xlu0 %v4698, 64
        %v7498 = vpop.permute.xlu0 %7497
        %v7499 = vsel %vm4769, %v7496, %v7498
        %v7503 = vsel %vm5078, %v7324, 0
        %7505 = vmatprep.subr.mxu0 0.0
        %7506 = vmatpush1.msra.mxu0 0.0
        %7507 = vmatprep.subr.mxu0 0.0
        %7508 = vmatpush1.msra.mxu0 0.0
        %7509 = vmatprep.subr.mxu0 0.0
        %7510 = vmatpush1.msra.mxu0 0.0
        %7511 = vmatprep.subr.mxu0 0.0
        %7512 = vmatpush1.msra.mxu0 0.0
        %7513 = vmatprep.subr.mxu0 0.0
        %7514 = vmatpush1.msra.mxu0 0.0
        %7515 = vmatprep.subr.mxu0 0.0
        %7516 = vmatpush1.msra.mxu0 0.0
        %7517 = vmatprep.subr.mxu0 0.0
        %7518 = vmatpush1.msra.mxu0 0.0
        %7519 = vmatprep.subr.mxu0 0.0
        %7520 = vmatpush1.msra.mxu0 0.0
        %7521 = vmatprep.subr.mxu0 0.0
        %7522 = vmatpush1.msra.mxu0 0.0
        %7523 = vmatprep.subr.mxu0 0.0
        %7524 = vmatpush1.msra.mxu0 0.0
        %7525 = vmatprep.subr.mxu0 0.0
        %7526 = vmatpush1.msra.mxu0 0.0
        %7527 = vmatprep.subr.mxu0 0.0
        %7528 = vmatpush1.msra.mxu0 0.0
        %7529 = vmatprep.subr.mxu0 0.0
        %7530 = vmatpush1.msra.mxu0 0.0
        %7531 = vmatprep.subr.mxu0 0.0
        %7532 = vmatpush1.msra.mxu0 0.0
        %7533 = vmatprep.subr.mxu0 0.0
        %7534 = vmatpush1.msra.mxu0 0.0
        %7535 = vmatprep.subr.mxu0 %v7498
        %7536 = vmatpush1.msra.mxu0 %v7499
        %7537 = vmatprep.subr.mxu0 0.0
        %7538 = vmatpush2.msra.mxu0 0.0
        %7539 = vmatprep.subr.mxu0 0.0
        %7540 = vmatpush2.msra.mxu0 0.0
        %7541 = vmatprep.subr.mxu0 0.0
        %7542 = vmatpush2.msra.mxu0 0.0
        %7543 = vmatprep.subr.mxu0 0.0
        %7544 = vmatpush2.msra.mxu0 0.0
        %7545 = vmatprep.subr.mxu0 0.0
        %7546 = vmatpush2.msra.mxu0 0.0
        %7547 = vmatprep.subr.mxu0 0.0
        %7548 = vmatpush2.msra.mxu0 0.0
        %7549 = vmatprep.subr.mxu0 0.0
        %7550 = vmatpush2.msra.mxu0 0.0
        %7551 = vmatprep.subr.mxu0 0.0
        %7552 = vmatpush2.msra.mxu0 0.0
        %7553 = vmatprep.subr.mxu0 0.0
        %7554 = vmatpush2.msra.mxu0 0.0
        %7555 = vmatprep.subr.mxu0 0.0
        %7556 = vmatpush2.msra.mxu0 0.0
        %7557 = vmatprep.subr.mxu0 0.0
        %7558 = vmatpush2.msra.mxu0 0.0
        %7559 = vmatprep.subr.mxu0 0.0
        %7560 = vmatpush2.msra.mxu0 0.0
        %7561 = vmatprep.subr.mxu0 0.0
        %7562 = vmatpush2.msra.mxu0 0.0
        %7563 = vmatprep.subr.mxu0 0.0
        %7564 = vmatpush2.msra.mxu0 0.0
        %7565 = vmatprep.subr.mxu0 0.0
        %7566 = vmatpush2.msra.mxu0 0.0
        %7567 = vmatprep.subr.mxu0 0.0
        %7568 = vmatpush2.msra.mxu0 0.0
        %7569 = vmatprep.mubr.f32.mxu0 0.0
        %7570 = vmatmul.mubr.f32.gmra.mxu0 %v7503
        %v7571 = vpop.f32.mrf.mxu0
        %v7572 = vadd.f32 0.0, %v7571
        %v7573 = vpop.f32.mrf.mxu0
        %v7574 = vadd.f32 0.0, %v7573
        %7575 = vdwg.mxu0
        %7578 = vrot.lane.b32.xlu0 %v4702, 64
        %v7579 = vpop.permute.xlu0 %7578
        %7580 = vrot.lane.b32.xlu0 %v4704, 64
        %v7581 = vpop.permute.xlu0 %7580
        %v7582 = vsel %vm4769, %v7579, %v7581
        %v7586 = vsel %vm5078, %v7326, 0
        %7588 = vmatprep.subr.mxu0 0.0
        %7589 = vmatpush1.msra.mxu0 0.0
        %7590 = vmatprep.subr.mxu0 0.0
        %7591 = vmatpush1.msra.mxu0 0.0
        %7592 = vmatprep.subr.mxu0 0.0
        %7593 = vmatpush1.msra.mxu0 0.0
        %7594 = vmatprep.subr.mxu0 0.0
        %7595 = vmatpush1.msra.mxu0 0.0
        %7596 = vmatprep.subr.mxu0 0.0
        %7597 = vmatpush1.msra.mxu0 0.0
        %7598 = vmatprep.subr.mxu0 0.0
        %7599 = vmatpush1.msra.mxu0 0.0
        %7600 = vmatprep.subr.mxu0 0.0
        %7601 = vmatpush1.msra.mxu0 0.0
        %7602 = vmatprep.subr.mxu0 0.0
        %7603 = vmatpush1.msra.mxu0 0.0
        %7604 = vmatprep.subr.mxu0 0.0
        %7605 = vmatpush1.msra.mxu0 0.0
        %7606 = vmatprep.subr.mxu0 0.0
        %7607 = vmatpush1.msra.mxu0 0.0
        %7608 = vmatprep.subr.mxu0 0.0
        %7609 = vmatpush1.msra.mxu0 0.0
        %7610 = vmatprep.subr.mxu0 0.0
        %7611 = vmatpush1.msra.mxu0 0.0
        %7612 = vmatprep.subr.mxu0 0.0
        %7613 = vmatpush1.msra.mxu0 0.0
        %7614 = vmatprep.subr.mxu0 0.0
        %7615 = vmatpush1.msra.mxu0 0.0
        %7616 = vmatprep.subr.mxu0 0.0
        %7617 = vmatpush1.msra.mxu0 0.0
        %7618 = vmatprep.subr.mxu0 %v7581
        %7619 = vmatpush1.msra.mxu0 %v7582
        %7620 = vmatprep.subr.mxu0 0.0
        %7621 = vmatpush2.msra.mxu0 0.0
        %7622 = vmatprep.subr.mxu0 0.0
        %7623 = vmatpush2.msra.mxu0 0.0
        %7624 = vmatprep.subr.mxu0 0.0
        %7625 = vmatpush2.msra.mxu0 0.0
        %7626 = vmatprep.subr.mxu0 0.0
        %7627 = vmatpush2.msra.mxu0 0.0
        %7628 = vmatprep.subr.mxu0 0.0
        %7629 = vmatpush2.msra.mxu0 0.0
        %7630 = vmatprep.subr.mxu0 0.0
        %7631 = vmatpush2.msra.mxu0 0.0
        %7632 = vmatprep.subr.mxu0 0.0
        %7633 = vmatpush2.msra.mxu0 0.0
        %7634 = vmatprep.subr.mxu0 0.0
        %7635 = vmatpush2.msra.mxu0 0.0
        %7636 = vmatprep.subr.mxu0 0.0
        %7637 = vmatpush2.msra.mxu0 0.0
        %7638 = vmatprep.subr.mxu0 0.0
        %7639 = vmatpush2.msra.mxu0 0.0
        %7640 = vmatprep.subr.mxu0 0.0
        %7641 = vmatpush2.msra.mxu0 0.0
        %7642 = vmatprep.subr.mxu0 0.0
        %7643 = vmatpush2.msra.mxu0 0.0
        %7644 = vmatprep.subr.mxu0 0.0
        %7645 = vmatpush2.msra.mxu0 0.0
        %7646 = vmatprep.subr.mxu0 0.0
        %7647 = vmatpush2.msra.mxu0 0.0
        %7648 = vmatprep.subr.mxu0 0.0
        %7649 = vmatpush2.msra.mxu0 0.0
        %7650 = vmatprep.subr.mxu0 0.0
        %7651 = vmatpush2.msra.mxu0 0.0
        %7652 = vmatprep.mubr.f32.mxu0 0.0
        %7653 = vmatmul.mubr.f32.gmra.mxu0 %v7586
        %v7654 = vpop.f32.mrf.mxu0
        %v7655 = vadd.f32 0.0, %v7654
        %v7656 = vpop.f32.mrf.mxu0
        %v7657 = vadd.f32 0.0, %v7656
        %7658 = vdwg.mxu0
        %7667 = vrot.lane.b32.xlu0 %v5962, 64
        %v7668 = vpop.permute.xlu0 %7667
        %7669 = vrot.lane.b32.xlu0 %v5964, 64
        %v7670 = vpop.permute.xlu0 %7669
        %7671 = vrot.lane.b32.xlu0 %v6045, 64
        %v7672 = vpop.permute.xlu0 %7671
        %7673 = vrot.lane.b32.xlu0 %v6047, 64
        %v7674 = vpop.permute.xlu0 %7673
        %7675 = vrot.lane.b32.xlu0 %v6128, 64
        %v7676 = vpop.permute.xlu0 %7675
        %7677 = vrot.lane.b32.xlu0 %v6130, 64
        %v7678 = vpop.permute.xlu0 %7677
        %7679 = vrot.lane.b32.xlu0 %v6211, 64
        %v7680 = vpop.permute.xlu0 %7679
        %7681 = vrot.lane.b32.xlu0 %v6213, 64
        %v7682 = vpop.permute.xlu0 %7681
        %v7683 = vsel %vm4769, %v7668, %v7670
        %v7684 = vsel %vm4769, %v7672, %v7674
        %v7685 = vsel %vm4769, %v7676, %v7678
        %v7686 = vsel %vm4769, %v7680, %v7682
        %7703 = vrot.lane.b32.xlu0 %v7406, 64
        %v7704 = vpop.permute.xlu0 %7703
        %7705 = vrot.lane.b32.xlu0 %v7408, 64
        %v7706 = vpop.permute.xlu0 %7705
        %7707 = vrot.lane.b32.xlu0 %v7489, 64
        %v7708 = vpop.permute.xlu0 %7707
        %7709 = vrot.lane.b32.xlu0 %v7491, 64
        %v7710 = vpop.permute.xlu0 %7709
        %7711 = vrot.lane.b32.xlu0 %v7572, 64
        %v7712 = vpop.permute.xlu0 %7711
        %7713 = vrot.lane.b32.xlu0 %v7574, 64
        %v7714 = vpop.permute.xlu0 %7713
        %7715 = vrot.lane.b32.xlu0 %v7655, 64
        %v7716 = vpop.permute.xlu0 %7715
        %7717 = vrot.lane.b32.xlu0 %v7657, 64
        %v7718 = vpop.permute.xlu0 %7717
        %v7719 = vsel %vm4769, %v7704, %v7706
        %v7720 = vsel %vm4769, %v7708, %v7710
        %v7721 = vsel %vm4769, %v7712, %v7714
        %v7722 = vsel %vm4769, %v7716, %v7718
        %v7731 = vsel %vm4769, %v5227, %v7668
        %v7732 = vsel %vm4769, %v5301, %v7672
        %v7733 = vsel %vm4769, %v5375, %v7676
        %v7734 = vsel %vm4769, %v5449, %v7680
        %v7735 = vsel %vm4769, %v6671, %v7704
        %v7736 = vsel %vm4769, %v6745, %v7708
        %v7737 = vsel %vm4769, %v6819, %v7712
        %v7738 = vsel %vm4769, %v6893, %v7716
        %7739 = vst [vmem:[%s444] sm:$0xff] %v5225
        %7740 = vst [vmem:[%s444 + $0x8] sm:$0xff] %v7731
        %7741 = vst [vmem:[%s444 + $0x10] sm:$0xff] %v7683
        %7742 = vst [vmem:[%s444 + $0x18] sm:$0xff] %v6669
        %7743 = vst [vmem:[%s444 + $0x20] sm:$0xff] %v7735
        %7744 = vst [vmem:[%s444 + $0x28] sm:$0xff] %v7719
        %7745 = vst [vmem:[%s444 + $0x30] sm:$0xff] %v5299
        %7746 = vst [vmem:[%s444 + $0x38] sm:$0xff] %v7732
        %7747 = vst [vmem:[%s444 + $0x40] sm:$0xff] %v7684
        %7748 = vst [vmem:[%s444 + $0x48] sm:$0xff] %v6743
        %7749 = vst [vmem:[%s444 + $0x50] sm:$0xff] %v7736
        %7750 = vst [vmem:[%s444 + $0x58] sm:$0xff] %v7720
        %7751 = vst [vmem:[%s444 + $0x60] sm:$0xff] %v5373
        %7752 = vst [vmem:[%s444 + $0x68] sm:$0xff] %v7733
        %7753 = vst [vmem:[%s444 + $0x70] sm:$0xff] %v7685
        %7754 = vst [vmem:[%s444 + $0x78] sm:$0xff] %v6817
        %7755 = vst [vmem:[%s444 + $0x80] sm:$0xff] %v7737
        %7756 = vst [vmem:[%s444 + $0x88] sm:$0xff] %v7721
        %7757 = vst [vmem:[%s444 + $0x90] sm:$0xff] %v5447
        %7758 = vst [vmem:[%s444 + $0x98] sm:$0xff] %v7734
        %7759 = vst [vmem:[%s444 + $0xa0] sm:$0xff] %v7686
        %7760 = vst [vmem:[%s444 + $0xa8] sm:$0xff] %v6891
        %7761 = vst [vmem:[%s444 + $0xb0] sm:$0xff] %v7738
        %7762 = vst [vmem:[%s444 + $0xb8] sm:$0xff] %v7722
        %v7763 = vld [vmem:[%s372] sm:$0xff]
        %v7764 = vld [vmem:[%s372 + $0x8] sm:$0xff]
        %v7765 = vld [vmem:[%s372 + $0x10] sm:$0xff]
        %v7766 = vld [vmem:[%s372 + $0x18] sm:$0xff]
        %v7767 = vld [vmem:[%s372 + $0x20] sm:$0xff]
        %v7768 = vld [vmem:[%s372 + $0x28] sm:$0xff]
        %v7769 = vld [vmem:[%s372 + $0x30] sm:$0xff]
        %v7770 = vld [vmem:[%s372 + $0x38] sm:$0xff]
        %v7771 = vld [vmem:[%s372 + $0x40] sm:$0xff]
        %v7772 = vld [vmem:[%s372 + $0x48] sm:$0xff]
        %v7773 = vld [vmem:[%s372 + $0x50] sm:$0xff]
        %v7774 = vld [vmem:[%s372 + $0x58] sm:$0xff]
        %v7775 = vld [vmem:[%s372 + $0x60] sm:$0xff]
        %v7776 = vld [vmem:[%s372 + $0x68] sm:$0xff]
        %v7777 = vld [vmem:[%s372 + $0x70] sm:$0xff]
        %v7778 = vld [vmem:[%s372 + $0x78] sm:$0xff]
        %v7779 = vld [vmem:[%s372 + $0x80] sm:$0xff]
        %v7780 = vld [vmem:[%s372 + $0x88] sm:$0xff]
        %v7781 = vld [vmem:[%s372 + $0x90] sm:$0xff]
        %v7782 = vld [vmem:[%s372 + $0x98] sm:$0xff]
        %v7783 = vld [vmem:[%s372 + $0xa0] sm:$0xff]
        %v7784 = vld [vmem:[%s372 + $0xa8] sm:$0xff]
        %v7785 = vld [vmem:[%s372 + $0xb0] sm:$0xff]
        %v7786 = vld [vmem:[%s372 + $0xb8] sm:$0xff]
        %v7787 = vld [vmem:[%s381] sm:$0xff]
        %v7788 = vld [vmem:[%s381 + $0x8] sm:$0xff]
        %v7789 = vld [vmem:[%s381 + $0x10] sm:$0xff]
        %v7790 = vld [vmem:[%s381 + $0x18] sm:$0xff]
        %v7791 = vld [vmem:[%s381 + $0x20] sm:$0xff]
        %v7792 = vld [vmem:[%s381 + $0x28] sm:$0xff]
        %v7793 = vld [vmem:[%s381 + $0x30] sm:$0xff]
        %v7794 = vld [vmem:[%s381 + $0x38] sm:$0xff]
        %v7795 = vld [vmem:[%s381 + $0x40] sm:$0xff]
        %v7796 = vld [vmem:[%s381 + $0x48] sm:$0xff]
        %v7797 = vld [vmem:[%s381 + $0x50] sm:$0xff]
        %v7798 = vld [vmem:[%s381 + $0x58] sm:$0xff]
        %v7799 = vld [vmem:[%s381 + $0x60] sm:$0xff]
        %v7800 = vld [vmem:[%s381 + $0x68] sm:$0xff]
        %v7801 = vld [vmem:[%s381 + $0x70] sm:$0xff]
        %v7802 = vld [vmem:[%s381 + $0x78] sm:$0xff]
        %v7803 = vld [vmem:[%s381 + $0x80] sm:$0xff]
        %v7804 = vld [vmem:[%s381 + $0x88] sm:$0xff]
        %v7805 = vld [vmem:[%s381 + $0x90] sm:$0xff]
        %v7806 = vld [vmem:[%s381 + $0x98] sm:$0xff]
        %v7807 = vld [vmem:[%s381 + $0xa0] sm:$0xff]
        %v7808 = vld [vmem:[%s381 + $0xa8] sm:$0xff]
        %v7809 = vld [vmem:[%s381 + $0xb0] sm:$0xff]
        %v7810 = vld [vmem:[%s381 + $0xb8] sm:$0xff]
        %v7811 = vadd.f32 %v7763, %v7787
        %v7812 = vadd.f32 %v7764, %v7788
        %v7813 = vadd.f32 %v7765, %v7789
        %v7814 = vadd.f32 %v7766, %v7790
        %v7815 = vadd.f32 %v7767, %v7791
        %v7816 = vadd.f32 %v7768, %v7792
        %v7817 = vadd.f32 %v7769, %v7793
        %v7818 = vadd.f32 %v7770, %v7794
        %v7819 = vadd.f32 %v7771, %v7795
        %v7820 = vadd.f32 %v7772, %v7796
        %v7821 = vadd.f32 %v7773, %v7797
        %v7822 = vadd.f32 %v7774, %v7798
        %v7823 = vadd.f32 %v7775, %v7799
        %v7824 = vadd.f32 %v7776, %v7800
        %v7825 = vadd.f32 %v7777, %v7801
        %v7826 = vadd.f32 %v7778, %v7802
        %v7827 = vadd.f32 %v7779, %v7803
        %v7828 = vadd.f32 %v7780, %v7804
        %v7829 = vadd.f32 %v7781, %v7805
        %v7830 = vadd.f32 %v7782, %v7806
        %v7831 = vadd.f32 %v7783, %v7807
        %v7832 = vadd.f32 %v7784, %v7808
        %v7833 = vadd.f32 %v7785, %v7809
        %v7834 = vadd.f32 %v7786, %v7810
        %v7835 = vadd.f32 %v7811, %v7812
        %v7836 = vadd.f32 %v7835, %v7813
        %v7837 = vadd.f32 %v7836, %v7814
        %v7838 = vadd.f32 %v7837, %v7815
        %v7839 = vadd.f32 %v7838, %v7816
        %7840 = vadd.xlane.f32.xlu0 %v7839
        %v7841 = vpop.xlane.xlu0 %7840
        %v7842 = vadd.f32 %v7817, %v7818
        %v7843 = vadd.f32 %v7842, %v7819
        %v7844 = vadd.f32 %v7843, %v7820
        %v7845 = vadd.f32 %v7844, %v7821
        %v7846 = vadd.f32 %v7845, %v7822
        %7847 = vadd.xlane.f32.xlu0 %v7846
        %v7848 = vpop.xlane.xlu0 %7847
        %v7849 = vadd.f32 %v7823, %v7824
        %v7850 = vadd.f32 %v7849, %v7825
        %v7851 = vadd.f32 %v7850, %v7826
        %v7852 = vadd.f32 %v7851, %v7827
        %v7853 = vadd.f32 %v7852, %v7828
        %7854 = vadd.xlane.f32.xlu0 %v7853
        %v7855 = vpop.xlane.xlu0 %7854
        %v7856 = vadd.f32 %v7829, %v7830
        %v7857 = vadd.f32 %v7856, %v7831
        %v7858 = vadd.f32 %v7857, %v7832
        %v7859 = vadd.f32 %v7858, %v7833
        %v7860 = vadd.f32 %v7859, %v7834
        %7861 = vadd.xlane.f32.xlu0 %v7860
        %v7862 = vpop.xlane.xlu0 %7861
        %v7863 = vrcp.pop 768.0
        %v7864 = vmul.f32 %v7841, %v7863
        %v7865 = vmul.f32 %v7848, %v7863
        %v7866 = vmul.f32 %v7855, %v7863
        %v7867 = vmul.f32 %v7862, %v7863
        %v7868 = vsub.f32 %v7811, %v7864
        %v7869 = vsub.f32 %v7812, %v7864
        %v7870 = vsub.f32 %v7813, %v7864
        %v7871 = vsub.f32 %v7814, %v7864
        %v7872 = vsub.f32 %v7815, %v7864
        %v7873 = vsub.f32 %v7816, %v7864
        %v7874 = vsub.f32 %v7817, %v7865
        %v7875 = vsub.f32 %v7818, %v7865
        %v7876 = vsub.f32 %v7819, %v7865
        %v7877 = vsub.f32 %v7820, %v7865
        %v7878 = vsub.f32 %v7821, %v7865
        %v7879 = vsub.f32 %v7822, %v7865
        %v7880 = vsub.f32 %v7823, %v7866
        %v7881 = vsub.f32 %v7824, %v7866
        %v7882 = vsub.f32 %v7825, %v7866
        %v7883 = vsub.f32 %v7826, %v7866
        %v7884 = vsub.f32 %v7827, %v7866
        %v7885 = vsub.f32 %v7828, %v7866
        %v7886 = vsub.f32 %v7829, %v7867
        %v7887 = vsub.f32 %v7830, %v7867
        %v7888 = vsub.f32 %v7831, %v7867
        %v7889 = vsub.f32 %v7832, %v7867
        %v7890 = vsub.f32 %v7833, %v7867
        %v7891 = vsub.f32 %v7834, %v7867
        %v7892 = vmul.f32 %v7868, %v7868
        %v7893 = vmul.f32 %v7869, %v7869
        %v7894 = vmul.f32 %v7870, %v7870
        %v7895 = vmul.f32 %v7871, %v7871
        %v7896 = vmul.f32 %v7872, %v7872
        %v7897 = vmul.f32 %v7873, %v7873
        %v7898 = vmul.f32 %v7874, %v7874
        %v7899 = vmul.f32 %v7875, %v7875
        %v7900 = vmul.f32 %v7876, %v7876
        %v7901 = vmul.f32 %v7877, %v7877
        %v7902 = vmul.f32 %v7878, %v7878
        %v7903 = vmul.f32 %v7879, %v7879
        %v7904 = vmul.f32 %v7880, %v7880
        %v7905 = vmul.f32 %v7881, %v7881
        %v7906 = vmul.f32 %v7882, %v7882
        %v7907 = vmul.f32 %v7883, %v7883
        %v7908 = vmul.f32 %v7884, %v7884
        %v7909 = vmul.f32 %v7885, %v7885
        %v7910 = vmul.f32 %v7886, %v7886
        %v7911 = vmul.f32 %v7887, %v7887
        %v7912 = vmul.f32 %v7888, %v7888
        %v7913 = vmul.f32 %v7889, %v7889
        %v7914 = vmul.f32 %v7890, %v7890
        %v7915 = vmul.f32 %v7891, %v7891
        %v7916 = vadd.f32 %v7892, %v7893
        %v7917 = vadd.f32 %v7916, %v7894
        %v7918 = vadd.f32 %v7917, %v7895
        %v7919 = vadd.f32 %v7918, %v7896
        %v7920 = vadd.f32 %v7919, %v7897
        %7921 = vadd.xlane.f32.xlu0 %v7920
        %v7922 = vpop.xlane.xlu0 %7921
        %v7923 = vadd.f32 %v7898, %v7899
        %v7924 = vadd.f32 %v7923, %v7900
        %v7925 = vadd.f32 %v7924, %v7901
        %v7926 = vadd.f32 %v7925, %v7902
        %v7927 = vadd.f32 %v7926, %v7903
        %7928 = vadd.xlane.f32.xlu0 %v7927
        %v7929 = vpop.xlane.xlu0 %7928
        %v7930 = vadd.f32 %v7904, %v7905
        %v7931 = vadd.f32 %v7930, %v7906
        %v7932 = vadd.f32 %v7931, %v7907
        %v7933 = vadd.f32 %v7932, %v7908
        %v7934 = vadd.f32 %v7933, %v7909
        %7935 = vadd.xlane.f32.xlu0 %v7934
        %v7936 = vpop.xlane.xlu0 %7935
        %v7937 = vadd.f32 %v7910, %v7911
        %v7938 = vadd.f32 %v7937, %v7912
        %v7939 = vadd.f32 %v7938, %v7913
        %v7940 = vadd.f32 %v7939, %v7914
        %v7941 = vadd.f32 %v7940, %v7915
        %7942 = vadd.xlane.f32.xlu0 %v7941
        %v7943 = vpop.xlane.xlu0 %7942
        %v7944 = vmul.f32 %v7922, %v7863
        %v7945 = vmul.f32 %v7929, %v7863
        %v7946 = vmul.f32 %v7936, %v7863
        %v7947 = vmul.f32 %v7943, %v7863
        %v7948 = vadd.f32 %v7944, 1e-05
        %v7949 = vadd.f32 %v7945, 1e-05
        %v7950 = vadd.f32 %v7946, 1e-05
        %v7951 = vadd.f32 %v7947, 1e-05
        %v7952 = vrsqrt.pop %v7948
        %v7953 = vrsqrt.pop %v7949
        %v7954 = vrsqrt.pop %v7950
        %v7955 = vrsqrt.pop %v7951
        %v7956 = vmul.f32 %v7868, %v7952
        %v7957 = vmul.f32 %v7869, %v7952
        %v7958 = vmul.f32 %v7870, %v7952
        %v7959 = vmul.f32 %v7871, %v7952
        %v7960 = vmul.f32 %v7872, %v7952
        %v7961 = vmul.f32 %v7873, %v7952
        %v7962 = vmul.f32 %v7874, %v7953
        %v7963 = vmul.f32 %v7875, %v7953
        %v7964 = vmul.f32 %v7876, %v7953
        %v7965 = vmul.f32 %v7877, %v7953
        %v7966 = vmul.f32 %v7878, %v7953
        %v7967 = vmul.f32 %v7879, %v7953
        %v7968 = vmul.f32 %v7880, %v7954
        %v7969 = vmul.f32 %v7881, %v7954
        %v7970 = vmul.f32 %v7882, %v7954
        %v7971 = vmul.f32 %v7883, %v7954
        %v7972 = vmul.f32 %v7884, %v7954
        %v7973 = vmul.f32 %v7885, %v7954
        %v7974 = vmul.f32 %v7886, %v7955
        %v7975 = vmul.f32 %v7887, %v7955
        %v7976 = vmul.f32 %v7888, %v7955
        %v7977 = vmul.f32 %v7889, %v7955
        %v7978 = vmul.f32 %v7890, %v7955
        %v7979 = vmul.f32 %v7891, %v7955
        %v7980 = vld [vmem:[#allocation10] sm:$0x3f]
        %v7982 = vlaneseq
        %v7983 = vshrl.u32 %v7982, 7
        %v7984 = vsub.s32 0, %v7983
        %v7985 = vrot.slane %v7980, %v7984
        %v7986 = vlaneseq
        %v7987 = vshrl.u32 %v7986, 7
        %v7988 = vsub.s32 1, %v7987
        %v7989 = vrot.slane %v7980, %v7988
        %v7990 = vlaneseq
        %v7991 = vshrl.u32 %v7990, 7
        %v7992 = vsub.s32 2, %v7991
        %v7993 = vrot.slane %v7980, %v7992
        %v7994 = vlaneseq
        %v7995 = vshrl.u32 %v7994, 7
        %v7996 = vsub.s32 3, %v7995
        %v7997 = vrot.slane %v7980, %v7996
        %v7998 = vlaneseq
        %v7999 = vshrl.u32 %v7998, 7
        %v8000 = vsub.s32 4, %v7999
        %v8001 = vrot.slane %v7980, %v8000
        %v8002 = vlaneseq
        %v8003 = vshrl.u32 %v8002, 7
        %v8004 = vsub.s32 5, %v8003
        %v8005 = vrot.slane %v7980, %v8004
        %v8012 = vmul.f32 %v7956, %v7985
        %v8013 = vmul.f32 %v7957, %v7989
        %v8014 = vmul.f32 %v7958, %v7993
        %v8015 = vmul.f32 %v7959, %v7997
        %v8016 = vmul.f32 %v7960, %v8001
        %v8017 = vmul.f32 %v7961, %v8005
        %v8018 = vmul.f32 %v7962, %v7985
        %v8019 = vmul.f32 %v7963, %v7989
        %v8020 = vmul.f32 %v7964, %v7993
        %v8021 = vmul.f32 %v7965, %v7997
        %v8022 = vmul.f32 %v7966, %v8001
        %v8023 = vmul.f32 %v7967, %v8005
        %v8024 = vmul.f32 %v7968, %v7985
        %v8025 = vmul.f32 %v7969, %v7989
        %v8026 = vmul.f32 %v7970, %v7993
        %v8027 = vmul.f32 %v7971, %v7997
        %v8028 = vmul.f32 %v7972, %v8001
        %v8029 = vmul.f32 %v7973, %v8005
        %v8030 = vmul.f32 %v7974, %v7985
        %v8031 = vmul.f32 %v7975, %v7989
        %v8032 = vmul.f32 %v7976, %v7993
        %v8033 = vmul.f32 %v7977, %v7997
        %v8034 = vmul.f32 %v7978, %v8001
        %v8035 = vmul.f32 %v7979, %v8005
        %v8036 = vld [vmem:[#allocation11] sm:$0x3f]
        %v8038 = vlaneseq
        %v8039 = vshrl.u32 %v8038, 7
        %v8040 = vsub.s32 0, %v8039
        %v8041 = vrot.slane %v8036, %v8040
        %v8042 = vlaneseq
        %v8043 = vshrl.u32 %v8042, 7
        %v8044 = vsub.s32 1, %v8043
        %v8045 = vrot.slane %v8036, %v8044
        %v8046 = vlaneseq
        %v8047 = vshrl.u32 %v8046, 7
        %v8048 = vsub.s32 2, %v8047
        %v8049 = vrot.slane %v8036, %v8048
        %v8050 = vlaneseq
        %v8051 = vshrl.u32 %v8050, 7
        %v8052 = vsub.s32 3, %v8051
        %v8053 = vrot.slane %v8036, %v8052
        %v8054 = vlaneseq
        %v8055 = vshrl.u32 %v8054, 7
        %v8056 = vsub.s32 4, %v8055
        %v8057 = vrot.slane %v8036, %v8056
        %v8058 = vlaneseq
        %v8059 = vshrl.u32 %v8058, 7
        %v8060 = vsub.s32 5, %v8059
        %v8061 = vrot.slane %v8036, %v8060
        %v8068 = vadd.f32 %v8012, %v8041
        %v8069 = vadd.f32 %v8013, %v8045
        %v8070 = vadd.f32 %v8014, %v8049
        %v8071 = vadd.f32 %v8015, %v8053
        %v8072 = vadd.f32 %v8016, %v8057
        %v8073 = vadd.f32 %v8017, %v8061
        %v8074 = vadd.f32 %v8018, %v8041
        %v8075 = vadd.f32 %v8019, %v8045
        %v8076 = vadd.f32 %v8020, %v8049
        %v8077 = vadd.f32 %v8021, %v8053
        %v8078 = vadd.f32 %v8022, %v8057
        %v8079 = vadd.f32 %v8023, %v8061
        %v8080 = vadd.f32 %v8024, %v8041
        %v8081 = vadd.f32 %v8025, %v8045
        %v8082 = vadd.f32 %v8026, %v8049
        %v8083 = vadd.f32 %v8027, %v8053
        %v8084 = vadd.f32 %v8028, %v8057
        %v8085 = vadd.f32 %v8029, %v8061
        %v8086 = vadd.f32 %v8030, %v8041
        %v8087 = vadd.f32 %v8031, %v8045
        %v8088 = vadd.f32 %v8032, %v8049
        %v8089 = vadd.f32 %v8033, %v8053
        %v8090 = vadd.f32 %v8034, %v8057
        %v8091 = vadd.f32 %v8035, %v8061
        %8092 = vst [vmem:[%s437] sm:$0xff] %v8068
        %8093 = vst [vmem:[%s437 + $0x8] sm:$0xff] %v8069
        %8094 = vst [vmem:[%s437 + $0x10] sm:$0xff] %v8070
        %8095 = vst [vmem:[%s437 + $0x18] sm:$0xff] %v8071
        %8096 = vst [vmem:[%s437 + $0x20] sm:$0xff] %v8072
        %8097 = vst [vmem:[%s437 + $0x28] sm:$0xff] %v8073
        %8098 = vst [vmem:[%s437 + $0x30] sm:$0xff] %v8074
        %8099 = vst [vmem:[%s437 + $0x38] sm:$0xff] %v8075
        %8100 = vst [vmem:[%s437 + $0x40] sm:$0xff] %v8076
        %8101 = vst [vmem:[%s437 + $0x48] sm:$0xff] %v8077
        %8102 = vst [vmem:[%s437 + $0x50] sm:$0xff] %v8078
        %8103 = vst [vmem:[%s437 + $0x58] sm:$0xff] %v8079
        %8104 = vst [vmem:[%s437 + $0x60] sm:$0xff] %v8080
        %8105 = vst [vmem:[%s437 + $0x68] sm:$0xff] %v8081
        %8106 = vst [vmem:[%s437 + $0x70] sm:$0xff] %v8082
        %8107 = vst [vmem:[%s437 + $0x78] sm:$0xff] %v8083
        %8108 = vst [vmem:[%s437 + $0x80] sm:$0xff] %v8084
        %8109 = vst [vmem:[%s437 + $0x88] sm:$0xff] %v8085
        %8110 = vst [vmem:[%s437 + $0x90] sm:$0xff] %v8086
        %8111 = vst [vmem:[%s437 + $0x98] sm:$0xff] %v8087
        %8112 = vst [vmem:[%s437 + $0xa0] sm:$0xff] %v8088
        %8113 = vst [vmem:[%s437 + $0xa8] sm:$0xff] %v8089
        %8114 = vst [vmem:[%s437 + $0xb0] sm:$0xff] %v8090
        %8115 = vst [vmem:[%s437 + $0xb8] sm:$0xff] %v8091
        %s8116 = sand.u32 %s204, 1
        %s8117 = scalar_lea.sflag [#allocation4], %s8116
        %s8118 = sand.u32 %s204, 1
        %s8119 = smul.addr %s8118, 192
        %s8120 = scalar_lea.vmem [#allocation13], %s8119
        %s8121 = sand.u32 %s230, 1
        %s8122 = scalar_lea.sflag [#allocation15], %s8121
        %s8123 = sand.u32 %s230, 1
        %s8124 = smul.addr %s8123, 192
        %s8125 = scalar_lea.vmem [#allocation14], %s8124
        // Predicated region
        $region73: #{tpu_custom_call.1} parent=47 // pred_check
          %p8126 = pneg %p214
        $region74: #{tpu_custom_call.1} parent=47 // pred_check_branch
          %8128 = sbr.rel (%p8126) target = $region76
        $region75: #{tpu_custom_call.1} parent=47 // pred_region
          %s8129 = smul.u32 4, %s34
          %s8131 = ssub.s32 3072, 3072
          %8132 = vsyncadd %s8117, %s8131
          %s8133 = smul.addr %s8129, 6
          %s8134 = smul.addr %s8133, 128
          %s8135 = scalar_lea.hbm %s7, %s8134
          %s8136 = sshll.u32 %s8120, 4
          %s8137 = int_to_ptr.vmem [resolvable:$true] %s8136
          %8142 = dma.vmem_to_hbm [thread:$0]  %s8137, 3072, %s8135, %s8117, 768, 768, 48
        $region76: #{tpu_custom_call.1} parent=47 // pred_fallthru
          _
        // Predicated region
        $region77: #{tpu_custom_call.1} parent=47 // pred_check
          %p8143 = pneg %p240
        $region78: #{tpu_custom_call.1} parent=47 // pred_check_branch
          %8145 = sbr.rel (%p8143) target = $region80
        $region79: #{tpu_custom_call.1} parent=47 // pred_region
          %s8146 = smul.u32 4, %s34
          %s8148 = ssub.s32 3072, 3072
          %8149 = vsyncadd %s8122, %s8148
          %s8150 = smul.addr %s8146, 6
          %s8151 = smul.addr %s8150, 128
          %s8152 = scalar_lea.hbm %s8, %s8151
          %s8153 = sshll.u32 %s8125, 4
          %s8154 = int_to_ptr.vmem [resolvable:$true] %s8153
          %8159 = dma.vmem_to_hbm [thread:$0]  %s8154, 3072, %s8152, %s8122, 768, 768, 48
        $region80: #{tpu_custom_call.1} parent=47 // pred_fallthru
          _
      $region48: #{tpu_custom_call.1} parent=5 // pred_fallthru
        _
      %p8160 = scmp.le.s32.totalorder 2, %s29
      // Predicated region
      $region81: #{tpu_custom_call.1} parent=5 // pred_check
        %p8161 = pneg %p8160
      $region82: #{tpu_custom_call.1} parent=5 // pred_check_branch
        %8163 = sbr.rel (%p8161) target = $region84
      $region83: #{tpu_custom_call.1} parent=5 // pred_region
        %s8164 = ssub.s32 %s29, 2
        // Predicated region
        $region85: #{tpu_custom_call.1} parent=83 // pred_check
          %p8165 = pneg %p220
        $region86: #{tpu_custom_call.1} parent=83 // pred_check_branch
          %8167 = sbr.rel (%p8165) target = $region88
        $region87: #{tpu_custom_call.1} parent=83 // pred_region
          %s8168 = sand.u32 %s205, 1
          %s8169 = scalar_lea.sflag [#allocation4], %s8168
          %s8170 = sand.u32 %s205, 1
          %s8171 = smul.addr %s8170, 192
          %s8172 = scalar_lea.vmem [#allocation13], %s8171
          %8173 = dma.done %s8169, 3072
        $region88: #{tpu_custom_call.1} parent=83 // pred_fallthru
          _
        // Predicated region
        $region89: #{tpu_custom_call.1} parent=83 // pred_check
          %p8174 = pneg %p246
        $region90: #{tpu_custom_call.1} parent=83 // pred_check_branch
          %8176 = sbr.rel (%p8174) target = $region92
        $region91: #{tpu_custom_call.1} parent=83 // pred_region
          %s8177 = sand.u32 %s231, 1
          %s8178 = scalar_lea.sflag [#allocation15], %s8177
          %s8179 = sand.u32 %s231, 1
          %s8180 = smul.addr %s8179, 192
          %s8181 = scalar_lea.vmem [#allocation14], %s8180
          %8182 = dma.done %s8178, 3072
        $region92: #{tpu_custom_call.1} parent=83 // pred_fallthru
          _
      $region84: #{tpu_custom_call.1} parent=5 // pred_fallthru
        _
    $region6: #{tpu_custom_call.1} parent=1 // loop_footer
      %s33 = sadd.s32 1, %s29
    $region7: #{tpu_custom_call.1} parent=1 // loop_footer_branch
      %28 = sbr.rel target = $region3
    $region8: #{tpu_custom_call.1} parent=1 // loop_exit
      _
    %8183 = vsyncpa [#allocation3], 1
    %s8184 = scalar_lea.sflag [#allocation3], 1
    %8185 = vsyncpa %s8184, 1
    %8186 = vsyncpa [#allocation6], 1
    %s8187 = scalar_lea.sflag [#allocation6], 1
    %8188 = vsyncpa %s8187, 1
    %8189 = vsyncpa [#allocation9], 1
    %8190 = vsyncpa [#allocation12], 1
    %8191 = vsyncpa [#allocation4], 1
    %s8192 = scalar_lea.sflag [#allocation4], 1
    %8193 = vsyncpa %s8192, 1
    %8194 = vsyncpa [#allocation15], 1
    %s8195 = scalar_lea.sflag [#allocation15], 1
    %8196 = vsyncpa %s8195, 1

</llo_original>
